<compile_context>
chip_gen: v7x
topology: tpu7x:2x2x1
jax: 0.10.0
libtpu: 0.0.40
codegen_flags: <defaults>
</compile_context>

<pallas_src>
import functools

import jax
import jax.numpy as jnp
from jax.experimental import pallas as pl
from jax.experimental.pallas import tpu as pltpu

# f32 matmuls everywhere (kernel in interpret mode, wrapper glue, and the reference) — the
# default TPU matmul precision demotes f32 to bf16 and breaks the 1e-3 tolerance check.
jax.config.update("jax_default_matmul_precision", "highest")


def _round_up(x, m):
    return ((x + m - 1) // m) * m


def _pad_to(x, shape):
    return jnp.pad(x, [(0, s - d) for d, s in zip(x.shape, shape)])


# ---------------------------------------------------------------------------
# Kernel A: multi-layer GRU over the target sequence + Luong "dot" attention.
# ---------------------------------------------------------------------------
def make_gru_attention_kernel(n_layers, n_hiddens_pad, seq_len, batch_pad):
    L, Hp, T, Bp = n_layers, n_hiddens_pad, seq_len, batch_pad

    def kernel(*refs):
        e_ref, h0_ref, ctx_ref, mbias_ref = refs[:4]   # e_ref: [T*Bp, Ep] time-major flattened
        gru_refs = refs[4:4 + 4 * L]                   # per layer: w_ih^T, w_hh^T, b_ih, b_hh
        s_ref, c_ref, x_scr = refs[4 + 4 * L:]         # outputs + VMEM scratch [T*Bp, Hp]

        # ---- multi-layer GRU, layer-major (PyTorch gate order r, z, n) ----
        h = None
        for l in range(L):
            # weight/bias loads hoisted out of the time loop
            w_ih_t = gru_refs[4 * l][...]              # [in_pad, 3*Hp]
            w_hh_t = gru_refs[4 * l + 1][...]          # [Hp, 3*Hp]
            b_ih = gru_refs[4 * l + 2][...]            # [1, 3*Hp]
            b_hh = gru_refs[4 * l + 3][...]            # [1, 3*Hp]

            # One input-to-hidden matmul for ALL timesteps of this layer (MXU-friendly).
            x_all = e_ref[...] if l == 0 else x_scr[...]             # [T*Bp, in_pad]
            gx_cat = jnp.dot(x_all, w_ih_t,
                             preferred_element_type=jnp.float32) + b_ih

            h = h0_ref[l]                              # [Bp, Hp]
            # TODO(synk): switch to lax.fori_loop (small unroll) for long T.
            for t in range(T):
                gx = gx_cat[t * Bp:(t + 1) * Bp, :]    # sublane-aligned static slice
                gh = jnp.dot(h, w_hh_t, preferred_element_type=jnp.float32) + b_hh
                r = jax.nn.sigmoid(gx[:, :Hp] + gh[:, :Hp])
                z = jax.nn.sigmoid(gx[:, Hp:2 * Hp] + gh[:, Hp:2 * Hp])
                n = jnp.tanh(gx[:, 2 * Hp:] + r * gh[:, 2 * Hp:])
                h = (1.0 - z) * n + z * h
                if l + 1 < L:                          # next layer's input (dropout == identity)
                    x_scr[t * Bp:(t + 1) * Bp, :] = h
            s_ref[l] = h                               # final hidden state of this layer

        h_last = h                                     # [Bp, Hp]  (== s[-1], top layer, last step)

        # ---- Luong "dot" attention on VPU (multiply) + XLU (reduce): q=1, so MXU mat-vecs
        #      would waste 255/256 of the systolic rows and may force ctx transposes. ----
        ctx = ctx_ref[...]                                            # [Bp, Sp, Hp]
        scores = jnp.sum(h_last[:, None, :] * ctx, axis=-1)          # [Bp, Sp] lane reduce
        scores = scores + mbias_ref[...]                              # additive mask (0 / -1e10)
        m = jnp.max(scores, axis=-1, keepdims=True)
        p = jnp.exp(scores - m)
        denom = jnp.sum(p, axis=-1, keepdims=True)
        a = p / denom                                                 # exact softmax weights
        c_ref[...] = jnp.sum(a[:, :, None] * ctx, axis=1)            # [Bp, Hp] sublane reduce

    return kernel


# ---------------------------------------------------------------------------
# Kernel B: vocab-tiled output projection  logits = s[-1] @ W1 + c @ W2 + b.
# ---------------------------------------------------------------------------
def projection_kernel(h_ref, c_ref, w1_ref, w2_ref, b_ref, out_ref):
    out_ref[...] = (
        jnp.dot(h_ref[...], w1_ref[...], preferred_element_type=jnp.float32)
        + jnp.dot(c_ref[...], w2_ref[...], preferred_element_type=jnp.float32)
        + b_ref[...]
    )


# ---------------------------------------------------------------------------
# Parameters
# ---------------------------------------------------------------------------
def init_params(key, n_vocab, n_embed, n_hiddens, n_layers):
    params = {}
    k = 1.0 / jnp.sqrt(jnp.float32(n_hiddens))
    keys = list(jax.random.split(key, 4 * n_layers + 3))
    it = iter(keys)
    params['emb'] = jax.random.normal(next(it), (n_vocab, n_embed), jnp.float32) * 0.1
    for l in range(n_layers):
        in_dim = n_embed if l == 0 else n_hiddens
        params[f'w_ih_{l}'] = jax.random.uniform(next(it), (3 * n_hiddens, in_dim), jnp.float32, -k, k)
        params[f'w_hh_{l}'] = jax.random.uniform(next(it), (3 * n_hiddens, n_hiddens), jnp.float32, -k, k)
        params[f'b_ih_{l}'] = jax.random.uniform(next(it), (3 * n_hiddens,), jnp.float32, -k, k)
        params[f'b_hh_{l}'] = jax.random.uniform(next(it), (3 * n_hiddens,), jnp.float32, -k, k)
    k2 = 1.0 / jnp.sqrt(jnp.float32(2 * n_hiddens))
    params['w_out'] = jax.random.uniform(next(it), (n_vocab, 2 * n_hiddens), jnp.float32, -k2, k2)
    params['b_out'] = jax.random.uniform(next(it), (n_vocab,), jnp.float32, -k2, k2)
    return params


def _prep_gate_weight(w, in_pad, h_pad):
    """PyTorch [3H, in] (r,z,n stacked) -> transposed [in_pad, 3*h_pad] with per-gate padding."""
    h3, in_dim = w.shape
    h = h3 // 3
    blocks = []
    for g in range(3):
        blk = w[g * h:(g + 1) * h, :]                                 # [H, in]
        blk = jnp.pad(blk, ((0, h_pad - h), (0, in_pad - in_dim)))
        blocks.append(blk.T)                                          # [in_pad, h_pad]
    return jnp.concatenate(blocks, axis=1)                            # [in_pad, 3*h_pad]


def _prep_gate_bias(b, h_pad):
    h = b.shape[0] // 3
    blocks = [jnp.pad(b[g * h:(g + 1) * h], (0, h_pad - h)) for g in range(3)]
    return jnp.concatenate(blocks)[None, :]                           # [1, 3*h_pad]


# ---------------------------------------------------------------------------
# Wrapper
# ---------------------------------------------------------------------------
@functools.partial(jax.jit, static_argnames=('n_layers', 'n_hiddens'))
def luong_decoder_forward(params, y, state, mask, *, n_layers, n_hiddens):
    """Mirrors LuongDecoder.forward(y, state, mask) with score_fn='dot' (eval mode)."""
    ctx, s = state
    B, T = y.shape
    S = ctx.shape[1]
    H = n_hiddens
    E = params['emb'].shape[1]
    V = params['w_out'].shape[0]

    # hardware-tile padding: sublanes (8) for batch, lanes (128) for feature/source/vocab dims
    Bp = _round_up(B, 8)
    Hp = _round_up(H, 128)
    Ep = _round_up(E, 128)
    Sp = _round_up(S, 128)

    # Glue: embedding gather (nn.Embedding); dropout is identity in eval mode.
    e = jnp.take(params['emb'], y, axis=0)                            # [B, T, E]
    e_pad = _pad_to(e, (Bp, T, Ep))
    e_flat = jnp.transpose(e_pad, (1, 0, 2)).reshape(T * Bp, Ep)      # time-major flattened
    h0_pad = _pad_to(s, (n_layers, Bp, Hp))
    ctx_pad = _pad_to(ctx, (Bp, Sp, Hp))
    # additive float mask: 0 where valid, -1e10 where masked / padded (no in-kernel compare+select)
    mask_f = _pad_to(mask.astype(jnp.float32), (Bp, Sp))
    mbias = (mask_f - 1.0) * 1e10                                     # [Bp, Sp]

    inputs = [e_flat, h0_pad, ctx_pad, mbias]
    for l in range(n_layers):
        in_dim_pad = Ep if l == 0 else Hp
        inputs += [
            _prep_gate_weight(params[f'w_ih_{l}'], in_dim_pad, Hp),
            _prep_gate_weight(params[f'w_hh_{l}'], Hp, Hp),
            _prep_gate_bias(params[f'b_ih_{l}'], Hp),
            _prep_gate_bias(params[f'b_hh_{l}'], Hp),
        ]

    # explicit VMEM residency budget for the grid-less kernel (inputs + weights + outputs +
    # scratch + the big temporaries: gx_cat and the [Bp,Sp,Hp] attention product), with margin.
    w_elems = sum(((Ep if l == 0 else Hp) + Hp) * 3 * Hp + 2 * 3 * Hp for l in range(n_layers))
    io_elems = (T * Bp * Ep) + 2 * (n_layers * Bp * Hp) + (Bp * Sp * Hp) + (Bp * Sp) \
        + (Bp * Hp) + (T * Bp * Hp)
    tmp_elems = (T * Bp * 3 * Hp) + (Bp * Sp * Hp) + 3 * (Bp * Sp)
    vmem_a = min(96 * 1024 * 1024, int(4 * (w_elems + io_elems + tmp_elems) * 1.5) + (2 << 20))

    vmem = pl.BlockSpec(memory_space=pltpu.MemorySpace.VMEM)
    kernel_a = make_gru_attention_kernel(n_layers, Hp, T, Bp)
    s_new_pad, c_pad = pl.pallas_call(
        kernel_a,
        out_shape=(jax.ShapeDtypeStruct((n_layers, Bp, Hp), jnp.float32),
                   jax.ShapeDtypeStruct((Bp, Hp), jnp.float32)),
        in_specs=[vmem] * len(inputs),
        out_specs=(vmem, vmem),
        scratch_shapes=[pltpu.VMEM((T * Bp, Hp), jnp.float32)],
        # reuse the h0 buffer for the new hidden state (h0_ref[l] is read before s_ref[l] is
        # written inside each layer iteration, so the aliasing is safe)
        input_output_aliases={1: 0},
        compiler_params=pltpu.CompilerParams(vmem_limit_bytes=vmem_a),
    )(*inputs)

    h_last_pad = s_new_pad[n_layers - 1]                              # [Bp, Hp]

    # split output weights so no lane-dim concat is needed inside the kernel
    # vocab tiling: lane-dense tiles; Vp padded UP to a multiple of tile_v (no 128 fallback).
    tile_v = 512                                                      # fits v7x VMEM even at Hp=1024
    if V <= tile_v:
        tile_v = max(128, _round_up(V, 128))
    Vp = _round_up(V, tile_v)

    w_out = params['w_out']                                           # [V, 2H]
    w1_t = jnp.pad(w_out[:, :H].T, ((0, Hp - H), (0, Vp - V)))        # [Hp, Vp]
    w2_t = jnp.pad(w_out[:, H:].T, ((0, Hp - H), (0, Vp - V)))        # [Hp, Vp]
    b_out = jnp.pad(params['b_out'], (0, Vp - V))[None, :]            # [1, Vp]

    vmem_b = 4 * (2 * 2 * (Bp * Hp) + 2 * 2 * (Hp * tile_v) + 2 * tile_v + 2 * (Bp * tile_v))
    vmem_b = min(96 * 1024 * 1024, vmem_b * 2 + (2 << 20))

    logits_pad = pl.pallas_call(
        projection_kernel,
        out_shape=jax.ShapeDtypeStruct((Bp, Vp), jnp.float32),
        grid=(Vp // tile_v,),
        in_specs=[
            pl.BlockSpec((Bp, Hp), lambda j: (0, 0)),
            pl.BlockSpec((Bp, Hp), lambda j: (0, 0)),
            pl.BlockSpec((Hp, tile_v), lambda j: (0, j)),
            pl.BlockSpec((Hp, tile_v), lambda j: (0, j)),
            pl.BlockSpec((1, tile_v), lambda j: (0, j)),
        ],
        out_specs=pl.BlockSpec((Bp, tile_v), lambda j: (0, j)),
        compiler_params=pltpu.CompilerParams(
            dimension_semantics=("parallel",), vmem_limit_bytes=vmem_b),
    )(h_last_pad, c_pad, w1_t, w2_t, b_out)

    logits = logits_pad[:B, :V]
    s_new = s_new_pad[:, :B, :H]
    return logits[:, None, :], (ctx, s_new)                           # o: [B, 1, V]


# ---------------------------------------------------------------------------
# Pure-JAX reference (PyTorch semantics) for correctness check
# ---------------------------------------------------------------------------
def reference_forward(params, y, state, mask, *, n_layers, n_hiddens):
    hi = jax.lax.Precision.HIGHEST
    ctx, s = state
    H = n_hiddens
    e = jnp.take(params['emb'], y, axis=0)
    h = [s[l] for l in range(n_layers)]
    B, T, _ = e.shape
    for t in range(T):
        x = e[:, t, :]
        for l in range(n_layers):
            gx = jnp.dot(x, params[f'w_ih_{l}'].T, precision=hi) + params[f'b_ih_{l}']
            gh = jnp.dot(h[l], params[f'w_hh_{l}'].T, precision=hi) + params[f'b_hh_{l}']
            r = jax.nn.sigmoid(gx[:, :H] + gh[:, :H])
            z = jax.nn.sigmoid(gx[:, H:2 * H] + gh[:, H:2 * H])
            n = jnp.tanh(gx[:, 2 * H:] + r * gh[:, 2 * H:])
            h[l] = (1 - z) * n + z * h[l]
            x = h[l]
    h_last = h[-1]
    scores = jnp.einsum('bh,bsh->bs', h_last, ctx, precision=hi)
    scores = jnp.where(mask == 0, -1e10, scores)
    a = jax.nn.softmax(scores, axis=-1)
    c = jnp.einsum('bs,bsh->bh', a, ctx, precision=hi)
    cat = jnp.concatenate([h_last, c], axis=-1)
    logits = jnp.dot(cat, params['w_out'].T, precision=hi) + params['b_out']
    return logits[:, None, :], (ctx, jnp.stack(h))


if __name__ == "__main__":
    n_vocab, n_embed, n_hiddens, n_layers = 64, 32, 32, 2
    B, T, S = 2, 1, 8

    key = jax.random.PRNGKey(0)
    kp, ky, kc, ks = jax.random.split(key, 4)
    params = init_params(kp, n_vocab, n_embed, n_hiddens, n_layers)

    y = jax.random.randint(ky, (B, T), 0, n_vocab, dtype=jnp.int32)
    ctx = jax.random.normal(kc, (B, S, n_hiddens), jnp.float32)
    s0 = jax.random.normal(ks, (n_layers, B, n_hiddens), jnp.float32)
    lengths = jnp.array([S, 5], jnp.int32)
    mask = (jnp.arange(S)[None, :] < lengths[:, None]).astype(jnp.int32)   # [B, S]

    o, (ctx_out, s_out) = luong_decoder_forward(
        params, y, (ctx, s0), mask, n_layers=n_layers, n_hiddens=n_hiddens)
    jax.block_until_ready((o, s_out))

    o_ref, (_, s_ref) = reference_forward(
        params, y, (ctx, s0), mask, n_layers=n_layers, n_hiddens=n_hiddens)
    assert o.shape == (B, 1, n_vocab) and s_out.shape == (n_layers, B, n_hiddens)
    assert jnp.allclose(o, o_ref, atol=2e-3, rtol=2e-3), \
        f"max |o - o_ref| = {jnp.max(jnp.abs(o - o_ref))}"
    assert jnp.allclose(s_out, s_ref, atol=2e-3, rtol=2e-3), \
        f"max |s - s_ref| = {jnp.max(jnp.abs(s_out - s_ref))}"
    print("KERNEL_OK")
</pallas_src>

<mosaic_0001>
module attributes {stable_mosaic.version = 11 : i64} {
  func.func @kernel(%arg0: memref<8x128xf32, #tpu.memory_space<vmem>>, %arg1: memref<2x8x128xf32, #tpu.memory_space<vmem>>, %arg2: memref<8x128x128xf32, #tpu.memory_space<vmem>>, %arg3: memref<8x128xf32, #tpu.memory_space<vmem>>, %arg4: memref<128x384xf32, #tpu.memory_space<vmem>>, %arg5: memref<128x384xf32, #tpu.memory_space<vmem>>, %arg6: memref<1x384xf32, #tpu.memory_space<vmem>>, %arg7: memref<1x384xf32, #tpu.memory_space<vmem>>, %arg8: memref<128x384xf32, #tpu.memory_space<vmem>>, %arg9: memref<128x384xf32, #tpu.memory_space<vmem>>, %arg10: memref<1x384xf32, #tpu.memory_space<vmem>>, %arg11: memref<1x384xf32, #tpu.memory_space<vmem>>, %arg12: memref<2x8x128xf32, #tpu.memory_space<vmem>>, %arg13: memref<8x128xf32, #tpu.memory_space<vmem>>, %arg14: memref<8x128xf32, #tpu.memory_space<vmem>>) attributes {dimension_semantics = [], scalar_prefetch = 0 : i64, scratch_operands = 1 : i64, tpu.core_type = #tpu.core_type<tc>} {
    %c0 = arith.constant 0 : index
    %c0_0 = arith.constant 0 : index
    %0 = vector.load %arg4[%c0, %c0_0] : memref<128x384xf32, #tpu.memory_space<vmem>>, vector<128x384xf32>
    %c0_1 = arith.constant 0 : index
    %c0_2 = arith.constant 0 : index
    %1 = vector.load %arg5[%c0_1, %c0_2] : memref<128x384xf32, #tpu.memory_space<vmem>>, vector<128x384xf32>
    %c0_3 = arith.constant 0 : index
    %c0_4 = arith.constant 0 : index
    %2 = vector.load %arg6[%c0_3, %c0_4] : memref<1x384xf32, #tpu.memory_space<vmem>>, vector<1x384xf32>
    %c0_5 = arith.constant 0 : index
    %c0_6 = arith.constant 0 : index
    %3 = vector.load %arg7[%c0_5, %c0_6] : memref<1x384xf32, #tpu.memory_space<vmem>>, vector<1x384xf32>
    %c0_7 = arith.constant 0 : index
    %c0_8 = arith.constant 0 : index
    %4 = vector.load %arg0[%c0_7, %c0_8] : memref<8x128xf32, #tpu.memory_space<vmem>>, vector<8x128xf32>
    %cst = arith.constant dense<0.000000e+00> : vector<8x384xf32>
    %5 = tpu.matmul %4, %0, %cst {dimension_numbers = #tpu.dot_dimension_numbers<[1], [0], [0], [1], [0, 0, 1, 1], [], []>, precision = #tpu.contract_precision<fp32>} : vector<8x128xf32>, vector<128x384xf32>, vector<8x384xf32> -> vector<8x384xf32>
    %6 = vector.broadcast %2 : vector<1x384xf32> to vector<8x384xf32>
    %7 = arith.addf %5, %6 : vector<8x384xf32>
    %c0_9 = arith.constant 0 : index
    %c0_10 = arith.constant 0 : index
    %c0_11 = arith.constant 0 : index
    %8 = vector.load %arg1[%c0_9, %c0_10, %c0_11] : memref<2x8x128xf32, #tpu.memory_space<vmem>>, vector<1x8x128xf32>
    %9 = vector.shape_cast %8 : vector<1x8x128xf32> to vector<8x128xf32>
    %cst_12 = arith.constant dense<0.000000e+00> : vector<8x384xf32>
    %10 = tpu.matmul %9, %1, %cst_12 {dimension_numbers = #tpu.dot_dimension_numbers<[1], [0], [0], [1], [0, 0, 1, 1], [], []>, precision = #tpu.contract_precision<fp32>} : vector<8x128xf32>, vector<128x384xf32>, vector<8x384xf32> -> vector<8x384xf32>
    %11 = vector.broadcast %3 : vector<1x384xf32> to vector<8x384xf32>
    %12 = arith.addf %10, %11 : vector<8x384xf32>
    %13 = vector.extract_strided_slice %7 {offsets = [0, 0], sizes = [8, 128], strides = [1, 1]} : vector<8x384xf32> to vector<8x128xf32>
    %14 = vector.extract_strided_slice %12 {offsets = [0, 0], sizes = [8, 128], strides = [1, 1]} : vector<8x384xf32> to vector<8x128xf32>
    %15 = arith.addf %13, %14 : vector<8x128xf32>
    %16 = arith.negf %15 : vector<8x128xf32>
    %17 = math.exp %16 : vector<8x128xf32>
    %cst_13 = arith.constant 1.000000e+00 : f32
    %18 = vector.broadcast %cst_13 : f32 to vector<8x128xf32>
    %19 = arith.addf %18, %17 : vector<8x128xf32>
    %20 = arith.divf %18, %19 : vector<8x128xf32>
    %21 = vector.extract_strided_slice %7 {offsets = [0, 128], sizes = [8, 128], strides = [1, 1]} : vector<8x384xf32> to vector<8x128xf32>
    %22 = vector.extract_strided_slice %12 {offsets = [0, 128], sizes = [8, 128], strides = [1, 1]} : vector<8x384xf32> to vector<8x128xf32>
    %23 = arith.addf %21, %22 : vector<8x128xf32>
    %24 = arith.negf %23 : vector<8x128xf32>
    %25 = math.exp %24 : vector<8x128xf32>
    %cst_14 = arith.constant 1.000000e+00 : f32
    %26 = vector.broadcast %cst_14 : f32 to vector<8x128xf32>
    %27 = arith.addf %26, %25 : vector<8x128xf32>
    %28 = arith.divf %26, %27 : vector<8x128xf32>
    %29 = vector.extract_strided_slice %7 {offsets = [0, 256], sizes = [8, 128], strides = [1, 1]} : vector<8x384xf32> to vector<8x128xf32>
    %30 = vector.extract_strided_slice %12 {offsets = [0, 256], sizes = [8, 128], strides = [1, 1]} : vector<8x384xf32> to vector<8x128xf32>
    %31 = arith.mulf %20, %30 : vector<8x128xf32>
    %32 = arith.addf %29, %31 : vector<8x128xf32>
    %33 = math.tanh %32 : vector<8x128xf32>
    %cst_15 = arith.constant 1.000000e+00 : f32
    %34 = vector.broadcast %cst_15 : f32 to vector<8x128xf32>
    %35 = arith.subf %34, %28 : vector<8x128xf32>
    %36 = arith.mulf %35, %33 : vector<8x128xf32>
    %37 = arith.mulf %28, %9 : vector<8x128xf32>
    %38 = arith.addf %36, %37 : vector<8x128xf32>
    %c0_16 = arith.constant 0 : index
    %c0_17 = arith.constant 0 : index
    %39 = vector.load %arg14[%c0_16, %c0_17] : memref<8x128xf32, #tpu.memory_space<vmem>>, vector<8x128xf32>
    tpu.vector_store %arg14[%c0_16, %c0_17], %38 {strides = array<i32>} : memref<8x128xf32, #tpu.memory_space<vmem>>, vector<8x128xf32>,
    %c0_18 = arith.constant 0 : index
    %c0_19 = arith.constant 0 : index
    %c0_20 = arith.constant 0 : index
    %40 = vector.load %arg12[%c0_18, %c0_19, %c0_20] : memref<2x8x128xf32, #tpu.memory_space<vmem>>, vector<1x8x128xf32>
    %41 = vector.shape_cast %40 : vector<1x8x128xf32> to vector<8x128xf32>
    %42 = vector.shape_cast %38 : vector<8x128xf32> to vector<1x8x128xf32>
    tpu.vector_store %arg12[%c0_18, %c0_19, %c0_20], %42 {strides = array<i32>} : memref<2x8x128xf32, #tpu.memory_space<vmem>>, vector<1x8x128xf32>,
    %c0_21 = arith.constant 0 : index
    %c0_22 = arith.constant 0 : index
    %43 = vector.load %arg8[%c0_21, %c0_22] : memref<128x384xf32, #tpu.memory_space<vmem>>, vector<128x384xf32>
    %c0_23 = arith.constant 0 : index
    %c0_24 = arith.constant 0 : index
    %44 = vector.load %arg9[%c0_23, %c0_24] : memref<128x384xf32, #tpu.memory_space<vmem>>, vector<128x384xf32>
    %c0_25 = arith.constant 0 : index
    %c0_26 = arith.constant 0 : index
    %45 = vector.load %arg10[%c0_25, %c0_26] : memref<1x384xf32, #tpu.memory_space<vmem>>, vector<1x384xf32>
    %c0_27 = arith.constant 0 : index
    %c0_28 = arith.constant 0 : index
    %46 = vector.load %arg11[%c0_27, %c0_28] : memref<1x384xf32, #tpu.memory_space<vmem>>, vector<1x384xf32>
    %c0_29 = arith.constant 0 : index
    %c0_30 = arith.constant 0 : index
    %47 = vector.load %arg14[%c0_29, %c0_30] : memref<8x128xf32, #tpu.memory_space<vmem>>, vector<8x128xf32>
    %cst_31 = arith.constant dense<0.000000e+00> : vector<8x384xf32>
    %48 = tpu.matmul %47, %43, %cst_31 {dimension_numbers = #tpu.dot_dimension_numbers<[1], [0], [0], [1], [0, 0, 1, 1], [], []>, precision = #tpu.contract_precision<fp32>} : vector<8x128xf32>, vector<128x384xf32>, vector<8x384xf32> -> vector<8x384xf32>
    %49 = vector.broadcast %45 : vector<1x384xf32> to vector<8x384xf32>
    %50 = arith.addf %48, %49 : vector<8x384xf32>
    %c1 = arith.constant 1 : index
    %c0_32 = arith.constant 0 : index
    %c0_33 = arith.constant 0 : index
    %51 = vector.load %arg1[%c1, %c0_32, %c0_33] : memref<2x8x128xf32, #tpu.memory_space<vmem>>, vector<1x8x128xf32>
    %52 = vector.shape_cast %51 : vector<1x8x128xf32> to vector<8x128xf32>
    %cst_34 = arith.constant dense<0.000000e+00> : vector<8x384xf32>
    %53 = tpu.matmul %52, %44, %cst_34 {dimension_numbers = #tpu.dot_dimension_numbers<[1], [0], [0], [1], [0, 0, 1, 1], [], []>, precision = #tpu.contract_precision<fp32>} : vector<8x128xf32>, vector<128x384xf32>, vector<8x384xf32> -> vector<8x384xf32>
    %54 = vector.broadcast %46 : vector<1x384xf32> to vector<8x384xf32>
    %55 = arith.addf %53, %54 : vector<8x384xf32>
    %56 = vector.extract_strided_slice %50 {offsets = [0, 0], sizes = [8, 128], strides = [1, 1]} : vector<8x384xf32> to vector<8x128xf32>
    %57 = vector.extract_strided_slice %55 {offsets = [0, 0], sizes = [8, 128], strides = [1, 1]} : vector<8x384xf32> to vector<8x128xf32>
    %58 = arith.addf %56, %57 : vector<8x128xf32>
    %59 = arith.negf %58 : vector<8x128xf32>
    %60 = math.exp %59 : vector<8x128xf32>
    %cst_35 = arith.constant 1.000000e+00 : f32
    %61 = vector.broadcast %cst_35 : f32 to vector<8x128xf32>
    %62 = arith.addf %61, %60 : vector<8x128xf32>
    %63 = arith.divf %61, %62 : vector<8x128xf32>
    %64 = vector.extract_strided_slice %50 {offsets = [0, 128], sizes = [8, 128], strides = [1, 1]} : vector<8x384xf32> to vector<8x128xf32>
    %65 = vector.extract_strided_slice %55 {offsets = [0, 128], sizes = [8, 128], strides = [1, 1]} : vector<8x384xf32> to vector<8x128xf32>
    %66 = arith.addf %64, %65 : vector<8x128xf32>
    %67 = arith.negf %66 : vector<8x128xf32>
    %68 = math.exp %67 : vector<8x128xf32>
    %cst_36 = arith.constant 1.000000e+00 : f32
    %69 = vector.broadcast %cst_36 : f32 to vector<8x128xf32>
    %70 = arith.addf %69, %68 : vector<8x128xf32>
    %71 = arith.divf %69, %70 : vector<8x128xf32>
    %72 = vector.extract_strided_slice %50 {offsets = [0, 256], sizes = [8, 128], strides = [1, 1]} : vector<8x384xf32> to vector<8x128xf32>
    %73 = vector.extract_strided_slice %55 {offsets = [0, 256], sizes = [8, 128], strides = [1, 1]} : vector<8x384xf32> to vector<8x128xf32>
    %74 = arith.mulf %63, %73 : vector<8x128xf32>
    %75 = arith.addf %72, %74 : vector<8x128xf32>
    %76 = math.tanh %75 : vector<8x128xf32>
    %cst_37 = arith.constant 1.000000e+00 : f32
    %77 = vector.broadcast %cst_37 : f32 to vector<8x128xf32>
    %78 = arith.subf %77, %71 : vector<8x128xf32>
    %79 = arith.mulf %78, %76 : vector<8x128xf32>
    %80 = arith.mulf %71, %52 : vector<8x128xf32>
    %81 = arith.addf %79, %80 : vector<8x128xf32>
    %c1_38 = arith.constant 1 : index
    %c0_39 = arith.constant 0 : index
    %c0_40 = arith.constant 0 : index
    %82 = vector.load %arg12[%c1_38, %c0_39, %c0_40] : memref<2x8x128xf32, #tpu.memory_space<vmem>>, vector<1x8x128xf32>
    %83 = vector.shape_cast %82 : vector<1x8x128xf32> to vector<8x128xf32>
    %84 = vector.shape_cast %81 : vector<8x128xf32> to vector<1x8x128xf32>
    tpu.vector_store %arg12[%c1_38, %c0_39, %c0_40], %84 {strides = array<i32>} : memref<2x8x128xf32, #tpu.memory_space<vmem>>, vector<1x8x128xf32>,
    %c0_41 = arith.constant 0 : index
    %c0_42 = arith.constant 0 : index
    %c0_43 = arith.constant 0 : index
    %85 = vector.load %arg2[%c0_41, %c0_42, %c0_43] : memref<8x128x128xf32, #tpu.memory_space<vmem>>, vector<8x128x128xf32>
    %86 = vector.shape_cast %81 : vector<8x128xf32> to vector<8x1x128xf32>
    %87 = vector.broadcast %86 : vector<8x1x128xf32> to vector<8x128x128xf32>
    %88 = arith.mulf %87, %85 : vector<8x128x128xf32>
    %cst_44 = arith.constant dense<0.000000e+00> : vector<8x128xf32>
    %89 = vector.multi_reduction <add>, %88, %cst_44 [2] : vector<8x128x128xf32> to vector<8x128xf32>
    %c0_45 = arith.constant 0 : index
    %c0_46 = arith.constant 0 : index
    %90 = vector.load %arg3[%c0_45, %c0_46] : memref<8x128xf32, #tpu.memory_space<vmem>>, vector<8x128xf32>
    %91 = arith.addf %89, %90 : vector<8x128xf32>
    %cst_47 = arith.constant dense<0xFF800000> : vector<8xf32>
    %92 = vector.multi_reduction <maximumf>, %91, %cst_47 [1] : vector<8x128xf32> to vector<8xf32>
    %93 = vector.shape_cast %92 : vector<8xf32> to vector<8x1xf32>
    %94 = vector.broadcast %93 : vector<8x1xf32> to vector<8x128xf32>
    %95 = arith.subf %91, %94 : vector<8x128xf32>
    %96 = math.exp %95 : vector<8x128xf32>
    %cst_48 = arith.constant dense<0.000000e+00> : vector<8xf32>
    %97 = vector.multi_reduction <add>, %96, %cst_48 [1] : vector<8x128xf32> to vector<8xf32>
    %98 = vector.shape_cast %97 : vector<8xf32> to vector<8x1xf32>
    %99 = vector.broadcast %98 : vector<8x1xf32> to vector<8x128xf32>
    %100 = arith.divf %96, %99 : vector<8x128xf32>
    %101 = vector.shape_cast %100 : vector<8x128xf32> to vector<8x128x1xf32>
    %102 = vector.broadcast %101 : vector<8x128x1xf32> to vector<8x128x128xf32>
    %103 = arith.mulf %102, %85 : vector<8x128x128xf32>
    %cst_49 = arith.constant dense<0.000000e+00> : vector<8x128xf32>
    %104 = vector.multi_reduction <add>, %103, %cst_49 [1] : vector<8x128x128xf32> to vector<8x128xf32>
    %c0_50 = arith.constant 0 : index
    %c0_51 = arith.constant 0 : index
    %105 = vector.load %arg13[%c0_50, %c0_51] : memref<8x128xf32, #tpu.memory_space<vmem>>, vector<8x128xf32>
    tpu.vector_store %arg13[%c0_50, %c0_51], %104 {strides = array<i32>} : memref<8x128xf32, #tpu.memory_space<vmem>>, vector<8x128xf32>,
    return
  }
}

module attributes {stable_mosaic.version = 11 : i64} {
  func.func @projection_kernel(%arg0: i32, %arg1: memref<8x128xf32, #tpu.memory_space<vmem>>, %arg2: memref<8x128xf32, #tpu.memory_space<vmem>>, %arg3: memref<128x128xf32, #tpu.memory_space<vmem>>, %arg4: memref<128x128xf32, #tpu.memory_space<vmem>>, %arg5: memref<1x128xf32, #tpu.memory_space<vmem>>, %arg6: memref<8x128xf32, #tpu.memory_space<vmem>>) attributes {dimension_semantics = [#tpu.dimension_semantics<parallel>], iteration_bounds = array<i64: 1>, scalar_prefetch = 0 : i64, scratch_operands = 0 : i64, tpu.core_type = #tpu.core_type<tc>, window_params = [{pipeline_mode = #tpu.pipeline_mode<synchronous>, transform_indices = @transform_0, window_bounds = array<i64: 8, 128>}, {pipeline_mode = #tpu.pipeline_mode<synchronous>, transform_indices = @transform_1, window_bounds = array<i64: 8, 128>}, {transform_indices = @transform_2, window_bounds = array<i64: 128, 128>}, {transform_indices = @transform_3, window_bounds = array<i64: 128, 128>}, {transform_indices = @transform_4, window_bounds = array<i64: 1, 128>}, {transform_indices = @transform_5, window_bounds = array<i64: 8, 128>}]} {
    %c0 = arith.constant 0 : index
    %c0_0 = arith.constant 0 : index
    %0 = vector.load %arg1[%c0, %c0_0] : memref<8x128xf32, #tpu.memory_space<vmem>>, vector<8x128xf32>
    %c0_1 = arith.constant 0 : index
    %c0_2 = arith.constant 0 : index
    %1 = vector.load %arg3[%c0_1, %c0_2] : memref<128x128xf32, #tpu.memory_space<vmem>>, vector<128x128xf32>
    %cst = arith.constant dense<0.000000e+00> : vector<8x128xf32>
    %2 = tpu.matmul %0, %1, %cst {dimension_numbers = #tpu.dot_dimension_numbers<[1], [0], [0], [1], [0, 0, 1, 1], [], []>, precision = #tpu.contract_precision<fp32>} : vector<8x128xf32>, vector<128x128xf32>, vector<8x128xf32> -> vector<8x128xf32>
    %c0_3 = arith.constant 0 : index
    %c0_4 = arith.constant 0 : index
    %3 = vector.load %arg2[%c0_3, %c0_4] : memref<8x128xf32, #tpu.memory_space<vmem>>, vector<8x128xf32>
    %c0_5 = arith.constant 0 : index
    %c0_6 = arith.constant 0 : index
    %4 = vector.load %arg4[%c0_5, %c0_6] : memref<128x128xf32, #tpu.memory_space<vmem>>, vector<128x128xf32>
    %cst_7 = arith.constant dense<0.000000e+00> : vector<8x128xf32>
    %5 = tpu.matmul %3, %4, %cst_7 {dimension_numbers = #tpu.dot_dimension_numbers<[1], [0], [0], [1], [0, 0, 1, 1], [], []>, precision = #tpu.contract_precision<fp32>} : vector<8x128xf32>, vector<128x128xf32>, vector<8x128xf32> -> vector<8x128xf32>
    %6 = arith.addf %2, %5 : vector<8x128xf32>
    %c0_8 = arith.constant 0 : index
    %c0_9 = arith.constant 0 : index
    %7 = vector.load %arg5[%c0_8, %c0_9] : memref<1x128xf32, #tpu.memory_space<vmem>>, vector<1x128xf32>
    %8 = vector.broadcast %7 : vector<1x128xf32> to vector<8x128xf32>
    %9 = arith.addf %6, %8 : vector<8x128xf32>
    %c0_10 = arith.constant 0 : index
    %c0_11 = arith.constant 0 : index
    %10 = vector.load %arg6[%c0_10, %c0_11] : memref<8x128xf32, #tpu.memory_space<vmem>>, vector<8x128xf32>
    tpu.vector_store %arg6[%c0_10, %c0_11], %9 {strides = array<i32>} : memref<8x128xf32, #tpu.memory_space<vmem>>, vector<8x128xf32>,
    return
  }
  func.func @transform_0(%arg0: i32) -> (i32, i32) {
    %c0_i32 = arith.constant 0 : i32
    %c0_i32_0 = arith.constant 0 : i32
    %c0_i32_1 = arith.constant 0 : i32
    return %c0_i32, %c0_i32_0 : i32, i32
  }
  func.func @transform_1(%arg0: i32) -> (i32, i32) {
    %c0_i32 = arith.constant 0 : i32
    %c0_i32_0 = arith.constant 0 : i32
    %c0_i32_1 = arith.constant 0 : i32
    return %c0_i32, %c0_i32_0 : i32, i32
  }
  func.func @transform_2(%arg0: i32) -> (i32, i32) {
    %c0_i32 = arith.constant 0 : i32
    %c0_i32_0 = arith.constant 0 : i32
    return %c0_i32, %arg0 : i32, i32
  }
  func.func @transform_3(%arg0: i32) -> (i32, i32) {
    %c0_i32 = arith.constant 0 : i32
    %c0_i32_0 = arith.constant 0 : i32
    return %c0_i32, %arg0 : i32, i32
  }
  func.func @transform_4(%arg0: i32) -> (i32, i32) {
    %c0_i32 = arith.constant 0 : i32
    %c0_i32_0 = arith.constant 0 : i32
    return %c0_i32, %arg0 : i32, i32
  }
  func.func @transform_5(%arg0: i32) -> (i32, i32) {
    %c0_i32 = arith.constant 0 : i32
    %c0_i32_0 = arith.constant 0 : i32
    return %c0_i32, %arg0 : i32, i32
  }
}

</mosaic_0001>

<llo_original>
// kernel: luong_decoder_forward.3
$region0: #{luong_decoder_forward.3}
  #allocation0 [shape = 'u32[]', space=smem, size = 0x4, offset = 0x4, fixed_abs, tag = 'smem constant byte address 0x4 - core index']
  #allocation1 [shape = 'u32[144,128]{1,0:T(1,128)}', space=vmem, size = 0x12000, scoped, tag = 'internal scratch']
  %s0 = inlined_call_operand.vmem [shape: f32[8,128], index: 0, kind: input, shape index: {}]
  %s1 = inlined_call_operand.vmem [shape: f32[8,128], index: 1, kind: input, shape index: {}]
  %s2 = inlined_call_operand.vmem [shape: f32[128,128], index: 2, kind: input, shape index: {}]
  %s3 = inlined_call_operand.vmem [shape: f32[128,128], index: 3, kind: input, shape index: {}]
  %s4 = inlined_call_operand.vmem [shape: f32[1,128], index: 4, kind: input, shape index: {}]
  %s5 = inlined_call_operand.vmem [shape: f32[8,128], index: 5, kind: output, shape index: {}]
  %s6 = sld [smem:[#allocation0]]
  $region30: #{luong_decoder_forward.3} parent=0
    _
  %s8 = ssub.s32 1, %s6
  %s9 = scalar_select 0, %s8, %s6
  // Predicated region
  $region2: #{luong_decoder_forward.3} parent=0 // pred_check
    _
  $region3: #{luong_decoder_forward.3} parent=0 // pred_check_branch
    %11 = sbr.rel (0) target = $region5
  $region4: #{luong_decoder_forward.3} parent=0 // pred_region
    _
  $region5: #{luong_decoder_forward.3} parent=0 // pred_fallthru
    _
  // Predicated region
  $region6: #{luong_decoder_forward.3} parent=0 // pred_check
    _
  $region7: #{luong_decoder_forward.3} parent=0 // pred_check_branch
    %13 = sbr.rel (0) target = $region9
  $region8: #{luong_decoder_forward.3} parent=0 // pred_region
    _
  $region9: #{luong_decoder_forward.3} parent=0 // pred_fallthru
    _
  // Predicated region
  $region10: #{luong_decoder_forward.3} parent=0 // pred_check
    _
  $region11: #{luong_decoder_forward.3} parent=0 // pred_check_branch
    %15 = sbr.rel (0) target = $region13
  $region12: #{luong_decoder_forward.3} parent=0 // pred_region
    _
  $region13: #{luong_decoder_forward.3} parent=0 // pred_fallthru
    _
  // Predicated region
  $region14: #{luong_decoder_forward.3} parent=0 // pred_check
    _
  $region15: #{luong_decoder_forward.3} parent=0 // pred_check_branch
    %17 = sbr.rel (0) target = $region17
  $region16: #{luong_decoder_forward.3} parent=0 // pred_region
    _
  $region17: #{luong_decoder_forward.3} parent=0 // pred_fallthru
    _
  // Predicated region
  $region18: #{luong_decoder_forward.3} parent=0 // pred_check
    _
  $region19: #{luong_decoder_forward.3} parent=0 // pred_check_branch
    %19 = sbr.rel (0) target = $region21
  $region20: #{luong_decoder_forward.3} parent=0 // pred_region
    _
  $region21: #{luong_decoder_forward.3} parent=0 // pred_fallthru
    _
  %v20 = vld [vmem:[%s0] sm:$0xff]
  %v21 = vld [vmem:[%s2] sm:$0xff]
  %v22 = vld [vmem:[%s2 + $0x8] sm:$0xff]
  %v23 = vld [vmem:[%s2 + $0x10] sm:$0xff]
  %v24 = vld [vmem:[%s2 + $0x18] sm:$0xff]
  %v25 = vld [vmem:[%s2 + $0x20] sm:$0xff]
  %v26 = vld [vmem:[%s2 + $0x28] sm:$0xff]
  %v27 = vld [vmem:[%s2 + $0x30] sm:$0xff]
  %v28 = vld [vmem:[%s2 + $0x38] sm:$0xff]
  %v29 = vld [vmem:[%s2 + $0x40] sm:$0xff]
  %v30 = vld [vmem:[%s2 + $0x48] sm:$0xff]
  %v31 = vld [vmem:[%s2 + $0x50] sm:$0xff]
  %v32 = vld [vmem:[%s2 + $0x58] sm:$0xff]
  %v33 = vld [vmem:[%s2 + $0x60] sm:$0xff]
  %v34 = vld [vmem:[%s2 + $0x68] sm:$0xff]
  %v35 = vld [vmem:[%s2 + $0x70] sm:$0xff]
  %v36 = vld [vmem:[%s2 + $0x78] sm:$0xff]
  %v37 = vld [vmem:[%s1] sm:$0xff]
  %v38 = vld [vmem:[%s3] sm:$0xff]
  %v39 = vld [vmem:[%s3 + $0x8] sm:$0xff]
  %v40 = vld [vmem:[%s3 + $0x10] sm:$0xff]
  %v41 = vld [vmem:[%s3 + $0x18] sm:$0xff]
  %v42 = vld [vmem:[%s3 + $0x20] sm:$0xff]
  %v43 = vld [vmem:[%s3 + $0x28] sm:$0xff]
  %v44 = vld [vmem:[%s3 + $0x30] sm:$0xff]
  %v45 = vld [vmem:[%s3 + $0x38] sm:$0xff]
  %v46 = vld [vmem:[%s3 + $0x40] sm:$0xff]
  %v47 = vld [vmem:[%s3 + $0x48] sm:$0xff]
  %v48 = vld [vmem:[%s3 + $0x50] sm:$0xff]
  %v49 = vld [vmem:[%s3 + $0x58] sm:$0xff]
  %v50 = vld [vmem:[%s3 + $0x60] sm:$0xff]
  %v51 = vld [vmem:[%s3 + $0x68] sm:$0xff]
  %v52 = vld [vmem:[%s3 + $0x70] sm:$0xff]
  %v53 = vld [vmem:[%s3 + $0x78] sm:$0xff]
  %54 = vmatprep.subr.mxu0 0.0
  %v55 = vand.u32 %v38, 4294901760
  %56 = vmatpush1.msra.mxu0 %v55
  %57 = vmatprep.subr.mxu0 0.0
  %v58 = vand.u32 %v39, 4294901760
  %59 = vmatpush1.msra.mxu0 %v58
  %60 = vmatprep.subr.mxu0 0.0
  %v61 = vand.u32 %v40, 4294901760
  %62 = vmatpush1.msra.mxu0 %v61
  %63 = vmatprep.subr.mxu0 0.0
  %v64 = vand.u32 %v41, 4294901760
  %65 = vmatpush1.msra.mxu0 %v64
  %66 = vmatprep.subr.mxu0 0.0
  %v67 = vand.u32 %v42, 4294901760
  %68 = vmatpush1.msra.mxu0 %v67
  %69 = vmatprep.subr.mxu0 0.0
  %v70 = vand.u32 %v43, 4294901760
  %71 = vmatpush1.msra.mxu0 %v70
  %72 = vmatprep.subr.mxu0 0.0
  %v73 = vand.u32 %v44, 4294901760
  %74 = vmatpush1.msra.mxu0 %v73
  %75 = vmatprep.subr.mxu0 0.0
  %v76 = vand.u32 %v45, 4294901760
  %77 = vmatpush1.msra.mxu0 %v76
  %78 = vmatprep.subr.mxu0 0.0
  %v79 = vand.u32 %v46, 4294901760
  %80 = vmatpush1.msra.mxu0 %v79
  %81 = vmatprep.subr.mxu0 0.0
  %v82 = vand.u32 %v47, 4294901760
  %83 = vmatpush1.msra.mxu0 %v82
  %84 = vmatprep.subr.mxu0 0.0
  %v85 = vand.u32 %v48, 4294901760
  %86 = vmatpush1.msra.mxu0 %v85
  %87 = vmatprep.subr.mxu0 0.0
  %v88 = vand.u32 %v49, 4294901760
  %89 = vmatpush1.msra.mxu0 %v88
  %90 = vmatprep.subr.mxu0 0.0
  %v91 = vand.u32 %v50, 4294901760
  %92 = vmatpush1.msra.mxu0 %v91
  %93 = vmatprep.subr.mxu0 0.0
  %v94 = vand.u32 %v51, 4294901760
  %95 = vmatpush1.msra.mxu0 %v94
  %96 = vmatprep.subr.mxu0 0.0
  %v97 = vand.u32 %v52, 4294901760
  %98 = vmatpush1.msra.mxu0 %v97
  %99 = vmatprep.subr.mxu0 0.0
  %v100 = vand.u32 %v53, 4294901760
  %101 = vmatpush1.msra.mxu0 %v100
  %102 = vmatprep.subr.mxu0 0.0
  %103 = vmatpush1.msra.mxu0 0.0
  %104 = vmatprep.subr.mxu0 0.0
  %105 = vmatpush1.msra.mxu0 0.0
  %106 = vmatprep.subr.mxu0 0.0
  %107 = vmatpush1.msra.mxu0 0.0
  %108 = vmatprep.subr.mxu0 0.0
  %109 = vmatpush1.msra.mxu0 0.0
  %110 = vmatprep.subr.mxu0 0.0
  %111 = vmatpush1.msra.mxu0 0.0
  %112 = vmatprep.subr.mxu0 0.0
  %113 = vmatpush1.msra.mxu0 0.0
  %114 = vmatprep.subr.mxu0 0.0
  %115 = vmatpush1.msra.mxu0 0.0
  %116 = vmatprep.subr.mxu0 0.0
  %117 = vmatpush1.msra.mxu0 0.0
  %118 = vmatprep.subr.mxu0 0.0
  %119 = vmatpush1.msra.mxu0 0.0
  %120 = vmatprep.subr.mxu0 0.0
  %121 = vmatpush1.msra.mxu0 0.0
  %122 = vmatprep.subr.mxu0 0.0
  %123 = vmatpush1.msra.mxu0 0.0
  %124 = vmatprep.subr.mxu0 0.0
  %125 = vmatpush1.msra.mxu0 0.0
  %126 = vmatprep.subr.mxu0 0.0
  %127 = vmatpush1.msra.mxu0 0.0
  %128 = vmatprep.subr.mxu0 0.0
  %129 = vmatpush1.msra.mxu0 0.0
  %130 = vmatprep.subr.mxu0 0.0
  %131 = vmatpush1.msra.mxu0 0.0
  %132 = vmatprep.subr.mxu0 0.0
  %133 = vmatpush1.msra.mxu0 0.0
  %134 = vmatprep.mubr.f32.mxu0 0.0
  %v135 = vand.u32 %v37, 4294901760
  %v136 = vsub.f32 %v37, %v135
  %v137 = vand.u32 %v136, 4294901760
  %v138 = vsub.f32 %v136, %v137
  %v139 = vand.u32 %v138, 4294901760
  %140 = vmatmul.mubr.f32.gmra.mrb[0].mxu0 %v139
  %v141 = vpop.f32.mrb[0].mxu0
  %v142 = vadd.f32 0.0, %v141
  %v143 = vpop.f32.mrb[0].mxu0
  %144 = vdwg.mxu0
  %145 = vmatprep.subr.mxu0 0.0
  %v146 = vand.u32 %v38, 4294901760
  %v147 = vsub.f32 %v38, %v146
  %v148 = vand.u32 %v147, 4294901760
  %v149 = vsub.f32 %v147, %v148
  %v150 = vand.u32 %v149, 4294901760
  %151 = vmatpush1.msra.mxu0 %v150
  %152 = vmatprep.subr.mxu0 0.0
  %v153 = vand.u32 %v39, 4294901760
  %v154 = vsub.f32 %v39, %v153
  %v155 = vand.u32 %v154, 4294901760
  %v156 = vsub.f32 %v154, %v155
  %v157 = vand.u32 %v156, 4294901760
  %158 = vmatpush1.msra.mxu0 %v157
  %159 = vmatprep.subr.mxu0 0.0
  %v160 = vand.u32 %v40, 4294901760
  %v161 = vsub.f32 %v40, %v160
  %v162 = vand.u32 %v161, 4294901760
  %v163 = vsub.f32 %v161, %v162
  %v164 = vand.u32 %v163, 4294901760
  %165 = vmatpush1.msra.mxu0 %v164
  %166 = vmatprep.subr.mxu0 0.0
  %v167 = vand.u32 %v41, 4294901760
  %v168 = vsub.f32 %v41, %v167
  %v169 = vand.u32 %v168, 4294901760
  %v170 = vsub.f32 %v168, %v169
  %v171 = vand.u32 %v170, 4294901760
  %172 = vmatpush1.msra.mxu0 %v171
  %173 = vmatprep.subr.mxu0 0.0
  %v174 = vand.u32 %v42, 4294901760
  %v175 = vsub.f32 %v42, %v174
  %v176 = vand.u32 %v175, 4294901760
  %v177 = vsub.f32 %v175, %v176
  %v178 = vand.u32 %v177, 4294901760
  %179 = vmatpush1.msra.mxu0 %v178
  %180 = vmatprep.subr.mxu0 0.0
  %v181 = vand.u32 %v43, 4294901760
  %v182 = vsub.f32 %v43, %v181
  %v183 = vand.u32 %v182, 4294901760
  %v184 = vsub.f32 %v182, %v183
  %v185 = vand.u32 %v184, 4294901760
  %186 = vmatpush1.msra.mxu0 %v185
  %187 = vmatprep.subr.mxu0 0.0
  %v188 = vand.u32 %v44, 4294901760
  %v189 = vsub.f32 %v44, %v188
  %v190 = vand.u32 %v189, 4294901760
  %v191 = vsub.f32 %v189, %v190
  %v192 = vand.u32 %v191, 4294901760
  %193 = vmatpush1.msra.mxu0 %v192
  %194 = vmatprep.subr.mxu0 0.0
  %v195 = vand.u32 %v45, 4294901760
  %v196 = vsub.f32 %v45, %v195
  %v197 = vand.u32 %v196, 4294901760
  %v198 = vsub.f32 %v196, %v197
  %v199 = vand.u32 %v198, 4294901760
  %200 = vmatpush1.msra.mxu0 %v199
  %201 = vmatprep.subr.mxu0 0.0
  %v202 = vand.u32 %v46, 4294901760
  %v203 = vsub.f32 %v46, %v202
  %v204 = vand.u32 %v203, 4294901760
  %v205 = vsub.f32 %v203, %v204
  %v206 = vand.u32 %v205, 4294901760
  %207 = vmatpush1.msra.mxu0 %v206
  %208 = vmatprep.subr.mxu0 0.0
  %v209 = vand.u32 %v47, 4294901760
  %v210 = vsub.f32 %v47, %v209
  %v211 = vand.u32 %v210, 4294901760
  %v212 = vsub.f32 %v210, %v211
  %v213 = vand.u32 %v212, 4294901760
  %214 = vmatpush1.msra.mxu0 %v213
  %215 = vmatprep.subr.mxu0 0.0
  %v216 = vand.u32 %v48, 4294901760
  %v217 = vsub.f32 %v48, %v216
  %v218 = vand.u32 %v217, 4294901760
  %v219 = vsub.f32 %v217, %v218
  %v220 = vand.u32 %v219, 4294901760
  %221 = vmatpush1.msra.mxu0 %v220
  %222 = vmatprep.subr.mxu0 0.0
  %v223 = vand.u32 %v49, 4294901760
  %v224 = vsub.f32 %v49, %v223
  %v225 = vand.u32 %v224, 4294901760
  %v226 = vsub.f32 %v224, %v225
  %v227 = vand.u32 %v226, 4294901760
  %228 = vmatpush1.msra.mxu0 %v227
  %229 = vmatprep.subr.mxu0 0.0
  %v230 = vand.u32 %v50, 4294901760
  %v231 = vsub.f32 %v50, %v230
  %v232 = vand.u32 %v231, 4294901760
  %v233 = vsub.f32 %v231, %v232
  %v234 = vand.u32 %v233, 4294901760
  %235 = vmatpush1.msra.mxu0 %v234
  %236 = vmatprep.subr.mxu0 0.0
  %v237 = vand.u32 %v51, 4294901760
  %v238 = vsub.f32 %v51, %v237
  %v239 = vand.u32 %v238, 4294901760
  %v240 = vsub.f32 %v238, %v239
  %v241 = vand.u32 %v240, 4294901760
  %242 = vmatpush1.msra.mxu0 %v241
  %243 = vmatprep.subr.mxu0 0.0
  %v244 = vand.u32 %v52, 4294901760
  %v245 = vsub.f32 %v52, %v244
  %v246 = vand.u32 %v245, 4294901760
  %v247 = vsub.f32 %v245, %v246
  %v248 = vand.u32 %v247, 4294901760
  %249 = vmatpush1.msra.mxu0 %v248
  %250 = vmatprep.subr.mxu0 0.0
  %v251 = vand.u32 %v53, 4294901760
  %v252 = vsub.f32 %v53, %v251
  %v253 = vand.u32 %v252, 4294901760
  %v254 = vsub.f32 %v252, %v253
  %v255 = vand.u32 %v254, 4294901760
  %256 = vmatpush1.msra.mxu0 %v255
  %257 = vmatprep.subr.mxu0 0.0
  %258 = vmatpush1.msra.mxu0 0.0
  %259 = vmatprep.subr.mxu0 0.0
  %260 = vmatpush1.msra.mxu0 0.0
  %261 = vmatprep.subr.mxu0 0.0
  %262 = vmatpush1.msra.mxu0 0.0
  %263 = vmatprep.subr.mxu0 0.0
  %264 = vmatpush1.msra.mxu0 0.0
  %265 = vmatprep.subr.mxu0 0.0
  %266 = vmatpush1.msra.mxu0 0.0
  %267 = vmatprep.subr.mxu0 0.0
  %268 = vmatpush1.msra.mxu0 0.0
  %269 = vmatprep.subr.mxu0 0.0
  %270 = vmatpush1.msra.mxu0 0.0
  %271 = vmatprep.subr.mxu0 0.0
  %272 = vmatpush1.msra.mxu0 0.0
  %273 = vmatprep.subr.mxu0 0.0
  %274 = vmatpush1.msra.mxu0 0.0
  %275 = vmatprep.subr.mxu0 0.0
  %276 = vmatpush1.msra.mxu0 0.0
  %277 = vmatprep.subr.mxu0 0.0
  %278 = vmatpush1.msra.mxu0 0.0
  %279 = vmatprep.subr.mxu0 0.0
  %280 = vmatpush1.msra.mxu0 0.0
  %281 = vmatprep.subr.mxu0 0.0
  %282 = vmatpush1.msra.mxu0 0.0
  %283 = vmatprep.subr.mxu0 0.0
  %284 = vmatpush1.msra.mxu0 0.0
  %285 = vmatprep.subr.mxu0 0.0
  %286 = vmatpush1.msra.mxu0 0.0
  %287 = vmatprep.subr.mxu0 0.0
  %288 = vmatpush1.msra.mxu0 0.0
  %289 = vmatprep.mubr.f32.mxu0 0.0
  %v290 = vand.u32 %v37, 4294901760
  %291 = vmatmul.mubr.f32.gmra.mrb[0].mxu0 %v290
  %v292 = vpop.f32.mrb[0].mxu0
  %v293 = vadd.f32 %v142, %v292
  %v294 = vpop.f32.mrb[0].mxu0
  %295 = vdwg.mxu0
  %296 = vmatprep.subr.mxu0 0.0
  %v297 = vand.u32 %v38, 4294901760
  %v298 = vsub.f32 %v38, %v297
  %299 = vmatpush1.msra.mxu0 %v298
  %300 = vmatprep.subr.mxu0 0.0
  %v301 = vand.u32 %v39, 4294901760
  %v302 = vsub.f32 %v39, %v301
  %303 = vmatpush1.msra.mxu0 %v302
  %304 = vmatprep.subr.mxu0 0.0
  %v305 = vand.u32 %v40, 4294901760
  %v306 = vsub.f32 %v40, %v305
  %307 = vmatpush1.msra.mxu0 %v306
  %308 = vmatprep.subr.mxu0 0.0
  %v309 = vand.u32 %v41, 4294901760
  %v310 = vsub.f32 %v41, %v309
  %311 = vmatpush1.msra.mxu0 %v310
  %312 = vmatprep.subr.mxu0 0.0
  %v313 = vand.u32 %v42, 4294901760
  %v314 = vsub.f32 %v42, %v313
  %315 = vmatpush1.msra.mxu0 %v314
  %316 = vmatprep.subr.mxu0 0.0
  %v317 = vand.u32 %v43, 4294901760
  %v318 = vsub.f32 %v43, %v317
  %319 = vmatpush1.msra.mxu0 %v318
  %320 = vmatprep.subr.mxu0 0.0
  %v321 = vand.u32 %v44, 4294901760
  %v322 = vsub.f32 %v44, %v321
  %323 = vmatpush1.msra.mxu0 %v322
  %324 = vmatprep.subr.mxu0 0.0
  %v325 = vand.u32 %v45, 4294901760
  %v326 = vsub.f32 %v45, %v325
  %327 = vmatpush1.msra.mxu0 %v326
  %328 = vmatprep.subr.mxu0 0.0
  %v329 = vand.u32 %v46, 4294901760
  %v330 = vsub.f32 %v46, %v329
  %331 = vmatpush1.msra.mxu0 %v330
  %332 = vmatprep.subr.mxu0 0.0
  %v333 = vand.u32 %v47, 4294901760
  %v334 = vsub.f32 %v47, %v333
  %335 = vmatpush1.msra.mxu0 %v334
  %336 = vmatprep.subr.mxu0 0.0
  %v337 = vand.u32 %v48, 4294901760
  %v338 = vsub.f32 %v48, %v337
  %339 = vmatpush1.msra.mxu0 %v338
  %340 = vmatprep.subr.mxu0 0.0
  %v341 = vand.u32 %v49, 4294901760
  %v342 = vsub.f32 %v49, %v341
  %343 = vmatpush1.msra.mxu0 %v342
  %344 = vmatprep.subr.mxu0 0.0
  %v345 = vand.u32 %v50, 4294901760
  %v346 = vsub.f32 %v50, %v345
  %347 = vmatpush1.msra.mxu0 %v346
  %348 = vmatprep.subr.mxu0 0.0
  %v349 = vand.u32 %v51, 4294901760
  %v350 = vsub.f32 %v51, %v349
  %351 = vmatpush1.msra.mxu0 %v350
  %352 = vmatprep.subr.mxu0 0.0
  %v353 = vand.u32 %v52, 4294901760
  %v354 = vsub.f32 %v52, %v353
  %355 = vmatpush1.msra.mxu0 %v354
  %356 = vmatprep.subr.mxu0 0.0
  %v357 = vand.u32 %v53, 4294901760
  %v358 = vsub.f32 %v53, %v357
  %359 = vmatpush1.msra.mxu0 %v358
  %360 = vmatprep.subr.mxu0 0.0
  %361 = vmatpush1.msra.mxu0 0.0
  %362 = vmatprep.subr.mxu0 0.0
  %363 = vmatpush1.msra.mxu0 0.0
  %364 = vmatprep.subr.mxu0 0.0
  %365 = vmatpush1.msra.mxu0 0.0
  %366 = vmatprep.subr.mxu0 0.0
  %367 = vmatpush1.msra.mxu0 0.0
  %368 = vmatprep.subr.mxu0 0.0
  %369 = vmatpush1.msra.mxu0 0.0
  %370 = vmatprep.subr.mxu0 0.0
  %371 = vmatpush1.msra.mxu0 0.0
  %372 = vmatprep.subr.mxu0 0.0
  %373 = vmatpush1.msra.mxu0 0.0
  %374 = vmatprep.subr.mxu0 0.0
  %375 = vmatpush1.msra.mxu0 0.0
  %376 = vmatprep.subr.mxu0 0.0
  %377 = vmatpush1.msra.mxu0 0.0
  %378 = vmatprep.subr.mxu0 0.0
  %379 = vmatpush1.msra.mxu0 0.0
  %380 = vmatprep.subr.mxu0 0.0
  %381 = vmatpush1.msra.mxu0 0.0
  %382 = vmatprep.subr.mxu0 0.0
  %383 = vmatpush1.msra.mxu0 0.0
  %384 = vmatprep.subr.mxu0 0.0
  %385 = vmatpush1.msra.mxu0 0.0
  %386 = vmatprep.subr.mxu0 0.0
  %387 = vmatpush1.msra.mxu0 0.0
  %388 = vmatprep.subr.mxu0 0.0
  %389 = vmatpush1.msra.mxu0 0.0
  %390 = vmatprep.subr.mxu0 0.0
  %391 = vmatpush1.msra.mxu0 0.0
  %392 = vmatprep.mubr.f32.mxu0 0.0
  %v393 = vand.u32 %v37, 4294901760
  %v394 = vsub.f32 %v37, %v393
  %395 = vmatmul.mubr.f32.gmra.mrb[0].mxu0 %v394
  %v396 = vpop.f32.mrb[0].mxu0
  %v397 = vadd.f32 %v293, %v396
  %v398 = vpop.f32.mrb[0].mxu0
  %399 = vdwg.mxu0
  %400 = vmatprep.subr.mxu0 0.0
  %v401 = vand.u32 %v38, 4294901760
  %402 = vmatpush1.msra.mxu0 %v401
  %403 = vmatprep.subr.mxu0 0.0
  %v404 = vand.u32 %v39, 4294901760
  %405 = vmatpush1.msra.mxu0 %v404
  %406 = vmatprep.subr.mxu0 0.0
  %v407 = vand.u32 %v40, 4294901760
  %408 = vmatpush1.msra.mxu0 %v407
  %409 = vmatprep.subr.mxu0 0.0
  %v410 = vand.u32 %v41, 4294901760
  %411 = vmatpush1.msra.mxu0 %v410
  %412 = vmatprep.subr.mxu0 0.0
  %v413 = vand.u32 %v42, 4294901760
  %414 = vmatpush1.msra.mxu0 %v413
  %415 = vmatprep.subr.mxu0 0.0
  %v416 = vand.u32 %v43, 4294901760
  %417 = vmatpush1.msra.mxu0 %v416
  %418 = vmatprep.subr.mxu0 0.0
  %v419 = vand.u32 %v44, 4294901760
  %420 = vmatpush1.msra.mxu0 %v419
  %421 = vmatprep.subr.mxu0 0.0
  %v422 = vand.u32 %v45, 4294901760
  %423 = vmatpush1.msra.mxu0 %v422
  %424 = vmatprep.subr.mxu0 0.0
  %v425 = vand.u32 %v46, 4294901760
  %426 = vmatpush1.msra.mxu0 %v425
  %427 = vmatprep.subr.mxu0 0.0
  %v428 = vand.u32 %v47, 4294901760
  %429 = vmatpush1.msra.mxu0 %v428
  %430 = vmatprep.subr.mxu0 0.0
  %v431 = vand.u32 %v48, 4294901760
  %432 = vmatpush1.msra.mxu0 %v431
  %433 = vmatprep.subr.mxu0 0.0
  %v434 = vand.u32 %v49, 4294901760
  %435 = vmatpush1.msra.mxu0 %v434
  %436 = vmatprep.subr.mxu0 0.0
  %v437 = vand.u32 %v50, 4294901760
  %438 = vmatpush1.msra.mxu0 %v437
  %439 = vmatprep.subr.mxu0 0.0
  %v440 = vand.u32 %v51, 4294901760
  %441 = vmatpush1.msra.mxu0 %v440
  %442 = vmatprep.subr.mxu0 0.0
  %v443 = vand.u32 %v52, 4294901760
  %444 = vmatpush1.msra.mxu0 %v443
  %445 = vmatprep.subr.mxu0 0.0
  %v446 = vand.u32 %v53, 4294901760
  %447 = vmatpush1.msra.mxu0 %v446
  %448 = vmatprep.subr.mxu0 0.0
  %449 = vmatpush1.msra.mxu0 0.0
  %450 = vmatprep.subr.mxu0 0.0
  %451 = vmatpush1.msra.mxu0 0.0
  %452 = vmatprep.subr.mxu0 0.0
  %453 = vmatpush1.msra.mxu0 0.0
  %454 = vmatprep.subr.mxu0 0.0
  %455 = vmatpush1.msra.mxu0 0.0
  %456 = vmatprep.subr.mxu0 0.0
  %457 = vmatpush1.msra.mxu0 0.0
  %458 = vmatprep.subr.mxu0 0.0
  %459 = vmatpush1.msra.mxu0 0.0
  %460 = vmatprep.subr.mxu0 0.0
  %461 = vmatpush1.msra.mxu0 0.0
  %462 = vmatprep.subr.mxu0 0.0
  %463 = vmatpush1.msra.mxu0 0.0
  %464 = vmatprep.subr.mxu0 0.0
  %465 = vmatpush1.msra.mxu0 0.0
  %466 = vmatprep.subr.mxu0 0.0
  %467 = vmatpush1.msra.mxu0 0.0
  %468 = vmatprep.subr.mxu0 0.0
  %469 = vmatpush1.msra.mxu0 0.0
  %470 = vmatprep.subr.mxu0 0.0
  %471 = vmatpush1.msra.mxu0 0.0
  %472 = vmatprep.subr.mxu0 0.0
  %473 = vmatpush1.msra.mxu0 0.0
  %474 = vmatprep.subr.mxu0 0.0
  %475 = vmatpush1.msra.mxu0 0.0
  %476 = vmatprep.subr.mxu0 0.0
  %477 = vmatpush1.msra.mxu0 0.0
  %478 = vmatprep.subr.mxu0 0.0
  %479 = vmatpush1.msra.mxu0 0.0
  %480 = vmatprep.mubr.f32.mxu0 0.0
  %v481 = vand.u32 %v37, 4294901760
  %v482 = vsub.f32 %v37, %v481
  %v483 = vand.u32 %v482, 4294901760
  %484 = vmatmul.mubr.f32.gmra.mrb[0].mxu0 %v483
  %v485 = vpop.f32.mrb[0].mxu0
  %v486 = vadd.f32 %v397, %v485
  %v487 = vpop.f32.mrb[0].mxu0
  %488 = vdwg.mxu0
  %489 = vmatprep.subr.mxu0 0.0
  %v490 = vand.u32 %v38, 4294901760
  %v491 = vsub.f32 %v38, %v490
  %v492 = vand.u32 %v491, 4294901760
  %493 = vmatpush1.msra.mxu0 %v492
  %494 = vmatprep.subr.mxu0 0.0
  %v495 = vand.u32 %v39, 4294901760
  %v496 = vsub.f32 %v39, %v495
  %v497 = vand.u32 %v496, 4294901760
  %498 = vmatpush1.msra.mxu0 %v497
  %499 = vmatprep.subr.mxu0 0.0
  %v500 = vand.u32 %v40, 4294901760
  %v501 = vsub.f32 %v40, %v500
  %v502 = vand.u32 %v501, 4294901760
  %503 = vmatpush1.msra.mxu0 %v502
  %504 = vmatprep.subr.mxu0 0.0
  %v505 = vand.u32 %v41, 4294901760
  %v506 = vsub.f32 %v41, %v505
  %v507 = vand.u32 %v506, 4294901760
  %508 = vmatpush1.msra.mxu0 %v507
  %509 = vmatprep.subr.mxu0 0.0
  %v510 = vand.u32 %v42, 4294901760
  %v511 = vsub.f32 %v42, %v510
  %v512 = vand.u32 %v511, 4294901760
  %513 = vmatpush1.msra.mxu0 %v512
  %514 = vmatprep.subr.mxu0 0.0
  %v515 = vand.u32 %v43, 4294901760
  %v516 = vsub.f32 %v43, %v515
  %v517 = vand.u32 %v516, 4294901760
  %518 = vmatpush1.msra.mxu0 %v517
  %519 = vmatprep.subr.mxu0 0.0
  %v520 = vand.u32 %v44, 4294901760
  %v521 = vsub.f32 %v44, %v520
  %v522 = vand.u32 %v521, 4294901760
  %523 = vmatpush1.msra.mxu0 %v522
  %524 = vmatprep.subr.mxu0 0.0
  %v525 = vand.u32 %v45, 4294901760
  %v526 = vsub.f32 %v45, %v525
  %v527 = vand.u32 %v526, 4294901760
  %528 = vmatpush1.msra.mxu0 %v527
  %529 = vmatprep.subr.mxu0 0.0
  %v530 = vand.u32 %v46, 4294901760
  %v531 = vsub.f32 %v46, %v530
  %v532 = vand.u32 %v531, 4294901760
  %533 = vmatpush1.msra.mxu0 %v532
  %534 = vmatprep.subr.mxu0 0.0
  %v535 = vand.u32 %v47, 4294901760
  %v536 = vsub.f32 %v47, %v535
  %v537 = vand.u32 %v536, 4294901760
  %538 = vmatpush1.msra.mxu0 %v537
  %539 = vmatprep.subr.mxu0 0.0
  %v540 = vand.u32 %v48, 4294901760
  %v541 = vsub.f32 %v48, %v540
  %v542 = vand.u32 %v541, 4294901760
  %543 = vmatpush1.msra.mxu0 %v542
  %544 = vmatprep.subr.mxu0 0.0
  %v545 = vand.u32 %v49, 4294901760
  %v546 = vsub.f32 %v49, %v545
  %v547 = vand.u32 %v546, 4294901760
  %548 = vmatpush1.msra.mxu0 %v547
  %549 = vmatprep.subr.mxu0 0.0
  %v550 = vand.u32 %v50, 4294901760
  %v551 = vsub.f32 %v50, %v550
  %v552 = vand.u32 %v551, 4294901760
  %553 = vmatpush1.msra.mxu0 %v552
  %554 = vmatprep.subr.mxu0 0.0
  %v555 = vand.u32 %v51, 4294901760
  %v556 = vsub.f32 %v51, %v555
  %v557 = vand.u32 %v556, 4294901760
  %558 = vmatpush1.msra.mxu0 %v557
  %559 = vmatprep.subr.mxu0 0.0
  %v560 = vand.u32 %v52, 4294901760
  %v561 = vsub.f32 %v52, %v560
  %v562 = vand.u32 %v561, 4294901760
  %563 = vmatpush1.msra.mxu0 %v562
  %564 = vmatprep.subr.mxu0 0.0
  %v565 = vand.u32 %v53, 4294901760
  %v566 = vsub.f32 %v53, %v565
  %v567 = vand.u32 %v566, 4294901760
  %568 = vmatpush1.msra.mxu0 %v567
  %569 = vmatprep.subr.mxu0 0.0
  %570 = vmatpush1.msra.mxu0 0.0
  %571 = vmatprep.subr.mxu0 0.0
  %572 = vmatpush1.msra.mxu0 0.0
  %573 = vmatprep.subr.mxu0 0.0
  %574 = vmatpush1.msra.mxu0 0.0
  %575 = vmatprep.subr.mxu0 0.0
  %576 = vmatpush1.msra.mxu0 0.0
  %577 = vmatprep.subr.mxu0 0.0
  %578 = vmatpush1.msra.mxu0 0.0
  %579 = vmatprep.subr.mxu0 0.0
  %580 = vmatpush1.msra.mxu0 0.0
  %581 = vmatprep.subr.mxu0 0.0
  %582 = vmatpush1.msra.mxu0 0.0
  %583 = vmatprep.subr.mxu0 0.0
  %584 = vmatpush1.msra.mxu0 0.0
  %585 = vmatprep.subr.mxu0 0.0
  %586 = vmatpush1.msra.mxu0 0.0
  %587 = vmatprep.subr.mxu0 0.0
  %588 = vmatpush1.msra.mxu0 0.0
  %589 = vmatprep.subr.mxu0 0.0
  %590 = vmatpush1.msra.mxu0 0.0
  %591 = vmatprep.subr.mxu0 0.0
  %592 = vmatpush1.msra.mxu0 0.0
  %593 = vmatprep.subr.mxu0 0.0
  %594 = vmatpush1.msra.mxu0 0.0
  %595 = vmatprep.subr.mxu0 0.0
  %596 = vmatpush1.msra.mxu0 0.0
  %597 = vmatprep.subr.mxu0 0.0
  %598 = vmatpush1.msra.mxu0 0.0
  %599 = vmatprep.subr.mxu0 0.0
  %600 = vmatpush1.msra.mxu0 0.0
  %601 = vmatprep.mubr.f32.mxu0 0.0
  %v602 = vand.u32 %v37, 4294901760
  %603 = vmatmul.mubr.f32.gmra.mrb[0].mxu0 %v602
  %v604 = vpop.f32.mrb[0].mxu0
  %v605 = vadd.f32 %v486, %v604
  %v606 = vpop.f32.mrb[0].mxu0
  %607 = vdwg.mxu0
  %608 = vmatprep.subr.mxu0 0.0
  %v609 = vand.u32 %v38, 4294901760
  %610 = vmatpush1.msra.mxu0 %v609
  %611 = vmatprep.subr.mxu0 0.0
  %v612 = vand.u32 %v39, 4294901760
  %613 = vmatpush1.msra.mxu0 %v612
  %614 = vmatprep.subr.mxu0 0.0
  %v615 = vand.u32 %v40, 4294901760
  %616 = vmatpush1.msra.mxu0 %v615
  %617 = vmatprep.subr.mxu0 0.0
  %v618 = vand.u32 %v41, 4294901760
  %619 = vmatpush1.msra.mxu0 %v618
  %620 = vmatprep.subr.mxu0 0.0
  %v621 = vand.u32 %v42, 4294901760
  %622 = vmatpush1.msra.mxu0 %v621
  %623 = vmatprep.subr.mxu0 0.0
  %v624 = vand.u32 %v43, 4294901760
  %625 = vmatpush1.msra.mxu0 %v624
  %626 = vmatprep.subr.mxu0 0.0
  %v627 = vand.u32 %v44, 4294901760
  %628 = vmatpush1.msra.mxu0 %v627
  %629 = vmatprep.subr.mxu0 0.0
  %v630 = vand.u32 %v45, 4294901760
  %631 = vmatpush1.msra.mxu0 %v630
  %632 = vmatprep.subr.mxu0 0.0
  %v633 = vand.u32 %v46, 4294901760
  %634 = vmatpush1.msra.mxu0 %v633
  %635 = vmatprep.subr.mxu0 0.0
  %v636 = vand.u32 %v47, 4294901760
  %637 = vmatpush1.msra.mxu0 %v636
  %638 = vmatprep.subr.mxu0 0.0
  %v639 = vand.u32 %v48, 4294901760
  %640 = vmatpush1.msra.mxu0 %v639
  %641 = vmatprep.subr.mxu0 0.0
  %v642 = vand.u32 %v49, 4294901760
  %643 = vmatpush1.msra.mxu0 %v642
  %644 = vmatprep.subr.mxu0 0.0
  %v645 = vand.u32 %v50, 4294901760
  %646 = vmatpush1.msra.mxu0 %v645
  %647 = vmatprep.subr.mxu0 0.0
  %v648 = vand.u32 %v51, 4294901760
  %649 = vmatpush1.msra.mxu0 %v648
  %650 = vmatprep.subr.mxu0 0.0
  %v651 = vand.u32 %v52, 4294901760
  %652 = vmatpush1.msra.mxu0 %v651
  %653 = vmatprep.subr.mxu0 0.0
  %v654 = vand.u32 %v53, 4294901760
  %655 = vmatpush1.msra.mxu0 %v654
  %656 = vmatprep.subr.mxu0 0.0
  %657 = vmatpush1.msra.mxu0 0.0
  %658 = vmatprep.subr.mxu0 0.0
  %659 = vmatpush1.msra.mxu0 0.0
  %660 = vmatprep.subr.mxu0 0.0
  %661 = vmatpush1.msra.mxu0 0.0
  %662 = vmatprep.subr.mxu0 0.0
  %663 = vmatpush1.msra.mxu0 0.0
  %664 = vmatprep.subr.mxu0 0.0
  %665 = vmatpush1.msra.mxu0 0.0
  %666 = vmatprep.subr.mxu0 0.0
  %667 = vmatpush1.msra.mxu0 0.0
  %668 = vmatprep.subr.mxu0 0.0
  %669 = vmatpush1.msra.mxu0 0.0
  %670 = vmatprep.subr.mxu0 0.0
  %671 = vmatpush1.msra.mxu0 0.0
  %672 = vmatprep.subr.mxu0 0.0
  %673 = vmatpush1.msra.mxu0 0.0
  %674 = vmatprep.subr.mxu0 0.0
  %675 = vmatpush1.msra.mxu0 0.0
  %676 = vmatprep.subr.mxu0 0.0
  %677 = vmatpush1.msra.mxu0 0.0
  %678 = vmatprep.subr.mxu0 0.0
  %679 = vmatpush1.msra.mxu0 0.0
  %680 = vmatprep.subr.mxu0 0.0
  %681 = vmatpush1.msra.mxu0 0.0
  %682 = vmatprep.subr.mxu0 0.0
  %683 = vmatpush1.msra.mxu0 0.0
  %684 = vmatprep.subr.mxu0 0.0
  %685 = vmatpush1.msra.mxu0 0.0
  %686 = vmatprep.subr.mxu0 0.0
  %687 = vmatpush1.msra.mxu0 0.0
  %688 = vmatprep.mubr.f32.mxu0 0.0
  %v689 = vand.u32 %v37, 4294901760
  %690 = vmatmul.mubr.f32.gmra.mrb[0].mxu0 %v689
  %v691 = vpop.f32.mrb[0].mxu0
  %v692 = vadd.f32 %v605, %v691
  %v693 = vpop.f32.mrb[0].mxu0
  %694 = vdwg.mxu0
  %695 = vmatprep.subr.mxu0 0.0
  %v696 = vand.u32 %v21, 4294901760
  %697 = vmatpush1.msra.mxu0 %v696
  %698 = vmatprep.subr.mxu0 0.0
  %v699 = vand.u32 %v22, 4294901760
  %700 = vmatpush1.msra.mxu0 %v699
  %701 = vmatprep.subr.mxu0 0.0
  %v702 = vand.u32 %v23, 4294901760
  %703 = vmatpush1.msra.mxu0 %v702
  %704 = vmatprep.subr.mxu0 0.0
  %v705 = vand.u32 %v24, 4294901760
  %706 = vmatpush1.msra.mxu0 %v705
  %707 = vmatprep.subr.mxu0 0.0
  %v708 = vand.u32 %v25, 4294901760
  %709 = vmatpush1.msra.mxu0 %v708
  %710 = vmatprep.subr.mxu0 0.0
  %v711 = vand.u32 %v26, 4294901760
  %712 = vmatpush1.msra.mxu0 %v711
  %713 = vmatprep.subr.mxu0 0.0
  %v714 = vand.u32 %v27, 4294901760
  %715 = vmatpush1.msra.mxu0 %v714
  %716 = vmatprep.subr.mxu0 0.0
  %v717 = vand.u32 %v28, 4294901760
  %718 = vmatpush1.msra.mxu0 %v717
  %719 = vmatprep.subr.mxu0 0.0
  %v720 = vand.u32 %v29, 4294901760
  %721 = vmatpush1.msra.mxu0 %v720
  %722 = vmatprep.subr.mxu0 0.0
  %v723 = vand.u32 %v30, 4294901760
  %724 = vmatpush1.msra.mxu0 %v723
  %725 = vmatprep.subr.mxu0 0.0
  %v726 = vand.u32 %v31, 4294901760
  %727 = vmatpush1.msra.mxu0 %v726
  %728 = vmatprep.subr.mxu0 0.0
  %v729 = vand.u32 %v32, 4294901760
  %730 = vmatpush1.msra.mxu0 %v729
  %731 = vmatprep.subr.mxu0 0.0
  %v732 = vand.u32 %v33, 4294901760
  %733 = vmatpush1.msra.mxu0 %v732
  %734 = vmatprep.subr.mxu0 0.0
  %v735 = vand.u32 %v34, 4294901760
  %736 = vmatpush1.msra.mxu0 %v735
  %737 = vmatprep.subr.mxu0 0.0
  %v738 = vand.u32 %v35, 4294901760
  %739 = vmatpush1.msra.mxu0 %v738
  %740 = vmatprep.subr.mxu0 0.0
  %v741 = vand.u32 %v36, 4294901760
  %742 = vmatpush1.msra.mxu0 %v741
  %743 = vmatprep.subr.mxu0 0.0
  %744 = vmatpush1.msra.mxu0 0.0
  %745 = vmatprep.subr.mxu0 0.0
  %746 = vmatpush1.msra.mxu0 0.0
  %747 = vmatprep.subr.mxu0 0.0
  %748 = vmatpush1.msra.mxu0 0.0
  %749 = vmatprep.subr.mxu0 0.0
  %750 = vmatpush1.msra.mxu0 0.0
  %751 = vmatprep.subr.mxu0 0.0
  %752 = vmatpush1.msra.mxu0 0.0
  %753 = vmatprep.subr.mxu0 0.0
  %754 = vmatpush1.msra.mxu0 0.0
  %755 = vmatprep.subr.mxu0 0.0
  %756 = vmatpush1.msra.mxu0 0.0
  %757 = vmatprep.subr.mxu0 0.0
  %758 = vmatpush1.msra.mxu0 0.0
  %759 = vmatprep.subr.mxu0 0.0
  %760 = vmatpush1.msra.mxu0 0.0
  %761 = vmatprep.subr.mxu0 0.0
  %762 = vmatpush1.msra.mxu0 0.0
  %763 = vmatprep.subr.mxu0 0.0
  %764 = vmatpush1.msra.mxu0 0.0
  %765 = vmatprep.subr.mxu0 0.0
  %766 = vmatpush1.msra.mxu0 0.0
  %767 = vmatprep.subr.mxu0 0.0
  %768 = vmatpush1.msra.mxu0 0.0
  %769 = vmatprep.subr.mxu0 0.0
  %770 = vmatpush1.msra.mxu0 0.0
  %771 = vmatprep.subr.mxu0 0.0
  %772 = vmatpush1.msra.mxu0 0.0
  %773 = vmatprep.subr.mxu0 0.0
  %774 = vmatpush1.msra.mxu0 0.0
  %775 = vmatprep.mubr.f32.mxu0 0.0
  %v776 = vand.u32 %v20, 4294901760
  %v777 = vsub.f32 %v20, %v776
  %v778 = vand.u32 %v777, 4294901760
  %v779 = vsub.f32 %v777, %v778
  %v780 = vand.u32 %v779, 4294901760
  %781 = vmatmul.mubr.f32.gmra.mrb[0].mxu0 %v780
  %v782 = vpop.f32.mrb[0].mxu0
  %v783 = vadd.f32 %v692, %v782
  %v784 = vpop.f32.mrb[0].mxu0
  %785 = vdwg.mxu0
  %786 = vmatprep.subr.mxu0 0.0
  %v787 = vand.u32 %v21, 4294901760
  %v788 = vsub.f32 %v21, %v787
  %v789 = vand.u32 %v788, 4294901760
  %v790 = vsub.f32 %v788, %v789
  %v791 = vand.u32 %v790, 4294901760
  %792 = vmatpush1.msra.mxu0 %v791
  %793 = vmatprep.subr.mxu0 0.0
  %v794 = vand.u32 %v22, 4294901760
  %v795 = vsub.f32 %v22, %v794
  %v796 = vand.u32 %v795, 4294901760
  %v797 = vsub.f32 %v795, %v796
  %v798 = vand.u32 %v797, 4294901760
  %799 = vmatpush1.msra.mxu0 %v798
  %800 = vmatprep.subr.mxu0 0.0
  %v801 = vand.u32 %v23, 4294901760
  %v802 = vsub.f32 %v23, %v801
  %v803 = vand.u32 %v802, 4294901760
  %v804 = vsub.f32 %v802, %v803
  %v805 = vand.u32 %v804, 4294901760
  %806 = vmatpush1.msra.mxu0 %v805
  %807 = vmatprep.subr.mxu0 0.0
  %v808 = vand.u32 %v24, 4294901760
  %v809 = vsub.f32 %v24, %v808
  %v810 = vand.u32 %v809, 4294901760
  %v811 = vsub.f32 %v809, %v810
  %v812 = vand.u32 %v811, 4294901760
  %813 = vmatpush1.msra.mxu0 %v812
  %814 = vmatprep.subr.mxu0 0.0
  %v815 = vand.u32 %v25, 4294901760
  %v816 = vsub.f32 %v25, %v815
  %v817 = vand.u32 %v816, 4294901760
  %v818 = vsub.f32 %v816, %v817
  %v819 = vand.u32 %v818, 4294901760
  %820 = vmatpush1.msra.mxu0 %v819
  %821 = vmatprep.subr.mxu0 0.0
  %v822 = vand.u32 %v26, 4294901760
  %v823 = vsub.f32 %v26, %v822
  %v824 = vand.u32 %v823, 4294901760
  %v825 = vsub.f32 %v823, %v824
  %v826 = vand.u32 %v825, 4294901760
  %827 = vmatpush1.msra.mxu0 %v826
  %828 = vmatprep.subr.mxu0 0.0
  %v829 = vand.u32 %v27, 4294901760
  %v830 = vsub.f32 %v27, %v829
  %v831 = vand.u32 %v830, 4294901760
  %v832 = vsub.f32 %v830, %v831
  %v833 = vand.u32 %v832, 4294901760
  %834 = vmatpush1.msra.mxu0 %v833
  %835 = vmatprep.subr.mxu0 0.0
  %v836 = vand.u32 %v28, 4294901760
  %v837 = vsub.f32 %v28, %v836
  %v838 = vand.u32 %v837, 4294901760
  %v839 = vsub.f32 %v837, %v838
  %v840 = vand.u32 %v839, 4294901760
  %841 = vmatpush1.msra.mxu0 %v840
  %842 = vmatprep.subr.mxu0 0.0
  %v843 = vand.u32 %v29, 4294901760
  %v844 = vsub.f32 %v29, %v843
  %v845 = vand.u32 %v844, 4294901760
  %v846 = vsub.f32 %v844, %v845
  %v847 = vand.u32 %v846, 4294901760
  %848 = vmatpush1.msra.mxu0 %v847
  %849 = vmatprep.subr.mxu0 0.0
  %v850 = vand.u32 %v30, 4294901760
  %v851 = vsub.f32 %v30, %v850
  %v852 = vand.u32 %v851, 4294901760
  %v853 = vsub.f32 %v851, %v852
  %v854 = vand.u32 %v853, 4294901760
  %855 = vmatpush1.msra.mxu0 %v854
  %856 = vmatprep.subr.mxu0 0.0
  %v857 = vand.u32 %v31, 4294901760
  %v858 = vsub.f32 %v31, %v857
  %v859 = vand.u32 %v858, 4294901760
  %v860 = vsub.f32 %v858, %v859
  %v861 = vand.u32 %v860, 4294901760
  %862 = vmatpush1.msra.mxu0 %v861
  %863 = vmatprep.subr.mxu0 0.0
  %v864 = vand.u32 %v32, 4294901760
  %v865 = vsub.f32 %v32, %v864
  %v866 = vand.u32 %v865, 4294901760
  %v867 = vsub.f32 %v865, %v866
  %v868 = vand.u32 %v867, 4294901760
  %869 = vmatpush1.msra.mxu0 %v868
  %870 = vmatprep.subr.mxu0 0.0
  %v871 = vand.u32 %v33, 4294901760
  %v872 = vsub.f32 %v33, %v871
  %v873 = vand.u32 %v872, 4294901760
  %v874 = vsub.f32 %v872, %v873
  %v875 = vand.u32 %v874, 4294901760
  %876 = vmatpush1.msra.mxu0 %v875
  %877 = vmatprep.subr.mxu0 0.0
  %v878 = vand.u32 %v34, 4294901760
  %v879 = vsub.f32 %v34, %v878
  %v880 = vand.u32 %v879, 4294901760
  %v881 = vsub.f32 %v879, %v880
  %v882 = vand.u32 %v881, 4294901760
  %883 = vmatpush1.msra.mxu0 %v882
  %884 = vmatprep.subr.mxu0 0.0
  %v885 = vand.u32 %v35, 4294901760
  %v886 = vsub.f32 %v35, %v885
  %v887 = vand.u32 %v886, 4294901760
  %v888 = vsub.f32 %v886, %v887
  %v889 = vand.u32 %v888, 4294901760
  %890 = vmatpush1.msra.mxu0 %v889
  %891 = vmatprep.subr.mxu0 0.0
  %v892 = vand.u32 %v36, 4294901760
  %v893 = vsub.f32 %v36, %v892
  %v894 = vand.u32 %v893, 4294901760
  %v895 = vsub.f32 %v893, %v894
  %v896 = vand.u32 %v895, 4294901760
  %897 = vmatpush1.msra.mxu0 %v896
  %898 = vmatprep.subr.mxu0 0.0
  %899 = vmatpush1.msra.mxu0 0.0
  %900 = vmatprep.subr.mxu0 0.0
  %901 = vmatpush1.msra.mxu0 0.0
  %902 = vmatprep.subr.mxu0 0.0
  %903 = vmatpush1.msra.mxu0 0.0
  %904 = vmatprep.subr.mxu0 0.0
  %905 = vmatpush1.msra.mxu0 0.0
  %906 = vmatprep.subr.mxu0 0.0
  %907 = vmatpush1.msra.mxu0 0.0
  %908 = vmatprep.subr.mxu0 0.0
  %909 = vmatpush1.msra.mxu0 0.0
  %910 = vmatprep.subr.mxu0 0.0
  %911 = vmatpush1.msra.mxu0 0.0
  %912 = vmatprep.subr.mxu0 0.0
  %913 = vmatpush1.msra.mxu0 0.0
  %914 = vmatprep.subr.mxu0 0.0
  %915 = vmatpush1.msra.mxu0 0.0
  %916 = vmatprep.subr.mxu0 0.0
  %917 = vmatpush1.msra.mxu0 0.0
  %918 = vmatprep.subr.mxu0 0.0
  %919 = vmatpush1.msra.mxu0 0.0
  %920 = vmatprep.subr.mxu0 0.0
  %921 = vmatpush1.msra.mxu0 0.0
  %922 = vmatprep.subr.mxu0 0.0
  %923 = vmatpush1.msra.mxu0 0.0
  %924 = vmatprep.subr.mxu0 0.0
  %925 = vmatpush1.msra.mxu0 0.0
  %926 = vmatprep.subr.mxu0 0.0
  %927 = vmatpush1.msra.mxu0 0.0
  %928 = vmatprep.subr.mxu0 0.0
  %929 = vmatpush1.msra.mxu0 0.0
  %930 = vmatprep.mubr.f32.mxu0 0.0
  %v931 = vand.u32 %v20, 4294901760
  %932 = vmatmul.mubr.f32.gmra.mrb[0].mxu0 %v931
  %v933 = vpop.f32.mrb[0].mxu0
  %v934 = vadd.f32 %v783, %v933
  %v935 = vpop.f32.mrb[0].mxu0
  %936 = vdwg.mxu0
  %937 = vmatprep.subr.mxu0 0.0
  %v938 = vand.u32 %v21, 4294901760
  %v939 = vsub.f32 %v21, %v938
  %940 = vmatpush1.msra.mxu0 %v939
  %941 = vmatprep.subr.mxu0 0.0
  %v942 = vand.u32 %v22, 4294901760
  %v943 = vsub.f32 %v22, %v942
  %944 = vmatpush1.msra.mxu0 %v943
  %945 = vmatprep.subr.mxu0 0.0
  %v946 = vand.u32 %v23, 4294901760
  %v947 = vsub.f32 %v23, %v946
  %948 = vmatpush1.msra.mxu0 %v947
  %949 = vmatprep.subr.mxu0 0.0
  %v950 = vand.u32 %v24, 4294901760
  %v951 = vsub.f32 %v24, %v950
  %952 = vmatpush1.msra.mxu0 %v951
  %953 = vmatprep.subr.mxu0 0.0
  %v954 = vand.u32 %v25, 4294901760
  %v955 = vsub.f32 %v25, %v954
  %956 = vmatpush1.msra.mxu0 %v955
  %957 = vmatprep.subr.mxu0 0.0
  %v958 = vand.u32 %v26, 4294901760
  %v959 = vsub.f32 %v26, %v958
  %960 = vmatpush1.msra.mxu0 %v959
  %961 = vmatprep.subr.mxu0 0.0
  %v962 = vand.u32 %v27, 4294901760
  %v963 = vsub.f32 %v27, %v962
  %964 = vmatpush1.msra.mxu0 %v963
  %965 = vmatprep.subr.mxu0 0.0
  %v966 = vand.u32 %v28, 4294901760
  %v967 = vsub.f32 %v28, %v966
  %968 = vmatpush1.msra.mxu0 %v967
  %969 = vmatprep.subr.mxu0 0.0
  %v970 = vand.u32 %v29, 4294901760
  %v971 = vsub.f32 %v29, %v970
  %972 = vmatpush1.msra.mxu0 %v971
  %973 = vmatprep.subr.mxu0 0.0
  %v974 = vand.u32 %v30, 4294901760
  %v975 = vsub.f32 %v30, %v974
  %976 = vmatpush1.msra.mxu0 %v975
  %977 = vmatprep.subr.mxu0 0.0
  %v978 = vand.u32 %v31, 4294901760
  %v979 = vsub.f32 %v31, %v978
  %980 = vmatpush1.msra.mxu0 %v979
  %981 = vmatprep.subr.mxu0 0.0
  %v982 = vand.u32 %v32, 4294901760
  %v983 = vsub.f32 %v32, %v982
  %984 = vmatpush1.msra.mxu0 %v983
  %985 = vmatprep.subr.mxu0 0.0
  %v986 = vand.u32 %v33, 4294901760
  %v987 = vsub.f32 %v33, %v986
  %988 = vmatpush1.msra.mxu0 %v987
  %989 = vmatprep.subr.mxu0 0.0
  %v990 = vand.u32 %v34, 4294901760
  %v991 = vsub.f32 %v34, %v990
  %992 = vmatpush1.msra.mxu0 %v991
  %993 = vmatprep.subr.mxu0 0.0
  %v994 = vand.u32 %v35, 4294901760
  %v995 = vsub.f32 %v35, %v994
  %996 = vmatpush1.msra.mxu0 %v995
  %997 = vmatprep.subr.mxu0 0.0
  %v998 = vand.u32 %v36, 4294901760
  %v999 = vsub.f32 %v36, %v998
  %1000 = vmatpush1.msra.mxu0 %v999
  %1001 = vmatprep.subr.mxu0 0.0
  %1002 = vmatpush1.msra.mxu0 0.0
  %1003 = vmatprep.subr.mxu0 0.0
  %1004 = vmatpush1.msra.mxu0 0.0
  %1005 = vmatprep.subr.mxu0 0.0
  %1006 = vmatpush1.msra.mxu0 0.0
  %1007 = vmatprep.subr.mxu0 0.0
  %1008 = vmatpush1.msra.mxu0 0.0
  %1009 = vmatprep.subr.mxu0 0.0
  %1010 = vmatpush1.msra.mxu0 0.0
  %1011 = vmatprep.subr.mxu0 0.0
  %1012 = vmatpush1.msra.mxu0 0.0
  %1013 = vmatprep.subr.mxu0 0.0
  %1014 = vmatpush1.msra.mxu0 0.0
  %1015 = vmatprep.subr.mxu0 0.0
  %1016 = vmatpush1.msra.mxu0 0.0
  %1017 = vmatprep.subr.mxu0 0.0
  %1018 = vmatpush1.msra.mxu0 0.0
  %1019 = vmatprep.subr.mxu0 0.0
  %1020 = vmatpush1.msra.mxu0 0.0
  %1021 = vmatprep.subr.mxu0 0.0
  %1022 = vmatpush1.msra.mxu0 0.0
  %1023 = vmatprep.subr.mxu0 0.0
  %1024 = vmatpush1.msra.mxu0 0.0
  %1025 = vmatprep.subr.mxu0 0.0
  %1026 = vmatpush1.msra.mxu0 0.0
  %1027 = vmatprep.subr.mxu0 0.0
  %1028 = vmatpush1.msra.mxu0 0.0
  %1029 = vmatprep.subr.mxu0 0.0
  %1030 = vmatpush1.msra.mxu0 0.0
  %1031 = vmatprep.subr.mxu0 0.0
  %1032 = vmatpush1.msra.mxu0 0.0
  %1033 = vmatprep.mubr.f32.mxu0 0.0
  %v1034 = vand.u32 %v20, 4294901760
  %v1035 = vsub.f32 %v20, %v1034
  %1036 = vmatmul.mubr.f32.gmra.mrb[0].mxu0 %v1035
  %v1037 = vpop.f32.mrb[0].mxu0
  %v1038 = vadd.f32 %v934, %v1037
  %v1039 = vpop.f32.mrb[0].mxu0
  %1040 = vdwg.mxu0
  %1041 = vmatprep.subr.mxu0 0.0
  %v1042 = vand.u32 %v21, 4294901760
  %1043 = vmatpush1.msra.mxu0 %v1042
  %1044 = vmatprep.subr.mxu0 0.0
  %v1045 = vand.u32 %v22, 4294901760
  %1046 = vmatpush1.msra.mxu0 %v1045
  %1047 = vmatprep.subr.mxu0 0.0
  %v1048 = vand.u32 %v23, 4294901760
  %1049 = vmatpush1.msra.mxu0 %v1048
  %1050 = vmatprep.subr.mxu0 0.0
  %v1051 = vand.u32 %v24, 4294901760
  %1052 = vmatpush1.msra.mxu0 %v1051
  %1053 = vmatprep.subr.mxu0 0.0
  %v1054 = vand.u32 %v25, 4294901760
  %1055 = vmatpush1.msra.mxu0 %v1054
  %1056 = vmatprep.subr.mxu0 0.0
  %v1057 = vand.u32 %v26, 4294901760
  %1058 = vmatpush1.msra.mxu0 %v1057
  %1059 = vmatprep.subr.mxu0 0.0
  %v1060 = vand.u32 %v27, 4294901760
  %1061 = vmatpush1.msra.mxu0 %v1060
  %1062 = vmatprep.subr.mxu0 0.0
  %v1063 = vand.u32 %v28, 4294901760
  %1064 = vmatpush1.msra.mxu0 %v1063
  %1065 = vmatprep.subr.mxu0 0.0
  %v1066 = vand.u32 %v29, 4294901760
  %1067 = vmatpush1.msra.mxu0 %v1066
  %1068 = vmatprep.subr.mxu0 0.0
  %v1069 = vand.u32 %v30, 4294901760
  %1070 = vmatpush1.msra.mxu0 %v1069
  %1071 = vmatprep.subr.mxu0 0.0
  %v1072 = vand.u32 %v31, 4294901760
  %1073 = vmatpush1.msra.mxu0 %v1072
  %1074 = vmatprep.subr.mxu0 0.0
  %v1075 = vand.u32 %v32, 4294901760
  %1076 = vmatpush1.msra.mxu0 %v1075
  %1077 = vmatprep.subr.mxu0 0.0
  %v1078 = vand.u32 %v33, 4294901760
  %1079 = vmatpush1.msra.mxu0 %v1078
  %1080 = vmatprep.subr.mxu0 0.0
  %v1081 = vand.u32 %v34, 4294901760
  %1082 = vmatpush1.msra.mxu0 %v1081
  %1083 = vmatprep.subr.mxu0 0.0
  %v1084 = vand.u32 %v35, 4294901760
  %1085 = vmatpush1.msra.mxu0 %v1084
  %1086 = vmatprep.subr.mxu0 0.0
  %v1087 = vand.u32 %v36, 4294901760
  %1088 = vmatpush1.msra.mxu0 %v1087
  %1089 = vmatprep.subr.mxu0 0.0
  %1090 = vmatpush1.msra.mxu0 0.0
  %1091 = vmatprep.subr.mxu0 0.0
  %1092 = vmatpush1.msra.mxu0 0.0
  %1093 = vmatprep.subr.mxu0 0.0
  %1094 = vmatpush1.msra.mxu0 0.0
  %1095 = vmatprep.subr.mxu0 0.0
  %1096 = vmatpush1.msra.mxu0 0.0
  %1097 = vmatprep.subr.mxu0 0.0
  %1098 = vmatpush1.msra.mxu0 0.0
  %1099 = vmatprep.subr.mxu0 0.0
  %1100 = vmatpush1.msra.mxu0 0.0
  %1101 = vmatprep.subr.mxu0 0.0
  %1102 = vmatpush1.msra.mxu0 0.0
  %1103 = vmatprep.subr.mxu0 0.0
  %1104 = vmatpush1.msra.mxu0 0.0
  %1105 = vmatprep.subr.mxu0 0.0
  %1106 = vmatpush1.msra.mxu0 0.0
  %1107 = vmatprep.subr.mxu0 0.0
  %1108 = vmatpush1.msra.mxu0 0.0
  %1109 = vmatprep.subr.mxu0 0.0
  %1110 = vmatpush1.msra.mxu0 0.0
  %1111 = vmatprep.subr.mxu0 0.0
  %1112 = vmatpush1.msra.mxu0 0.0
  %1113 = vmatprep.subr.mxu0 0.0
  %1114 = vmatpush1.msra.mxu0 0.0
  %1115 = vmatprep.subr.mxu0 0.0
  %1116 = vmatpush1.msra.mxu0 0.0
  %1117 = vmatprep.subr.mxu0 0.0
  %1118 = vmatpush1.msra.mxu0 0.0
  %1119 = vmatprep.subr.mxu0 0.0
  %1120 = vmatpush1.msra.mxu0 0.0
  %1121 = vmatprep.mubr.f32.mxu0 0.0
  %v1122 = vand.u32 %v20, 4294901760
  %v1123 = vsub.f32 %v20, %v1122
  %v1124 = vand.u32 %v1123, 4294901760
  %1125 = vmatmul.mubr.f32.gmra.mrb[0].mxu0 %v1124
  %v1126 = vpop.f32.mrb[0].mxu0
  %v1127 = vadd.f32 %v1038, %v1126
  %v1128 = vpop.f32.mrb[0].mxu0
  %1129 = vdwg.mxu0
  %1130 = vmatprep.subr.mxu0 0.0
  %v1131 = vand.u32 %v21, 4294901760
  %v1132 = vsub.f32 %v21, %v1131
  %v1133 = vand.u32 %v1132, 4294901760
  %1134 = vmatpush1.msra.mxu0 %v1133
  %1135 = vmatprep.subr.mxu0 0.0
  %v1136 = vand.u32 %v22, 4294901760
  %v1137 = vsub.f32 %v22, %v1136
  %v1138 = vand.u32 %v1137, 4294901760
  %1139 = vmatpush1.msra.mxu0 %v1138
  %1140 = vmatprep.subr.mxu0 0.0
  %v1141 = vand.u32 %v23, 4294901760
  %v1142 = vsub.f32 %v23, %v1141
  %v1143 = vand.u32 %v1142, 4294901760
  %1144 = vmatpush1.msra.mxu0 %v1143
  %1145 = vmatprep.subr.mxu0 0.0
  %v1146 = vand.u32 %v24, 4294901760
  %v1147 = vsub.f32 %v24, %v1146
  %v1148 = vand.u32 %v1147, 4294901760
  %1149 = vmatpush1.msra.mxu0 %v1148
  %1150 = vmatprep.subr.mxu0 0.0
  %v1151 = vand.u32 %v25, 4294901760
  %v1152 = vsub.f32 %v25, %v1151
  %v1153 = vand.u32 %v1152, 4294901760
  %1154 = vmatpush1.msra.mxu0 %v1153
  %1155 = vmatprep.subr.mxu0 0.0
  %v1156 = vand.u32 %v26, 4294901760
  %v1157 = vsub.f32 %v26, %v1156
  %v1158 = vand.u32 %v1157, 4294901760
  %1159 = vmatpush1.msra.mxu0 %v1158
  %1160 = vmatprep.subr.mxu0 0.0
  %v1161 = vand.u32 %v27, 4294901760
  %v1162 = vsub.f32 %v27, %v1161
  %v1163 = vand.u32 %v1162, 4294901760
  %1164 = vmatpush1.msra.mxu0 %v1163
  %1165 = vmatprep.subr.mxu0 0.0
  %v1166 = vand.u32 %v28, 4294901760
  %v1167 = vsub.f32 %v28, %v1166
  %v1168 = vand.u32 %v1167, 4294901760
  %1169 = vmatpush1.msra.mxu0 %v1168
  %1170 = vmatprep.subr.mxu0 0.0
  %v1171 = vand.u32 %v29, 4294901760
  %v1172 = vsub.f32 %v29, %v1171
  %v1173 = vand.u32 %v1172, 4294901760
  %1174 = vmatpush1.msra.mxu0 %v1173
  %1175 = vmatprep.subr.mxu0 0.0
  %v1176 = vand.u32 %v30, 4294901760
  %v1177 = vsub.f32 %v30, %v1176
  %v1178 = vand.u32 %v1177, 4294901760
  %1179 = vmatpush1.msra.mxu0 %v1178
  %1180 = vmatprep.subr.mxu0 0.0
  %v1181 = vand.u32 %v31, 4294901760
  %v1182 = vsub.f32 %v31, %v1181
  %v1183 = vand.u32 %v1182, 4294901760
  %1184 = vmatpush1.msra.mxu0 %v1183
  %1185 = vmatprep.subr.mxu0 0.0
  %v1186 = vand.u32 %v32, 4294901760
  %v1187 = vsub.f32 %v32, %v1186
  %v1188 = vand.u32 %v1187, 4294901760
  %1189 = vmatpush1.msra.mxu0 %v1188
  %1190 = vmatprep.subr.mxu0 0.0
  %v1191 = vand.u32 %v33, 4294901760
  %v1192 = vsub.f32 %v33, %v1191
  %v1193 = vand.u32 %v1192, 4294901760
  %1194 = vmatpush1.msra.mxu0 %v1193
  %1195 = vmatprep.subr.mxu0 0.0
  %v1196 = vand.u32 %v34, 4294901760
  %v1197 = vsub.f32 %v34, %v1196
  %v1198 = vand.u32 %v1197, 4294901760
  %1199 = vmatpush1.msra.mxu0 %v1198
  %1200 = vmatprep.subr.mxu0 0.0
  %v1201 = vand.u32 %v35, 4294901760
  %v1202 = vsub.f32 %v35, %v1201
  %v1203 = vand.u32 %v1202, 4294901760
  %1204 = vmatpush1.msra.mxu0 %v1203
  %1205 = vmatprep.subr.mxu0 0.0
  %v1206 = vand.u32 %v36, 4294901760
  %v1207 = vsub.f32 %v36, %v1206
  %v1208 = vand.u32 %v1207, 4294901760
  %1209 = vmatpush1.msra.mxu0 %v1208
  %1210 = vmatprep.subr.mxu0 0.0
  %1211 = vmatpush1.msra.mxu0 0.0
  %1212 = vmatprep.subr.mxu0 0.0
  %1213 = vmatpush1.msra.mxu0 0.0
  %1214 = vmatprep.subr.mxu0 0.0
  %1215 = vmatpush1.msra.mxu0 0.0
  %1216 = vmatprep.subr.mxu0 0.0
  %1217 = vmatpush1.msra.mxu0 0.0
  %1218 = vmatprep.subr.mxu0 0.0
  %1219 = vmatpush1.msra.mxu0 0.0
  %1220 = vmatprep.subr.mxu0 0.0
  %1221 = vmatpush1.msra.mxu0 0.0
  %1222 = vmatprep.subr.mxu0 0.0
  %1223 = vmatpush1.msra.mxu0 0.0
  %1224 = vmatprep.subr.mxu0 0.0
  %1225 = vmatpush1.msra.mxu0 0.0
  %1226 = vmatprep.subr.mxu0 0.0
  %1227 = vmatpush1.msra.mxu0 0.0
  %1228 = vmatprep.subr.mxu0 0.0
  %1229 = vmatpush1.msra.mxu0 0.0
  %1230 = vmatprep.subr.mxu0 0.0
  %1231 = vmatpush1.msra.mxu0 0.0
  %1232 = vmatprep.subr.mxu0 0.0
  %1233 = vmatpush1.msra.mxu0 0.0
  %1234 = vmatprep.subr.mxu0 0.0
  %1235 = vmatpush1.msra.mxu0 0.0
  %1236 = vmatprep.subr.mxu0 0.0
  %1237 = vmatpush1.msra.mxu0 0.0
  %1238 = vmatprep.subr.mxu0 0.0
  %1239 = vmatpush1.msra.mxu0 0.0
  %1240 = vmatprep.subr.mxu0 0.0
  %1241 = vmatpush1.msra.mxu0 0.0
  %1242 = vmatprep.mubr.f32.mxu0 0.0
  %v1243 = vand.u32 %v20, 4294901760
  %1244 = vmatmul.mubr.f32.gmra.mrb[0].mxu0 %v1243
  %v1245 = vpop.f32.mrb[0].mxu0
  %v1246 = vadd.f32 %v1127, %v1245
  %v1247 = vpop.f32.mrb[0].mxu0
  %1248 = vdwg.mxu0
  %1249 = vmatprep.subr.mxu0 0.0
  %v1250 = vand.u32 %v21, 4294901760
  %1251 = vmatpush1.msra.mxu0 %v1250
  %1252 = vmatprep.subr.mxu0 0.0
  %v1253 = vand.u32 %v22, 4294901760
  %1254 = vmatpush1.msra.mxu0 %v1253
  %1255 = vmatprep.subr.mxu0 0.0
  %v1256 = vand.u32 %v23, 4294901760
  %1257 = vmatpush1.msra.mxu0 %v1256
  %1258 = vmatprep.subr.mxu0 0.0
  %v1259 = vand.u32 %v24, 4294901760
  %1260 = vmatpush1.msra.mxu0 %v1259
  %1261 = vmatprep.subr.mxu0 0.0
  %v1262 = vand.u32 %v25, 4294901760
  %1263 = vmatpush1.msra.mxu0 %v1262
  %1264 = vmatprep.subr.mxu0 0.0
  %v1265 = vand.u32 %v26, 4294901760
  %1266 = vmatpush1.msra.mxu0 %v1265
  %1267 = vmatprep.subr.mxu0 0.0
  %v1268 = vand.u32 %v27, 4294901760
  %1269 = vmatpush1.msra.mxu0 %v1268
  %1270 = vmatprep.subr.mxu0 0.0
  %v1271 = vand.u32 %v28, 4294901760
  %1272 = vmatpush1.msra.mxu0 %v1271
  %1273 = vmatprep.subr.mxu0 0.0
  %v1274 = vand.u32 %v29, 4294901760
  %1275 = vmatpush1.msra.mxu0 %v1274
  %1276 = vmatprep.subr.mxu0 0.0
  %v1277 = vand.u32 %v30, 4294901760
  %1278 = vmatpush1.msra.mxu0 %v1277
  %1279 = vmatprep.subr.mxu0 0.0
  %v1280 = vand.u32 %v31, 4294901760
  %1281 = vmatpush1.msra.mxu0 %v1280
  %1282 = vmatprep.subr.mxu0 0.0
  %v1283 = vand.u32 %v32, 4294901760
  %1284 = vmatpush1.msra.mxu0 %v1283
  %1285 = vmatprep.subr.mxu0 0.0
  %v1286 = vand.u32 %v33, 4294901760
  %1287 = vmatpush1.msra.mxu0 %v1286
  %1288 = vmatprep.subr.mxu0 0.0
  %v1289 = vand.u32 %v34, 4294901760
  %1290 = vmatpush1.msra.mxu0 %v1289
  %1291 = vmatprep.subr.mxu0 0.0
  %v1292 = vand.u32 %v35, 4294901760
  %1293 = vmatpush1.msra.mxu0 %v1292
  %1294 = vmatprep.subr.mxu0 0.0
  %v1295 = vand.u32 %v36, 4294901760
  %1296 = vmatpush1.msra.mxu0 %v1295
  %1297 = vmatprep.subr.mxu0 0.0
  %1298 = vmatpush1.msra.mxu0 0.0
  %1299 = vmatprep.subr.mxu0 0.0
  %1300 = vmatpush1.msra.mxu0 0.0
  %1301 = vmatprep.subr.mxu0 0.0
  %1302 = vmatpush1.msra.mxu0 0.0
  %1303 = vmatprep.subr.mxu0 0.0
  %1304 = vmatpush1.msra.mxu0 0.0
  %1305 = vmatprep.subr.mxu0 0.0
  %1306 = vmatpush1.msra.mxu0 0.0
  %1307 = vmatprep.subr.mxu0 0.0
  %1308 = vmatpush1.msra.mxu0 0.0
  %1309 = vmatprep.subr.mxu0 0.0
  %1310 = vmatpush1.msra.mxu0 0.0
  %1311 = vmatprep.subr.mxu0 0.0
  %1312 = vmatpush1.msra.mxu0 0.0
  %1313 = vmatprep.subr.mxu0 0.0
  %1314 = vmatpush1.msra.mxu0 0.0
  %1315 = vmatprep.subr.mxu0 0.0
  %1316 = vmatpush1.msra.mxu0 0.0
  %1317 = vmatprep.subr.mxu0 0.0
  %1318 = vmatpush1.msra.mxu0 0.0
  %1319 = vmatprep.subr.mxu0 0.0
  %1320 = vmatpush1.msra.mxu0 0.0
  %1321 = vmatprep.subr.mxu0 0.0
  %1322 = vmatpush1.msra.mxu0 0.0
  %1323 = vmatprep.subr.mxu0 0.0
  %1324 = vmatpush1.msra.mxu0 0.0
  %1325 = vmatprep.subr.mxu0 0.0
  %1326 = vmatpush1.msra.mxu0 0.0
  %1327 = vmatprep.subr.mxu0 0.0
  %1328 = vmatpush1.msra.mxu0 0.0
  %1329 = vmatprep.mubr.f32.mxu0 0.0
  %v1330 = vand.u32 %v20, 4294901760
  %1331 = vmatmul.mubr.f32.gmra.mrb[0].mxu0 %v1330
  %v1332 = vpop.f32.mrb[0].mxu0
  %v1333 = vadd.f32 %v1246, %v1332
  %v1334 = vpop.f32.mrb[0].mxu0
  %1335 = vdwg.mxu0
  %v1336 = vld [vmem:[%s4] sm:$0x1]
  %v1338 = vlaneseq
  %v1339 = vshrl.u32 %v1338, 7
  %v1340 = vsub.s32 0, %v1339
  %v1341 = vrot.slane %v1336, %v1340
  %v1343 = vadd.f32 %v1333, %v1341
  %1344 = vst [vmem:[%s5] sm:$0xff] %v1343
  // Predicated region
  $region22: #{luong_decoder_forward.3} parent=0 // pred_check
    _
  $region23: #{luong_decoder_forward.3} parent=0 // pred_check_branch
    %1346 = sbr.rel (0) target = $region25
  $region24: #{luong_decoder_forward.3} parent=0 // pred_region
    _
  $region25: #{luong_decoder_forward.3} parent=0 // pred_fallthru
    _
  // Predicated region
  $region26: #{luong_decoder_forward.3} parent=0 // pred_check
    _
  $region27: #{luong_decoder_forward.3} parent=0 // pred_check_branch
    %1348 = sbr.rel (0) target = $region29
  $region28: #{luong_decoder_forward.3} parent=0 // pred_region
    _
  $region29: #{luong_decoder_forward.3} parent=0 // pred_fallthru
    _

// kernel: luong_decoder_forward.2
$region0: #{luong_decoder_forward.2}
  #allocation0 [shape = 'u32[]', space=smem, size = 0x4, offset = 0x4, fixed_abs, tag = 'smem constant byte address 0x4 - core index']
  #allocation1 [shape = 'u32[144,128]{1,0:T(1,128)}', space=vmem, size = 0x12000, scoped, tag = 'internal scratch']
  #allocation2 [shape = 'f32[8,128]{1,0:T(8,128)}', space=vmem, size = 0x1000, scoped, tag = 'scratch operand']
  %s0 = inlined_call_operand.vmem [shape: f32[8,128], index: 0, kind: input, shape index: {}]
  %s1 = inlined_call_operand.vmem [shape: f32[2,8,128], index: 1, kind: input, shape index: {}, may-alias: {1,12}]
  %s2 = inlined_call_operand.vmem [shape: f32[8,128,128], index: 2, kind: input, shape index: {}]
  %s3 = inlined_call_operand.vmem [shape: f32[8,128], index: 3, kind: input, shape index: {}]
  %s4 = inlined_call_operand.vmem [shape: f32[128,384], index: 4, kind: input, shape index: {}]
  %s5 = inlined_call_operand.vmem [shape: f32[128,384], index: 5, kind: input, shape index: {}]
  %s6 = inlined_call_operand.vmem [shape: f32[1,384], index: 6, kind: input, shape index: {}]
  %s7 = inlined_call_operand.vmem [shape: f32[1,384], index: 7, kind: input, shape index: {}]
  %s8 = inlined_call_operand.vmem [shape: f32[128,384], index: 8, kind: input, shape index: {}]
  %s9 = inlined_call_operand.vmem [shape: f32[128,384], index: 9, kind: input, shape index: {}]
  %s10 = inlined_call_operand.vmem [shape: f32[1,384], index: 10, kind: input, shape index: {}]
  %s11 = inlined_call_operand.vmem [shape: f32[1,384], index: 11, kind: input, shape index: {}]
  %s12 = inlined_call_operand.vmem [shape: f32[2,8,128], index: 12, kind: output, shape index: {0}, may-alias: {1,12}]
  %s13 = inlined_call_operand.vmem [shape: f32[8,128], index: 13, kind: output, shape index: {1}]
  %14 = xla_tuple %s12, %s13
  %s15 = sld [smem:[#allocation0]]
  $region66: #{luong_decoder_forward.2} parent=0
    _
  %s17 = ssub.s32 1, %s15
  %s18 = scalar_select 0, %s17, %s15
  // Predicated region
  $region2: #{luong_decoder_forward.2} parent=0 // pred_check
    _
  $region3: #{luong_decoder_forward.2} parent=0 // pred_check_branch
    %20 = sbr.rel (0) target = $region5
  $region4: #{luong_decoder_forward.2} parent=0 // pred_region
    _
  $region5: #{luong_decoder_forward.2} parent=0 // pred_fallthru
    _
  // Predicated region
  $region6: #{luong_decoder_forward.2} parent=0 // pred_check
    _
  $region7: #{luong_decoder_forward.2} parent=0 // pred_check_branch
    %22 = sbr.rel (0) target = $region9
  $region8: #{luong_decoder_forward.2} parent=0 // pred_region
    _
  $region9: #{luong_decoder_forward.2} parent=0 // pred_fallthru
    _
  // Predicated region
  $region10: #{luong_decoder_forward.2} parent=0 // pred_check
    _
  $region11: #{luong_decoder_forward.2} parent=0 // pred_check_branch
    %24 = sbr.rel (0) target = $region13
  $region12: #{luong_decoder_forward.2} parent=0 // pred_region
    _
  $region13: #{luong_decoder_forward.2} parent=0 // pred_fallthru
    _
  // Predicated region
  $region14: #{luong_decoder_forward.2} parent=0 // pred_check
    _
  $region15: #{luong_decoder_forward.2} parent=0 // pred_check_branch
    %26 = sbr.rel (0) target = $region17
  $region16: #{luong_decoder_forward.2} parent=0 // pred_region
    _
  $region17: #{luong_decoder_forward.2} parent=0 // pred_fallthru
    _
  // Predicated region
  $region18: #{luong_decoder_forward.2} parent=0 // pred_check
    _
  $region19: #{luong_decoder_forward.2} parent=0 // pred_check_branch
    %28 = sbr.rel (0) target = $region21
  $region20: #{luong_decoder_forward.2} parent=0 // pred_region
    _
  $region21: #{luong_decoder_forward.2} parent=0 // pred_fallthru
    _
  // Predicated region
  $region22: #{luong_decoder_forward.2} parent=0 // pred_check
    _
  $region23: #{luong_decoder_forward.2} parent=0 // pred_check_branch
    %30 = sbr.rel (0) target = $region25
  $region24: #{luong_decoder_forward.2} parent=0 // pred_region
    _
  $region25: #{luong_decoder_forward.2} parent=0 // pred_fallthru
    _
  // Predicated region
  $region26: #{luong_decoder_forward.2} parent=0 // pred_check
    _
  $region27: #{luong_decoder_forward.2} parent=0 // pred_check_branch
    %32 = sbr.rel (0) target = $region29
  $region28: #{luong_decoder_forward.2} parent=0 // pred_region
    _
  $region29: #{luong_decoder_forward.2} parent=0 // pred_fallthru
    _
  // Predicated region
  $region30: #{luong_decoder_forward.2} parent=0 // pred_check
    _
  $region31: #{luong_decoder_forward.2} parent=0 // pred_check_branch
    %34 = sbr.rel (0) target = $region33
  $region32: #{luong_decoder_forward.2} parent=0 // pred_region
    _
  $region33: #{luong_decoder_forward.2} parent=0 // pred_fallthru
    _
  // Predicated region
  $region34: #{luong_decoder_forward.2} parent=0 // pred_check
    _
  $region35: #{luong_decoder_forward.2} parent=0 // pred_check_branch
    %36 = sbr.rel (0) target = $region37
  $region36: #{luong_decoder_forward.2} parent=0 // pred_region
    _
  $region37: #{luong_decoder_forward.2} parent=0 // pred_fallthru
    _
  // Predicated region
  $region38: #{luong_decoder_forward.2} parent=0 // pred_check
    _
  $region39: #{luong_decoder_forward.2} parent=0 // pred_check_branch
    %38 = sbr.rel (0) target = $region41
  $region40: #{luong_decoder_forward.2} parent=0 // pred_region
    _
  $region41: #{luong_decoder_forward.2} parent=0 // pred_fallthru
    _
  // Predicated region
  $region42: #{luong_decoder_forward.2} parent=0 // pred_check
    _
  $region43: #{luong_decoder_forward.2} parent=0 // pred_check_branch
    %40 = sbr.rel (0) target = $region45
  $region44: #{luong_decoder_forward.2} parent=0 // pred_region
    _
  $region45: #{luong_decoder_forward.2} parent=0 // pred_fallthru
    _
  // Predicated region
  $region46: #{luong_decoder_forward.2} parent=0 // pred_check
    _
  $region47: #{luong_decoder_forward.2} parent=0 // pred_check_branch
    %42 = sbr.rel (0) target = $region49
  $region48: #{luong_decoder_forward.2} parent=0 // pred_region
    _
  $region49: #{luong_decoder_forward.2} parent=0 // pred_fallthru
    _
  %v43 = vld [vmem:[%s4] sm:$0xff]
  %v44 = vld [vmem:[%s4 + $0x8] sm:$0xff]
  %v45 = vld [vmem:[%s4 + $0x10] sm:$0xff]
  %v46 = vld [vmem:[%s4 + $0x18] sm:$0xff]
  %v47 = vld [vmem:[%s4 + $0x20] sm:$0xff]
  %v48 = vld [vmem:[%s4 + $0x28] sm:$0xff]
  %v49 = vld [vmem:[%s4 + $0x30] sm:$0xff]
  %v50 = vld [vmem:[%s4 + $0x38] sm:$0xff]
  %v51 = vld [vmem:[%s4 + $0x40] sm:$0xff]
  %v52 = vld [vmem:[%s4 + $0x48] sm:$0xff]
  %v53 = vld [vmem:[%s4 + $0x50] sm:$0xff]
  %v54 = vld [vmem:[%s4 + $0x58] sm:$0xff]
  %v55 = vld [vmem:[%s4 + $0x60] sm:$0xff]
  %v56 = vld [vmem:[%s4 + $0x68] sm:$0xff]
  %v57 = vld [vmem:[%s4 + $0x70] sm:$0xff]
  %v58 = vld [vmem:[%s4 + $0x78] sm:$0xff]
  %v59 = vld [vmem:[%s4 + $0x80] sm:$0xff]
  %v60 = vld [vmem:[%s4 + $0x88] sm:$0xff]
  %v61 = vld [vmem:[%s4 + $0x90] sm:$0xff]
  %v62 = vld [vmem:[%s4 + $0x98] sm:$0xff]
  %v63 = vld [vmem:[%s4 + $0xa0] sm:$0xff]
  %v64 = vld [vmem:[%s4 + $0xa8] sm:$0xff]
  %v65 = vld [vmem:[%s4 + $0xb0] sm:$0xff]
  %v66 = vld [vmem:[%s4 + $0xb8] sm:$0xff]
  %v67 = vld [vmem:[%s4 + $0xc0] sm:$0xff]
  %v68 = vld [vmem:[%s4 + $0xc8] sm:$0xff]
  %v69 = vld [vmem:[%s4 + $0xd0] sm:$0xff]
  %v70 = vld [vmem:[%s4 + $0xd8] sm:$0xff]
  %v71 = vld [vmem:[%s4 + $0xe0] sm:$0xff]
  %v72 = vld [vmem:[%s4 + $0xe8] sm:$0xff]
  %v73 = vld [vmem:[%s4 + $0xf0] sm:$0xff]
  %v74 = vld [vmem:[%s4 + $0xf8] sm:$0xff]
  %v75 = vld [vmem:[%s4 + $0x100] sm:$0xff]
  %v76 = vld [vmem:[%s4 + $0x108] sm:$0xff]
  %v77 = vld [vmem:[%s4 + $0x110] sm:$0xff]
  %v78 = vld [vmem:[%s4 + $0x118] sm:$0xff]
  %v79 = vld [vmem:[%s4 + $0x120] sm:$0xff]
  %v80 = vld [vmem:[%s4 + $0x128] sm:$0xff]
  %v81 = vld [vmem:[%s4 + $0x130] sm:$0xff]
  %v82 = vld [vmem:[%s4 + $0x138] sm:$0xff]
  %v83 = vld [vmem:[%s4 + $0x140] sm:$0xff]
  %v84 = vld [vmem:[%s4 + $0x148] sm:$0xff]
  %v85 = vld [vmem:[%s4 + $0x150] sm:$0xff]
  %v86 = vld [vmem:[%s4 + $0x158] sm:$0xff]
  %v87 = vld [vmem:[%s4 + $0x160] sm:$0xff]
  %v88 = vld [vmem:[%s4 + $0x168] sm:$0xff]
  %v89 = vld [vmem:[%s4 + $0x170] sm:$0xff]
  %v90 = vld [vmem:[%s4 + $0x178] sm:$0xff]
  %v91 = vld [vmem:[%s5] sm:$0xff]
  %v92 = vld [vmem:[%s5 + $0x8] sm:$0xff]
  %v93 = vld [vmem:[%s5 + $0x10] sm:$0xff]
  %v94 = vld [vmem:[%s5 + $0x18] sm:$0xff]
  %v95 = vld [vmem:[%s5 + $0x20] sm:$0xff]
  %v96 = vld [vmem:[%s5 + $0x28] sm:$0xff]
  %v97 = vld [vmem:[%s5 + $0x30] sm:$0xff]
  %v98 = vld [vmem:[%s5 + $0x38] sm:$0xff]
  %v99 = vld [vmem:[%s5 + $0x40] sm:$0xff]
  %v100 = vld [vmem:[%s5 + $0x48] sm:$0xff]
  %v101 = vld [vmem:[%s5 + $0x50] sm:$0xff]
  %v102 = vld [vmem:[%s5 + $0x58] sm:$0xff]
  %v103 = vld [vmem:[%s5 + $0x60] sm:$0xff]
  %v104 = vld [vmem:[%s5 + $0x68] sm:$0xff]
  %v105 = vld [vmem:[%s5 + $0x70] sm:$0xff]
  %v106 = vld [vmem:[%s5 + $0x78] sm:$0xff]
  %v107 = vld [vmem:[%s5 + $0x80] sm:$0xff]
  %v108 = vld [vmem:[%s5 + $0x88] sm:$0xff]
  %v109 = vld [vmem:[%s5 + $0x90] sm:$0xff]
  %v110 = vld [vmem:[%s5 + $0x98] sm:$0xff]
  %v111 = vld [vmem:[%s5 + $0xa0] sm:$0xff]
  %v112 = vld [vmem:[%s5 + $0xa8] sm:$0xff]
  %v113 = vld [vmem:[%s5 + $0xb0] sm:$0xff]
  %v114 = vld [vmem:[%s5 + $0xb8] sm:$0xff]
  %v115 = vld [vmem:[%s5 + $0xc0] sm:$0xff]
  %v116 = vld [vmem:[%s5 + $0xc8] sm:$0xff]
  %v117 = vld [vmem:[%s5 + $0xd0] sm:$0xff]
  %v118 = vld [vmem:[%s5 + $0xd8] sm:$0xff]
  %v119 = vld [vmem:[%s5 + $0xe0] sm:$0xff]
  %v120 = vld [vmem:[%s5 + $0xe8] sm:$0xff]
  %v121 = vld [vmem:[%s5 + $0xf0] sm:$0xff]
  %v122 = vld [vmem:[%s5 + $0xf8] sm:$0xff]
  %v123 = vld [vmem:[%s5 + $0x100] sm:$0xff]
  %v124 = vld [vmem:[%s5 + $0x108] sm:$0xff]
  %v125 = vld [vmem:[%s5 + $0x110] sm:$0xff]
  %v126 = vld [vmem:[%s5 + $0x118] sm:$0xff]
  %v127 = vld [vmem:[%s5 + $0x120] sm:$0xff]
  %v128 = vld [vmem:[%s5 + $0x128] sm:$0xff]
  %v129 = vld [vmem:[%s5 + $0x130] sm:$0xff]
  %v130 = vld [vmem:[%s5 + $0x138] sm:$0xff]
  %v131 = vld [vmem:[%s5 + $0x140] sm:$0xff]
  %v132 = vld [vmem:[%s5 + $0x148] sm:$0xff]
  %v133 = vld [vmem:[%s5 + $0x150] sm:$0xff]
  %v134 = vld [vmem:[%s5 + $0x158] sm:$0xff]
  %v135 = vld [vmem:[%s5 + $0x160] sm:$0xff]
  %v136 = vld [vmem:[%s5 + $0x168] sm:$0xff]
  %v137 = vld [vmem:[%s5 + $0x170] sm:$0xff]
  %v138 = vld [vmem:[%s5 + $0x178] sm:$0xff]
  %v139 = vld [vmem:[%s6] sm:$0x7]
  %v140 = vld [vmem:[%s7] sm:$0x7]
  %v141 = vld [vmem:[%s0] sm:$0xff]
  %v143 = vlaneseq
  %v144 = vshrl.u32 %v143, 7
  %v145 = vsub.s32 0, %v144
  %v146 = vrot.slane %v139, %v145
  %v147 = vlaneseq
  %v148 = vshrl.u32 %v147, 7
  %v149 = vsub.s32 1, %v148
  %v150 = vrot.slane %v139, %v149
  %v151 = vlaneseq
  %v152 = vshrl.u32 %v151, 7
  %v153 = vsub.s32 2, %v152
  %v154 = vrot.slane %v139, %v153
  %v158 = vand.u32 %v44, 4294901760
  %159 = vmatprep.subr.mxu0 %v158
  %v160 = vand.u32 %v43, 4294901760
  %161 = vmatpush1.msra.mxu0 %v160
  %v162 = vand.u32 %v47, 4294901760
  %163 = vmatprep.subr.mxu0 %v162
  %v164 = vand.u32 %v46, 4294901760
  %165 = vmatpush1.msra.mxu0 %v164
  %v166 = vand.u32 %v50, 4294901760
  %167 = vmatprep.subr.mxu0 %v166
  %v168 = vand.u32 %v49, 4294901760
  %169 = vmatpush1.msra.mxu0 %v168
  %v170 = vand.u32 %v53, 4294901760
  %171 = vmatprep.subr.mxu0 %v170
  %v172 = vand.u32 %v52, 4294901760
  %173 = vmatpush1.msra.mxu0 %v172
  %v174 = vand.u32 %v56, 4294901760
  %175 = vmatprep.subr.mxu0 %v174
  %v176 = vand.u32 %v55, 4294901760
  %177 = vmatpush1.msra.mxu0 %v176
  %v178 = vand.u32 %v59, 4294901760
  %179 = vmatprep.subr.mxu0 %v178
  %v180 = vand.u32 %v58, 4294901760
  %181 = vmatpush1.msra.mxu0 %v180
  %v182 = vand.u32 %v62, 4294901760
  %183 = vmatprep.subr.mxu0 %v182
  %v184 = vand.u32 %v61, 4294901760
  %185 = vmatpush1.msra.mxu0 %v184
  %v186 = vand.u32 %v65, 4294901760
  %187 = vmatprep.subr.mxu0 %v186
  %v188 = vand.u32 %v64, 4294901760
  %189 = vmatpush1.msra.mxu0 %v188
  %v190 = vand.u32 %v68, 4294901760
  %191 = vmatprep.subr.mxu0 %v190
  %v192 = vand.u32 %v67, 4294901760
  %193 = vmatpush1.msra.mxu0 %v192
  %v194 = vand.u32 %v71, 4294901760
  %195 = vmatprep.subr.mxu0 %v194
  %v196 = vand.u32 %v70, 4294901760
  %197 = vmatpush1.msra.mxu0 %v196
  %v198 = vand.u32 %v74, 4294901760
  %199 = vmatprep.subr.mxu0 %v198
  %v200 = vand.u32 %v73, 4294901760
  %201 = vmatpush1.msra.mxu0 %v200
  %v202 = vand.u32 %v77, 4294901760
  %203 = vmatprep.subr.mxu0 %v202
  %v204 = vand.u32 %v76, 4294901760
  %205 = vmatpush1.msra.mxu0 %v204
  %v206 = vand.u32 %v80, 4294901760
  %207 = vmatprep.subr.mxu0 %v206
  %v208 = vand.u32 %v79, 4294901760
  %209 = vmatpush1.msra.mxu0 %v208
  %v210 = vand.u32 %v83, 4294901760
  %211 = vmatprep.subr.mxu0 %v210
  %v212 = vand.u32 %v82, 4294901760
  %213 = vmatpush1.msra.mxu0 %v212
  %v214 = vand.u32 %v86, 4294901760
  %215 = vmatprep.subr.mxu0 %v214
  %v216 = vand.u32 %v85, 4294901760
  %217 = vmatpush1.msra.mxu0 %v216
  %v218 = vand.u32 %v89, 4294901760
  %219 = vmatprep.subr.mxu0 %v218
  %v220 = vand.u32 %v88, 4294901760
  %221 = vmatpush1.msra.mxu0 %v220
  %222 = vmatprep.subr.mxu0 0.0
  %223 = vmatpush1.msra.mxu0 0.0
  %224 = vmatprep.subr.mxu0 0.0
  %225 = vmatpush1.msra.mxu0 0.0
  %226 = vmatprep.subr.mxu0 0.0
  %227 = vmatpush1.msra.mxu0 0.0
  %228 = vmatprep.subr.mxu0 0.0
  %229 = vmatpush1.msra.mxu0 0.0
  %230 = vmatprep.subr.mxu0 0.0
  %231 = vmatpush1.msra.mxu0 0.0
  %232 = vmatprep.subr.mxu0 0.0
  %233 = vmatpush1.msra.mxu0 0.0
  %234 = vmatprep.subr.mxu0 0.0
  %235 = vmatpush1.msra.mxu0 0.0
  %236 = vmatprep.subr.mxu0 0.0
  %237 = vmatpush1.msra.mxu0 0.0
  %238 = vmatprep.subr.mxu0 0.0
  %239 = vmatpush1.msra.mxu0 0.0
  %240 = vmatprep.subr.mxu0 0.0
  %241 = vmatpush1.msra.mxu0 0.0
  %242 = vmatprep.subr.mxu0 0.0
  %243 = vmatpush1.msra.mxu0 0.0
  %244 = vmatprep.subr.mxu0 0.0
  %245 = vmatpush1.msra.mxu0 0.0
  %246 = vmatprep.subr.mxu0 0.0
  %247 = vmatpush1.msra.mxu0 0.0
  %248 = vmatprep.subr.mxu0 0.0
  %249 = vmatpush1.msra.mxu0 0.0
  %250 = vmatprep.subr.mxu0 0.0
  %251 = vmatpush1.msra.mxu0 0.0
  %252 = vmatprep.subr.mxu0 0.0
  %253 = vmatpush1.msra.mxu0 0.0
  %254 = vmatprep.mubr.f32.mxu0 0.0
  %v255 = vand.u32 %v141, 4294901760
  %v256 = vsub.f32 %v141, %v255
  %v257 = vand.u32 %v256, 4294901760
  %v258 = vsub.f32 %v256, %v257
  %v259 = vand.u32 %v258, 4294901760
  %260 = vmatmul.mubr.f32.gmra.mrb[0].mxu0 %v259
  %v261 = vpop.f32.mrb[0].mxu0
  %v262 = vadd.f32 %v146, %v261
  %v263 = vpop.f32.mrb[0].mxu0
  %v264 = vadd.f32 %v150, %v263
  %265 = vdwg.mxu0
  %v266 = vand.u32 %v44, 4294901760
  %v267 = vsub.f32 %v44, %v266
  %v268 = vand.u32 %v267, 4294901760
  %v269 = vsub.f32 %v267, %v268
  %v270 = vand.u32 %v269, 4294901760
  %271 = vmatprep.subr.mxu0 %v270
  %v272 = vand.u32 %v43, 4294901760
  %v273 = vsub.f32 %v43, %v272
  %v274 = vand.u32 %v273, 4294901760
  %v275 = vsub.f32 %v273, %v274
  %v276 = vand.u32 %v275, 4294901760
  %277 = vmatpush1.msra.mxu0 %v276
  %v278 = vand.u32 %v47, 4294901760
  %v279 = vsub.f32 %v47, %v278
  %v280 = vand.u32 %v279, 4294901760
  %v281 = vsub.f32 %v279, %v280
  %v282 = vand.u32 %v281, 4294901760
  %283 = vmatprep.subr.mxu0 %v282
  %v284 = vand.u32 %v46, 4294901760
  %v285 = vsub.f32 %v46, %v284
  %v286 = vand.u32 %v285, 4294901760
  %v287 = vsub.f32 %v285, %v286
  %v288 = vand.u32 %v287, 4294901760
  %289 = vmatpush1.msra.mxu0 %v288
  %v290 = vand.u32 %v50, 4294901760
  %v291 = vsub.f32 %v50, %v290
  %v292 = vand.u32 %v291, 4294901760
  %v293 = vsub.f32 %v291, %v292
  %v294 = vand.u32 %v293, 4294901760
  %295 = vmatprep.subr.mxu0 %v294
  %v296 = vand.u32 %v49, 4294901760
  %v297 = vsub.f32 %v49, %v296
  %v298 = vand.u32 %v297, 4294901760
  %v299 = vsub.f32 %v297, %v298
  %v300 = vand.u32 %v299, 4294901760
  %301 = vmatpush1.msra.mxu0 %v300
  %v302 = vand.u32 %v53, 4294901760
  %v303 = vsub.f32 %v53, %v302
  %v304 = vand.u32 %v303, 4294901760
  %v305 = vsub.f32 %v303, %v304
  %v306 = vand.u32 %v305, 4294901760
  %307 = vmatprep.subr.mxu0 %v306
  %v308 = vand.u32 %v52, 4294901760
  %v309 = vsub.f32 %v52, %v308
  %v310 = vand.u32 %v309, 4294901760
  %v311 = vsub.f32 %v309, %v310
  %v312 = vand.u32 %v311, 4294901760
  %313 = vmatpush1.msra.mxu0 %v312
  %v314 = vand.u32 %v56, 4294901760
  %v315 = vsub.f32 %v56, %v314
  %v316 = vand.u32 %v315, 4294901760
  %v317 = vsub.f32 %v315, %v316
  %v318 = vand.u32 %v317, 4294901760
  %319 = vmatprep.subr.mxu0 %v318
  %v320 = vand.u32 %v55, 4294901760
  %v321 = vsub.f32 %v55, %v320
  %v322 = vand.u32 %v321, 4294901760
  %v323 = vsub.f32 %v321, %v322
  %v324 = vand.u32 %v323, 4294901760
  %325 = vmatpush1.msra.mxu0 %v324
  %v326 = vand.u32 %v59, 4294901760
  %v327 = vsub.f32 %v59, %v326
  %v328 = vand.u32 %v327, 4294901760
  %v329 = vsub.f32 %v327, %v328
  %v330 = vand.u32 %v329, 4294901760
  %331 = vmatprep.subr.mxu0 %v330
  %v332 = vand.u32 %v58, 4294901760
  %v333 = vsub.f32 %v58, %v332
  %v334 = vand.u32 %v333, 4294901760
  %v335 = vsub.f32 %v333, %v334
  %v336 = vand.u32 %v335, 4294901760
  %337 = vmatpush1.msra.mxu0 %v336
  %v338 = vand.u32 %v62, 4294901760
  %v339 = vsub.f32 %v62, %v338
  %v340 = vand.u32 %v339, 4294901760
  %v341 = vsub.f32 %v339, %v340
  %v342 = vand.u32 %v341, 4294901760
  %343 = vmatprep.subr.mxu0 %v342
  %v344 = vand.u32 %v61, 4294901760
  %v345 = vsub.f32 %v61, %v344
  %v346 = vand.u32 %v345, 4294901760
  %v347 = vsub.f32 %v345, %v346
  %v348 = vand.u32 %v347, 4294901760
  %349 = vmatpush1.msra.mxu0 %v348
  %v350 = vand.u32 %v65, 4294901760
  %v351 = vsub.f32 %v65, %v350
  %v352 = vand.u32 %v351, 4294901760
  %v353 = vsub.f32 %v351, %v352
  %v354 = vand.u32 %v353, 4294901760
  %355 = vmatprep.subr.mxu0 %v354
  %v356 = vand.u32 %v64, 4294901760
  %v357 = vsub.f32 %v64, %v356
  %v358 = vand.u32 %v357, 4294901760
  %v359 = vsub.f32 %v357, %v358
  %v360 = vand.u32 %v359, 4294901760
  %361 = vmatpush1.msra.mxu0 %v360
  %v362 = vand.u32 %v68, 4294901760
  %v363 = vsub.f32 %v68, %v362
  %v364 = vand.u32 %v363, 4294901760
  %v365 = vsub.f32 %v363, %v364
  %v366 = vand.u32 %v365, 4294901760
  %367 = vmatprep.subr.mxu0 %v366
  %v368 = vand.u32 %v67, 4294901760
  %v369 = vsub.f32 %v67, %v368
  %v370 = vand.u32 %v369, 4294901760
  %v371 = vsub.f32 %v369, %v370
  %v372 = vand.u32 %v371, 4294901760
  %373 = vmatpush1.msra.mxu0 %v372
  %v374 = vand.u32 %v71, 4294901760
  %v375 = vsub.f32 %v71, %v374
  %v376 = vand.u32 %v375, 4294901760
  %v377 = vsub.f32 %v375, %v376
  %v378 = vand.u32 %v377, 4294901760
  %379 = vmatprep.subr.mxu0 %v378
  %v380 = vand.u32 %v70, 4294901760
  %v381 = vsub.f32 %v70, %v380
  %v382 = vand.u32 %v381, 4294901760
  %v383 = vsub.f32 %v381, %v382
  %v384 = vand.u32 %v383, 4294901760
  %385 = vmatpush1.msra.mxu0 %v384
  %v386 = vand.u32 %v74, 4294901760
  %v387 = vsub.f32 %v74, %v386
  %v388 = vand.u32 %v387, 4294901760
  %v389 = vsub.f32 %v387, %v388
  %v390 = vand.u32 %v389, 4294901760
  %391 = vmatprep.subr.mxu0 %v390
  %v392 = vand.u32 %v73, 4294901760
  %v393 = vsub.f32 %v73, %v392
  %v394 = vand.u32 %v393, 4294901760
  %v395 = vsub.f32 %v393, %v394
  %v396 = vand.u32 %v395, 4294901760
  %397 = vmatpush1.msra.mxu0 %v396
  %v398 = vand.u32 %v77, 4294901760
  %v399 = vsub.f32 %v77, %v398
  %v400 = vand.u32 %v399, 4294901760
  %v401 = vsub.f32 %v399, %v400
  %v402 = vand.u32 %v401, 4294901760
  %403 = vmatprep.subr.mxu0 %v402
  %v404 = vand.u32 %v76, 4294901760
  %v405 = vsub.f32 %v76, %v404
  %v406 = vand.u32 %v405, 4294901760
  %v407 = vsub.f32 %v405, %v406
  %v408 = vand.u32 %v407, 4294901760
  %409 = vmatpush1.msra.mxu0 %v408
  %v410 = vand.u32 %v80, 4294901760
  %v411 = vsub.f32 %v80, %v410
  %v412 = vand.u32 %v411, 4294901760
  %v413 = vsub.f32 %v411, %v412
  %v414 = vand.u32 %v413, 4294901760
  %415 = vmatprep.subr.mxu0 %v414
  %v416 = vand.u32 %v79, 4294901760
  %v417 = vsub.f32 %v79, %v416
  %v418 = vand.u32 %v417, 4294901760
  %v419 = vsub.f32 %v417, %v418
  %v420 = vand.u32 %v419, 4294901760
  %421 = vmatpush1.msra.mxu0 %v420
  %v422 = vand.u32 %v83, 4294901760
  %v423 = vsub.f32 %v83, %v422
  %v424 = vand.u32 %v423, 4294901760
  %v425 = vsub.f32 %v423, %v424
  %v426 = vand.u32 %v425, 4294901760
  %427 = vmatprep.subr.mxu0 %v426
  %v428 = vand.u32 %v82, 4294901760
  %v429 = vsub.f32 %v82, %v428
  %v430 = vand.u32 %v429, 4294901760
  %v431 = vsub.f32 %v429, %v430
  %v432 = vand.u32 %v431, 4294901760
  %433 = vmatpush1.msra.mxu0 %v432
  %v434 = vand.u32 %v86, 4294901760
  %v435 = vsub.f32 %v86, %v434
  %v436 = vand.u32 %v435, 4294901760
  %v437 = vsub.f32 %v435, %v436
  %v438 = vand.u32 %v437, 4294901760
  %439 = vmatprep.subr.mxu0 %v438
  %v440 = vand.u32 %v85, 4294901760
  %v441 = vsub.f32 %v85, %v440
  %v442 = vand.u32 %v441, 4294901760
  %v443 = vsub.f32 %v441, %v442
  %v444 = vand.u32 %v443, 4294901760
  %445 = vmatpush1.msra.mxu0 %v444
  %v446 = vand.u32 %v89, 4294901760
  %v447 = vsub.f32 %v89, %v446
  %v448 = vand.u32 %v447, 4294901760
  %v449 = vsub.f32 %v447, %v448
  %v450 = vand.u32 %v449, 4294901760
  %451 = vmatprep.subr.mxu0 %v450
  %v452 = vand.u32 %v88, 4294901760
  %v453 = vsub.f32 %v88, %v452
  %v454 = vand.u32 %v453, 4294901760
  %v455 = vsub.f32 %v453, %v454
  %v456 = vand.u32 %v455, 4294901760
  %457 = vmatpush1.msra.mxu0 %v456
  %458 = vmatprep.subr.mxu0 0.0
  %459 = vmatpush1.msra.mxu0 0.0
  %460 = vmatprep.subr.mxu0 0.0
  %461 = vmatpush1.msra.mxu0 0.0
  %462 = vmatprep.subr.mxu0 0.0
  %463 = vmatpush1.msra.mxu0 0.0
  %464 = vmatprep.subr.mxu0 0.0
  %465 = vmatpush1.msra.mxu0 0.0
  %466 = vmatprep.subr.mxu0 0.0
  %467 = vmatpush1.msra.mxu0 0.0
  %468 = vmatprep.subr.mxu0 0.0
  %469 = vmatpush1.msra.mxu0 0.0
  %470 = vmatprep.subr.mxu0 0.0
  %471 = vmatpush1.msra.mxu0 0.0
  %472 = vmatprep.subr.mxu0 0.0
  %473 = vmatpush1.msra.mxu0 0.0
  %474 = vmatprep.subr.mxu0 0.0
  %475 = vmatpush1.msra.mxu0 0.0
  %476 = vmatprep.subr.mxu0 0.0
  %477 = vmatpush1.msra.mxu0 0.0
  %478 = vmatprep.subr.mxu0 0.0
  %479 = vmatpush1.msra.mxu0 0.0
  %480 = vmatprep.subr.mxu0 0.0
  %481 = vmatpush1.msra.mxu0 0.0
  %482 = vmatprep.subr.mxu0 0.0
  %483 = vmatpush1.msra.mxu0 0.0
  %484 = vmatprep.subr.mxu0 0.0
  %485 = vmatpush1.msra.mxu0 0.0
  %486 = vmatprep.subr.mxu0 0.0
  %487 = vmatpush1.msra.mxu0 0.0
  %488 = vmatprep.subr.mxu0 0.0
  %489 = vmatpush1.msra.mxu0 0.0
  %490 = vmatprep.mubr.f32.mxu0 0.0
  %v491 = vand.u32 %v141, 4294901760
  %492 = vmatmul.mubr.f32.gmra.mrb[0].mxu0 %v491
  %v493 = vpop.f32.mrb[0].mxu0
  %v494 = vadd.f32 %v262, %v493
  %v495 = vpop.f32.mrb[0].mxu0
  %v496 = vadd.f32 %v264, %v495
  %497 = vdwg.mxu0
  %v498 = vand.u32 %v44, 4294901760
  %v499 = vsub.f32 %v44, %v498
  %500 = vmatprep.subr.mxu0 %v499
  %v501 = vand.u32 %v43, 4294901760
  %v502 = vsub.f32 %v43, %v501
  %503 = vmatpush1.msra.mxu0 %v502
  %v504 = vand.u32 %v47, 4294901760
  %v505 = vsub.f32 %v47, %v504
  %506 = vmatprep.subr.mxu0 %v505
  %v507 = vand.u32 %v46, 4294901760
  %v508 = vsub.f32 %v46, %v507
  %509 = vmatpush1.msra.mxu0 %v508
  %v510 = vand.u32 %v50, 4294901760
  %v511 = vsub.f32 %v50, %v510
  %512 = vmatprep.subr.mxu0 %v511
  %v513 = vand.u32 %v49, 4294901760
  %v514 = vsub.f32 %v49, %v513
  %515 = vmatpush1.msra.mxu0 %v514
  %v516 = vand.u32 %v53, 4294901760
  %v517 = vsub.f32 %v53, %v516
  %518 = vmatprep.subr.mxu0 %v517
  %v519 = vand.u32 %v52, 4294901760
  %v520 = vsub.f32 %v52, %v519
  %521 = vmatpush1.msra.mxu0 %v520
  %v522 = vand.u32 %v56, 4294901760
  %v523 = vsub.f32 %v56, %v522
  %524 = vmatprep.subr.mxu0 %v523
  %v525 = vand.u32 %v55, 4294901760
  %v526 = vsub.f32 %v55, %v525
  %527 = vmatpush1.msra.mxu0 %v526
  %v528 = vand.u32 %v59, 4294901760
  %v529 = vsub.f32 %v59, %v528
  %530 = vmatprep.subr.mxu0 %v529
  %v531 = vand.u32 %v58, 4294901760
  %v532 = vsub.f32 %v58, %v531
  %533 = vmatpush1.msra.mxu0 %v532
  %v534 = vand.u32 %v62, 4294901760
  %v535 = vsub.f32 %v62, %v534
  %536 = vmatprep.subr.mxu0 %v535
  %v537 = vand.u32 %v61, 4294901760
  %v538 = vsub.f32 %v61, %v537
  %539 = vmatpush1.msra.mxu0 %v538
  %v540 = vand.u32 %v65, 4294901760
  %v541 = vsub.f32 %v65, %v540
  %542 = vmatprep.subr.mxu0 %v541
  %v543 = vand.u32 %v64, 4294901760
  %v544 = vsub.f32 %v64, %v543
  %545 = vmatpush1.msra.mxu0 %v544
  %v546 = vand.u32 %v68, 4294901760
  %v547 = vsub.f32 %v68, %v546
  %548 = vmatprep.subr.mxu0 %v547
  %v549 = vand.u32 %v67, 4294901760
  %v550 = vsub.f32 %v67, %v549
  %551 = vmatpush1.msra.mxu0 %v550
  %v552 = vand.u32 %v71, 4294901760
  %v553 = vsub.f32 %v71, %v552
  %554 = vmatprep.subr.mxu0 %v553
  %v555 = vand.u32 %v70, 4294901760
  %v556 = vsub.f32 %v70, %v555
  %557 = vmatpush1.msra.mxu0 %v556
  %v558 = vand.u32 %v74, 4294901760
  %v559 = vsub.f32 %v74, %v558
  %560 = vmatprep.subr.mxu0 %v559
  %v561 = vand.u32 %v73, 4294901760
  %v562 = vsub.f32 %v73, %v561
  %563 = vmatpush1.msra.mxu0 %v562
  %v564 = vand.u32 %v77, 4294901760
  %v565 = vsub.f32 %v77, %v564
  %566 = vmatprep.subr.mxu0 %v565
  %v567 = vand.u32 %v76, 4294901760
  %v568 = vsub.f32 %v76, %v567
  %569 = vmatpush1.msra.mxu0 %v568
  %v570 = vand.u32 %v80, 4294901760
  %v571 = vsub.f32 %v80, %v570
  %572 = vmatprep.subr.mxu0 %v571
  %v573 = vand.u32 %v79, 4294901760
  %v574 = vsub.f32 %v79, %v573
  %575 = vmatpush1.msra.mxu0 %v574
  %v576 = vand.u32 %v83, 4294901760
  %v577 = vsub.f32 %v83, %v576
  %578 = vmatprep.subr.mxu0 %v577
  %v579 = vand.u32 %v82, 4294901760
  %v580 = vsub.f32 %v82, %v579
  %581 = vmatpush1.msra.mxu0 %v580
  %v582 = vand.u32 %v86, 4294901760
  %v583 = vsub.f32 %v86, %v582
  %584 = vmatprep.subr.mxu0 %v583
  %v585 = vand.u32 %v85, 4294901760
  %v586 = vsub.f32 %v85, %v585
  %587 = vmatpush1.msra.mxu0 %v586
  %v588 = vand.u32 %v89, 4294901760
  %v589 = vsub.f32 %v89, %v588
  %590 = vmatprep.subr.mxu0 %v589
  %v591 = vand.u32 %v88, 4294901760
  %v592 = vsub.f32 %v88, %v591
  %593 = vmatpush1.msra.mxu0 %v592
  %594 = vmatprep.subr.mxu0 0.0
  %595 = vmatpush1.msra.mxu0 0.0
  %596 = vmatprep.subr.mxu0 0.0
  %597 = vmatpush1.msra.mxu0 0.0
  %598 = vmatprep.subr.mxu0 0.0
  %599 = vmatpush1.msra.mxu0 0.0
  %600 = vmatprep.subr.mxu0 0.0
  %601 = vmatpush1.msra.mxu0 0.0
  %602 = vmatprep.subr.mxu0 0.0
  %603 = vmatpush1.msra.mxu0 0.0
  %604 = vmatprep.subr.mxu0 0.0
  %605 = vmatpush1.msra.mxu0 0.0
  %606 = vmatprep.subr.mxu0 0.0
  %607 = vmatpush1.msra.mxu0 0.0
  %608 = vmatprep.subr.mxu0 0.0
  %609 = vmatpush1.msra.mxu0 0.0
  %610 = vmatprep.subr.mxu0 0.0
  %611 = vmatpush1.msra.mxu0 0.0
  %612 = vmatprep.subr.mxu0 0.0
  %613 = vmatpush1.msra.mxu0 0.0
  %614 = vmatprep.subr.mxu0 0.0
  %615 = vmatpush1.msra.mxu0 0.0
  %616 = vmatprep.subr.mxu0 0.0
  %617 = vmatpush1.msra.mxu0 0.0
  %618 = vmatprep.subr.mxu0 0.0
  %619 = vmatpush1.msra.mxu0 0.0
  %620 = vmatprep.subr.mxu0 0.0
  %621 = vmatpush1.msra.mxu0 0.0
  %622 = vmatprep.subr.mxu0 0.0
  %623 = vmatpush1.msra.mxu0 0.0
  %624 = vmatprep.subr.mxu0 0.0
  %625 = vmatpush1.msra.mxu0 0.0
  %626 = vmatprep.mubr.f32.mxu0 0.0
  %v627 = vand.u32 %v141, 4294901760
  %v628 = vsub.f32 %v141, %v627
  %629 = vmatmul.mubr.f32.gmra.mrb[0].mxu0 %v628
  %v630 = vpop.f32.mrb[0].mxu0
  %v631 = vadd.f32 %v494, %v630
  %v632 = vpop.f32.mrb[0].mxu0
  %v633 = vadd.f32 %v496, %v632
  %634 = vdwg.mxu0
  %v635 = vand.u32 %v44, 4294901760
  %636 = vmatprep.subr.mxu0 %v635
  %v637 = vand.u32 %v43, 4294901760
  %638 = vmatpush1.msra.mxu0 %v637
  %v639 = vand.u32 %v47, 4294901760
  %640 = vmatprep.subr.mxu0 %v639
  %v641 = vand.u32 %v46, 4294901760
  %642 = vmatpush1.msra.mxu0 %v641
  %v643 = vand.u32 %v50, 4294901760
  %644 = vmatprep.subr.mxu0 %v643
  %v645 = vand.u32 %v49, 4294901760
  %646 = vmatpush1.msra.mxu0 %v645
  %v647 = vand.u32 %v53, 4294901760
  %648 = vmatprep.subr.mxu0 %v647
  %v649 = vand.u32 %v52, 4294901760
  %650 = vmatpush1.msra.mxu0 %v649
  %v651 = vand.u32 %v56, 4294901760
  %652 = vmatprep.subr.mxu0 %v651
  %v653 = vand.u32 %v55, 4294901760
  %654 = vmatpush1.msra.mxu0 %v653
  %v655 = vand.u32 %v59, 4294901760
  %656 = vmatprep.subr.mxu0 %v655
  %v657 = vand.u32 %v58, 4294901760
  %658 = vmatpush1.msra.mxu0 %v657
  %v659 = vand.u32 %v62, 4294901760
  %660 = vmatprep.subr.mxu0 %v659
  %v661 = vand.u32 %v61, 4294901760
  %662 = vmatpush1.msra.mxu0 %v661
  %v663 = vand.u32 %v65, 4294901760
  %664 = vmatprep.subr.mxu0 %v663
  %v665 = vand.u32 %v64, 4294901760
  %666 = vmatpush1.msra.mxu0 %v665
  %v667 = vand.u32 %v68, 4294901760
  %668 = vmatprep.subr.mxu0 %v667
  %v669 = vand.u32 %v67, 4294901760
  %670 = vmatpush1.msra.mxu0 %v669
  %v671 = vand.u32 %v71, 4294901760
  %672 = vmatprep.subr.mxu0 %v671
  %v673 = vand.u32 %v70, 4294901760
  %674 = vmatpush1.msra.mxu0 %v673
  %v675 = vand.u32 %v74, 4294901760
  %676 = vmatprep.subr.mxu0 %v675
  %v677 = vand.u32 %v73, 4294901760
  %678 = vmatpush1.msra.mxu0 %v677
  %v679 = vand.u32 %v77, 4294901760
  %680 = vmatprep.subr.mxu0 %v679
  %v681 = vand.u32 %v76, 4294901760
  %682 = vmatpush1.msra.mxu0 %v681
  %v683 = vand.u32 %v80, 4294901760
  %684 = vmatprep.subr.mxu0 %v683
  %v685 = vand.u32 %v79, 4294901760
  %686 = vmatpush1.msra.mxu0 %v685
  %v687 = vand.u32 %v83, 4294901760
  %688 = vmatprep.subr.mxu0 %v687
  %v689 = vand.u32 %v82, 4294901760
  %690 = vmatpush1.msra.mxu0 %v689
  %v691 = vand.u32 %v86, 4294901760
  %692 = vmatprep.subr.mxu0 %v691
  %v693 = vand.u32 %v85, 4294901760
  %694 = vmatpush1.msra.mxu0 %v693
  %v695 = vand.u32 %v89, 4294901760
  %696 = vmatprep.subr.mxu0 %v695
  %v697 = vand.u32 %v88, 4294901760
  %698 = vmatpush1.msra.mxu0 %v697
  %699 = vmatprep.subr.mxu0 0.0
  %700 = vmatpush1.msra.mxu0 0.0
  %701 = vmatprep.subr.mxu0 0.0
  %702 = vmatpush1.msra.mxu0 0.0
  %703 = vmatprep.subr.mxu0 0.0
  %704 = vmatpush1.msra.mxu0 0.0
  %705 = vmatprep.subr.mxu0 0.0
  %706 = vmatpush1.msra.mxu0 0.0
  %707 = vmatprep.subr.mxu0 0.0
  %708 = vmatpush1.msra.mxu0 0.0
  %709 = vmatprep.subr.mxu0 0.0
  %710 = vmatpush1.msra.mxu0 0.0
  %711 = vmatprep.subr.mxu0 0.0
  %712 = vmatpush1.msra.mxu0 0.0
  %713 = vmatprep.subr.mxu0 0.0
  %714 = vmatpush1.msra.mxu0 0.0
  %715 = vmatprep.subr.mxu0 0.0
  %716 = vmatpush1.msra.mxu0 0.0
  %717 = vmatprep.subr.mxu0 0.0
  %718 = vmatpush1.msra.mxu0 0.0
  %719 = vmatprep.subr.mxu0 0.0
  %720 = vmatpush1.msra.mxu0 0.0
  %721 = vmatprep.subr.mxu0 0.0
  %722 = vmatpush1.msra.mxu0 0.0
  %723 = vmatprep.subr.mxu0 0.0
  %724 = vmatpush1.msra.mxu0 0.0
  %725 = vmatprep.subr.mxu0 0.0
  %726 = vmatpush1.msra.mxu0 0.0
  %727 = vmatprep.subr.mxu0 0.0
  %728 = vmatpush1.msra.mxu0 0.0
  %729 = vmatprep.subr.mxu0 0.0
  %730 = vmatpush1.msra.mxu0 0.0
  %731 = vmatprep.mubr.f32.mxu0 0.0
  %v732 = vand.u32 %v141, 4294901760
  %v733 = vsub.f32 %v141, %v732
  %v734 = vand.u32 %v733, 4294901760
  %735 = vmatmul.mubr.f32.gmra.mrb[0].mxu0 %v734
  %v736 = vpop.f32.mrb[0].mxu0
  %v737 = vadd.f32 %v631, %v736
  %v738 = vpop.f32.mrb[0].mxu0
  %v739 = vadd.f32 %v633, %v738
  %740 = vdwg.mxu0
  %v741 = vand.u32 %v44, 4294901760
  %v742 = vsub.f32 %v44, %v741
  %v743 = vand.u32 %v742, 4294901760
  %744 = vmatprep.subr.mxu0 %v743
  %v745 = vand.u32 %v43, 4294901760
  %v746 = vsub.f32 %v43, %v745
  %v747 = vand.u32 %v746, 4294901760
  %748 = vmatpush1.msra.mxu0 %v747
  %v749 = vand.u32 %v47, 4294901760
  %v750 = vsub.f32 %v47, %v749
  %v751 = vand.u32 %v750, 4294901760
  %752 = vmatprep.subr.mxu0 %v751
  %v753 = vand.u32 %v46, 4294901760
  %v754 = vsub.f32 %v46, %v753
  %v755 = vand.u32 %v754, 4294901760
  %756 = vmatpush1.msra.mxu0 %v755
  %v757 = vand.u32 %v50, 4294901760
  %v758 = vsub.f32 %v50, %v757
  %v759 = vand.u32 %v758, 4294901760
  %760 = vmatprep.subr.mxu0 %v759
  %v761 = vand.u32 %v49, 4294901760
  %v762 = vsub.f32 %v49, %v761
  %v763 = vand.u32 %v762, 4294901760
  %764 = vmatpush1.msra.mxu0 %v763
  %v765 = vand.u32 %v53, 4294901760
  %v766 = vsub.f32 %v53, %v765
  %v767 = vand.u32 %v766, 4294901760
  %768 = vmatprep.subr.mxu0 %v767
  %v769 = vand.u32 %v52, 4294901760
  %v770 = vsub.f32 %v52, %v769
  %v771 = vand.u32 %v770, 4294901760
  %772 = vmatpush1.msra.mxu0 %v771
  %v773 = vand.u32 %v56, 4294901760
  %v774 = vsub.f32 %v56, %v773
  %v775 = vand.u32 %v774, 4294901760
  %776 = vmatprep.subr.mxu0 %v775
  %v777 = vand.u32 %v55, 4294901760
  %v778 = vsub.f32 %v55, %v777
  %v779 = vand.u32 %v778, 4294901760
  %780 = vmatpush1.msra.mxu0 %v779
  %v781 = vand.u32 %v59, 4294901760
  %v782 = vsub.f32 %v59, %v781
  %v783 = vand.u32 %v782, 4294901760
  %784 = vmatprep.subr.mxu0 %v783
  %v785 = vand.u32 %v58, 4294901760
  %v786 = vsub.f32 %v58, %v785
  %v787 = vand.u32 %v786, 4294901760
  %788 = vmatpush1.msra.mxu0 %v787
  %v789 = vand.u32 %v62, 4294901760
  %v790 = vsub.f32 %v62, %v789
  %v791 = vand.u32 %v790, 4294901760
  %792 = vmatprep.subr.mxu0 %v791
  %v793 = vand.u32 %v61, 4294901760
  %v794 = vsub.f32 %v61, %v793
  %v795 = vand.u32 %v794, 4294901760
  %796 = vmatpush1.msra.mxu0 %v795
  %v797 = vand.u32 %v65, 4294901760
  %v798 = vsub.f32 %v65, %v797
  %v799 = vand.u32 %v798, 4294901760
  %800 = vmatprep.subr.mxu0 %v799
  %v801 = vand.u32 %v64, 4294901760
  %v802 = vsub.f32 %v64, %v801
  %v803 = vand.u32 %v802, 4294901760
  %804 = vmatpush1.msra.mxu0 %v803
  %v805 = vand.u32 %v68, 4294901760
  %v806 = vsub.f32 %v68, %v805
  %v807 = vand.u32 %v806, 4294901760
  %808 = vmatprep.subr.mxu0 %v807
  %v809 = vand.u32 %v67, 4294901760
  %v810 = vsub.f32 %v67, %v809
  %v811 = vand.u32 %v810, 4294901760
  %812 = vmatpush1.msra.mxu0 %v811
  %v813 = vand.u32 %v71, 4294901760
  %v814 = vsub.f32 %v71, %v813
  %v815 = vand.u32 %v814, 4294901760
  %816 = vmatprep.subr.mxu0 %v815
  %v817 = vand.u32 %v70, 4294901760
  %v818 = vsub.f32 %v70, %v817
  %v819 = vand.u32 %v818, 4294901760
  %820 = vmatpush1.msra.mxu0 %v819
  %v821 = vand.u32 %v74, 4294901760
  %v822 = vsub.f32 %v74, %v821
  %v823 = vand.u32 %v822, 4294901760
  %824 = vmatprep.subr.mxu0 %v823
  %v825 = vand.u32 %v73, 4294901760
  %v826 = vsub.f32 %v73, %v825
  %v827 = vand.u32 %v826, 4294901760
  %828 = vmatpush1.msra.mxu0 %v827
  %v829 = vand.u32 %v77, 4294901760
  %v830 = vsub.f32 %v77, %v829
  %v831 = vand.u32 %v830, 4294901760
  %832 = vmatprep.subr.mxu0 %v831
  %v833 = vand.u32 %v76, 4294901760
  %v834 = vsub.f32 %v76, %v833
  %v835 = vand.u32 %v834, 4294901760
  %836 = vmatpush1.msra.mxu0 %v835
  %v837 = vand.u32 %v80, 4294901760
  %v838 = vsub.f32 %v80, %v837
  %v839 = vand.u32 %v838, 4294901760
  %840 = vmatprep.subr.mxu0 %v839
  %v841 = vand.u32 %v79, 4294901760
  %v842 = vsub.f32 %v79, %v841
  %v843 = vand.u32 %v842, 4294901760
  %844 = vmatpush1.msra.mxu0 %v843
  %v845 = vand.u32 %v83, 4294901760
  %v846 = vsub.f32 %v83, %v845
  %v847 = vand.u32 %v846, 4294901760
  %848 = vmatprep.subr.mxu0 %v847
  %v849 = vand.u32 %v82, 4294901760
  %v850 = vsub.f32 %v82, %v849
  %v851 = vand.u32 %v850, 4294901760
  %852 = vmatpush1.msra.mxu0 %v851
  %v853 = vand.u32 %v86, 4294901760
  %v854 = vsub.f32 %v86, %v853
  %v855 = vand.u32 %v854, 4294901760
  %856 = vmatprep.subr.mxu0 %v855
  %v857 = vand.u32 %v85, 4294901760
  %v858 = vsub.f32 %v85, %v857
  %v859 = vand.u32 %v858, 4294901760
  %860 = vmatpush1.msra.mxu0 %v859
  %v861 = vand.u32 %v89, 4294901760
  %v862 = vsub.f32 %v89, %v861
  %v863 = vand.u32 %v862, 4294901760
  %864 = vmatprep.subr.mxu0 %v863
  %v865 = vand.u32 %v88, 4294901760
  %v866 = vsub.f32 %v88, %v865
  %v867 = vand.u32 %v866, 4294901760
  %868 = vmatpush1.msra.mxu0 %v867
  %869 = vmatprep.subr.mxu0 0.0
  %870 = vmatpush1.msra.mxu0 0.0
  %871 = vmatprep.subr.mxu0 0.0
  %872 = vmatpush1.msra.mxu0 0.0
  %873 = vmatprep.subr.mxu0 0.0
  %874 = vmatpush1.msra.mxu0 0.0
  %875 = vmatprep.subr.mxu0 0.0
  %876 = vmatpush1.msra.mxu0 0.0
  %877 = vmatprep.subr.mxu0 0.0
  %878 = vmatpush1.msra.mxu0 0.0
  %879 = vmatprep.subr.mxu0 0.0
  %880 = vmatpush1.msra.mxu0 0.0
  %881 = vmatprep.subr.mxu0 0.0
  %882 = vmatpush1.msra.mxu0 0.0
  %883 = vmatprep.subr.mxu0 0.0
  %884 = vmatpush1.msra.mxu0 0.0
  %885 = vmatprep.subr.mxu0 0.0
  %886 = vmatpush1.msra.mxu0 0.0
  %887 = vmatprep.subr.mxu0 0.0
  %888 = vmatpush1.msra.mxu0 0.0
  %889 = vmatprep.subr.mxu0 0.0
  %890 = vmatpush1.msra.mxu0 0.0
  %891 = vmatprep.subr.mxu0 0.0
  %892 = vmatpush1.msra.mxu0 0.0
  %893 = vmatprep.subr.mxu0 0.0
  %894 = vmatpush1.msra.mxu0 0.0
  %895 = vmatprep.subr.mxu0 0.0
  %896 = vmatpush1.msra.mxu0 0.0
  %897 = vmatprep.subr.mxu0 0.0
  %898 = vmatpush1.msra.mxu0 0.0
  %899 = vmatprep.subr.mxu0 0.0
  %900 = vmatpush1.msra.mxu0 0.0
  %901 = vmatprep.mubr.f32.mxu0 0.0
  %v902 = vand.u32 %v141, 4294901760
  %903 = vmatmul.mubr.f32.gmra.mrb[0].mxu0 %v902
  %v904 = vpop.f32.mrb[0].mxu0
  %v905 = vadd.f32 %v737, %v904
  %v906 = vpop.f32.mrb[0].mxu0
  %v907 = vadd.f32 %v739, %v906
  %908 = vdwg.mxu0
  %v909 = vand.u32 %v44, 4294901760
  %910 = vmatprep.subr.mxu0 %v909
  %v911 = vand.u32 %v43, 4294901760
  %912 = vmatpush1.msra.mxu0 %v911
  %v913 = vand.u32 %v47, 4294901760
  %914 = vmatprep.subr.mxu0 %v913
  %v915 = vand.u32 %v46, 4294901760
  %916 = vmatpush1.msra.mxu0 %v915
  %v917 = vand.u32 %v50, 4294901760
  %918 = vmatprep.subr.mxu0 %v917
  %v919 = vand.u32 %v49, 4294901760
  %920 = vmatpush1.msra.mxu0 %v919
  %v921 = vand.u32 %v53, 4294901760
  %922 = vmatprep.subr.mxu0 %v921
  %v923 = vand.u32 %v52, 4294901760
  %924 = vmatpush1.msra.mxu0 %v923
  %v925 = vand.u32 %v56, 4294901760
  %926 = vmatprep.subr.mxu0 %v925
  %v927 = vand.u32 %v55, 4294901760
  %928 = vmatpush1.msra.mxu0 %v927
  %v929 = vand.u32 %v59, 4294901760
  %930 = vmatprep.subr.mxu0 %v929
  %v931 = vand.u32 %v58, 4294901760
  %932 = vmatpush1.msra.mxu0 %v931
  %v933 = vand.u32 %v62, 4294901760
  %934 = vmatprep.subr.mxu0 %v933
  %v935 = vand.u32 %v61, 4294901760
  %936 = vmatpush1.msra.mxu0 %v935
  %v937 = vand.u32 %v65, 4294901760
  %938 = vmatprep.subr.mxu0 %v937
  %v939 = vand.u32 %v64, 4294901760
  %940 = vmatpush1.msra.mxu0 %v939
  %v941 = vand.u32 %v68, 4294901760
  %942 = vmatprep.subr.mxu0 %v941
  %v943 = vand.u32 %v67, 4294901760
  %944 = vmatpush1.msra.mxu0 %v943
  %v945 = vand.u32 %v71, 4294901760
  %946 = vmatprep.subr.mxu0 %v945
  %v947 = vand.u32 %v70, 4294901760
  %948 = vmatpush1.msra.mxu0 %v947
  %v949 = vand.u32 %v74, 4294901760
  %950 = vmatprep.subr.mxu0 %v949
  %v951 = vand.u32 %v73, 4294901760
  %952 = vmatpush1.msra.mxu0 %v951
  %v953 = vand.u32 %v77, 4294901760
  %954 = vmatprep.subr.mxu0 %v953
  %v955 = vand.u32 %v76, 4294901760
  %956 = vmatpush1.msra.mxu0 %v955
  %v957 = vand.u32 %v80, 4294901760
  %958 = vmatprep.subr.mxu0 %v957
  %v959 = vand.u32 %v79, 4294901760
  %960 = vmatpush1.msra.mxu0 %v959
  %v961 = vand.u32 %v83, 4294901760
  %962 = vmatprep.subr.mxu0 %v961
  %v963 = vand.u32 %v82, 4294901760
  %964 = vmatpush1.msra.mxu0 %v963
  %v965 = vand.u32 %v86, 4294901760
  %966 = vmatprep.subr.mxu0 %v965
  %v967 = vand.u32 %v85, 4294901760
  %968 = vmatpush1.msra.mxu0 %v967
  %v969 = vand.u32 %v89, 4294901760
  %970 = vmatprep.subr.mxu0 %v969
  %v971 = vand.u32 %v88, 4294901760
  %972 = vmatpush1.msra.mxu0 %v971
  %973 = vmatprep.subr.mxu0 0.0
  %974 = vmatpush1.msra.mxu0 0.0
  %975 = vmatprep.subr.mxu0 0.0
  %976 = vmatpush1.msra.mxu0 0.0
  %977 = vmatprep.subr.mxu0 0.0
  %978 = vmatpush1.msra.mxu0 0.0
  %979 = vmatprep.subr.mxu0 0.0
  %980 = vmatpush1.msra.mxu0 0.0
  %981 = vmatprep.subr.mxu0 0.0
  %982 = vmatpush1.msra.mxu0 0.0
  %983 = vmatprep.subr.mxu0 0.0
  %984 = vmatpush1.msra.mxu0 0.0
  %985 = vmatprep.subr.mxu0 0.0
  %986 = vmatpush1.msra.mxu0 0.0
  %987 = vmatprep.subr.mxu0 0.0
  %988 = vmatpush1.msra.mxu0 0.0
  %989 = vmatprep.subr.mxu0 0.0
  %990 = vmatpush1.msra.mxu0 0.0
  %991 = vmatprep.subr.mxu0 0.0
  %992 = vmatpush1.msra.mxu0 0.0
  %993 = vmatprep.subr.mxu0 0.0
  %994 = vmatpush1.msra.mxu0 0.0
  %995 = vmatprep.subr.mxu0 0.0
  %996 = vmatpush1.msra.mxu0 0.0
  %997 = vmatprep.subr.mxu0 0.0
  %998 = vmatpush1.msra.mxu0 0.0
  %999 = vmatprep.subr.mxu0 0.0
  %1000 = vmatpush1.msra.mxu0 0.0
  %1001 = vmatprep.subr.mxu0 0.0
  %1002 = vmatpush1.msra.mxu0 0.0
  %1003 = vmatprep.subr.mxu0 0.0
  %1004 = vmatpush1.msra.mxu0 0.0
  %1005 = vmatprep.mubr.f32.mxu0 0.0
  %v1006 = vand.u32 %v141, 4294901760
  %1007 = vmatmul.mubr.f32.gmra.mrb[0].mxu0 %v1006
  %v1008 = vpop.f32.mrb[0].mxu0
  %v1009 = vadd.f32 %v905, %v1008
  %v1010 = vpop.f32.mrb[0].mxu0
  %v1011 = vadd.f32 %v907, %v1010
  %1012 = vdwg.mxu0
  %1013 = vmatprep.subr.mxu0 0.0
  %v1014 = vand.u32 %v45, 4294901760
  %1015 = vmatpush1.msra.mxu0 %v1014
  %1016 = vmatprep.subr.mxu0 0.0
  %v1017 = vand.u32 %v48, 4294901760
  %1018 = vmatpush1.msra.mxu0 %v1017
  %1019 = vmatprep.subr.mxu0 0.0
  %v1020 = vand.u32 %v51, 4294901760
  %1021 = vmatpush1.msra.mxu0 %v1020
  %1022 = vmatprep.subr.mxu0 0.0
  %v1023 = vand.u32 %v54, 4294901760
  %1024 = vmatpush1.msra.mxu0 %v1023
  %1025 = vmatprep.subr.mxu0 0.0
  %v1026 = vand.u32 %v57, 4294901760
  %1027 = vmatpush1.msra.mxu0 %v1026
  %1028 = vmatprep.subr.mxu0 0.0
  %v1029 = vand.u32 %v60, 4294901760
  %1030 = vmatpush1.msra.mxu0 %v1029
  %1031 = vmatprep.subr.mxu0 0.0
  %v1032 = vand.u32 %v63, 4294901760
  %1033 = vmatpush1.msra.mxu0 %v1032
  %1034 = vmatprep.subr.mxu0 0.0
  %v1035 = vand.u32 %v66, 4294901760
  %1036 = vmatpush1.msra.mxu0 %v1035
  %1037 = vmatprep.subr.mxu0 0.0
  %v1038 = vand.u32 %v69, 4294901760
  %1039 = vmatpush1.msra.mxu0 %v1038
  %1040 = vmatprep.subr.mxu0 0.0
  %v1041 = vand.u32 %v72, 4294901760
  %1042 = vmatpush1.msra.mxu0 %v1041
  %1043 = vmatprep.subr.mxu0 0.0
  %v1044 = vand.u32 %v75, 4294901760
  %1045 = vmatpush1.msra.mxu0 %v1044
  %1046 = vmatprep.subr.mxu0 0.0
  %v1047 = vand.u32 %v78, 4294901760
  %1048 = vmatpush1.msra.mxu0 %v1047
  %1049 = vmatprep.subr.mxu0 0.0
  %v1050 = vand.u32 %v81, 4294901760
  %1051 = vmatpush1.msra.mxu0 %v1050
  %1052 = vmatprep.subr.mxu0 0.0
  %v1053 = vand.u32 %v84, 4294901760
  %1054 = vmatpush1.msra.mxu0 %v1053
  %1055 = vmatprep.subr.mxu0 0.0
  %v1056 = vand.u32 %v87, 4294901760
  %1057 = vmatpush1.msra.mxu0 %v1056
  %1058 = vmatprep.subr.mxu0 0.0
  %v1059 = vand.u32 %v90, 4294901760
  %1060 = vmatpush1.msra.mxu0 %v1059
  %1061 = vmatprep.subr.mxu0 0.0
  %1062 = vmatpush1.msra.mxu0 0.0
  %1063 = vmatprep.subr.mxu0 0.0
  %1064 = vmatpush1.msra.mxu0 0.0
  %1065 = vmatprep.subr.mxu0 0.0
  %1066 = vmatpush1.msra.mxu0 0.0
  %1067 = vmatprep.subr.mxu0 0.0
  %1068 = vmatpush1.msra.mxu0 0.0
  %1069 = vmatprep.subr.mxu0 0.0
  %1070 = vmatpush1.msra.mxu0 0.0
  %1071 = vmatprep.subr.mxu0 0.0
  %1072 = vmatpush1.msra.mxu0 0.0
  %1073 = vmatprep.subr.mxu0 0.0
  %1074 = vmatpush1.msra.mxu0 0.0
  %1075 = vmatprep.subr.mxu0 0.0
  %1076 = vmatpush1.msra.mxu0 0.0
  %1077 = vmatprep.subr.mxu0 0.0
  %1078 = vmatpush1.msra.mxu0 0.0
  %1079 = vmatprep.subr.mxu0 0.0
  %1080 = vmatpush1.msra.mxu0 0.0
  %1081 = vmatprep.subr.mxu0 0.0
  %1082 = vmatpush1.msra.mxu0 0.0
  %1083 = vmatprep.subr.mxu0 0.0
  %1084 = vmatpush1.msra.mxu0 0.0
  %1085 = vmatprep.subr.mxu0 0.0
  %1086 = vmatpush1.msra.mxu0 0.0
  %1087 = vmatprep.subr.mxu0 0.0
  %1088 = vmatpush1.msra.mxu0 0.0
  %1089 = vmatprep.subr.mxu0 0.0
  %1090 = vmatpush1.msra.mxu0 0.0
  %1091 = vmatprep.subr.mxu0 0.0
  %1092 = vmatpush1.msra.mxu0 0.0
  %1093 = vmatprep.mubr.f32.mxu0 0.0
  %v1094 = vand.u32 %v141, 4294901760
  %v1095 = vsub.f32 %v141, %v1094
  %v1096 = vand.u32 %v1095, 4294901760
  %v1097 = vsub.f32 %v1095, %v1096
  %v1098 = vand.u32 %v1097, 4294901760
  %1099 = vmatmul.mubr.f32.gmra.mrb[0].mxu0 %v1098
  %v1100 = vpop.f32.mrb[0].mxu0
  %v1101 = vadd.f32 %v154, %v1100
  %v1102 = vpop.f32.mrb[0].mxu0
  %1103 = vdwg.mxu0
  %1104 = vmatprep.subr.mxu0 0.0
  %v1105 = vand.u32 %v45, 4294901760
  %v1106 = vsub.f32 %v45, %v1105
  %v1107 = vand.u32 %v1106, 4294901760
  %v1108 = vsub.f32 %v1106, %v1107
  %v1109 = vand.u32 %v1108, 4294901760
  %1110 = vmatpush1.msra.mxu0 %v1109
  %1111 = vmatprep.subr.mxu0 0.0
  %v1112 = vand.u32 %v48, 4294901760
  %v1113 = vsub.f32 %v48, %v1112
  %v1114 = vand.u32 %v1113, 4294901760
  %v1115 = vsub.f32 %v1113, %v1114
  %v1116 = vand.u32 %v1115, 4294901760
  %1117 = vmatpush1.msra.mxu0 %v1116
  %1118 = vmatprep.subr.mxu0 0.0
  %v1119 = vand.u32 %v51, 4294901760
  %v1120 = vsub.f32 %v51, %v1119
  %v1121 = vand.u32 %v1120, 4294901760
  %v1122 = vsub.f32 %v1120, %v1121
  %v1123 = vand.u32 %v1122, 4294901760
  %1124 = vmatpush1.msra.mxu0 %v1123
  %1125 = vmatprep.subr.mxu0 0.0
  %v1126 = vand.u32 %v54, 4294901760
  %v1127 = vsub.f32 %v54, %v1126
  %v1128 = vand.u32 %v1127, 4294901760
  %v1129 = vsub.f32 %v1127, %v1128
  %v1130 = vand.u32 %v1129, 4294901760
  %1131 = vmatpush1.msra.mxu0 %v1130
  %1132 = vmatprep.subr.mxu0 0.0
  %v1133 = vand.u32 %v57, 4294901760
  %v1134 = vsub.f32 %v57, %v1133
  %v1135 = vand.u32 %v1134, 4294901760
  %v1136 = vsub.f32 %v1134, %v1135
  %v1137 = vand.u32 %v1136, 4294901760
  %1138 = vmatpush1.msra.mxu0 %v1137
  %1139 = vmatprep.subr.mxu0 0.0
  %v1140 = vand.u32 %v60, 4294901760
  %v1141 = vsub.f32 %v60, %v1140
  %v1142 = vand.u32 %v1141, 4294901760
  %v1143 = vsub.f32 %v1141, %v1142
  %v1144 = vand.u32 %v1143, 4294901760
  %1145 = vmatpush1.msra.mxu0 %v1144
  %1146 = vmatprep.subr.mxu0 0.0
  %v1147 = vand.u32 %v63, 4294901760
  %v1148 = vsub.f32 %v63, %v1147
  %v1149 = vand.u32 %v1148, 4294901760
  %v1150 = vsub.f32 %v1148, %v1149
  %v1151 = vand.u32 %v1150, 4294901760
  %1152 = vmatpush1.msra.mxu0 %v1151
  %1153 = vmatprep.subr.mxu0 0.0
  %v1154 = vand.u32 %v66, 4294901760
  %v1155 = vsub.f32 %v66, %v1154
  %v1156 = vand.u32 %v1155, 4294901760
  %v1157 = vsub.f32 %v1155, %v1156
  %v1158 = vand.u32 %v1157, 4294901760
  %1159 = vmatpush1.msra.mxu0 %v1158
  %1160 = vmatprep.subr.mxu0 0.0
  %v1161 = vand.u32 %v69, 4294901760
  %v1162 = vsub.f32 %v69, %v1161
  %v1163 = vand.u32 %v1162, 4294901760
  %v1164 = vsub.f32 %v1162, %v1163
  %v1165 = vand.u32 %v1164, 4294901760
  %1166 = vmatpush1.msra.mxu0 %v1165
  %1167 = vmatprep.subr.mxu0 0.0
  %v1168 = vand.u32 %v72, 4294901760
  %v1169 = vsub.f32 %v72, %v1168
  %v1170 = vand.u32 %v1169, 4294901760
  %v1171 = vsub.f32 %v1169, %v1170
  %v1172 = vand.u32 %v1171, 4294901760
  %1173 = vmatpush1.msra.mxu0 %v1172
  %1174 = vmatprep.subr.mxu0 0.0
  %v1175 = vand.u32 %v75, 4294901760
  %v1176 = vsub.f32 %v75, %v1175
  %v1177 = vand.u32 %v1176, 4294901760
  %v1178 = vsub.f32 %v1176, %v1177
  %v1179 = vand.u32 %v1178, 4294901760
  %1180 = vmatpush1.msra.mxu0 %v1179
  %1181 = vmatprep.subr.mxu0 0.0
  %v1182 = vand.u32 %v78, 4294901760
  %v1183 = vsub.f32 %v78, %v1182
  %v1184 = vand.u32 %v1183, 4294901760
  %v1185 = vsub.f32 %v1183, %v1184
  %v1186 = vand.u32 %v1185, 4294901760
  %1187 = vmatpush1.msra.mxu0 %v1186
  %1188 = vmatprep.subr.mxu0 0.0
  %v1189 = vand.u32 %v81, 4294901760
  %v1190 = vsub.f32 %v81, %v1189
  %v1191 = vand.u32 %v1190, 4294901760
  %v1192 = vsub.f32 %v1190, %v1191
  %v1193 = vand.u32 %v1192, 4294901760
  %1194 = vmatpush1.msra.mxu0 %v1193
  %1195 = vmatprep.subr.mxu0 0.0
  %v1196 = vand.u32 %v84, 4294901760
  %v1197 = vsub.f32 %v84, %v1196
  %v1198 = vand.u32 %v1197, 4294901760
  %v1199 = vsub.f32 %v1197, %v1198
  %v1200 = vand.u32 %v1199, 4294901760
  %1201 = vmatpush1.msra.mxu0 %v1200
  %1202 = vmatprep.subr.mxu0 0.0
  %v1203 = vand.u32 %v87, 4294901760
  %v1204 = vsub.f32 %v87, %v1203
  %v1205 = vand.u32 %v1204, 4294901760
  %v1206 = vsub.f32 %v1204, %v1205
  %v1207 = vand.u32 %v1206, 4294901760
  %1208 = vmatpush1.msra.mxu0 %v1207
  %1209 = vmatprep.subr.mxu0 0.0
  %v1210 = vand.u32 %v90, 4294901760
  %v1211 = vsub.f32 %v90, %v1210
  %v1212 = vand.u32 %v1211, 4294901760
  %v1213 = vsub.f32 %v1211, %v1212
  %v1214 = vand.u32 %v1213, 4294901760
  %1215 = vmatpush1.msra.mxu0 %v1214
  %1216 = vmatprep.subr.mxu0 0.0
  %1217 = vmatpush1.msra.mxu0 0.0
  %1218 = vmatprep.subr.mxu0 0.0
  %1219 = vmatpush1.msra.mxu0 0.0
  %1220 = vmatprep.subr.mxu0 0.0
  %1221 = vmatpush1.msra.mxu0 0.0
  %1222 = vmatprep.subr.mxu0 0.0
  %1223 = vmatpush1.msra.mxu0 0.0
  %1224 = vmatprep.subr.mxu0 0.0
  %1225 = vmatpush1.msra.mxu0 0.0
  %1226 = vmatprep.subr.mxu0 0.0
  %1227 = vmatpush1.msra.mxu0 0.0
  %1228 = vmatprep.subr.mxu0 0.0
  %1229 = vmatpush1.msra.mxu0 0.0
  %1230 = vmatprep.subr.mxu0 0.0
  %1231 = vmatpush1.msra.mxu0 0.0
  %1232 = vmatprep.subr.mxu0 0.0
  %1233 = vmatpush1.msra.mxu0 0.0
  %1234 = vmatprep.subr.mxu0 0.0
  %1235 = vmatpush1.msra.mxu0 0.0
  %1236 = vmatprep.subr.mxu0 0.0
  %1237 = vmatpush1.msra.mxu0 0.0
  %1238 = vmatprep.subr.mxu0 0.0
  %1239 = vmatpush1.msra.mxu0 0.0
  %1240 = vmatprep.subr.mxu0 0.0
  %1241 = vmatpush1.msra.mxu0 0.0
  %1242 = vmatprep.subr.mxu0 0.0
  %1243 = vmatpush1.msra.mxu0 0.0
  %1244 = vmatprep.subr.mxu0 0.0
  %1245 = vmatpush1.msra.mxu0 0.0
  %1246 = vmatprep.subr.mxu0 0.0
  %1247 = vmatpush1.msra.mxu0 0.0
  %1248 = vmatprep.mubr.f32.mxu0 0.0
  %v1249 = vand.u32 %v141, 4294901760
  %1250 = vmatmul.mubr.f32.gmra.mrb[0].mxu0 %v1249
  %v1251 = vpop.f32.mrb[0].mxu0
  %v1252 = vadd.f32 %v1101, %v1251
  %v1253 = vpop.f32.mrb[0].mxu0
  %1254 = vdwg.mxu0
  %1255 = vmatprep.subr.mxu0 0.0
  %v1256 = vand.u32 %v45, 4294901760
  %v1257 = vsub.f32 %v45, %v1256
  %1258 = vmatpush1.msra.mxu0 %v1257
  %1259 = vmatprep.subr.mxu0 0.0
  %v1260 = vand.u32 %v48, 4294901760
  %v1261 = vsub.f32 %v48, %v1260
  %1262 = vmatpush1.msra.mxu0 %v1261
  %1263 = vmatprep.subr.mxu0 0.0
  %v1264 = vand.u32 %v51, 4294901760
  %v1265 = vsub.f32 %v51, %v1264
  %1266 = vmatpush1.msra.mxu0 %v1265
  %1267 = vmatprep.subr.mxu0 0.0
  %v1268 = vand.u32 %v54, 4294901760
  %v1269 = vsub.f32 %v54, %v1268
  %1270 = vmatpush1.msra.mxu0 %v1269
  %1271 = vmatprep.subr.mxu0 0.0
  %v1272 = vand.u32 %v57, 4294901760
  %v1273 = vsub.f32 %v57, %v1272
  %1274 = vmatpush1.msra.mxu0 %v1273
  %1275 = vmatprep.subr.mxu0 0.0
  %v1276 = vand.u32 %v60, 4294901760
  %v1277 = vsub.f32 %v60, %v1276
  %1278 = vmatpush1.msra.mxu0 %v1277
  %1279 = vmatprep.subr.mxu0 0.0
  %v1280 = vand.u32 %v63, 4294901760
  %v1281 = vsub.f32 %v63, %v1280
  %1282 = vmatpush1.msra.mxu0 %v1281
  %1283 = vmatprep.subr.mxu0 0.0
  %v1284 = vand.u32 %v66, 4294901760
  %v1285 = vsub.f32 %v66, %v1284
  %1286 = vmatpush1.msra.mxu0 %v1285
  %1287 = vmatprep.subr.mxu0 0.0
  %v1288 = vand.u32 %v69, 4294901760
  %v1289 = vsub.f32 %v69, %v1288
  %1290 = vmatpush1.msra.mxu0 %v1289
  %1291 = vmatprep.subr.mxu0 0.0
  %v1292 = vand.u32 %v72, 4294901760
  %v1293 = vsub.f32 %v72, %v1292
  %1294 = vmatpush1.msra.mxu0 %v1293
  %1295 = vmatprep.subr.mxu0 0.0
  %v1296 = vand.u32 %v75, 4294901760
  %v1297 = vsub.f32 %v75, %v1296
  %1298 = vmatpush1.msra.mxu0 %v1297
  %1299 = vmatprep.subr.mxu0 0.0
  %v1300 = vand.u32 %v78, 4294901760
  %v1301 = vsub.f32 %v78, %v1300
  %1302 = vmatpush1.msra.mxu0 %v1301
  %1303 = vmatprep.subr.mxu0 0.0
  %v1304 = vand.u32 %v81, 4294901760
  %v1305 = vsub.f32 %v81, %v1304
  %1306 = vmatpush1.msra.mxu0 %v1305
  %1307 = vmatprep.subr.mxu0 0.0
  %v1308 = vand.u32 %v84, 4294901760
  %v1309 = vsub.f32 %v84, %v1308
  %1310 = vmatpush1.msra.mxu0 %v1309
  %1311 = vmatprep.subr.mxu0 0.0
  %v1312 = vand.u32 %v87, 4294901760
  %v1313 = vsub.f32 %v87, %v1312
  %1314 = vmatpush1.msra.mxu0 %v1313
  %1315 = vmatprep.subr.mxu0 0.0
  %v1316 = vand.u32 %v90, 4294901760
  %v1317 = vsub.f32 %v90, %v1316
  %1318 = vmatpush1.msra.mxu0 %v1317
  %1319 = vmatprep.subr.mxu0 0.0
  %1320 = vmatpush1.msra.mxu0 0.0
  %1321 = vmatprep.subr.mxu0 0.0
  %1322 = vmatpush1.msra.mxu0 0.0
  %1323 = vmatprep.subr.mxu0 0.0
  %1324 = vmatpush1.msra.mxu0 0.0
  %1325 = vmatprep.subr.mxu0 0.0
  %1326 = vmatpush1.msra.mxu0 0.0
  %1327 = vmatprep.subr.mxu0 0.0
  %1328 = vmatpush1.msra.mxu0 0.0
  %1329 = vmatprep.subr.mxu0 0.0
  %1330 = vmatpush1.msra.mxu0 0.0
  %1331 = vmatprep.subr.mxu0 0.0
  %1332 = vmatpush1.msra.mxu0 0.0
  %1333 = vmatprep.subr.mxu0 0.0
  %1334 = vmatpush1.msra.mxu0 0.0
  %1335 = vmatprep.subr.mxu0 0.0
  %1336 = vmatpush1.msra.mxu0 0.0
  %1337 = vmatprep.subr.mxu0 0.0
  %1338 = vmatpush1.msra.mxu0 0.0
  %1339 = vmatprep.subr.mxu0 0.0
  %1340 = vmatpush1.msra.mxu0 0.0
  %1341 = vmatprep.subr.mxu0 0.0
  %1342 = vmatpush1.msra.mxu0 0.0
  %1343 = vmatprep.subr.mxu0 0.0
  %1344 = vmatpush1.msra.mxu0 0.0
  %1345 = vmatprep.subr.mxu0 0.0
  %1346 = vmatpush1.msra.mxu0 0.0
  %1347 = vmatprep.subr.mxu0 0.0
  %1348 = vmatpush1.msra.mxu0 0.0
  %1349 = vmatprep.subr.mxu0 0.0
  %1350 = vmatpush1.msra.mxu0 0.0
  %1351 = vmatprep.mubr.f32.mxu0 0.0
  %v1352 = vand.u32 %v141, 4294901760
  %v1353 = vsub.f32 %v141, %v1352
  %1354 = vmatmul.mubr.f32.gmra.mrb[0].mxu0 %v1353
  %v1355 = vpop.f32.mrb[0].mxu0
  %v1356 = vadd.f32 %v1252, %v1355
  %v1357 = vpop.f32.mrb[0].mxu0
  %1358 = vdwg.mxu0
  %1359 = vmatprep.subr.mxu0 0.0
  %v1360 = vand.u32 %v45, 4294901760
  %1361 = vmatpush1.msra.mxu0 %v1360
  %1362 = vmatprep.subr.mxu0 0.0
  %v1363 = vand.u32 %v48, 4294901760
  %1364 = vmatpush1.msra.mxu0 %v1363
  %1365 = vmatprep.subr.mxu0 0.0
  %v1366 = vand.u32 %v51, 4294901760
  %1367 = vmatpush1.msra.mxu0 %v1366
  %1368 = vmatprep.subr.mxu0 0.0
  %v1369 = vand.u32 %v54, 4294901760
  %1370 = vmatpush1.msra.mxu0 %v1369
  %1371 = vmatprep.subr.mxu0 0.0
  %v1372 = vand.u32 %v57, 4294901760
  %1373 = vmatpush1.msra.mxu0 %v1372
  %1374 = vmatprep.subr.mxu0 0.0
  %v1375 = vand.u32 %v60, 4294901760
  %1376 = vmatpush1.msra.mxu0 %v1375
  %1377 = vmatprep.subr.mxu0 0.0
  %v1378 = vand.u32 %v63, 4294901760
  %1379 = vmatpush1.msra.mxu0 %v1378
  %1380 = vmatprep.subr.mxu0 0.0
  %v1381 = vand.u32 %v66, 4294901760
  %1382 = vmatpush1.msra.mxu0 %v1381
  %1383 = vmatprep.subr.mxu0 0.0
  %v1384 = vand.u32 %v69, 4294901760
  %1385 = vmatpush1.msra.mxu0 %v1384
  %1386 = vmatprep.subr.mxu0 0.0
  %v1387 = vand.u32 %v72, 4294901760
  %1388 = vmatpush1.msra.mxu0 %v1387
  %1389 = vmatprep.subr.mxu0 0.0
  %v1390 = vand.u32 %v75, 4294901760
  %1391 = vmatpush1.msra.mxu0 %v1390
  %1392 = vmatprep.subr.mxu0 0.0
  %v1393 = vand.u32 %v78, 4294901760
  %1394 = vmatpush1.msra.mxu0 %v1393
  %1395 = vmatprep.subr.mxu0 0.0
  %v1396 = vand.u32 %v81, 4294901760
  %1397 = vmatpush1.msra.mxu0 %v1396
  %1398 = vmatprep.subr.mxu0 0.0
  %v1399 = vand.u32 %v84, 4294901760
  %1400 = vmatpush1.msra.mxu0 %v1399
  %1401 = vmatprep.subr.mxu0 0.0
  %v1402 = vand.u32 %v87, 4294901760
  %1403 = vmatpush1.msra.mxu0 %v1402
  %1404 = vmatprep.subr.mxu0 0.0
  %v1405 = vand.u32 %v90, 4294901760
  %1406 = vmatpush1.msra.mxu0 %v1405
  %1407 = vmatprep.subr.mxu0 0.0
  %1408 = vmatpush1.msra.mxu0 0.0
  %1409 = vmatprep.subr.mxu0 0.0
  %1410 = vmatpush1.msra.mxu0 0.0
  %1411 = vmatprep.subr.mxu0 0.0
  %1412 = vmatpush1.msra.mxu0 0.0
  %1413 = vmatprep.subr.mxu0 0.0
  %1414 = vmatpush1.msra.mxu0 0.0
  %1415 = vmatprep.subr.mxu0 0.0
  %1416 = vmatpush1.msra.mxu0 0.0
  %1417 = vmatprep.subr.mxu0 0.0
  %1418 = vmatpush1.msra.mxu0 0.0
  %1419 = vmatprep.subr.mxu0 0.0
  %1420 = vmatpush1.msra.mxu0 0.0
  %1421 = vmatprep.subr.mxu0 0.0
  %1422 = vmatpush1.msra.mxu0 0.0
  %1423 = vmatprep.subr.mxu0 0.0
  %1424 = vmatpush1.msra.mxu0 0.0
  %1425 = vmatprep.subr.mxu0 0.0
  %1426 = vmatpush1.msra.mxu0 0.0
  %1427 = vmatprep.subr.mxu0 0.0
  %1428 = vmatpush1.msra.mxu0 0.0
  %1429 = vmatprep.subr.mxu0 0.0
  %1430 = vmatpush1.msra.mxu0 0.0
  %1431 = vmatprep.subr.mxu0 0.0
  %1432 = vmatpush1.msra.mxu0 0.0
  %1433 = vmatprep.subr.mxu0 0.0
  %1434 = vmatpush1.msra.mxu0 0.0
  %1435 = vmatprep.subr.mxu0 0.0
  %1436 = vmatpush1.msra.mxu0 0.0
  %1437 = vmatprep.subr.mxu0 0.0
  %1438 = vmatpush1.msra.mxu0 0.0
  %1439 = vmatprep.mubr.f32.mxu0 0.0
  %v1440 = vand.u32 %v141, 4294901760
  %v1441 = vsub.f32 %v141, %v1440
  %v1442 = vand.u32 %v1441, 4294901760
  %1443 = vmatmul.mubr.f32.gmra.mrb[0].mxu0 %v1442
  %v1444 = vpop.f32.mrb[0].mxu0
  %v1445 = vadd.f32 %v1356, %v1444
  %v1446 = vpop.f32.mrb[0].mxu0
  %1447 = vdwg.mxu0
  %1448 = vmatprep.subr.mxu0 0.0
  %v1449 = vand.u32 %v45, 4294901760
  %v1450 = vsub.f32 %v45, %v1449
  %v1451 = vand.u32 %v1450, 4294901760
  %1452 = vmatpush1.msra.mxu0 %v1451
  %1453 = vmatprep.subr.mxu0 0.0
  %v1454 = vand.u32 %v48, 4294901760
  %v1455 = vsub.f32 %v48, %v1454
  %v1456 = vand.u32 %v1455, 4294901760
  %1457 = vmatpush1.msra.mxu0 %v1456
  %1458 = vmatprep.subr.mxu0 0.0
  %v1459 = vand.u32 %v51, 4294901760
  %v1460 = vsub.f32 %v51, %v1459
  %v1461 = vand.u32 %v1460, 4294901760
  %1462 = vmatpush1.msra.mxu0 %v1461
  %1463 = vmatprep.subr.mxu0 0.0
  %v1464 = vand.u32 %v54, 4294901760
  %v1465 = vsub.f32 %v54, %v1464
  %v1466 = vand.u32 %v1465, 4294901760
  %1467 = vmatpush1.msra.mxu0 %v1466
  %1468 = vmatprep.subr.mxu0 0.0
  %v1469 = vand.u32 %v57, 4294901760
  %v1470 = vsub.f32 %v57, %v1469
  %v1471 = vand.u32 %v1470, 4294901760
  %1472 = vmatpush1.msra.mxu0 %v1471
  %1473 = vmatprep.subr.mxu0 0.0
  %v1474 = vand.u32 %v60, 4294901760
  %v1475 = vsub.f32 %v60, %v1474
  %v1476 = vand.u32 %v1475, 4294901760
  %1477 = vmatpush1.msra.mxu0 %v1476
  %1478 = vmatprep.subr.mxu0 0.0
  %v1479 = vand.u32 %v63, 4294901760
  %v1480 = vsub.f32 %v63, %v1479
  %v1481 = vand.u32 %v1480, 4294901760
  %1482 = vmatpush1.msra.mxu0 %v1481
  %1483 = vmatprep.subr.mxu0 0.0
  %v1484 = vand.u32 %v66, 4294901760
  %v1485 = vsub.f32 %v66, %v1484
  %v1486 = vand.u32 %v1485, 4294901760
  %1487 = vmatpush1.msra.mxu0 %v1486
  %1488 = vmatprep.subr.mxu0 0.0
  %v1489 = vand.u32 %v69, 4294901760
  %v1490 = vsub.f32 %v69, %v1489
  %v1491 = vand.u32 %v1490, 4294901760
  %1492 = vmatpush1.msra.mxu0 %v1491
  %1493 = vmatprep.subr.mxu0 0.0
  %v1494 = vand.u32 %v72, 4294901760
  %v1495 = vsub.f32 %v72, %v1494
  %v1496 = vand.u32 %v1495, 4294901760
  %1497 = vmatpush1.msra.mxu0 %v1496
  %1498 = vmatprep.subr.mxu0 0.0
  %v1499 = vand.u32 %v75, 4294901760
  %v1500 = vsub.f32 %v75, %v1499
  %v1501 = vand.u32 %v1500, 4294901760
  %1502 = vmatpush1.msra.mxu0 %v1501
  %1503 = vmatprep.subr.mxu0 0.0
  %v1504 = vand.u32 %v78, 4294901760
  %v1505 = vsub.f32 %v78, %v1504
  %v1506 = vand.u32 %v1505, 4294901760
  %1507 = vmatpush1.msra.mxu0 %v1506
  %1508 = vmatprep.subr.mxu0 0.0
  %v1509 = vand.u32 %v81, 4294901760
  %v1510 = vsub.f32 %v81, %v1509
  %v1511 = vand.u32 %v1510, 4294901760
  %1512 = vmatpush1.msra.mxu0 %v1511
  %1513 = vmatprep.subr.mxu0 0.0
  %v1514 = vand.u32 %v84, 4294901760
  %v1515 = vsub.f32 %v84, %v1514
  %v1516 = vand.u32 %v1515, 4294901760
  %1517 = vmatpush1.msra.mxu0 %v1516
  %1518 = vmatprep.subr.mxu0 0.0
  %v1519 = vand.u32 %v87, 4294901760
  %v1520 = vsub.f32 %v87, %v1519
  %v1521 = vand.u32 %v1520, 4294901760
  %1522 = vmatpush1.msra.mxu0 %v1521
  %1523 = vmatprep.subr.mxu0 0.0
  %v1524 = vand.u32 %v90, 4294901760
  %v1525 = vsub.f32 %v90, %v1524
  %v1526 = vand.u32 %v1525, 4294901760
  %1527 = vmatpush1.msra.mxu0 %v1526
  %1528 = vmatprep.subr.mxu0 0.0
  %1529 = vmatpush1.msra.mxu0 0.0
  %1530 = vmatprep.subr.mxu0 0.0
  %1531 = vmatpush1.msra.mxu0 0.0
  %1532 = vmatprep.subr.mxu0 0.0
  %1533 = vmatpush1.msra.mxu0 0.0
  %1534 = vmatprep.subr.mxu0 0.0
  %1535 = vmatpush1.msra.mxu0 0.0
  %1536 = vmatprep.subr.mxu0 0.0
  %1537 = vmatpush1.msra.mxu0 0.0
  %1538 = vmatprep.subr.mxu0 0.0
  %1539 = vmatpush1.msra.mxu0 0.0
  %1540 = vmatprep.subr.mxu0 0.0
  %1541 = vmatpush1.msra.mxu0 0.0
  %1542 = vmatprep.subr.mxu0 0.0
  %1543 = vmatpush1.msra.mxu0 0.0
  %1544 = vmatprep.subr.mxu0 0.0
  %1545 = vmatpush1.msra.mxu0 0.0
  %1546 = vmatprep.subr.mxu0 0.0
  %1547 = vmatpush1.msra.mxu0 0.0
  %1548 = vmatprep.subr.mxu0 0.0
  %1549 = vmatpush1.msra.mxu0 0.0
  %1550 = vmatprep.subr.mxu0 0.0
  %1551 = vmatpush1.msra.mxu0 0.0
  %1552 = vmatprep.subr.mxu0 0.0
  %1553 = vmatpush1.msra.mxu0 0.0
  %1554 = vmatprep.subr.mxu0 0.0
  %1555 = vmatpush1.msra.mxu0 0.0
  %1556 = vmatprep.subr.mxu0 0.0
  %1557 = vmatpush1.msra.mxu0 0.0
  %1558 = vmatprep.subr.mxu0 0.0
  %1559 = vmatpush1.msra.mxu0 0.0
  %1560 = vmatprep.mubr.f32.mxu0 0.0
  %v1561 = vand.u32 %v141, 4294901760
  %1562 = vmatmul.mubr.f32.gmra.mrb[0].mxu0 %v1561
  %v1563 = vpop.f32.mrb[0].mxu0
  %v1564 = vadd.f32 %v1445, %v1563
  %v1565 = vpop.f32.mrb[0].mxu0
  %1566 = vdwg.mxu0
  %1567 = vmatprep.subr.mxu0 0.0
  %v1568 = vand.u32 %v45, 4294901760
  %1569 = vmatpush1.msra.mxu0 %v1568
  %1570 = vmatprep.subr.mxu0 0.0
  %v1571 = vand.u32 %v48, 4294901760
  %1572 = vmatpush1.msra.mxu0 %v1571
  %1573 = vmatprep.subr.mxu0 0.0
  %v1574 = vand.u32 %v51, 4294901760
  %1575 = vmatpush1.msra.mxu0 %v1574
  %1576 = vmatprep.subr.mxu0 0.0
  %v1577 = vand.u32 %v54, 4294901760
  %1578 = vmatpush1.msra.mxu0 %v1577
  %1579 = vmatprep.subr.mxu0 0.0
  %v1580 = vand.u32 %v57, 4294901760
  %1581 = vmatpush1.msra.mxu0 %v1580
  %1582 = vmatprep.subr.mxu0 0.0
  %v1583 = vand.u32 %v60, 4294901760
  %1584 = vmatpush1.msra.mxu0 %v1583
  %1585 = vmatprep.subr.mxu0 0.0
  %v1586 = vand.u32 %v63, 4294901760
  %1587 = vmatpush1.msra.mxu0 %v1586
  %1588 = vmatprep.subr.mxu0 0.0
  %v1589 = vand.u32 %v66, 4294901760
  %1590 = vmatpush1.msra.mxu0 %v1589
  %1591 = vmatprep.subr.mxu0 0.0
  %v1592 = vand.u32 %v69, 4294901760
  %1593 = vmatpush1.msra.mxu0 %v1592
  %1594 = vmatprep.subr.mxu0 0.0
  %v1595 = vand.u32 %v72, 4294901760
  %1596 = vmatpush1.msra.mxu0 %v1595
  %1597 = vmatprep.subr.mxu0 0.0
  %v1598 = vand.u32 %v75, 4294901760
  %1599 = vmatpush1.msra.mxu0 %v1598
  %1600 = vmatprep.subr.mxu0 0.0
  %v1601 = vand.u32 %v78, 4294901760
  %1602 = vmatpush1.msra.mxu0 %v1601
  %1603 = vmatprep.subr.mxu0 0.0
  %v1604 = vand.u32 %v81, 4294901760
  %1605 = vmatpush1.msra.mxu0 %v1604
  %1606 = vmatprep.subr.mxu0 0.0
  %v1607 = vand.u32 %v84, 4294901760
  %1608 = vmatpush1.msra.mxu0 %v1607
  %1609 = vmatprep.subr.mxu0 0.0
  %v1610 = vand.u32 %v87, 4294901760
  %1611 = vmatpush1.msra.mxu0 %v1610
  %1612 = vmatprep.subr.mxu0 0.0
  %v1613 = vand.u32 %v90, 4294901760
  %1614 = vmatpush1.msra.mxu0 %v1613
  %1615 = vmatprep.subr.mxu0 0.0
  %1616 = vmatpush1.msra.mxu0 0.0
  %1617 = vmatprep.subr.mxu0 0.0
  %1618 = vmatpush1.msra.mxu0 0.0
  %1619 = vmatprep.subr.mxu0 0.0
  %1620 = vmatpush1.msra.mxu0 0.0
  %1621 = vmatprep.subr.mxu0 0.0
  %1622 = vmatpush1.msra.mxu0 0.0
  %1623 = vmatprep.subr.mxu0 0.0
  %1624 = vmatpush1.msra.mxu0 0.0
  %1625 = vmatprep.subr.mxu0 0.0
  %1626 = vmatpush1.msra.mxu0 0.0
  %1627 = vmatprep.subr.mxu0 0.0
  %1628 = vmatpush1.msra.mxu0 0.0
  %1629 = vmatprep.subr.mxu0 0.0
  %1630 = vmatpush1.msra.mxu0 0.0
  %1631 = vmatprep.subr.mxu0 0.0
  %1632 = vmatpush1.msra.mxu0 0.0
  %1633 = vmatprep.subr.mxu0 0.0
  %1634 = vmatpush1.msra.mxu0 0.0
  %1635 = vmatprep.subr.mxu0 0.0
  %1636 = vmatpush1.msra.mxu0 0.0
  %1637 = vmatprep.subr.mxu0 0.0
  %1638 = vmatpush1.msra.mxu0 0.0
  %1639 = vmatprep.subr.mxu0 0.0
  %1640 = vmatpush1.msra.mxu0 0.0
  %1641 = vmatprep.subr.mxu0 0.0
  %1642 = vmatpush1.msra.mxu0 0.0
  %1643 = vmatprep.subr.mxu0 0.0
  %1644 = vmatpush1.msra.mxu0 0.0
  %1645 = vmatprep.subr.mxu0 0.0
  %1646 = vmatpush1.msra.mxu0 0.0
  %1647 = vmatprep.mubr.f32.mxu0 0.0
  %v1648 = vand.u32 %v141, 4294901760
  %1649 = vmatmul.mubr.f32.gmra.mrb[0].mxu0 %v1648
  %v1650 = vpop.f32.mrb[0].mxu0
  %v1651 = vadd.f32 %v1564, %v1650
  %v1652 = vpop.f32.mrb[0].mxu0
  %1653 = vdwg.mxu0
  %v1654 = vld [vmem:[%s1] sm:$0xff]
  %v1656 = vlaneseq
  %v1657 = vshrl.u32 %v1656, 7
  %v1658 = vsub.s32 0, %v1657
  %v1659 = vrot.slane %v140, %v1658
  %v1660 = vlaneseq
  %v1661 = vshrl.u32 %v1660, 7
  %v1662 = vsub.s32 1, %v1661
  %v1663 = vrot.slane %v140, %v1662
  %v1664 = vlaneseq
  %v1665 = vshrl.u32 %v1664, 7
  %v1666 = vsub.s32 2, %v1665
  %v1667 = vrot.slane %v140, %v1666
  %v1671 = vand.u32 %v92, 4294901760
  %1672 = vmatprep.subr.mxu0 %v1671
  %v1673 = vand.u32 %v91, 4294901760
  %1674 = vmatpush1.msra.mxu0 %v1673
  %v1675 = vand.u32 %v95, 4294901760
  %1676 = vmatprep.subr.mxu0 %v1675
  %v1677 = vand.u32 %v94, 4294901760
  %1678 = vmatpush1.msra.mxu0 %v1677
  %v1679 = vand.u32 %v98, 4294901760
  %1680 = vmatprep.subr.mxu0 %v1679
  %v1681 = vand.u32 %v97, 4294901760
  %1682 = vmatpush1.msra.mxu0 %v1681
  %v1683 = vand.u32 %v101, 4294901760
  %1684 = vmatprep.subr.mxu0 %v1683
  %v1685 = vand.u32 %v100, 4294901760
  %1686 = vmatpush1.msra.mxu0 %v1685
  %v1687 = vand.u32 %v104, 4294901760
  %1688 = vmatprep.subr.mxu0 %v1687
  %v1689 = vand.u32 %v103, 4294901760
  %1690 = vmatpush1.msra.mxu0 %v1689
  %v1691 = vand.u32 %v107, 4294901760
  %1692 = vmatprep.subr.mxu0 %v1691
  %v1693 = vand.u32 %v106, 4294901760
  %1694 = vmatpush1.msra.mxu0 %v1693
  %v1695 = vand.u32 %v110, 4294901760
  %1696 = vmatprep.subr.mxu0 %v1695
  %v1697 = vand.u32 %v109, 4294901760
  %1698 = vmatpush1.msra.mxu0 %v1697
  %v1699 = vand.u32 %v113, 4294901760
  %1700 = vmatprep.subr.mxu0 %v1699
  %v1701 = vand.u32 %v112, 4294901760
  %1702 = vmatpush1.msra.mxu0 %v1701
  %v1703 = vand.u32 %v116, 4294901760
  %1704 = vmatprep.subr.mxu0 %v1703
  %v1705 = vand.u32 %v115, 4294901760
  %1706 = vmatpush1.msra.mxu0 %v1705
  %v1707 = vand.u32 %v119, 4294901760
  %1708 = vmatprep.subr.mxu0 %v1707
  %v1709 = vand.u32 %v118, 4294901760
  %1710 = vmatpush1.msra.mxu0 %v1709
  %v1711 = vand.u32 %v122, 4294901760
  %1712 = vmatprep.subr.mxu0 %v1711
  %v1713 = vand.u32 %v121, 4294901760
  %1714 = vmatpush1.msra.mxu0 %v1713
  %v1715 = vand.u32 %v125, 4294901760
  %1716 = vmatprep.subr.mxu0 %v1715
  %v1717 = vand.u32 %v124, 4294901760
  %1718 = vmatpush1.msra.mxu0 %v1717
  %v1719 = vand.u32 %v128, 4294901760
  %1720 = vmatprep.subr.mxu0 %v1719
  %v1721 = vand.u32 %v127, 4294901760
  %1722 = vmatpush1.msra.mxu0 %v1721
  %v1723 = vand.u32 %v131, 4294901760
  %1724 = vmatprep.subr.mxu0 %v1723
  %v1725 = vand.u32 %v130, 4294901760
  %1726 = vmatpush1.msra.mxu0 %v1725
  %v1727 = vand.u32 %v134, 4294901760
  %1728 = vmatprep.subr.mxu0 %v1727
  %v1729 = vand.u32 %v133, 4294901760
  %1730 = vmatpush1.msra.mxu0 %v1729
  %v1731 = vand.u32 %v137, 4294901760
  %1732 = vmatprep.subr.mxu0 %v1731
  %v1733 = vand.u32 %v136, 4294901760
  %1734 = vmatpush1.msra.mxu0 %v1733
  %1735 = vmatprep.subr.mxu0 0.0
  %1736 = vmatpush1.msra.mxu0 0.0
  %1737 = vmatprep.subr.mxu0 0.0
  %1738 = vmatpush1.msra.mxu0 0.0
  %1739 = vmatprep.subr.mxu0 0.0
  %1740 = vmatpush1.msra.mxu0 0.0
  %1741 = vmatprep.subr.mxu0 0.0
  %1742 = vmatpush1.msra.mxu0 0.0
  %1743 = vmatprep.subr.mxu0 0.0
  %1744 = vmatpush1.msra.mxu0 0.0
  %1745 = vmatprep.subr.mxu0 0.0
  %1746 = vmatpush1.msra.mxu0 0.0
  %1747 = vmatprep.subr.mxu0 0.0
  %1748 = vmatpush1.msra.mxu0 0.0
  %1749 = vmatprep.subr.mxu0 0.0
  %1750 = vmatpush1.msra.mxu0 0.0
  %1751 = vmatprep.subr.mxu0 0.0
  %1752 = vmatpush1.msra.mxu0 0.0
  %1753 = vmatprep.subr.mxu0 0.0
  %1754 = vmatpush1.msra.mxu0 0.0
  %1755 = vmatprep.subr.mxu0 0.0
  %1756 = vmatpush1.msra.mxu0 0.0
  %1757 = vmatprep.subr.mxu0 0.0
  %1758 = vmatpush1.msra.mxu0 0.0
  %1759 = vmatprep.subr.mxu0 0.0
  %1760 = vmatpush1.msra.mxu0 0.0
  %1761 = vmatprep.subr.mxu0 0.0
  %1762 = vmatpush1.msra.mxu0 0.0
  %1763 = vmatprep.subr.mxu0 0.0
  %1764 = vmatpush1.msra.mxu0 0.0
  %1765 = vmatprep.subr.mxu0 0.0
  %1766 = vmatpush1.msra.mxu0 0.0
  %1767 = vmatprep.mubr.f32.mxu0 0.0
  %v1768 = vand.u32 %v1654, 4294901760
  %v1769 = vsub.f32 %v1654, %v1768
  %v1770 = vand.u32 %v1769, 4294901760
  %v1771 = vsub.f32 %v1769, %v1770
  %v1772 = vand.u32 %v1771, 4294901760
  %1773 = vmatmul.mubr.f32.gmra.mrb[0].mxu0 %v1772
  %v1774 = vpop.f32.mrb[0].mxu0
  %v1775 = vadd.f32 %v1659, %v1774
  %v1776 = vpop.f32.mrb[0].mxu0
  %v1777 = vadd.f32 %v1663, %v1776
  %1778 = vdwg.mxu0
  %v1779 = vand.u32 %v92, 4294901760
  %v1780 = vsub.f32 %v92, %v1779
  %v1781 = vand.u32 %v1780, 4294901760
  %v1782 = vsub.f32 %v1780, %v1781
  %v1783 = vand.u32 %v1782, 4294901760
  %1784 = vmatprep.subr.mxu0 %v1783
  %v1785 = vand.u32 %v91, 4294901760
  %v1786 = vsub.f32 %v91, %v1785
  %v1787 = vand.u32 %v1786, 4294901760
  %v1788 = vsub.f32 %v1786, %v1787
  %v1789 = vand.u32 %v1788, 4294901760
  %1790 = vmatpush1.msra.mxu0 %v1789
  %v1791 = vand.u32 %v95, 4294901760
  %v1792 = vsub.f32 %v95, %v1791
  %v1793 = vand.u32 %v1792, 4294901760
  %v1794 = vsub.f32 %v1792, %v1793
  %v1795 = vand.u32 %v1794, 4294901760
  %1796 = vmatprep.subr.mxu0 %v1795
  %v1797 = vand.u32 %v94, 4294901760
  %v1798 = vsub.f32 %v94, %v1797
  %v1799 = vand.u32 %v1798, 4294901760
  %v1800 = vsub.f32 %v1798, %v1799
  %v1801 = vand.u32 %v1800, 4294901760
  %1802 = vmatpush1.msra.mxu0 %v1801
  %v1803 = vand.u32 %v98, 4294901760
  %v1804 = vsub.f32 %v98, %v1803
  %v1805 = vand.u32 %v1804, 4294901760
  %v1806 = vsub.f32 %v1804, %v1805
  %v1807 = vand.u32 %v1806, 4294901760
  %1808 = vmatprep.subr.mxu0 %v1807
  %v1809 = vand.u32 %v97, 4294901760
  %v1810 = vsub.f32 %v97, %v1809
  %v1811 = vand.u32 %v1810, 4294901760
  %v1812 = vsub.f32 %v1810, %v1811
  %v1813 = vand.u32 %v1812, 4294901760
  %1814 = vmatpush1.msra.mxu0 %v1813
  %v1815 = vand.u32 %v101, 4294901760
  %v1816 = vsub.f32 %v101, %v1815
  %v1817 = vand.u32 %v1816, 4294901760
  %v1818 = vsub.f32 %v1816, %v1817
  %v1819 = vand.u32 %v1818, 4294901760
  %1820 = vmatprep.subr.mxu0 %v1819
  %v1821 = vand.u32 %v100, 4294901760
  %v1822 = vsub.f32 %v100, %v1821
  %v1823 = vand.u32 %v1822, 4294901760
  %v1824 = vsub.f32 %v1822, %v1823
  %v1825 = vand.u32 %v1824, 4294901760
  %1826 = vmatpush1.msra.mxu0 %v1825
  %v1827 = vand.u32 %v104, 4294901760
  %v1828 = vsub.f32 %v104, %v1827
  %v1829 = vand.u32 %v1828, 4294901760
  %v1830 = vsub.f32 %v1828, %v1829
  %v1831 = vand.u32 %v1830, 4294901760
  %1832 = vmatprep.subr.mxu0 %v1831
  %v1833 = vand.u32 %v103, 4294901760
  %v1834 = vsub.f32 %v103, %v1833
  %v1835 = vand.u32 %v1834, 4294901760
  %v1836 = vsub.f32 %v1834, %v1835
  %v1837 = vand.u32 %v1836, 4294901760
  %1838 = vmatpush1.msra.mxu0 %v1837
  %v1839 = vand.u32 %v107, 4294901760
  %v1840 = vsub.f32 %v107, %v1839
  %v1841 = vand.u32 %v1840, 4294901760
  %v1842 = vsub.f32 %v1840, %v1841
  %v1843 = vand.u32 %v1842, 4294901760
  %1844 = vmatprep.subr.mxu0 %v1843
  %v1845 = vand.u32 %v106, 4294901760
  %v1846 = vsub.f32 %v106, %v1845
  %v1847 = vand.u32 %v1846, 4294901760
  %v1848 = vsub.f32 %v1846, %v1847
  %v1849 = vand.u32 %v1848, 4294901760
  %1850 = vmatpush1.msra.mxu0 %v1849
  %v1851 = vand.u32 %v110, 4294901760
  %v1852 = vsub.f32 %v110, %v1851
  %v1853 = vand.u32 %v1852, 4294901760
  %v1854 = vsub.f32 %v1852, %v1853
  %v1855 = vand.u32 %v1854, 4294901760
  %1856 = vmatprep.subr.mxu0 %v1855
  %v1857 = vand.u32 %v109, 4294901760
  %v1858 = vsub.f32 %v109, %v1857
  %v1859 = vand.u32 %v1858, 4294901760
  %v1860 = vsub.f32 %v1858, %v1859
  %v1861 = vand.u32 %v1860, 4294901760
  %1862 = vmatpush1.msra.mxu0 %v1861
  %v1863 = vand.u32 %v113, 4294901760
  %v1864 = vsub.f32 %v113, %v1863
  %v1865 = vand.u32 %v1864, 4294901760
  %v1866 = vsub.f32 %v1864, %v1865
  %v1867 = vand.u32 %v1866, 4294901760
  %1868 = vmatprep.subr.mxu0 %v1867
  %v1869 = vand.u32 %v112, 4294901760
  %v1870 = vsub.f32 %v112, %v1869
  %v1871 = vand.u32 %v1870, 4294901760
  %v1872 = vsub.f32 %v1870, %v1871
  %v1873 = vand.u32 %v1872, 4294901760
  %1874 = vmatpush1.msra.mxu0 %v1873
  %v1875 = vand.u32 %v116, 4294901760
  %v1876 = vsub.f32 %v116, %v1875
  %v1877 = vand.u32 %v1876, 4294901760
  %v1878 = vsub.f32 %v1876, %v1877
  %v1879 = vand.u32 %v1878, 4294901760
  %1880 = vmatprep.subr.mxu0 %v1879
  %v1881 = vand.u32 %v115, 4294901760
  %v1882 = vsub.f32 %v115, %v1881
  %v1883 = vand.u32 %v1882, 4294901760
  %v1884 = vsub.f32 %v1882, %v1883
  %v1885 = vand.u32 %v1884, 4294901760
  %1886 = vmatpush1.msra.mxu0 %v1885
  %v1887 = vand.u32 %v119, 4294901760
  %v1888 = vsub.f32 %v119, %v1887
  %v1889 = vand.u32 %v1888, 4294901760
  %v1890 = vsub.f32 %v1888, %v1889
  %v1891 = vand.u32 %v1890, 4294901760
  %1892 = vmatprep.subr.mxu0 %v1891
  %v1893 = vand.u32 %v118, 4294901760
  %v1894 = vsub.f32 %v118, %v1893
  %v1895 = vand.u32 %v1894, 4294901760
  %v1896 = vsub.f32 %v1894, %v1895
  %v1897 = vand.u32 %v1896, 4294901760
  %1898 = vmatpush1.msra.mxu0 %v1897
  %v1899 = vand.u32 %v122, 4294901760
  %v1900 = vsub.f32 %v122, %v1899
  %v1901 = vand.u32 %v1900, 4294901760
  %v1902 = vsub.f32 %v1900, %v1901
  %v1903 = vand.u32 %v1902, 4294901760
  %1904 = vmatprep.subr.mxu0 %v1903
  %v1905 = vand.u32 %v121, 4294901760
  %v1906 = vsub.f32 %v121, %v1905
  %v1907 = vand.u32 %v1906, 4294901760
  %v1908 = vsub.f32 %v1906, %v1907
  %v1909 = vand.u32 %v1908, 4294901760
  %1910 = vmatpush1.msra.mxu0 %v1909
  %v1911 = vand.u32 %v125, 4294901760
  %v1912 = vsub.f32 %v125, %v1911
  %v1913 = vand.u32 %v1912, 4294901760
  %v1914 = vsub.f32 %v1912, %v1913
  %v1915 = vand.u32 %v1914, 4294901760
  %1916 = vmatprep.subr.mxu0 %v1915
  %v1917 = vand.u32 %v124, 4294901760
  %v1918 = vsub.f32 %v124, %v1917
  %v1919 = vand.u32 %v1918, 4294901760
  %v1920 = vsub.f32 %v1918, %v1919
  %v1921 = vand.u32 %v1920, 4294901760
  %1922 = vmatpush1.msra.mxu0 %v1921
  %v1923 = vand.u32 %v128, 4294901760
  %v1924 = vsub.f32 %v128, %v1923
  %v1925 = vand.u32 %v1924, 4294901760
  %v1926 = vsub.f32 %v1924, %v1925
  %v1927 = vand.u32 %v1926, 4294901760
  %1928 = vmatprep.subr.mxu0 %v1927
  %v1929 = vand.u32 %v127, 4294901760
  %v1930 = vsub.f32 %v127, %v1929
  %v1931 = vand.u32 %v1930, 4294901760
  %v1932 = vsub.f32 %v1930, %v1931
  %v1933 = vand.u32 %v1932, 4294901760
  %1934 = vmatpush1.msra.mxu0 %v1933
  %v1935 = vand.u32 %v131, 4294901760
  %v1936 = vsub.f32 %v131, %v1935
  %v1937 = vand.u32 %v1936, 4294901760
  %v1938 = vsub.f32 %v1936, %v1937
  %v1939 = vand.u32 %v1938, 4294901760
  %1940 = vmatprep.subr.mxu0 %v1939
  %v1941 = vand.u32 %v130, 4294901760
  %v1942 = vsub.f32 %v130, %v1941
  %v1943 = vand.u32 %v1942, 4294901760
  %v1944 = vsub.f32 %v1942, %v1943
  %v1945 = vand.u32 %v1944, 4294901760
  %1946 = vmatpush1.msra.mxu0 %v1945
  %v1947 = vand.u32 %v134, 4294901760
  %v1948 = vsub.f32 %v134, %v1947
  %v1949 = vand.u32 %v1948, 4294901760
  %v1950 = vsub.f32 %v1948, %v1949
  %v1951 = vand.u32 %v1950, 4294901760
  %1952 = vmatprep.subr.mxu0 %v1951
  %v1953 = vand.u32 %v133, 4294901760
  %v1954 = vsub.f32 %v133, %v1953
  %v1955 = vand.u32 %v1954, 4294901760
  %v1956 = vsub.f32 %v1954, %v1955
  %v1957 = vand.u32 %v1956, 4294901760
  %1958 = vmatpush1.msra.mxu0 %v1957
  %v1959 = vand.u32 %v137, 4294901760
  %v1960 = vsub.f32 %v137, %v1959
  %v1961 = vand.u32 %v1960, 4294901760
  %v1962 = vsub.f32 %v1960, %v1961
  %v1963 = vand.u32 %v1962, 4294901760
  %1964 = vmatprep.subr.mxu0 %v1963
  %v1965 = vand.u32 %v136, 4294901760
  %v1966 = vsub.f32 %v136, %v1965
  %v1967 = vand.u32 %v1966, 4294901760
  %v1968 = vsub.f32 %v1966, %v1967
  %v1969 = vand.u32 %v1968, 4294901760
  %1970 = vmatpush1.msra.mxu0 %v1969
  %1971 = vmatprep.subr.mxu0 0.0
  %1972 = vmatpush1.msra.mxu0 0.0
  %1973 = vmatprep.subr.mxu0 0.0
  %1974 = vmatpush1.msra.mxu0 0.0
  %1975 = vmatprep.subr.mxu0 0.0
  %1976 = vmatpush1.msra.mxu0 0.0
  %1977 = vmatprep.subr.mxu0 0.0
  %1978 = vmatpush1.msra.mxu0 0.0
  %1979 = vmatprep.subr.mxu0 0.0
  %1980 = vmatpush1.msra.mxu0 0.0
  %1981 = vmatprep.subr.mxu0 0.0
  %1982 = vmatpush1.msra.mxu0 0.0
  %1983 = vmatprep.subr.mxu0 0.0
  %1984 = vmatpush1.msra.mxu0 0.0
  %1985 = vmatprep.subr.mxu0 0.0
  %1986 = vmatpush1.msra.mxu0 0.0
  %1987 = vmatprep.subr.mxu0 0.0
  %1988 = vmatpush1.msra.mxu0 0.0
  %1989 = vmatprep.subr.mxu0 0.0
  %1990 = vmatpush1.msra.mxu0 0.0
  %1991 = vmatprep.subr.mxu0 0.0
  %1992 = vmatpush1.msra.mxu0 0.0
  %1993 = vmatprep.subr.mxu0 0.0
  %1994 = vmatpush1.msra.mxu0 0.0
  %1995 = vmatprep.subr.mxu0 0.0
  %1996 = vmatpush1.msra.mxu0 0.0
  %1997 = vmatprep.subr.mxu0 0.0
  %1998 = vmatpush1.msra.mxu0 0.0
  %1999 = vmatprep.subr.mxu0 0.0
  %2000 = vmatpush1.msra.mxu0 0.0
  %2001 = vmatprep.subr.mxu0 0.0
  %2002 = vmatpush1.msra.mxu0 0.0
  %2003 = vmatprep.mubr.f32.mxu0 0.0
  %v2004 = vand.u32 %v1654, 4294901760
  %2005 = vmatmul.mubr.f32.gmra.mrb[0].mxu0 %v2004
  %v2006 = vpop.f32.mrb[0].mxu0
  %v2007 = vadd.f32 %v1775, %v2006
  %v2008 = vpop.f32.mrb[0].mxu0
  %v2009 = vadd.f32 %v1777, %v2008
  %2010 = vdwg.mxu0
  %v2011 = vand.u32 %v92, 4294901760
  %v2012 = vsub.f32 %v92, %v2011
  %2013 = vmatprep.subr.mxu0 %v2012
  %v2014 = vand.u32 %v91, 4294901760
  %v2015 = vsub.f32 %v91, %v2014
  %2016 = vmatpush1.msra.mxu0 %v2015
  %v2017 = vand.u32 %v95, 4294901760
  %v2018 = vsub.f32 %v95, %v2017
  %2019 = vmatprep.subr.mxu0 %v2018
  %v2020 = vand.u32 %v94, 4294901760
  %v2021 = vsub.f32 %v94, %v2020
  %2022 = vmatpush1.msra.mxu0 %v2021
  %v2023 = vand.u32 %v98, 4294901760
  %v2024 = vsub.f32 %v98, %v2023
  %2025 = vmatprep.subr.mxu0 %v2024
  %v2026 = vand.u32 %v97, 4294901760
  %v2027 = vsub.f32 %v97, %v2026
  %2028 = vmatpush1.msra.mxu0 %v2027
  %v2029 = vand.u32 %v101, 4294901760
  %v2030 = vsub.f32 %v101, %v2029
  %2031 = vmatprep.subr.mxu0 %v2030
  %v2032 = vand.u32 %v100, 4294901760
  %v2033 = vsub.f32 %v100, %v2032
  %2034 = vmatpush1.msra.mxu0 %v2033
  %v2035 = vand.u32 %v104, 4294901760
  %v2036 = vsub.f32 %v104, %v2035
  %2037 = vmatprep.subr.mxu0 %v2036
  %v2038 = vand.u32 %v103, 4294901760
  %v2039 = vsub.f32 %v103, %v2038
  %2040 = vmatpush1.msra.mxu0 %v2039
  %v2041 = vand.u32 %v107, 4294901760
  %v2042 = vsub.f32 %v107, %v2041
  %2043 = vmatprep.subr.mxu0 %v2042
  %v2044 = vand.u32 %v106, 4294901760
  %v2045 = vsub.f32 %v106, %v2044
  %2046 = vmatpush1.msra.mxu0 %v2045
  %v2047 = vand.u32 %v110, 4294901760
  %v2048 = vsub.f32 %v110, %v2047
  %2049 = vmatprep.subr.mxu0 %v2048
  %v2050 = vand.u32 %v109, 4294901760
  %v2051 = vsub.f32 %v109, %v2050
  %2052 = vmatpush1.msra.mxu0 %v2051
  %v2053 = vand.u32 %v113, 4294901760
  %v2054 = vsub.f32 %v113, %v2053
  %2055 = vmatprep.subr.mxu0 %v2054
  %v2056 = vand.u32 %v112, 4294901760
  %v2057 = vsub.f32 %v112, %v2056
  %2058 = vmatpush1.msra.mxu0 %v2057
  %v2059 = vand.u32 %v116, 4294901760
  %v2060 = vsub.f32 %v116, %v2059
  %2061 = vmatprep.subr.mxu0 %v2060
  %v2062 = vand.u32 %v115, 4294901760
  %v2063 = vsub.f32 %v115, %v2062
  %2064 = vmatpush1.msra.mxu0 %v2063
  %v2065 = vand.u32 %v119, 4294901760
  %v2066 = vsub.f32 %v119, %v2065
  %2067 = vmatprep.subr.mxu0 %v2066
  %v2068 = vand.u32 %v118, 4294901760
  %v2069 = vsub.f32 %v118, %v2068
  %2070 = vmatpush1.msra.mxu0 %v2069
  %v2071 = vand.u32 %v122, 4294901760
  %v2072 = vsub.f32 %v122, %v2071
  %2073 = vmatprep.subr.mxu0 %v2072
  %v2074 = vand.u32 %v121, 4294901760
  %v2075 = vsub.f32 %v121, %v2074
  %2076 = vmatpush1.msra.mxu0 %v2075
  %v2077 = vand.u32 %v125, 4294901760
  %v2078 = vsub.f32 %v125, %v2077
  %2079 = vmatprep.subr.mxu0 %v2078
  %v2080 = vand.u32 %v124, 4294901760
  %v2081 = vsub.f32 %v124, %v2080
  %2082 = vmatpush1.msra.mxu0 %v2081
  %v2083 = vand.u32 %v128, 4294901760
  %v2084 = vsub.f32 %v128, %v2083
  %2085 = vmatprep.subr.mxu0 %v2084
  %v2086 = vand.u32 %v127, 4294901760
  %v2087 = vsub.f32 %v127, %v2086
  %2088 = vmatpush1.msra.mxu0 %v2087
  %v2089 = vand.u32 %v131, 4294901760
  %v2090 = vsub.f32 %v131, %v2089
  %2091 = vmatprep.subr.mxu0 %v2090
  %v2092 = vand.u32 %v130, 4294901760
  %v2093 = vsub.f32 %v130, %v2092
  %2094 = vmatpush1.msra.mxu0 %v2093
  %v2095 = vand.u32 %v134, 4294901760
  %v2096 = vsub.f32 %v134, %v2095
  %2097 = vmatprep.subr.mxu0 %v2096
  %v2098 = vand.u32 %v133, 4294901760
  %v2099 = vsub.f32 %v133, %v2098
  %2100 = vmatpush1.msra.mxu0 %v2099
  %v2101 = vand.u32 %v137, 4294901760
  %v2102 = vsub.f32 %v137, %v2101
  %2103 = vmatprep.subr.mxu0 %v2102
  %v2104 = vand.u32 %v136, 4294901760
  %v2105 = vsub.f32 %v136, %v2104
  %2106 = vmatpush1.msra.mxu0 %v2105
  %2107 = vmatprep.subr.mxu0 0.0
  %2108 = vmatpush1.msra.mxu0 0.0
  %2109 = vmatprep.subr.mxu0 0.0
  %2110 = vmatpush1.msra.mxu0 0.0
  %2111 = vmatprep.subr.mxu0 0.0
  %2112 = vmatpush1.msra.mxu0 0.0
  %2113 = vmatprep.subr.mxu0 0.0
  %2114 = vmatpush1.msra.mxu0 0.0
  %2115 = vmatprep.subr.mxu0 0.0
  %2116 = vmatpush1.msra.mxu0 0.0
  %2117 = vmatprep.subr.mxu0 0.0
  %2118 = vmatpush1.msra.mxu0 0.0
  %2119 = vmatprep.subr.mxu0 0.0
  %2120 = vmatpush1.msra.mxu0 0.0
  %2121 = vmatprep.subr.mxu0 0.0
  %2122 = vmatpush1.msra.mxu0 0.0
  %2123 = vmatprep.subr.mxu0 0.0
  %2124 = vmatpush1.msra.mxu0 0.0
  %2125 = vmatprep.subr.mxu0 0.0
  %2126 = vmatpush1.msra.mxu0 0.0
  %2127 = vmatprep.subr.mxu0 0.0
  %2128 = vmatpush1.msra.mxu0 0.0
  %2129 = vmatprep.subr.mxu0 0.0
  %2130 = vmatpush1.msra.mxu0 0.0
  %2131 = vmatprep.subr.mxu0 0.0
  %2132 = vmatpush1.msra.mxu0 0.0
  %2133 = vmatprep.subr.mxu0 0.0
  %2134 = vmatpush1.msra.mxu0 0.0
  %2135 = vmatprep.subr.mxu0 0.0
  %2136 = vmatpush1.msra.mxu0 0.0
  %2137 = vmatprep.subr.mxu0 0.0
  %2138 = vmatpush1.msra.mxu0 0.0
  %2139 = vmatprep.mubr.f32.mxu0 0.0
  %v2140 = vand.u32 %v1654, 4294901760
  %v2141 = vsub.f32 %v1654, %v2140
  %2142 = vmatmul.mubr.f32.gmra.mrb[0].mxu0 %v2141
  %v2143 = vpop.f32.mrb[0].mxu0
  %v2144 = vadd.f32 %v2007, %v2143
  %v2145 = vpop.f32.mrb[0].mxu0
  %v2146 = vadd.f32 %v2009, %v2145
  %2147 = vdwg.mxu0
  %v2148 = vand.u32 %v92, 4294901760
  %2149 = vmatprep.subr.mxu0 %v2148
  %v2150 = vand.u32 %v91, 4294901760
  %2151 = vmatpush1.msra.mxu0 %v2150
  %v2152 = vand.u32 %v95, 4294901760
  %2153 = vmatprep.subr.mxu0 %v2152
  %v2154 = vand.u32 %v94, 4294901760
  %2155 = vmatpush1.msra.mxu0 %v2154
  %v2156 = vand.u32 %v98, 4294901760
  %2157 = vmatprep.subr.mxu0 %v2156
  %v2158 = vand.u32 %v97, 4294901760
  %2159 = vmatpush1.msra.mxu0 %v2158
  %v2160 = vand.u32 %v101, 4294901760
  %2161 = vmatprep.subr.mxu0 %v2160
  %v2162 = vand.u32 %v100, 4294901760
  %2163 = vmatpush1.msra.mxu0 %v2162
  %v2164 = vand.u32 %v104, 4294901760
  %2165 = vmatprep.subr.mxu0 %v2164
  %v2166 = vand.u32 %v103, 4294901760
  %2167 = vmatpush1.msra.mxu0 %v2166
  %v2168 = vand.u32 %v107, 4294901760
  %2169 = vmatprep.subr.mxu0 %v2168
  %v2170 = vand.u32 %v106, 4294901760
  %2171 = vmatpush1.msra.mxu0 %v2170
  %v2172 = vand.u32 %v110, 4294901760
  %2173 = vmatprep.subr.mxu0 %v2172
  %v2174 = vand.u32 %v109, 4294901760
  %2175 = vmatpush1.msra.mxu0 %v2174
  %v2176 = vand.u32 %v113, 4294901760
  %2177 = vmatprep.subr.mxu0 %v2176
  %v2178 = vand.u32 %v112, 4294901760
  %2179 = vmatpush1.msra.mxu0 %v2178
  %v2180 = vand.u32 %v116, 4294901760
  %2181 = vmatprep.subr.mxu0 %v2180
  %v2182 = vand.u32 %v115, 4294901760
  %2183 = vmatpush1.msra.mxu0 %v2182
  %v2184 = vand.u32 %v119, 4294901760
  %2185 = vmatprep.subr.mxu0 %v2184
  %v2186 = vand.u32 %v118, 4294901760
  %2187 = vmatpush1.msra.mxu0 %v2186
  %v2188 = vand.u32 %v122, 4294901760
  %2189 = vmatprep.subr.mxu0 %v2188
  %v2190 = vand.u32 %v121, 4294901760
  %2191 = vmatpush1.msra.mxu0 %v2190
  %v2192 = vand.u32 %v125, 4294901760
  %2193 = vmatprep.subr.mxu0 %v2192
  %v2194 = vand.u32 %v124, 4294901760
  %2195 = vmatpush1.msra.mxu0 %v2194
  %v2196 = vand.u32 %v128, 4294901760
  %2197 = vmatprep.subr.mxu0 %v2196
  %v2198 = vand.u32 %v127, 4294901760
  %2199 = vmatpush1.msra.mxu0 %v2198
  %v2200 = vand.u32 %v131, 4294901760
  %2201 = vmatprep.subr.mxu0 %v2200
  %v2202 = vand.u32 %v130, 4294901760
  %2203 = vmatpush1.msra.mxu0 %v2202
  %v2204 = vand.u32 %v134, 4294901760
  %2205 = vmatprep.subr.mxu0 %v2204
  %v2206 = vand.u32 %v133, 4294901760
  %2207 = vmatpush1.msra.mxu0 %v2206
  %v2208 = vand.u32 %v137, 4294901760
  %2209 = vmatprep.subr.mxu0 %v2208
  %v2210 = vand.u32 %v136, 4294901760
  %2211 = vmatpush1.msra.mxu0 %v2210
  %2212 = vmatprep.subr.mxu0 0.0
  %2213 = vmatpush1.msra.mxu0 0.0
  %2214 = vmatprep.subr.mxu0 0.0
  %2215 = vmatpush1.msra.mxu0 0.0
  %2216 = vmatprep.subr.mxu0 0.0
  %2217 = vmatpush1.msra.mxu0 0.0
  %2218 = vmatprep.subr.mxu0 0.0
  %2219 = vmatpush1.msra.mxu0 0.0
  %2220 = vmatprep.subr.mxu0 0.0
  %2221 = vmatpush1.msra.mxu0 0.0
  %2222 = vmatprep.subr.mxu0 0.0
  %2223 = vmatpush1.msra.mxu0 0.0
  %2224 = vmatprep.subr.mxu0 0.0
  %2225 = vmatpush1.msra.mxu0 0.0
  %2226 = vmatprep.subr.mxu0 0.0
  %2227 = vmatpush1.msra.mxu0 0.0
  %2228 = vmatprep.subr.mxu0 0.0
  %2229 = vmatpush1.msra.mxu0 0.0
  %2230 = vmatprep.subr.mxu0 0.0
  %2231 = vmatpush1.msra.mxu0 0.0
  %2232 = vmatprep.subr.mxu0 0.0
  %2233 = vmatpush1.msra.mxu0 0.0
  %2234 = vmatprep.subr.mxu0 0.0
  %2235 = vmatpush1.msra.mxu0 0.0
  %2236 = vmatprep.subr.mxu0 0.0
  %2237 = vmatpush1.msra.mxu0 0.0
  %2238 = vmatprep.subr.mxu0 0.0
  %2239 = vmatpush1.msra.mxu0 0.0
  %2240 = vmatprep.subr.mxu0 0.0
  %2241 = vmatpush1.msra.mxu0 0.0
  %2242 = vmatprep.subr.mxu0 0.0
  %2243 = vmatpush1.msra.mxu0 0.0
  %2244 = vmatprep.mubr.f32.mxu0 0.0
  %v2245 = vand.u32 %v1654, 4294901760
  %v2246 = vsub.f32 %v1654, %v2245
  %v2247 = vand.u32 %v2246, 4294901760
  %2248 = vmatmul.mubr.f32.gmra.mrb[0].mxu0 %v2247
  %v2249 = vpop.f32.mrb[0].mxu0
  %v2250 = vadd.f32 %v2144, %v2249
  %v2251 = vpop.f32.mrb[0].mxu0
  %v2252 = vadd.f32 %v2146, %v2251
  %2253 = vdwg.mxu0
  %v2254 = vand.u32 %v92, 4294901760
  %v2255 = vsub.f32 %v92, %v2254
  %v2256 = vand.u32 %v2255, 4294901760
  %2257 = vmatprep.subr.mxu0 %v2256
  %v2258 = vand.u32 %v91, 4294901760
  %v2259 = vsub.f32 %v91, %v2258
  %v2260 = vand.u32 %v2259, 4294901760
  %2261 = vmatpush1.msra.mxu0 %v2260
  %v2262 = vand.u32 %v95, 4294901760
  %v2263 = vsub.f32 %v95, %v2262
  %v2264 = vand.u32 %v2263, 4294901760
  %2265 = vmatprep.subr.mxu0 %v2264
  %v2266 = vand.u32 %v94, 4294901760
  %v2267 = vsub.f32 %v94, %v2266
  %v2268 = vand.u32 %v2267, 4294901760
  %2269 = vmatpush1.msra.mxu0 %v2268
  %v2270 = vand.u32 %v98, 4294901760
  %v2271 = vsub.f32 %v98, %v2270
  %v2272 = vand.u32 %v2271, 4294901760
  %2273 = vmatprep.subr.mxu0 %v2272
  %v2274 = vand.u32 %v97, 4294901760
  %v2275 = vsub.f32 %v97, %v2274
  %v2276 = vand.u32 %v2275, 4294901760
  %2277 = vmatpush1.msra.mxu0 %v2276
  %v2278 = vand.u32 %v101, 4294901760
  %v2279 = vsub.f32 %v101, %v2278
  %v2280 = vand.u32 %v2279, 4294901760
  %2281 = vmatprep.subr.mxu0 %v2280
  %v2282 = vand.u32 %v100, 4294901760
  %v2283 = vsub.f32 %v100, %v2282
  %v2284 = vand.u32 %v2283, 4294901760
  %2285 = vmatpush1.msra.mxu0 %v2284
  %v2286 = vand.u32 %v104, 4294901760
  %v2287 = vsub.f32 %v104, %v2286
  %v2288 = vand.u32 %v2287, 4294901760
  %2289 = vmatprep.subr.mxu0 %v2288
  %v2290 = vand.u32 %v103, 4294901760
  %v2291 = vsub.f32 %v103, %v2290
  %v2292 = vand.u32 %v2291, 4294901760
  %2293 = vmatpush1.msra.mxu0 %v2292
  %v2294 = vand.u32 %v107, 4294901760
  %v2295 = vsub.f32 %v107, %v2294
  %v2296 = vand.u32 %v2295, 4294901760
  %2297 = vmatprep.subr.mxu0 %v2296
  %v2298 = vand.u32 %v106, 4294901760
  %v2299 = vsub.f32 %v106, %v2298
  %v2300 = vand.u32 %v2299, 4294901760
  %2301 = vmatpush1.msra.mxu0 %v2300
  %v2302 = vand.u32 %v110, 4294901760
  %v2303 = vsub.f32 %v110, %v2302
  %v2304 = vand.u32 %v2303, 4294901760
  %2305 = vmatprep.subr.mxu0 %v2304
  %v2306 = vand.u32 %v109, 4294901760
  %v2307 = vsub.f32 %v109, %v2306
  %v2308 = vand.u32 %v2307, 4294901760
  %2309 = vmatpush1.msra.mxu0 %v2308
  %v2310 = vand.u32 %v113, 4294901760
  %v2311 = vsub.f32 %v113, %v2310
  %v2312 = vand.u32 %v2311, 4294901760
  %2313 = vmatprep.subr.mxu0 %v2312
  %v2314 = vand.u32 %v112, 4294901760
  %v2315 = vsub.f32 %v112, %v2314
  %v2316 = vand.u32 %v2315, 4294901760
  %2317 = vmatpush1.msra.mxu0 %v2316
  %v2318 = vand.u32 %v116, 4294901760
  %v2319 = vsub.f32 %v116, %v2318
  %v2320 = vand.u32 %v2319, 4294901760
  %2321 = vmatprep.subr.mxu0 %v2320
  %v2322 = vand.u32 %v115, 4294901760
  %v2323 = vsub.f32 %v115, %v2322
  %v2324 = vand.u32 %v2323, 4294901760
  %2325 = vmatpush1.msra.mxu0 %v2324
  %v2326 = vand.u32 %v119, 4294901760
  %v2327 = vsub.f32 %v119, %v2326
  %v2328 = vand.u32 %v2327, 4294901760
  %2329 = vmatprep.subr.mxu0 %v2328
  %v2330 = vand.u32 %v118, 4294901760
  %v2331 = vsub.f32 %v118, %v2330
  %v2332 = vand.u32 %v2331, 4294901760
  %2333 = vmatpush1.msra.mxu0 %v2332
  %v2334 = vand.u32 %v122, 4294901760
  %v2335 = vsub.f32 %v122, %v2334
  %v2336 = vand.u32 %v2335, 4294901760
  %2337 = vmatprep.subr.mxu0 %v2336
  %v2338 = vand.u32 %v121, 4294901760
  %v2339 = vsub.f32 %v121, %v2338
  %v2340 = vand.u32 %v2339, 4294901760
  %2341 = vmatpush1.msra.mxu0 %v2340
  %v2342 = vand.u32 %v125, 4294901760
  %v2343 = vsub.f32 %v125, %v2342
  %v2344 = vand.u32 %v2343, 4294901760
  %2345 = vmatprep.subr.mxu0 %v2344
  %v2346 = vand.u32 %v124, 4294901760
  %v2347 = vsub.f32 %v124, %v2346
  %v2348 = vand.u32 %v2347, 4294901760
  %2349 = vmatpush1.msra.mxu0 %v2348
  %v2350 = vand.u32 %v128, 4294901760
  %v2351 = vsub.f32 %v128, %v2350
  %v2352 = vand.u32 %v2351, 4294901760
  %2353 = vmatprep.subr.mxu0 %v2352
  %v2354 = vand.u32 %v127, 4294901760
  %v2355 = vsub.f32 %v127, %v2354
  %v2356 = vand.u32 %v2355, 4294901760
  %2357 = vmatpush1.msra.mxu0 %v2356
  %v2358 = vand.u32 %v131, 4294901760
  %v2359 = vsub.f32 %v131, %v2358
  %v2360 = vand.u32 %v2359, 4294901760
  %2361 = vmatprep.subr.mxu0 %v2360
  %v2362 = vand.u32 %v130, 4294901760
  %v2363 = vsub.f32 %v130, %v2362
  %v2364 = vand.u32 %v2363, 4294901760
  %2365 = vmatpush1.msra.mxu0 %v2364
  %v2366 = vand.u32 %v134, 4294901760
  %v2367 = vsub.f32 %v134, %v2366
  %v2368 = vand.u32 %v2367, 4294901760
  %2369 = vmatprep.subr.mxu0 %v2368
  %v2370 = vand.u32 %v133, 4294901760
  %v2371 = vsub.f32 %v133, %v2370
  %v2372 = vand.u32 %v2371, 4294901760
  %2373 = vmatpush1.msra.mxu0 %v2372
  %v2374 = vand.u32 %v137, 4294901760
  %v2375 = vsub.f32 %v137, %v2374
  %v2376 = vand.u32 %v2375, 4294901760
  %2377 = vmatprep.subr.mxu0 %v2376
  %v2378 = vand.u32 %v136, 4294901760
  %v2379 = vsub.f32 %v136, %v2378
  %v2380 = vand.u32 %v2379, 4294901760
  %2381 = vmatpush1.msra.mxu0 %v2380
  %2382 = vmatprep.subr.mxu0 0.0
  %2383 = vmatpush1.msra.mxu0 0.0
  %2384 = vmatprep.subr.mxu0 0.0
  %2385 = vmatpush1.msra.mxu0 0.0
  %2386 = vmatprep.subr.mxu0 0.0
  %2387 = vmatpush1.msra.mxu0 0.0
  %2388 = vmatprep.subr.mxu0 0.0
  %2389 = vmatpush1.msra.mxu0 0.0
  %2390 = vmatprep.subr.mxu0 0.0
  %2391 = vmatpush1.msra.mxu0 0.0
  %2392 = vmatprep.subr.mxu0 0.0
  %2393 = vmatpush1.msra.mxu0 0.0
  %2394 = vmatprep.subr.mxu0 0.0
  %2395 = vmatpush1.msra.mxu0 0.0
  %2396 = vmatprep.subr.mxu0 0.0
  %2397 = vmatpush1.msra.mxu0 0.0
  %2398 = vmatprep.subr.mxu0 0.0
  %2399 = vmatpush1.msra.mxu0 0.0
  %2400 = vmatprep.subr.mxu0 0.0
  %2401 = vmatpush1.msra.mxu0 0.0
  %2402 = vmatprep.subr.mxu0 0.0
  %2403 = vmatpush1.msra.mxu0 0.0
  %2404 = vmatprep.subr.mxu0 0.0
  %2405 = vmatpush1.msra.mxu0 0.0
  %2406 = vmatprep.subr.mxu0 0.0
  %2407 = vmatpush1.msra.mxu0 0.0
  %2408 = vmatprep.subr.mxu0 0.0
  %2409 = vmatpush1.msra.mxu0 0.0
  %2410 = vmatprep.subr.mxu0 0.0
  %2411 = vmatpush1.msra.mxu0 0.0
  %2412 = vmatprep.subr.mxu0 0.0
  %2413 = vmatpush1.msra.mxu0 0.0
  %2414 = vmatprep.mubr.f32.mxu0 0.0
  %v2415 = vand.u32 %v1654, 4294901760
  %2416 = vmatmul.mubr.f32.gmra.mrb[0].mxu0 %v2415
  %v2417 = vpop.f32.mrb[0].mxu0
  %v2418 = vadd.f32 %v2250, %v2417
  %v2419 = vpop.f32.mrb[0].mxu0
  %v2420 = vadd.f32 %v2252, %v2419
  %2421 = vdwg.mxu0
  %v2422 = vand.u32 %v92, 4294901760
  %2423 = vmatprep.subr.mxu0 %v2422
  %v2424 = vand.u32 %v91, 4294901760
  %2425 = vmatpush1.msra.mxu0 %v2424
  %v2426 = vand.u32 %v95, 4294901760
  %2427 = vmatprep.subr.mxu0 %v2426
  %v2428 = vand.u32 %v94, 4294901760
  %2429 = vmatpush1.msra.mxu0 %v2428
  %v2430 = vand.u32 %v98, 4294901760
  %2431 = vmatprep.subr.mxu0 %v2430
  %v2432 = vand.u32 %v97, 4294901760
  %2433 = vmatpush1.msra.mxu0 %v2432
  %v2434 = vand.u32 %v101, 4294901760
  %2435 = vmatprep.subr.mxu0 %v2434
  %v2436 = vand.u32 %v100, 4294901760
  %2437 = vmatpush1.msra.mxu0 %v2436
  %v2438 = vand.u32 %v104, 4294901760
  %2439 = vmatprep.subr.mxu0 %v2438
  %v2440 = vand.u32 %v103, 4294901760
  %2441 = vmatpush1.msra.mxu0 %v2440
  %v2442 = vand.u32 %v107, 4294901760
  %2443 = vmatprep.subr.mxu0 %v2442
  %v2444 = vand.u32 %v106, 4294901760
  %2445 = vmatpush1.msra.mxu0 %v2444
  %v2446 = vand.u32 %v110, 4294901760
  %2447 = vmatprep.subr.mxu0 %v2446
  %v2448 = vand.u32 %v109, 4294901760
  %2449 = vmatpush1.msra.mxu0 %v2448
  %v2450 = vand.u32 %v113, 4294901760
  %2451 = vmatprep.subr.mxu0 %v2450
  %v2452 = vand.u32 %v112, 4294901760
  %2453 = vmatpush1.msra.mxu0 %v2452
  %v2454 = vand.u32 %v116, 4294901760
  %2455 = vmatprep.subr.mxu0 %v2454
  %v2456 = vand.u32 %v115, 4294901760
  %2457 = vmatpush1.msra.mxu0 %v2456
  %v2458 = vand.u32 %v119, 4294901760
  %2459 = vmatprep.subr.mxu0 %v2458
  %v2460 = vand.u32 %v118, 4294901760
  %2461 = vmatpush1.msra.mxu0 %v2460
  %v2462 = vand.u32 %v122, 4294901760
  %2463 = vmatprep.subr.mxu0 %v2462
  %v2464 = vand.u32 %v121, 4294901760
  %2465 = vmatpush1.msra.mxu0 %v2464
  %v2466 = vand.u32 %v125, 4294901760
  %2467 = vmatprep.subr.mxu0 %v2466
  %v2468 = vand.u32 %v124, 4294901760
  %2469 = vmatpush1.msra.mxu0 %v2468
  %v2470 = vand.u32 %v128, 4294901760
  %2471 = vmatprep.subr.mxu0 %v2470
  %v2472 = vand.u32 %v127, 4294901760
  %2473 = vmatpush1.msra.mxu0 %v2472
  %v2474 = vand.u32 %v131, 4294901760
  %2475 = vmatprep.subr.mxu0 %v2474
  %v2476 = vand.u32 %v130, 4294901760
  %2477 = vmatpush1.msra.mxu0 %v2476
  %v2478 = vand.u32 %v134, 4294901760
  %2479 = vmatprep.subr.mxu0 %v2478
  %v2480 = vand.u32 %v133, 4294901760
  %2481 = vmatpush1.msra.mxu0 %v2480
  %v2482 = vand.u32 %v137, 4294901760
  %2483 = vmatprep.subr.mxu0 %v2482
  %v2484 = vand.u32 %v136, 4294901760
  %2485 = vmatpush1.msra.mxu0 %v2484
  %2486 = vmatprep.subr.mxu0 0.0
  %2487 = vmatpush1.msra.mxu0 0.0
  %2488 = vmatprep.subr.mxu0 0.0
  %2489 = vmatpush1.msra.mxu0 0.0
  %2490 = vmatprep.subr.mxu0 0.0
  %2491 = vmatpush1.msra.mxu0 0.0
  %2492 = vmatprep.subr.mxu0 0.0
  %2493 = vmatpush1.msra.mxu0 0.0
  %2494 = vmatprep.subr.mxu0 0.0
  %2495 = vmatpush1.msra.mxu0 0.0
  %2496 = vmatprep.subr.mxu0 0.0
  %2497 = vmatpush1.msra.mxu0 0.0
  %2498 = vmatprep.subr.mxu0 0.0
  %2499 = vmatpush1.msra.mxu0 0.0
  %2500 = vmatprep.subr.mxu0 0.0
  %2501 = vmatpush1.msra.mxu0 0.0
  %2502 = vmatprep.subr.mxu0 0.0
  %2503 = vmatpush1.msra.mxu0 0.0
  %2504 = vmatprep.subr.mxu0 0.0
  %2505 = vmatpush1.msra.mxu0 0.0
  %2506 = vmatprep.subr.mxu0 0.0
  %2507 = vmatpush1.msra.mxu0 0.0
  %2508 = vmatprep.subr.mxu0 0.0
  %2509 = vmatpush1.msra.mxu0 0.0
  %2510 = vmatprep.subr.mxu0 0.0
  %2511 = vmatpush1.msra.mxu0 0.0
  %2512 = vmatprep.subr.mxu0 0.0
  %2513 = vmatpush1.msra.mxu0 0.0
  %2514 = vmatprep.subr.mxu0 0.0
  %2515 = vmatpush1.msra.mxu0 0.0
  %2516 = vmatprep.subr.mxu0 0.0
  %2517 = vmatpush1.msra.mxu0 0.0
  %2518 = vmatprep.mubr.f32.mxu0 0.0
  %v2519 = vand.u32 %v1654, 4294901760
  %2520 = vmatmul.mubr.f32.gmra.mrb[0].mxu0 %v2519
  %v2521 = vpop.f32.mrb[0].mxu0
  %v2522 = vadd.f32 %v2418, %v2521
  %v2523 = vpop.f32.mrb[0].mxu0
  %v2524 = vadd.f32 %v2420, %v2523
  %2525 = vdwg.mxu0
  %2526 = vmatprep.subr.mxu0 0.0
  %v2527 = vand.u32 %v93, 4294901760
  %2528 = vmatpush1.msra.mxu0 %v2527
  %2529 = vmatprep.subr.mxu0 0.0
  %v2530 = vand.u32 %v96, 4294901760
  %2531 = vmatpush1.msra.mxu0 %v2530
  %2532 = vmatprep.subr.mxu0 0.0
  %v2533 = vand.u32 %v99, 4294901760
  %2534 = vmatpush1.msra.mxu0 %v2533
  %2535 = vmatprep.subr.mxu0 0.0
  %v2536 = vand.u32 %v102, 4294901760
  %2537 = vmatpush1.msra.mxu0 %v2536
  %2538 = vmatprep.subr.mxu0 0.0
  %v2539 = vand.u32 %v105, 4294901760
  %2540 = vmatpush1.msra.mxu0 %v2539
  %2541 = vmatprep.subr.mxu0 0.0
  %v2542 = vand.u32 %v108, 4294901760
  %2543 = vmatpush1.msra.mxu0 %v2542
  %2544 = vmatprep.subr.mxu0 0.0
  %v2545 = vand.u32 %v111, 4294901760
  %2546 = vmatpush1.msra.mxu0 %v2545
  %2547 = vmatprep.subr.mxu0 0.0
  %v2548 = vand.u32 %v114, 4294901760
  %2549 = vmatpush1.msra.mxu0 %v2548
  %2550 = vmatprep.subr.mxu0 0.0
  %v2551 = vand.u32 %v117, 4294901760
  %2552 = vmatpush1.msra.mxu0 %v2551
  %2553 = vmatprep.subr.mxu0 0.0
  %v2554 = vand.u32 %v120, 4294901760
  %2555 = vmatpush1.msra.mxu0 %v2554
  %2556 = vmatprep.subr.mxu0 0.0
  %v2557 = vand.u32 %v123, 4294901760
  %2558 = vmatpush1.msra.mxu0 %v2557
  %2559 = vmatprep.subr.mxu0 0.0
  %v2560 = vand.u32 %v126, 4294901760
  %2561 = vmatpush1.msra.mxu0 %v2560
  %2562 = vmatprep.subr.mxu0 0.0
  %v2563 = vand.u32 %v129, 4294901760
  %2564 = vmatpush1.msra.mxu0 %v2563
  %2565 = vmatprep.subr.mxu0 0.0
  %v2566 = vand.u32 %v132, 4294901760
  %2567 = vmatpush1.msra.mxu0 %v2566
  %2568 = vmatprep.subr.mxu0 0.0
  %v2569 = vand.u32 %v135, 4294901760
  %2570 = vmatpush1.msra.mxu0 %v2569
  %2571 = vmatprep.subr.mxu0 0.0
  %v2572 = vand.u32 %v138, 4294901760
  %2573 = vmatpush1.msra.mxu0 %v2572
  %2574 = vmatprep.subr.mxu0 0.0
  %2575 = vmatpush1.msra.mxu0 0.0
  %2576 = vmatprep.subr.mxu0 0.0
  %2577 = vmatpush1.msra.mxu0 0.0
  %2578 = vmatprep.subr.mxu0 0.0
  %2579 = vmatpush1.msra.mxu0 0.0
  %2580 = vmatprep.subr.mxu0 0.0
  %2581 = vmatpush1.msra.mxu0 0.0
  %2582 = vmatprep.subr.mxu0 0.0
  %2583 = vmatpush1.msra.mxu0 0.0
  %2584 = vmatprep.subr.mxu0 0.0
  %2585 = vmatpush1.msra.mxu0 0.0
  %2586 = vmatprep.subr.mxu0 0.0
  %2587 = vmatpush1.msra.mxu0 0.0
  %2588 = vmatprep.subr.mxu0 0.0
  %2589 = vmatpush1.msra.mxu0 0.0
  %2590 = vmatprep.subr.mxu0 0.0
  %2591 = vmatpush1.msra.mxu0 0.0
  %2592 = vmatprep.subr.mxu0 0.0
  %2593 = vmatpush1.msra.mxu0 0.0
  %2594 = vmatprep.subr.mxu0 0.0
  %2595 = vmatpush1.msra.mxu0 0.0
  %2596 = vmatprep.subr.mxu0 0.0
  %2597 = vmatpush1.msra.mxu0 0.0
  %2598 = vmatprep.subr.mxu0 0.0
  %2599 = vmatpush1.msra.mxu0 0.0
  %2600 = vmatprep.subr.mxu0 0.0
  %2601 = vmatpush1.msra.mxu0 0.0
  %2602 = vmatprep.subr.mxu0 0.0
  %2603 = vmatpush1.msra.mxu0 0.0
  %2604 = vmatprep.subr.mxu0 0.0
  %2605 = vmatpush1.msra.mxu0 0.0
  %2606 = vmatprep.mubr.f32.mxu0 0.0
  %v2607 = vand.u32 %v1654, 4294901760
  %v2608 = vsub.f32 %v1654, %v2607
  %v2609 = vand.u32 %v2608, 4294901760
  %v2610 = vsub.f32 %v2608, %v2609
  %v2611 = vand.u32 %v2610, 4294901760
  %2612 = vmatmul.mubr.f32.gmra.mrb[0].mxu0 %v2611
  %v2613 = vpop.f32.mrb[0].mxu0
  %v2614 = vadd.f32 %v1667, %v2613
  %v2615 = vpop.f32.mrb[0].mxu0
  %2616 = vdwg.mxu0
  %2617 = vmatprep.subr.mxu0 0.0
  %v2618 = vand.u32 %v93, 4294901760
  %v2619 = vsub.f32 %v93, %v2618
  %v2620 = vand.u32 %v2619, 4294901760
  %v2621 = vsub.f32 %v2619, %v2620
  %v2622 = vand.u32 %v2621, 4294901760
  %2623 = vmatpush1.msra.mxu0 %v2622
  %2624 = vmatprep.subr.mxu0 0.0
  %v2625 = vand.u32 %v96, 4294901760
  %v2626 = vsub.f32 %v96, %v2625
  %v2627 = vand.u32 %v2626, 4294901760
  %v2628 = vsub.f32 %v2626, %v2627
  %v2629 = vand.u32 %v2628, 4294901760
  %2630 = vmatpush1.msra.mxu0 %v2629
  %2631 = vmatprep.subr.mxu0 0.0
  %v2632 = vand.u32 %v99, 4294901760
  %v2633 = vsub.f32 %v99, %v2632
  %v2634 = vand.u32 %v2633, 4294901760
  %v2635 = vsub.f32 %v2633, %v2634
  %v2636 = vand.u32 %v2635, 4294901760
  %2637 = vmatpush1.msra.mxu0 %v2636
  %2638 = vmatprep.subr.mxu0 0.0
  %v2639 = vand.u32 %v102, 4294901760
  %v2640 = vsub.f32 %v102, %v2639
  %v2641 = vand.u32 %v2640, 4294901760
  %v2642 = vsub.f32 %v2640, %v2641
  %v2643 = vand.u32 %v2642, 4294901760
  %2644 = vmatpush1.msra.mxu0 %v2643
  %2645 = vmatprep.subr.mxu0 0.0
  %v2646 = vand.u32 %v105, 4294901760
  %v2647 = vsub.f32 %v105, %v2646
  %v2648 = vand.u32 %v2647, 4294901760
  %v2649 = vsub.f32 %v2647, %v2648
  %v2650 = vand.u32 %v2649, 4294901760
  %2651 = vmatpush1.msra.mxu0 %v2650
  %2652 = vmatprep.subr.mxu0 0.0
  %v2653 = vand.u32 %v108, 4294901760
  %v2654 = vsub.f32 %v108, %v2653
  %v2655 = vand.u32 %v2654, 4294901760
  %v2656 = vsub.f32 %v2654, %v2655
  %v2657 = vand.u32 %v2656, 4294901760
  %2658 = vmatpush1.msra.mxu0 %v2657
  %2659 = vmatprep.subr.mxu0 0.0
  %v2660 = vand.u32 %v111, 4294901760
  %v2661 = vsub.f32 %v111, %v2660
  %v2662 = vand.u32 %v2661, 4294901760
  %v2663 = vsub.f32 %v2661, %v2662
  %v2664 = vand.u32 %v2663, 4294901760
  %2665 = vmatpush1.msra.mxu0 %v2664
  %2666 = vmatprep.subr.mxu0 0.0
  %v2667 = vand.u32 %v114, 4294901760
  %v2668 = vsub.f32 %v114, %v2667
  %v2669 = vand.u32 %v2668, 4294901760
  %v2670 = vsub.f32 %v2668, %v2669
  %v2671 = vand.u32 %v2670, 4294901760
  %2672 = vmatpush1.msra.mxu0 %v2671
  %2673 = vmatprep.subr.mxu0 0.0
  %v2674 = vand.u32 %v117, 4294901760
  %v2675 = vsub.f32 %v117, %v2674
  %v2676 = vand.u32 %v2675, 4294901760
  %v2677 = vsub.f32 %v2675, %v2676
  %v2678 = vand.u32 %v2677, 4294901760
  %2679 = vmatpush1.msra.mxu0 %v2678
  %2680 = vmatprep.subr.mxu0 0.0
  %v2681 = vand.u32 %v120, 4294901760
  %v2682 = vsub.f32 %v120, %v2681
  %v2683 = vand.u32 %v2682, 4294901760
  %v2684 = vsub.f32 %v2682, %v2683
  %v2685 = vand.u32 %v2684, 4294901760
  %2686 = vmatpush1.msra.mxu0 %v2685
  %2687 = vmatprep.subr.mxu0 0.0
  %v2688 = vand.u32 %v123, 4294901760
  %v2689 = vsub.f32 %v123, %v2688
  %v2690 = vand.u32 %v2689, 4294901760
  %v2691 = vsub.f32 %v2689, %v2690
  %v2692 = vand.u32 %v2691, 4294901760
  %2693 = vmatpush1.msra.mxu0 %v2692
  %2694 = vmatprep.subr.mxu0 0.0
  %v2695 = vand.u32 %v126, 4294901760
  %v2696 = vsub.f32 %v126, %v2695
  %v2697 = vand.u32 %v2696, 4294901760
  %v2698 = vsub.f32 %v2696, %v2697
  %v2699 = vand.u32 %v2698, 4294901760
  %2700 = vmatpush1.msra.mxu0 %v2699
  %2701 = vmatprep.subr.mxu0 0.0
  %v2702 = vand.u32 %v129, 4294901760
  %v2703 = vsub.f32 %v129, %v2702
  %v2704 = vand.u32 %v2703, 4294901760
  %v2705 = vsub.f32 %v2703, %v2704
  %v2706 = vand.u32 %v2705, 4294901760
  %2707 = vmatpush1.msra.mxu0 %v2706
  %2708 = vmatprep.subr.mxu0 0.0
  %v2709 = vand.u32 %v132, 4294901760
  %v2710 = vsub.f32 %v132, %v2709
  %v2711 = vand.u32 %v2710, 4294901760
  %v2712 = vsub.f32 %v2710, %v2711
  %v2713 = vand.u32 %v2712, 4294901760
  %2714 = vmatpush1.msra.mxu0 %v2713
  %2715 = vmatprep.subr.mxu0 0.0
  %v2716 = vand.u32 %v135, 4294901760
  %v2717 = vsub.f32 %v135, %v2716
  %v2718 = vand.u32 %v2717, 4294901760
  %v2719 = vsub.f32 %v2717, %v2718
  %v2720 = vand.u32 %v2719, 4294901760
  %2721 = vmatpush1.msra.mxu0 %v2720
  %2722 = vmatprep.subr.mxu0 0.0
  %v2723 = vand.u32 %v138, 4294901760
  %v2724 = vsub.f32 %v138, %v2723
  %v2725 = vand.u32 %v2724, 4294901760
  %v2726 = vsub.f32 %v2724, %v2725
  %v2727 = vand.u32 %v2726, 4294901760
  %2728 = vmatpush1.msra.mxu0 %v2727
  %2729 = vmatprep.subr.mxu0 0.0
  %2730 = vmatpush1.msra.mxu0 0.0
  %2731 = vmatprep.subr.mxu0 0.0
  %2732 = vmatpush1.msra.mxu0 0.0
  %2733 = vmatprep.subr.mxu0 0.0
  %2734 = vmatpush1.msra.mxu0 0.0
  %2735 = vmatprep.subr.mxu0 0.0
  %2736 = vmatpush1.msra.mxu0 0.0
  %2737 = vmatprep.subr.mxu0 0.0
  %2738 = vmatpush1.msra.mxu0 0.0
  %2739 = vmatprep.subr.mxu0 0.0
  %2740 = vmatpush1.msra.mxu0 0.0
  %2741 = vmatprep.subr.mxu0 0.0
  %2742 = vmatpush1.msra.mxu0 0.0
  %2743 = vmatprep.subr.mxu0 0.0
  %2744 = vmatpush1.msra.mxu0 0.0
  %2745 = vmatprep.subr.mxu0 0.0
  %2746 = vmatpush1.msra.mxu0 0.0
  %2747 = vmatprep.subr.mxu0 0.0
  %2748 = vmatpush1.msra.mxu0 0.0
  %2749 = vmatprep.subr.mxu0 0.0
  %2750 = vmatpush1.msra.mxu0 0.0
  %2751 = vmatprep.subr.mxu0 0.0
  %2752 = vmatpush1.msra.mxu0 0.0
  %2753 = vmatprep.subr.mxu0 0.0
  %2754 = vmatpush1.msra.mxu0 0.0
  %2755 = vmatprep.subr.mxu0 0.0
  %2756 = vmatpush1.msra.mxu0 0.0
  %2757 = vmatprep.subr.mxu0 0.0
  %2758 = vmatpush1.msra.mxu0 0.0
  %2759 = vmatprep.subr.mxu0 0.0
  %2760 = vmatpush1.msra.mxu0 0.0
  %2761 = vmatprep.mubr.f32.mxu0 0.0
  %v2762 = vand.u32 %v1654, 4294901760
  %2763 = vmatmul.mubr.f32.gmra.mrb[0].mxu0 %v2762
  %v2764 = vpop.f32.mrb[0].mxu0
  %v2765 = vadd.f32 %v2614, %v2764
  %v2766 = vpop.f32.mrb[0].mxu0
  %2767 = vdwg.mxu0
  %2768 = vmatprep.subr.mxu0 0.0
  %v2769 = vand.u32 %v93, 4294901760
  %v2770 = vsub.f32 %v93, %v2769
  %2771 = vmatpush1.msra.mxu0 %v2770
  %2772 = vmatprep.subr.mxu0 0.0
  %v2773 = vand.u32 %v96, 4294901760
  %v2774 = vsub.f32 %v96, %v2773
  %2775 = vmatpush1.msra.mxu0 %v2774
  %2776 = vmatprep.subr.mxu0 0.0
  %v2777 = vand.u32 %v99, 4294901760
  %v2778 = vsub.f32 %v99, %v2777
  %2779 = vmatpush1.msra.mxu0 %v2778
  %2780 = vmatprep.subr.mxu0 0.0
  %v2781 = vand.u32 %v102, 4294901760
  %v2782 = vsub.f32 %v102, %v2781
  %2783 = vmatpush1.msra.mxu0 %v2782
  %2784 = vmatprep.subr.mxu0 0.0
  %v2785 = vand.u32 %v105, 4294901760
  %v2786 = vsub.f32 %v105, %v2785
  %2787 = vmatpush1.msra.mxu0 %v2786
  %2788 = vmatprep.subr.mxu0 0.0
  %v2789 = vand.u32 %v108, 4294901760
  %v2790 = vsub.f32 %v108, %v2789
  %2791 = vmatpush1.msra.mxu0 %v2790
  %2792 = vmatprep.subr.mxu0 0.0
  %v2793 = vand.u32 %v111, 4294901760
  %v2794 = vsub.f32 %v111, %v2793
  %2795 = vmatpush1.msra.mxu0 %v2794
  %2796 = vmatprep.subr.mxu0 0.0
  %v2797 = vand.u32 %v114, 4294901760
  %v2798 = vsub.f32 %v114, %v2797
  %2799 = vmatpush1.msra.mxu0 %v2798
  %2800 = vmatprep.subr.mxu0 0.0
  %v2801 = vand.u32 %v117, 4294901760
  %v2802 = vsub.f32 %v117, %v2801
  %2803 = vmatpush1.msra.mxu0 %v2802
  %2804 = vmatprep.subr.mxu0 0.0
  %v2805 = vand.u32 %v120, 4294901760
  %v2806 = vsub.f32 %v120, %v2805
  %2807 = vmatpush1.msra.mxu0 %v2806
  %2808 = vmatprep.subr.mxu0 0.0
  %v2809 = vand.u32 %v123, 4294901760
  %v2810 = vsub.f32 %v123, %v2809
  %2811 = vmatpush1.msra.mxu0 %v2810
  %2812 = vmatprep.subr.mxu0 0.0
  %v2813 = vand.u32 %v126, 4294901760
  %v2814 = vsub.f32 %v126, %v2813
  %2815 = vmatpush1.msra.mxu0 %v2814
  %2816 = vmatprep.subr.mxu0 0.0
  %v2817 = vand.u32 %v129, 4294901760
  %v2818 = vsub.f32 %v129, %v2817
  %2819 = vmatpush1.msra.mxu0 %v2818
  %2820 = vmatprep.subr.mxu0 0.0
  %v2821 = vand.u32 %v132, 4294901760
  %v2822 = vsub.f32 %v132, %v2821
  %2823 = vmatpush1.msra.mxu0 %v2822
  %2824 = vmatprep.subr.mxu0 0.0
  %v2825 = vand.u32 %v135, 4294901760
  %v2826 = vsub.f32 %v135, %v2825
  %2827 = vmatpush1.msra.mxu0 %v2826
  %2828 = vmatprep.subr.mxu0 0.0
  %v2829 = vand.u32 %v138, 4294901760
  %v2830 = vsub.f32 %v138, %v2829
  %2831 = vmatpush1.msra.mxu0 %v2830
  %2832 = vmatprep.subr.mxu0 0.0
  %2833 = vmatpush1.msra.mxu0 0.0
  %2834 = vmatprep.subr.mxu0 0.0
  %2835 = vmatpush1.msra.mxu0 0.0
  %2836 = vmatprep.subr.mxu0 0.0
  %2837 = vmatpush1.msra.mxu0 0.0
  %2838 = vmatprep.subr.mxu0 0.0
  %2839 = vmatpush1.msra.mxu0 0.0
  %2840 = vmatprep.subr.mxu0 0.0
  %2841 = vmatpush1.msra.mxu0 0.0
  %2842 = vmatprep.subr.mxu0 0.0
  %2843 = vmatpush1.msra.mxu0 0.0
  %2844 = vmatprep.subr.mxu0 0.0
  %2845 = vmatpush1.msra.mxu0 0.0
  %2846 = vmatprep.subr.mxu0 0.0
  %2847 = vmatpush1.msra.mxu0 0.0
  %2848 = vmatprep.subr.mxu0 0.0
  %2849 = vmatpush1.msra.mxu0 0.0
  %2850 = vmatprep.subr.mxu0 0.0
  %2851 = vmatpush1.msra.mxu0 0.0
  %2852 = vmatprep.subr.mxu0 0.0
  %2853 = vmatpush1.msra.mxu0 0.0
  %2854 = vmatprep.subr.mxu0 0.0
  %2855 = vmatpush1.msra.mxu0 0.0
  %2856 = vmatprep.subr.mxu0 0.0
  %2857 = vmatpush1.msra.mxu0 0.0
  %2858 = vmatprep.subr.mxu0 0.0
  %2859 = vmatpush1.msra.mxu0 0.0
  %2860 = vmatprep.subr.mxu0 0.0
  %2861 = vmatpush1.msra.mxu0 0.0
  %2862 = vmatprep.subr.mxu0 0.0
  %2863 = vmatpush1.msra.mxu0 0.0
  %2864 = vmatprep.mubr.f32.mxu0 0.0
  %v2865 = vand.u32 %v1654, 4294901760
  %v2866 = vsub.f32 %v1654, %v2865
  %2867 = vmatmul.mubr.f32.gmra.mrb[0].mxu0 %v2866
  %v2868 = vpop.f32.mrb[0].mxu0
  %v2869 = vadd.f32 %v2765, %v2868
  %v2870 = vpop.f32.mrb[0].mxu0
  %2871 = vdwg.mxu0
  %2872 = vmatprep.subr.mxu0 0.0
  %v2873 = vand.u32 %v93, 4294901760
  %2874 = vmatpush1.msra.mxu0 %v2873
  %2875 = vmatprep.subr.mxu0 0.0
  %v2876 = vand.u32 %v96, 4294901760
  %2877 = vmatpush1.msra.mxu0 %v2876
  %2878 = vmatprep.subr.mxu0 0.0
  %v2879 = vand.u32 %v99, 4294901760
  %2880 = vmatpush1.msra.mxu0 %v2879
  %2881 = vmatprep.subr.mxu0 0.0
  %v2882 = vand.u32 %v102, 4294901760
  %2883 = vmatpush1.msra.mxu0 %v2882
  %2884 = vmatprep.subr.mxu0 0.0
  %v2885 = vand.u32 %v105, 4294901760
  %2886 = vmatpush1.msra.mxu0 %v2885
  %2887 = vmatprep.subr.mxu0 0.0
  %v2888 = vand.u32 %v108, 4294901760
  %2889 = vmatpush1.msra.mxu0 %v2888
  %2890 = vmatprep.subr.mxu0 0.0
  %v2891 = vand.u32 %v111, 4294901760
  %2892 = vmatpush1.msra.mxu0 %v2891
  %2893 = vmatprep.subr.mxu0 0.0
  %v2894 = vand.u32 %v114, 4294901760
  %2895 = vmatpush1.msra.mxu0 %v2894
  %2896 = vmatprep.subr.mxu0 0.0
  %v2897 = vand.u32 %v117, 4294901760
  %2898 = vmatpush1.msra.mxu0 %v2897
  %2899 = vmatprep.subr.mxu0 0.0
  %v2900 = vand.u32 %v120, 4294901760
  %2901 = vmatpush1.msra.mxu0 %v2900
  %2902 = vmatprep.subr.mxu0 0.0
  %v2903 = vand.u32 %v123, 4294901760
  %2904 = vmatpush1.msra.mxu0 %v2903
  %2905 = vmatprep.subr.mxu0 0.0
  %v2906 = vand.u32 %v126, 4294901760
  %2907 = vmatpush1.msra.mxu0 %v2906
  %2908 = vmatprep.subr.mxu0 0.0
  %v2909 = vand.u32 %v129, 4294901760
  %2910 = vmatpush1.msra.mxu0 %v2909
  %2911 = vmatprep.subr.mxu0 0.0
  %v2912 = vand.u32 %v132, 4294901760
  %2913 = vmatpush1.msra.mxu0 %v2912
  %2914 = vmatprep.subr.mxu0 0.0
  %v2915 = vand.u32 %v135, 4294901760
  %2916 = vmatpush1.msra.mxu0 %v2915
  %2917 = vmatprep.subr.mxu0 0.0
  %v2918 = vand.u32 %v138, 4294901760
  %2919 = vmatpush1.msra.mxu0 %v2918
  %2920 = vmatprep.subr.mxu0 0.0
  %2921 = vmatpush1.msra.mxu0 0.0
  %2922 = vmatprep.subr.mxu0 0.0
  %2923 = vmatpush1.msra.mxu0 0.0
  %2924 = vmatprep.subr.mxu0 0.0
  %2925 = vmatpush1.msra.mxu0 0.0
  %2926 = vmatprep.subr.mxu0 0.0
  %2927 = vmatpush1.msra.mxu0 0.0
  %2928 = vmatprep.subr.mxu0 0.0
  %2929 = vmatpush1.msra.mxu0 0.0
  %2930 = vmatprep.subr.mxu0 0.0
  %2931 = vmatpush1.msra.mxu0 0.0
  %2932 = vmatprep.subr.mxu0 0.0
  %2933 = vmatpush1.msra.mxu0 0.0
  %2934 = vmatprep.subr.mxu0 0.0
  %2935 = vmatpush1.msra.mxu0 0.0
  %2936 = vmatprep.subr.mxu0 0.0
  %2937 = vmatpush1.msra.mxu0 0.0
  %2938 = vmatprep.subr.mxu0 0.0
  %2939 = vmatpush1.msra.mxu0 0.0
  %2940 = vmatprep.subr.mxu0 0.0
  %2941 = vmatpush1.msra.mxu0 0.0
  %2942 = vmatprep.subr.mxu0 0.0
  %2943 = vmatpush1.msra.mxu0 0.0
  %2944 = vmatprep.subr.mxu0 0.0
  %2945 = vmatpush1.msra.mxu0 0.0
  %2946 = vmatprep.subr.mxu0 0.0
  %2947 = vmatpush1.msra.mxu0 0.0
  %2948 = vmatprep.subr.mxu0 0.0
  %2949 = vmatpush1.msra.mxu0 0.0
  %2950 = vmatprep.subr.mxu0 0.0
  %2951 = vmatpush1.msra.mxu0 0.0
  %2952 = vmatprep.mubr.f32.mxu0 0.0
  %v2953 = vand.u32 %v1654, 4294901760
  %v2954 = vsub.f32 %v1654, %v2953
  %v2955 = vand.u32 %v2954, 4294901760
  %2956 = vmatmul.mubr.f32.gmra.mrb[0].mxu0 %v2955
  %v2957 = vpop.f32.mrb[0].mxu0
  %v2958 = vadd.f32 %v2869, %v2957
  %v2959 = vpop.f32.mrb[0].mxu0
  %2960 = vdwg.mxu0
  %2961 = vmatprep.subr.mxu0 0.0
  %v2962 = vand.u32 %v93, 4294901760
  %v2963 = vsub.f32 %v93, %v2962
  %v2964 = vand.u32 %v2963, 4294901760
  %2965 = vmatpush1.msra.mxu0 %v2964
  %2966 = vmatprep.subr.mxu0 0.0
  %v2967 = vand.u32 %v96, 4294901760
  %v2968 = vsub.f32 %v96, %v2967
  %v2969 = vand.u32 %v2968, 4294901760
  %2970 = vmatpush1.msra.mxu0 %v2969
  %2971 = vmatprep.subr.mxu0 0.0
  %v2972 = vand.u32 %v99, 4294901760
  %v2973 = vsub.f32 %v99, %v2972
  %v2974 = vand.u32 %v2973, 4294901760
  %2975 = vmatpush1.msra.mxu0 %v2974
  %2976 = vmatprep.subr.mxu0 0.0
  %v2977 = vand.u32 %v102, 4294901760
  %v2978 = vsub.f32 %v102, %v2977
  %v2979 = vand.u32 %v2978, 4294901760
  %2980 = vmatpush1.msra.mxu0 %v2979
  %2981 = vmatprep.subr.mxu0 0.0
  %v2982 = vand.u32 %v105, 4294901760
  %v2983 = vsub.f32 %v105, %v2982
  %v2984 = vand.u32 %v2983, 4294901760
  %2985 = vmatpush1.msra.mxu0 %v2984
  %2986 = vmatprep.subr.mxu0 0.0
  %v2987 = vand.u32 %v108, 4294901760
  %v2988 = vsub.f32 %v108, %v2987
  %v2989 = vand.u32 %v2988, 4294901760
  %2990 = vmatpush1.msra.mxu0 %v2989
  %2991 = vmatprep.subr.mxu0 0.0
  %v2992 = vand.u32 %v111, 4294901760
  %v2993 = vsub.f32 %v111, %v2992
  %v2994 = vand.u32 %v2993, 4294901760
  %2995 = vmatpush1.msra.mxu0 %v2994
  %2996 = vmatprep.subr.mxu0 0.0
  %v2997 = vand.u32 %v114, 4294901760
  %v2998 = vsub.f32 %v114, %v2997
  %v2999 = vand.u32 %v2998, 4294901760
  %3000 = vmatpush1.msra.mxu0 %v2999
  %3001 = vmatprep.subr.mxu0 0.0
  %v3002 = vand.u32 %v117, 4294901760
  %v3003 = vsub.f32 %v117, %v3002
  %v3004 = vand.u32 %v3003, 4294901760
  %3005 = vmatpush1.msra.mxu0 %v3004
  %3006 = vmatprep.subr.mxu0 0.0
  %v3007 = vand.u32 %v120, 4294901760
  %v3008 = vsub.f32 %v120, %v3007
  %v3009 = vand.u32 %v3008, 4294901760
  %3010 = vmatpush1.msra.mxu0 %v3009
  %3011 = vmatprep.subr.mxu0 0.0
  %v3012 = vand.u32 %v123, 4294901760
  %v3013 = vsub.f32 %v123, %v3012
  %v3014 = vand.u32 %v3013, 4294901760
  %3015 = vmatpush1.msra.mxu0 %v3014
  %3016 = vmatprep.subr.mxu0 0.0
  %v3017 = vand.u32 %v126, 4294901760
  %v3018 = vsub.f32 %v126, %v3017
  %v3019 = vand.u32 %v3018, 4294901760
  %3020 = vmatpush1.msra.mxu0 %v3019
  %3021 = vmatprep.subr.mxu0 0.0
  %v3022 = vand.u32 %v129, 4294901760
  %v3023 = vsub.f32 %v129, %v3022
  %v3024 = vand.u32 %v3023, 4294901760
  %3025 = vmatpush1.msra.mxu0 %v3024
  %3026 = vmatprep.subr.mxu0 0.0
  %v3027 = vand.u32 %v132, 4294901760
  %v3028 = vsub.f32 %v132, %v3027
  %v3029 = vand.u32 %v3028, 4294901760
  %3030 = vmatpush1.msra.mxu0 %v3029
  %3031 = vmatprep.subr.mxu0 0.0
  %v3032 = vand.u32 %v135, 4294901760
  %v3033 = vsub.f32 %v135, %v3032
  %v3034 = vand.u32 %v3033, 4294901760
  %3035 = vmatpush1.msra.mxu0 %v3034
  %3036 = vmatprep.subr.mxu0 0.0
  %v3037 = vand.u32 %v138, 4294901760
  %v3038 = vsub.f32 %v138, %v3037
  %v3039 = vand.u32 %v3038, 4294901760
  %3040 = vmatpush1.msra.mxu0 %v3039
  %3041 = vmatprep.subr.mxu0 0.0
  %3042 = vmatpush1.msra.mxu0 0.0
  %3043 = vmatprep.subr.mxu0 0.0
  %3044 = vmatpush1.msra.mxu0 0.0
  %3045 = vmatprep.subr.mxu0 0.0
  %3046 = vmatpush1.msra.mxu0 0.0
  %3047 = vmatprep.subr.mxu0 0.0
  %3048 = vmatpush1.msra.mxu0 0.0
  %3049 = vmatprep.subr.mxu0 0.0
  %3050 = vmatpush1.msra.mxu0 0.0
  %3051 = vmatprep.subr.mxu0 0.0
  %3052 = vmatpush1.msra.mxu0 0.0
  %3053 = vmatprep.subr.mxu0 0.0
  %3054 = vmatpush1.msra.mxu0 0.0
  %3055 = vmatprep.subr.mxu0 0.0
  %3056 = vmatpush1.msra.mxu0 0.0
  %3057 = vmatprep.subr.mxu0 0.0
  %3058 = vmatpush1.msra.mxu0 0.0
  %3059 = vmatprep.subr.mxu0 0.0
  %3060 = vmatpush1.msra.mxu0 0.0
  %3061 = vmatprep.subr.mxu0 0.0
  %3062 = vmatpush1.msra.mxu0 0.0
  %3063 = vmatprep.subr.mxu0 0.0
  %3064 = vmatpush1.msra.mxu0 0.0
  %3065 = vmatprep.subr.mxu0 0.0
  %3066 = vmatpush1.msra.mxu0 0.0
  %3067 = vmatprep.subr.mxu0 0.0
  %3068 = vmatpush1.msra.mxu0 0.0
  %3069 = vmatprep.subr.mxu0 0.0
  %3070 = vmatpush1.msra.mxu0 0.0
  %3071 = vmatprep.subr.mxu0 0.0
  %3072 = vmatpush1.msra.mxu0 0.0
  %3073 = vmatprep.mubr.f32.mxu0 0.0
  %v3074 = vand.u32 %v1654, 4294901760
  %3075 = vmatmul.mubr.f32.gmra.mrb[0].mxu0 %v3074
  %v3076 = vpop.f32.mrb[0].mxu0
  %v3077 = vadd.f32 %v2958, %v3076
  %v3078 = vpop.f32.mrb[0].mxu0
  %3079 = vdwg.mxu0
  %3080 = vmatprep.subr.mxu0 0.0
  %v3081 = vand.u32 %v93, 4294901760
  %3082 = vmatpush1.msra.mxu0 %v3081
  %3083 = vmatprep.subr.mxu0 0.0
  %v3084 = vand.u32 %v96, 4294901760
  %3085 = vmatpush1.msra.mxu0 %v3084
  %3086 = vmatprep.subr.mxu0 0.0
  %v3087 = vand.u32 %v99, 4294901760
  %3088 = vmatpush1.msra.mxu0 %v3087
  %3089 = vmatprep.subr.mxu0 0.0
  %v3090 = vand.u32 %v102, 4294901760
  %3091 = vmatpush1.msra.mxu0 %v3090
  %3092 = vmatprep.subr.mxu0 0.0
  %v3093 = vand.u32 %v105, 4294901760
  %3094 = vmatpush1.msra.mxu0 %v3093
  %3095 = vmatprep.subr.mxu0 0.0
  %v3096 = vand.u32 %v108, 4294901760
  %3097 = vmatpush1.msra.mxu0 %v3096
  %3098 = vmatprep.subr.mxu0 0.0
  %v3099 = vand.u32 %v111, 4294901760
  %3100 = vmatpush1.msra.mxu0 %v3099
  %3101 = vmatprep.subr.mxu0 0.0
  %v3102 = vand.u32 %v114, 4294901760
  %3103 = vmatpush1.msra.mxu0 %v3102
  %3104 = vmatprep.subr.mxu0 0.0
  %v3105 = vand.u32 %v117, 4294901760
  %3106 = vmatpush1.msra.mxu0 %v3105
  %3107 = vmatprep.subr.mxu0 0.0
  %v3108 = vand.u32 %v120, 4294901760
  %3109 = vmatpush1.msra.mxu0 %v3108
  %3110 = vmatprep.subr.mxu0 0.0
  %v3111 = vand.u32 %v123, 4294901760
  %3112 = vmatpush1.msra.mxu0 %v3111
  %3113 = vmatprep.subr.mxu0 0.0
  %v3114 = vand.u32 %v126, 4294901760
  %3115 = vmatpush1.msra.mxu0 %v3114
  %3116 = vmatprep.subr.mxu0 0.0
  %v3117 = vand.u32 %v129, 4294901760
  %3118 = vmatpush1.msra.mxu0 %v3117
  %3119 = vmatprep.subr.mxu0 0.0
  %v3120 = vand.u32 %v132, 4294901760
  %3121 = vmatpush1.msra.mxu0 %v3120
  %3122 = vmatprep.subr.mxu0 0.0
  %v3123 = vand.u32 %v135, 4294901760
  %3124 = vmatpush1.msra.mxu0 %v3123
  %3125 = vmatprep.subr.mxu0 0.0
  %v3126 = vand.u32 %v138, 4294901760
  %3127 = vmatpush1.msra.mxu0 %v3126
  %3128 = vmatprep.subr.mxu0 0.0
  %3129 = vmatpush1.msra.mxu0 0.0
  %3130 = vmatprep.subr.mxu0 0.0
  %3131 = vmatpush1.msra.mxu0 0.0
  %3132 = vmatprep.subr.mxu0 0.0
  %3133 = vmatpush1.msra.mxu0 0.0
  %3134 = vmatprep.subr.mxu0 0.0
  %3135 = vmatpush1.msra.mxu0 0.0
  %3136 = vmatprep.subr.mxu0 0.0
  %3137 = vmatpush1.msra.mxu0 0.0
  %3138 = vmatprep.subr.mxu0 0.0
  %3139 = vmatpush1.msra.mxu0 0.0
  %3140 = vmatprep.subr.mxu0 0.0
  %3141 = vmatpush1.msra.mxu0 0.0
  %3142 = vmatprep.subr.mxu0 0.0
  %3143 = vmatpush1.msra.mxu0 0.0
  %3144 = vmatprep.subr.mxu0 0.0
  %3145 = vmatpush1.msra.mxu0 0.0
  %3146 = vmatprep.subr.mxu0 0.0
  %3147 = vmatpush1.msra.mxu0 0.0
  %3148 = vmatprep.subr.mxu0 0.0
  %3149 = vmatpush1.msra.mxu0 0.0
  %3150 = vmatprep.subr.mxu0 0.0
  %3151 = vmatpush1.msra.mxu0 0.0
  %3152 = vmatprep.subr.mxu0 0.0
  %3153 = vmatpush1.msra.mxu0 0.0
  %3154 = vmatprep.subr.mxu0 0.0
  %3155 = vmatpush1.msra.mxu0 0.0
  %3156 = vmatprep.subr.mxu0 0.0
  %3157 = vmatpush1.msra.mxu0 0.0
  %3158 = vmatprep.subr.mxu0 0.0
  %3159 = vmatpush1.msra.mxu0 0.0
  %3160 = vmatprep.mubr.f32.mxu0 0.0
  %v3161 = vand.u32 %v1654, 4294901760
  %3162 = vmatmul.mubr.f32.gmra.mrb[0].mxu0 %v3161
  %v3163 = vpop.f32.mrb[0].mxu0
  %v3164 = vadd.f32 %v3077, %v3163
  %v3165 = vpop.f32.mrb[0].mxu0
  %3166 = vdwg.mxu0
  %v3167 = vadd.f32 %v1009, %v2522
  %v3168 = vxor.u32 %v3167, 2147483648
  %v3169 = vmul.f32 %v3168, 1.442695
  %v3170 = vpow.pop %v3169
  %v3171 = vadd.f32 %v3170, 1.0
  %v3172 = vrcp.pop %v3171
  %v3173 = vmul.f32 1.0, %v3172
  %v3174 = vadd.f32 %v1011, %v2524
  %v3175 = vxor.u32 %v3174, 2147483648
  %v3176 = vmul.f32 %v3175, 1.442695
  %v3177 = vpow.pop %v3176
  %v3178 = vadd.f32 %v3177, 1.0
  %v3179 = vrcp.pop %v3178
  %v3180 = vmul.f32 1.0, %v3179
  %v3181 = vmul.f32 %v3173, %v3164
  %v3182 = vadd.f32 %v1651, %v3181
  %v3183 = vtanh.pop %v3182
  %v3184 = vsub.f32 1.0, %v3180
  %v3185 = vmul.f32 %v3184, %v3183
  %v3186 = vmul.f32 %v3180, %v1654
  %v3187 = vadd.f32 %v3185, %v3186
  %3188 = vst [vmem:[#allocation2] sm:$0xff] %v3187
  %3189 = vst [vmem:[%s12] sm:$0xff] %v3187
  %v3190 = vld [vmem:[%s8] sm:$0xff]
  %v3191 = vld [vmem:[%s8 + $0x8] sm:$0xff]
  %v3192 = vld [vmem:[%s8 + $0x10] sm:$0xff]
  %v3193 = vld [vmem:[%s8 + $0x18] sm:$0xff]
  %v3194 = vld [vmem:[%s8 + $0x20] sm:$0xff]
  %v3195 = vld [vmem:[%s8 + $0x28] sm:$0xff]
  %v3196 = vld [vmem:[%s8 + $0x30] sm:$0xff]
  %v3197 = vld [vmem:[%s8 + $0x38] sm:$0xff]
  %v3198 = vld [vmem:[%s8 + $0x40] sm:$0xff]
  %v3199 = vld [vmem:[%s8 + $0x48] sm:$0xff]
  %v3200 = vld [vmem:[%s8 + $0x50] sm:$0xff]
  %v3201 = vld [vmem:[%s8 + $0x58] sm:$0xff]
  %v3202 = vld [vmem:[%s8 + $0x60] sm:$0xff]
  %v3203 = vld [vmem:[%s8 + $0x68] sm:$0xff]
  %v3204 = vld [vmem:[%s8 + $0x70] sm:$0xff]
  %v3205 = vld [vmem:[%s8 + $0x78] sm:$0xff]
  %v3206 = vld [vmem:[%s8 + $0x80] sm:$0xff]
  %v3207 = vld [vmem:[%s8 + $0x88] sm:$0xff]
  %v3208 = vld [vmem:[%s8 + $0x90] sm:$0xff]
  %v3209 = vld [vmem:[%s8 + $0x98] sm:$0xff]
  %v3210 = vld [vmem:[%s8 + $0xa0] sm:$0xff]
  %v3211 = vld [vmem:[%s8 + $0xa8] sm:$0xff]
  %v3212 = vld [vmem:[%s8 + $0xb0] sm:$0xff]
  %v3213 = vld [vmem:[%s8 + $0xb8] sm:$0xff]
  %v3214 = vld [vmem:[%s8 + $0xc0] sm:$0xff]
  %v3215 = vld [vmem:[%s8 + $0xc8] sm:$0xff]
  %v3216 = vld [vmem:[%s8 + $0xd0] sm:$0xff]
  %v3217 = vld [vmem:[%s8 + $0xd8] sm:$0xff]
  %v3218 = vld [vmem:[%s8 + $0xe0] sm:$0xff]
  %v3219 = vld [vmem:[%s8 + $0xe8] sm:$0xff]
  %v3220 = vld [vmem:[%s8 + $0xf0] sm:$0xff]
  %v3221 = vld [vmem:[%s8 + $0xf8] sm:$0xff]
  %v3222 = vld [vmem:[%s8 + $0x100] sm:$0xff]
  %v3223 = vld [vmem:[%s8 + $0x108] sm:$0xff]
  %v3224 = vld [vmem:[%s8 + $0x110] sm:$0xff]
  %v3225 = vld [vmem:[%s8 + $0x118] sm:$0xff]
  %v3226 = vld [vmem:[%s8 + $0x120] sm:$0xff]
  %v3227 = vld [vmem:[%s8 + $0x128] sm:$0xff]
  %v3228 = vld [vmem:[%s8 + $0x130] sm:$0xff]
  %v3229 = vld [vmem:[%s8 + $0x138] sm:$0xff]
  %v3230 = vld [vmem:[%s8 + $0x140] sm:$0xff]
  %v3231 = vld [vmem:[%s8 + $0x148] sm:$0xff]
  %v3232 = vld [vmem:[%s8 + $0x150] sm:$0xff]
  %v3233 = vld [vmem:[%s8 + $0x158] sm:$0xff]
  %v3234 = vld [vmem:[%s8 + $0x160] sm:$0xff]
  %v3235 = vld [vmem:[%s8 + $0x168] sm:$0xff]
  %v3236 = vld [vmem:[%s8 + $0x170] sm:$0xff]
  %v3237 = vld [vmem:[%s8 + $0x178] sm:$0xff]
  %v3238 = vld [vmem:[%s9] sm:$0xff]
  %v3239 = vld [vmem:[%s9 + $0x8] sm:$0xff]
  %v3240 = vld [vmem:[%s9 + $0x10] sm:$0xff]
  %v3241 = vld [vmem:[%s9 + $0x18] sm:$0xff]
  %v3242 = vld [vmem:[%s9 + $0x20] sm:$0xff]
  %v3243 = vld [vmem:[%s9 + $0x28] sm:$0xff]
  %v3244 = vld [vmem:[%s9 + $0x30] sm:$0xff]
  %v3245 = vld [vmem:[%s9 + $0x38] sm:$0xff]
  %v3246 = vld [vmem:[%s9 + $0x40] sm:$0xff]
  %v3247 = vld [vmem:[%s9 + $0x48] sm:$0xff]
  %v3248 = vld [vmem:[%s9 + $0x50] sm:$0xff]
  %v3249 = vld [vmem:[%s9 + $0x58] sm:$0xff]
  %v3250 = vld [vmem:[%s9 + $0x60] sm:$0xff]
  %v3251 = vld [vmem:[%s9 + $0x68] sm:$0xff]
  %v3252 = vld [vmem:[%s9 + $0x70] sm:$0xff]
  %v3253 = vld [vmem:[%s9 + $0x78] sm:$0xff]
  %v3254 = vld [vmem:[%s9 + $0x80] sm:$0xff]
  %v3255 = vld [vmem:[%s9 + $0x88] sm:$0xff]
  %v3256 = vld [vmem:[%s9 + $0x90] sm:$0xff]
  %v3257 = vld [vmem:[%s9 + $0x98] sm:$0xff]
  %v3258 = vld [vmem:[%s9 + $0xa0] sm:$0xff]
  %v3259 = vld [vmem:[%s9 + $0xa8] sm:$0xff]
  %v3260 = vld [vmem:[%s9 + $0xb0] sm:$0xff]
  %v3261 = vld [vmem:[%s9 + $0xb8] sm:$0xff]
  %v3262 = vld [vmem:[%s9 + $0xc0] sm:$0xff]
  %v3263 = vld [vmem:[%s9 + $0xc8] sm:$0xff]
  %v3264 = vld [vmem:[%s9 + $0xd0] sm:$0xff]
  %v3265 = vld [vmem:[%s9 + $0xd8] sm:$0xff]
  %v3266 = vld [vmem:[%s9 + $0xe0] sm:$0xff]
  %v3267 = vld [vmem:[%s9 + $0xe8] sm:$0xff]
  %v3268 = vld [vmem:[%s9 + $0xf0] sm:$0xff]
  %v3269 = vld [vmem:[%s9 + $0xf8] sm:$0xff]
  %v3270 = vld [vmem:[%s9 + $0x100] sm:$0xff]
  %v3271 = vld [vmem:[%s9 + $0x108] sm:$0xff]
  %v3272 = vld [vmem:[%s9 + $0x110] sm:$0xff]
  %v3273 = vld [vmem:[%s9 + $0x118] sm:$0xff]
  %v3274 = vld [vmem:[%s9 + $0x120] sm:$0xff]
  %v3275 = vld [vmem:[%s9 + $0x128] sm:$0xff]
  %v3276 = vld [vmem:[%s9 + $0x130] sm:$0xff]
  %v3277 = vld [vmem:[%s9 + $0x138] sm:$0xff]
  %v3278 = vld [vmem:[%s9 + $0x140] sm:$0xff]
  %v3279 = vld [vmem:[%s9 + $0x148] sm:$0xff]
  %v3280 = vld [vmem:[%s9 + $0x150] sm:$0xff]
  %v3281 = vld [vmem:[%s9 + $0x158] sm:$0xff]
  %v3282 = vld [vmem:[%s9 + $0x160] sm:$0xff]
  %v3283 = vld [vmem:[%s9 + $0x168] sm:$0xff]
  %v3284 = vld [vmem:[%s9 + $0x170] sm:$0xff]
  %v3285 = vld [vmem:[%s9 + $0x178] sm:$0xff]
  %v3286 = vld [vmem:[%s10] sm:$0x7]
  %v3287 = vld [vmem:[%s11] sm:$0x7]
  %v3288 = vld [vmem:[#allocation2] sm:$0xff]
  %v3290 = vlaneseq
  %v3291 = vshrl.u32 %v3290, 7
  %v3292 = vsub.s32 0, %v3291
  %v3293 = vrot.slane %v3286, %v3292
  %v3294 = vlaneseq
  %v3295 = vshrl.u32 %v3294, 7
  %v3296 = vsub.s32 1, %v3295
  %v3297 = vrot.slane %v3286, %v3296
  %v3298 = vlaneseq
  %v3299 = vshrl.u32 %v3298, 7
  %v3300 = vsub.s32 2, %v3299
  %v3301 = vrot.slane %v3286, %v3300
  %v3305 = vand.u32 %v3191, 4294901760
  %3306 = vmatprep.subr.mxu0 %v3305
  %v3307 = vand.u32 %v3190, 4294901760
  %3308 = vmatpush1.msra.mxu0 %v3307
  %v3309 = vand.u32 %v3194, 4294901760
  %3310 = vmatprep.subr.mxu0 %v3309
  %v3311 = vand.u32 %v3193, 4294901760
  %3312 = vmatpush1.msra.mxu0 %v3311
  %v3313 = vand.u32 %v3197, 4294901760
  %3314 = vmatprep.subr.mxu0 %v3313
  %v3315 = vand.u32 %v3196, 4294901760
  %3316 = vmatpush1.msra.mxu0 %v3315
  %v3317 = vand.u32 %v3200, 4294901760
  %3318 = vmatprep.subr.mxu0 %v3317
  %v3319 = vand.u32 %v3199, 4294901760
  %3320 = vmatpush1.msra.mxu0 %v3319
  %v3321 = vand.u32 %v3203, 4294901760
  %3322 = vmatprep.subr.mxu0 %v3321
  %v3323 = vand.u32 %v3202, 4294901760
  %3324 = vmatpush1.msra.mxu0 %v3323
  %v3325 = vand.u32 %v3206, 4294901760
  %3326 = vmatprep.subr.mxu0 %v3325
  %v3327 = vand.u32 %v3205, 4294901760
  %3328 = vmatpush1.msra.mxu0 %v3327
  %v3329 = vand.u32 %v3209, 4294901760
  %3330 = vmatprep.subr.mxu0 %v3329
  %v3331 = vand.u32 %v3208, 4294901760
  %3332 = vmatpush1.msra.mxu0 %v3331
  %v3333 = vand.u32 %v3212, 4294901760
  %3334 = vmatprep.subr.mxu0 %v3333
  %v3335 = vand.u32 %v3211, 4294901760
  %3336 = vmatpush1.msra.mxu0 %v3335
  %v3337 = vand.u32 %v3215, 4294901760
  %3338 = vmatprep.subr.mxu0 %v3337
  %v3339 = vand.u32 %v3214, 4294901760
  %3340 = vmatpush1.msra.mxu0 %v3339
  %v3341 = vand.u32 %v3218, 4294901760
  %3342 = vmatprep.subr.mxu0 %v3341
  %v3343 = vand.u32 %v3217, 4294901760
  %3344 = vmatpush1.msra.mxu0 %v3343
  %v3345 = vand.u32 %v3221, 4294901760
  %3346 = vmatprep.subr.mxu0 %v3345
  %v3347 = vand.u32 %v3220, 4294901760
  %3348 = vmatpush1.msra.mxu0 %v3347
  %v3349 = vand.u32 %v3224, 4294901760
  %3350 = vmatprep.subr.mxu0 %v3349
  %v3351 = vand.u32 %v3223, 4294901760
  %3352 = vmatpush1.msra.mxu0 %v3351
  %v3353 = vand.u32 %v3227, 4294901760
  %3354 = vmatprep.subr.mxu0 %v3353
  %v3355 = vand.u32 %v3226, 4294901760
  %3356 = vmatpush1.msra.mxu0 %v3355
  %v3357 = vand.u32 %v3230, 4294901760
  %3358 = vmatprep.subr.mxu0 %v3357
  %v3359 = vand.u32 %v3229, 4294901760
  %3360 = vmatpush1.msra.mxu0 %v3359
  %v3361 = vand.u32 %v3233, 4294901760
  %3362 = vmatprep.subr.mxu0 %v3361
  %v3363 = vand.u32 %v3232, 4294901760
  %3364 = vmatpush1.msra.mxu0 %v3363
  %v3365 = vand.u32 %v3236, 4294901760
  %3366 = vmatprep.subr.mxu0 %v3365
  %v3367 = vand.u32 %v3235, 4294901760
  %3368 = vmatpush1.msra.mxu0 %v3367
  %3369 = vmatprep.subr.mxu0 0.0
  %3370 = vmatpush1.msra.mxu0 0.0
  %3371 = vmatprep.subr.mxu0 0.0
  %3372 = vmatpush1.msra.mxu0 0.0
  %3373 = vmatprep.subr.mxu0 0.0
  %3374 = vmatpush1.msra.mxu0 0.0
  %3375 = vmatprep.subr.mxu0 0.0
  %3376 = vmatpush1.msra.mxu0 0.0
  %3377 = vmatprep.subr.mxu0 0.0
  %3378 = vmatpush1.msra.mxu0 0.0
  %3379 = vmatprep.subr.mxu0 0.0
  %3380 = vmatpush1.msra.mxu0 0.0
  %3381 = vmatprep.subr.mxu0 0.0
  %3382 = vmatpush1.msra.mxu0 0.0
  %3383 = vmatprep.subr.mxu0 0.0
  %3384 = vmatpush1.msra.mxu0 0.0
  %3385 = vmatprep.subr.mxu0 0.0
  %3386 = vmatpush1.msra.mxu0 0.0
  %3387 = vmatprep.subr.mxu0 0.0
  %3388 = vmatpush1.msra.mxu0 0.0
  %3389 = vmatprep.subr.mxu0 0.0
  %3390 = vmatpush1.msra.mxu0 0.0
  %3391 = vmatprep.subr.mxu0 0.0
  %3392 = vmatpush1.msra.mxu0 0.0
  %3393 = vmatprep.subr.mxu0 0.0
  %3394 = vmatpush1.msra.mxu0 0.0
  %3395 = vmatprep.subr.mxu0 0.0
  %3396 = vmatpush1.msra.mxu0 0.0
  %3397 = vmatprep.subr.mxu0 0.0
  %3398 = vmatpush1.msra.mxu0 0.0
  %3399 = vmatprep.subr.mxu0 0.0
  %3400 = vmatpush1.msra.mxu0 0.0
  %3401 = vmatprep.mubr.f32.mxu0 0.0
  %v3402 = vand.u32 %v3288, 4294901760
  %v3403 = vsub.f32 %v3288, %v3402
  %v3404 = vand.u32 %v3403, 4294901760
  %v3405 = vsub.f32 %v3403, %v3404
  %v3406 = vand.u32 %v3405, 4294901760
  %3407 = vmatmul.mubr.f32.gmra.mrb[0].mxu0 %v3406
  %v3408 = vpop.f32.mrb[0].mxu0
  %v3409 = vadd.f32 %v3293, %v3408
  %v3410 = vpop.f32.mrb[0].mxu0
  %v3411 = vadd.f32 %v3297, %v3410
  %3412 = vdwg.mxu0
  %v3413 = vand.u32 %v3191, 4294901760
  %v3414 = vsub.f32 %v3191, %v3413
  %v3415 = vand.u32 %v3414, 4294901760
  %v3416 = vsub.f32 %v3414, %v3415
  %v3417 = vand.u32 %v3416, 4294901760
  %3418 = vmatprep.subr.mxu0 %v3417
  %v3419 = vand.u32 %v3190, 4294901760
  %v3420 = vsub.f32 %v3190, %v3419
  %v3421 = vand.u32 %v3420, 4294901760
  %v3422 = vsub.f32 %v3420, %v3421
  %v3423 = vand.u32 %v3422, 4294901760
  %3424 = vmatpush1.msra.mxu0 %v3423
  %v3425 = vand.u32 %v3194, 4294901760
  %v3426 = vsub.f32 %v3194, %v3425
  %v3427 = vand.u32 %v3426, 4294901760
  %v3428 = vsub.f32 %v3426, %v3427
  %v3429 = vand.u32 %v3428, 4294901760
  %3430 = vmatprep.subr.mxu0 %v3429
  %v3431 = vand.u32 %v3193, 4294901760
  %v3432 = vsub.f32 %v3193, %v3431
  %v3433 = vand.u32 %v3432, 4294901760
  %v3434 = vsub.f32 %v3432, %v3433
  %v3435 = vand.u32 %v3434, 4294901760
  %3436 = vmatpush1.msra.mxu0 %v3435
  %v3437 = vand.u32 %v3197, 4294901760
  %v3438 = vsub.f32 %v3197, %v3437
  %v3439 = vand.u32 %v3438, 4294901760
  %v3440 = vsub.f32 %v3438, %v3439
  %v3441 = vand.u32 %v3440, 4294901760
  %3442 = vmatprep.subr.mxu0 %v3441
  %v3443 = vand.u32 %v3196, 4294901760
  %v3444 = vsub.f32 %v3196, %v3443
  %v3445 = vand.u32 %v3444, 4294901760
  %v3446 = vsub.f32 %v3444, %v3445
  %v3447 = vand.u32 %v3446, 4294901760
  %3448 = vmatpush1.msra.mxu0 %v3447
  %v3449 = vand.u32 %v3200, 4294901760
  %v3450 = vsub.f32 %v3200, %v3449
  %v3451 = vand.u32 %v3450, 4294901760
  %v3452 = vsub.f32 %v3450, %v3451
  %v3453 = vand.u32 %v3452, 4294901760
  %3454 = vmatprep.subr.mxu0 %v3453
  %v3455 = vand.u32 %v3199, 4294901760
  %v3456 = vsub.f32 %v3199, %v3455
  %v3457 = vand.u32 %v3456, 4294901760
  %v3458 = vsub.f32 %v3456, %v3457
  %v3459 = vand.u32 %v3458, 4294901760
  %3460 = vmatpush1.msra.mxu0 %v3459
  %v3461 = vand.u32 %v3203, 4294901760
  %v3462 = vsub.f32 %v3203, %v3461
  %v3463 = vand.u32 %v3462, 4294901760
  %v3464 = vsub.f32 %v3462, %v3463
  %v3465 = vand.u32 %v3464, 4294901760
  %3466 = vmatprep.subr.mxu0 %v3465
  %v3467 = vand.u32 %v3202, 4294901760
  %v3468 = vsub.f32 %v3202, %v3467
  %v3469 = vand.u32 %v3468, 4294901760
  %v3470 = vsub.f32 %v3468, %v3469
  %v3471 = vand.u32 %v3470, 4294901760
  %3472 = vmatpush1.msra.mxu0 %v3471
  %v3473 = vand.u32 %v3206, 4294901760
  %v3474 = vsub.f32 %v3206, %v3473
  %v3475 = vand.u32 %v3474, 4294901760
  %v3476 = vsub.f32 %v3474, %v3475
  %v3477 = vand.u32 %v3476, 4294901760
  %3478 = vmatprep.subr.mxu0 %v3477
  %v3479 = vand.u32 %v3205, 4294901760
  %v3480 = vsub.f32 %v3205, %v3479
  %v3481 = vand.u32 %v3480, 4294901760
  %v3482 = vsub.f32 %v3480, %v3481
  %v3483 = vand.u32 %v3482, 4294901760
  %3484 = vmatpush1.msra.mxu0 %v3483
  %v3485 = vand.u32 %v3209, 4294901760
  %v3486 = vsub.f32 %v3209, %v3485
  %v3487 = vand.u32 %v3486, 4294901760
  %v3488 = vsub.f32 %v3486, %v3487
  %v3489 = vand.u32 %v3488, 4294901760
  %3490 = vmatprep.subr.mxu0 %v3489
  %v3491 = vand.u32 %v3208, 4294901760
  %v3492 = vsub.f32 %v3208, %v3491
  %v3493 = vand.u32 %v3492, 4294901760
  %v3494 = vsub.f32 %v3492, %v3493
  %v3495 = vand.u32 %v3494, 4294901760
  %3496 = vmatpush1.msra.mxu0 %v3495
  %v3497 = vand.u32 %v3212, 4294901760
  %v3498 = vsub.f32 %v3212, %v3497
  %v3499 = vand.u32 %v3498, 4294901760
  %v3500 = vsub.f32 %v3498, %v3499
  %v3501 = vand.u32 %v3500, 4294901760
  %3502 = vmatprep.subr.mxu0 %v3501
  %v3503 = vand.u32 %v3211, 4294901760
  %v3504 = vsub.f32 %v3211, %v3503
  %v3505 = vand.u32 %v3504, 4294901760
  %v3506 = vsub.f32 %v3504, %v3505
  %v3507 = vand.u32 %v3506, 4294901760
  %3508 = vmatpush1.msra.mxu0 %v3507
  %v3509 = vand.u32 %v3215, 4294901760
  %v3510 = vsub.f32 %v3215, %v3509
  %v3511 = vand.u32 %v3510, 4294901760
  %v3512 = vsub.f32 %v3510, %v3511
  %v3513 = vand.u32 %v3512, 4294901760
  %3514 = vmatprep.subr.mxu0 %v3513
  %v3515 = vand.u32 %v3214, 4294901760
  %v3516 = vsub.f32 %v3214, %v3515
  %v3517 = vand.u32 %v3516, 4294901760
  %v3518 = vsub.f32 %v3516, %v3517
  %v3519 = vand.u32 %v3518, 4294901760
  %3520 = vmatpush1.msra.mxu0 %v3519
  %v3521 = vand.u32 %v3218, 4294901760
  %v3522 = vsub.f32 %v3218, %v3521
  %v3523 = vand.u32 %v3522, 4294901760
  %v3524 = vsub.f32 %v3522, %v3523
  %v3525 = vand.u32 %v3524, 4294901760
  %3526 = vmatprep.subr.mxu0 %v3525
  %v3527 = vand.u32 %v3217, 4294901760
  %v3528 = vsub.f32 %v3217, %v3527
  %v3529 = vand.u32 %v3528, 4294901760
  %v3530 = vsub.f32 %v3528, %v3529
  %v3531 = vand.u32 %v3530, 4294901760
  %3532 = vmatpush1.msra.mxu0 %v3531
  %v3533 = vand.u32 %v3221, 4294901760
  %v3534 = vsub.f32 %v3221, %v3533
  %v3535 = vand.u32 %v3534, 4294901760
  %v3536 = vsub.f32 %v3534, %v3535
  %v3537 = vand.u32 %v3536, 4294901760
  %3538 = vmatprep.subr.mxu0 %v3537
  %v3539 = vand.u32 %v3220, 4294901760
  %v3540 = vsub.f32 %v3220, %v3539
  %v3541 = vand.u32 %v3540, 4294901760
  %v3542 = vsub.f32 %v3540, %v3541
  %v3543 = vand.u32 %v3542, 4294901760
  %3544 = vmatpush1.msra.mxu0 %v3543
  %v3545 = vand.u32 %v3224, 4294901760
  %v3546 = vsub.f32 %v3224, %v3545
  %v3547 = vand.u32 %v3546, 4294901760
  %v3548 = vsub.f32 %v3546, %v3547
  %v3549 = vand.u32 %v3548, 4294901760
  %3550 = vmatprep.subr.mxu0 %v3549
  %v3551 = vand.u32 %v3223, 4294901760
  %v3552 = vsub.f32 %v3223, %v3551
  %v3553 = vand.u32 %v3552, 4294901760
  %v3554 = vsub.f32 %v3552, %v3553
  %v3555 = vand.u32 %v3554, 4294901760
  %3556 = vmatpush1.msra.mxu0 %v3555
  %v3557 = vand.u32 %v3227, 4294901760
  %v3558 = vsub.f32 %v3227, %v3557
  %v3559 = vand.u32 %v3558, 4294901760
  %v3560 = vsub.f32 %v3558, %v3559
  %v3561 = vand.u32 %v3560, 4294901760
  %3562 = vmatprep.subr.mxu0 %v3561
  %v3563 = vand.u32 %v3226, 4294901760
  %v3564 = vsub.f32 %v3226, %v3563
  %v3565 = vand.u32 %v3564, 4294901760
  %v3566 = vsub.f32 %v3564, %v3565
  %v3567 = vand.u32 %v3566, 4294901760
  %3568 = vmatpush1.msra.mxu0 %v3567
  %v3569 = vand.u32 %v3230, 4294901760
  %v3570 = vsub.f32 %v3230, %v3569
  %v3571 = vand.u32 %v3570, 4294901760
  %v3572 = vsub.f32 %v3570, %v3571
  %v3573 = vand.u32 %v3572, 4294901760
  %3574 = vmatprep.subr.mxu0 %v3573
  %v3575 = vand.u32 %v3229, 4294901760
  %v3576 = vsub.f32 %v3229, %v3575
  %v3577 = vand.u32 %v3576, 4294901760
  %v3578 = vsub.f32 %v3576, %v3577
  %v3579 = vand.u32 %v3578, 4294901760
  %3580 = vmatpush1.msra.mxu0 %v3579
  %v3581 = vand.u32 %v3233, 4294901760
  %v3582 = vsub.f32 %v3233, %v3581
  %v3583 = vand.u32 %v3582, 4294901760
  %v3584 = vsub.f32 %v3582, %v3583
  %v3585 = vand.u32 %v3584, 4294901760
  %3586 = vmatprep.subr.mxu0 %v3585
  %v3587 = vand.u32 %v3232, 4294901760
  %v3588 = vsub.f32 %v3232, %v3587
  %v3589 = vand.u32 %v3588, 4294901760
  %v3590 = vsub.f32 %v3588, %v3589
  %v3591 = vand.u32 %v3590, 4294901760
  %3592 = vmatpush1.msra.mxu0 %v3591
  %v3593 = vand.u32 %v3236, 4294901760
  %v3594 = vsub.f32 %v3236, %v3593
  %v3595 = vand.u32 %v3594, 4294901760
  %v3596 = vsub.f32 %v3594, %v3595
  %v3597 = vand.u32 %v3596, 4294901760
  %3598 = vmatprep.subr.mxu0 %v3597
  %v3599 = vand.u32 %v3235, 4294901760
  %v3600 = vsub.f32 %v3235, %v3599
  %v3601 = vand.u32 %v3600, 4294901760
  %v3602 = vsub.f32 %v3600, %v3601
  %v3603 = vand.u32 %v3602, 4294901760
  %3604 = vmatpush1.msra.mxu0 %v3603
  %3605 = vmatprep.subr.mxu0 0.0
  %3606 = vmatpush1.msra.mxu0 0.0
  %3607 = vmatprep.subr.mxu0 0.0
  %3608 = vmatpush1.msra.mxu0 0.0
  %3609 = vmatprep.subr.mxu0 0.0
  %3610 = vmatpush1.msra.mxu0 0.0
  %3611 = vmatprep.subr.mxu0 0.0
  %3612 = vmatpush1.msra.mxu0 0.0
  %3613 = vmatprep.subr.mxu0 0.0
  %3614 = vmatpush1.msra.mxu0 0.0
  %3615 = vmatprep.subr.mxu0 0.0
  %3616 = vmatpush1.msra.mxu0 0.0
  %3617 = vmatprep.subr.mxu0 0.0
  %3618 = vmatpush1.msra.mxu0 0.0
  %3619 = vmatprep.subr.mxu0 0.0
  %3620 = vmatpush1.msra.mxu0 0.0
  %3621 = vmatprep.subr.mxu0 0.0
  %3622 = vmatpush1.msra.mxu0 0.0
  %3623 = vmatprep.subr.mxu0 0.0
  %3624 = vmatpush1.msra.mxu0 0.0
  %3625 = vmatprep.subr.mxu0 0.0
  %3626 = vmatpush1.msra.mxu0 0.0
  %3627 = vmatprep.subr.mxu0 0.0
  %3628 = vmatpush1.msra.mxu0 0.0
  %3629 = vmatprep.subr.mxu0 0.0
  %3630 = vmatpush1.msra.mxu0 0.0
  %3631 = vmatprep.subr.mxu0 0.0
  %3632 = vmatpush1.msra.mxu0 0.0
  %3633 = vmatprep.subr.mxu0 0.0
  %3634 = vmatpush1.msra.mxu0 0.0
  %3635 = vmatprep.subr.mxu0 0.0
  %3636 = vmatpush1.msra.mxu0 0.0
  %3637 = vmatprep.mubr.f32.mxu0 0.0
  %v3638 = vand.u32 %v3288, 4294901760
  %3639 = vmatmul.mubr.f32.gmra.mrb[0].mxu0 %v3638
  %v3640 = vpop.f32.mrb[0].mxu0
  %v3641 = vadd.f32 %v3409, %v3640
  %v3642 = vpop.f32.mrb[0].mxu0
  %v3643 = vadd.f32 %v3411, %v3642
  %3644 = vdwg.mxu0
  %v3645 = vand.u32 %v3191, 4294901760
  %v3646 = vsub.f32 %v3191, %v3645
  %3647 = vmatprep.subr.mxu0 %v3646
  %v3648 = vand.u32 %v3190, 4294901760
  %v3649 = vsub.f32 %v3190, %v3648
  %3650 = vmatpush1.msra.mxu0 %v3649
  %v3651 = vand.u32 %v3194, 4294901760
  %v3652 = vsub.f32 %v3194, %v3651
  %3653 = vmatprep.subr.mxu0 %v3652
  %v3654 = vand.u32 %v3193, 4294901760
  %v3655 = vsub.f32 %v3193, %v3654
  %3656 = vmatpush1.msra.mxu0 %v3655
  %v3657 = vand.u32 %v3197, 4294901760
  %v3658 = vsub.f32 %v3197, %v3657
  %3659 = vmatprep.subr.mxu0 %v3658
  %v3660 = vand.u32 %v3196, 4294901760
  %v3661 = vsub.f32 %v3196, %v3660
  %3662 = vmatpush1.msra.mxu0 %v3661
  %v3663 = vand.u32 %v3200, 4294901760
  %v3664 = vsub.f32 %v3200, %v3663
  %3665 = vmatprep.subr.mxu0 %v3664
  %v3666 = vand.u32 %v3199, 4294901760
  %v3667 = vsub.f32 %v3199, %v3666
  %3668 = vmatpush1.msra.mxu0 %v3667
  %v3669 = vand.u32 %v3203, 4294901760
  %v3670 = vsub.f32 %v3203, %v3669
  %3671 = vmatprep.subr.mxu0 %v3670
  %v3672 = vand.u32 %v3202, 4294901760
  %v3673 = vsub.f32 %v3202, %v3672
  %3674 = vmatpush1.msra.mxu0 %v3673
  %v3675 = vand.u32 %v3206, 4294901760
  %v3676 = vsub.f32 %v3206, %v3675
  %3677 = vmatprep.subr.mxu0 %v3676
  %v3678 = vand.u32 %v3205, 4294901760
  %v3679 = vsub.f32 %v3205, %v3678
  %3680 = vmatpush1.msra.mxu0 %v3679
  %v3681 = vand.u32 %v3209, 4294901760
  %v3682 = vsub.f32 %v3209, %v3681
  %3683 = vmatprep.subr.mxu0 %v3682
  %v3684 = vand.u32 %v3208, 4294901760
  %v3685 = vsub.f32 %v3208, %v3684
  %3686 = vmatpush1.msra.mxu0 %v3685
  %v3687 = vand.u32 %v3212, 4294901760
  %v3688 = vsub.f32 %v3212, %v3687
  %3689 = vmatprep.subr.mxu0 %v3688
  %v3690 = vand.u32 %v3211, 4294901760
  %v3691 = vsub.f32 %v3211, %v3690
  %3692 = vmatpush1.msra.mxu0 %v3691
  %v3693 = vand.u32 %v3215, 4294901760
  %v3694 = vsub.f32 %v3215, %v3693
  %3695 = vmatprep.subr.mxu0 %v3694
  %v3696 = vand.u32 %v3214, 4294901760
  %v3697 = vsub.f32 %v3214, %v3696
  %3698 = vmatpush1.msra.mxu0 %v3697
  %v3699 = vand.u32 %v3218, 4294901760
  %v3700 = vsub.f32 %v3218, %v3699
  %3701 = vmatprep.subr.mxu0 %v3700
  %v3702 = vand.u32 %v3217, 4294901760
  %v3703 = vsub.f32 %v3217, %v3702
  %3704 = vmatpush1.msra.mxu0 %v3703
  %v3705 = vand.u32 %v3221, 4294901760
  %v3706 = vsub.f32 %v3221, %v3705
  %3707 = vmatprep.subr.mxu0 %v3706
  %v3708 = vand.u32 %v3220, 4294901760
  %v3709 = vsub.f32 %v3220, %v3708
  %3710 = vmatpush1.msra.mxu0 %v3709
  %v3711 = vand.u32 %v3224, 4294901760
  %v3712 = vsub.f32 %v3224, %v3711
  %3713 = vmatprep.subr.mxu0 %v3712
  %v3714 = vand.u32 %v3223, 4294901760
  %v3715 = vsub.f32 %v3223, %v3714
  %3716 = vmatpush1.msra.mxu0 %v3715
  %v3717 = vand.u32 %v3227, 4294901760
  %v3718 = vsub.f32 %v3227, %v3717
  %3719 = vmatprep.subr.mxu0 %v3718
  %v3720 = vand.u32 %v3226, 4294901760
  %v3721 = vsub.f32 %v3226, %v3720
  %3722 = vmatpush1.msra.mxu0 %v3721
  %v3723 = vand.u32 %v3230, 4294901760
  %v3724 = vsub.f32 %v3230, %v3723
  %3725 = vmatprep.subr.mxu0 %v3724
  %v3726 = vand.u32 %v3229, 4294901760
  %v3727 = vsub.f32 %v3229, %v3726
  %3728 = vmatpush1.msra.mxu0 %v3727
  %v3729 = vand.u32 %v3233, 4294901760
  %v3730 = vsub.f32 %v3233, %v3729
  %3731 = vmatprep.subr.mxu0 %v3730
  %v3732 = vand.u32 %v3232, 4294901760
  %v3733 = vsub.f32 %v3232, %v3732
  %3734 = vmatpush1.msra.mxu0 %v3733
  %v3735 = vand.u32 %v3236, 4294901760
  %v3736 = vsub.f32 %v3236, %v3735
  %3737 = vmatprep.subr.mxu0 %v3736
  %v3738 = vand.u32 %v3235, 4294901760
  %v3739 = vsub.f32 %v3235, %v3738
  %3740 = vmatpush1.msra.mxu0 %v3739
  %3741 = vmatprep.subr.mxu0 0.0
  %3742 = vmatpush1.msra.mxu0 0.0
  %3743 = vmatprep.subr.mxu0 0.0
  %3744 = vmatpush1.msra.mxu0 0.0
  %3745 = vmatprep.subr.mxu0 0.0
  %3746 = vmatpush1.msra.mxu0 0.0
  %3747 = vmatprep.subr.mxu0 0.0
  %3748 = vmatpush1.msra.mxu0 0.0
  %3749 = vmatprep.subr.mxu0 0.0
  %3750 = vmatpush1.msra.mxu0 0.0
  %3751 = vmatprep.subr.mxu0 0.0
  %3752 = vmatpush1.msra.mxu0 0.0
  %3753 = vmatprep.subr.mxu0 0.0
  %3754 = vmatpush1.msra.mxu0 0.0
  %3755 = vmatprep.subr.mxu0 0.0
  %3756 = vmatpush1.msra.mxu0 0.0
  %3757 = vmatprep.subr.mxu0 0.0
  %3758 = vmatpush1.msra.mxu0 0.0
  %3759 = vmatprep.subr.mxu0 0.0
  %3760 = vmatpush1.msra.mxu0 0.0
  %3761 = vmatprep.subr.mxu0 0.0
  %3762 = vmatpush1.msra.mxu0 0.0
  %3763 = vmatprep.subr.mxu0 0.0
  %3764 = vmatpush1.msra.mxu0 0.0
  %3765 = vmatprep.subr.mxu0 0.0
  %3766 = vmatpush1.msra.mxu0 0.0
  %3767 = vmatprep.subr.mxu0 0.0
  %3768 = vmatpush1.msra.mxu0 0.0
  %3769 = vmatprep.subr.mxu0 0.0
  %3770 = vmatpush1.msra.mxu0 0.0
  %3771 = vmatprep.subr.mxu0 0.0
  %3772 = vmatpush1.msra.mxu0 0.0
  %3773 = vmatprep.mubr.f32.mxu0 0.0
  %v3774 = vand.u32 %v3288, 4294901760
  %v3775 = vsub.f32 %v3288, %v3774
  %3776 = vmatmul.mubr.f32.gmra.mrb[0].mxu0 %v3775
  %v3777 = vpop.f32.mrb[0].mxu0
  %v3778 = vadd.f32 %v3641, %v3777
  %v3779 = vpop.f32.mrb[0].mxu0
  %v3780 = vadd.f32 %v3643, %v3779
  %3781 = vdwg.mxu0
  %v3782 = vand.u32 %v3191, 4294901760
  %3783 = vmatprep.subr.mxu0 %v3782
  %v3784 = vand.u32 %v3190, 4294901760
  %3785 = vmatpush1.msra.mxu0 %v3784
  %v3786 = vand.u32 %v3194, 4294901760
  %3787 = vmatprep.subr.mxu0 %v3786
  %v3788 = vand.u32 %v3193, 4294901760
  %3789 = vmatpush1.msra.mxu0 %v3788
  %v3790 = vand.u32 %v3197, 4294901760
  %3791 = vmatprep.subr.mxu0 %v3790
  %v3792 = vand.u32 %v3196, 4294901760
  %3793 = vmatpush1.msra.mxu0 %v3792
  %v3794 = vand.u32 %v3200, 4294901760
  %3795 = vmatprep.subr.mxu0 %v3794
  %v3796 = vand.u32 %v3199, 4294901760
  %3797 = vmatpush1.msra.mxu0 %v3796
  %v3798 = vand.u32 %v3203, 4294901760
  %3799 = vmatprep.subr.mxu0 %v3798
  %v3800 = vand.u32 %v3202, 4294901760
  %3801 = vmatpush1.msra.mxu0 %v3800
  %v3802 = vand.u32 %v3206, 4294901760
  %3803 = vmatprep.subr.mxu0 %v3802
  %v3804 = vand.u32 %v3205, 4294901760
  %3805 = vmatpush1.msra.mxu0 %v3804
  %v3806 = vand.u32 %v3209, 4294901760
  %3807 = vmatprep.subr.mxu0 %v3806
  %v3808 = vand.u32 %v3208, 4294901760
  %3809 = vmatpush1.msra.mxu0 %v3808
  %v3810 = vand.u32 %v3212, 4294901760
  %3811 = vmatprep.subr.mxu0 %v3810
  %v3812 = vand.u32 %v3211, 4294901760
  %3813 = vmatpush1.msra.mxu0 %v3812
  %v3814 = vand.u32 %v3215, 4294901760
  %3815 = vmatprep.subr.mxu0 %v3814
  %v3816 = vand.u32 %v3214, 4294901760
  %3817 = vmatpush1.msra.mxu0 %v3816
  %v3818 = vand.u32 %v3218, 4294901760
  %3819 = vmatprep.subr.mxu0 %v3818
  %v3820 = vand.u32 %v3217, 4294901760
  %3821 = vmatpush1.msra.mxu0 %v3820
  %v3822 = vand.u32 %v3221, 4294901760
  %3823 = vmatprep.subr.mxu0 %v3822
  %v3824 = vand.u32 %v3220, 4294901760
  %3825 = vmatpush1.msra.mxu0 %v3824
  %v3826 = vand.u32 %v3224, 4294901760
  %3827 = vmatprep.subr.mxu0 %v3826
  %v3828 = vand.u32 %v3223, 4294901760
  %3829 = vmatpush1.msra.mxu0 %v3828
  %v3830 = vand.u32 %v3227, 4294901760
  %3831 = vmatprep.subr.mxu0 %v3830
  %v3832 = vand.u32 %v3226, 4294901760
  %3833 = vmatpush1.msra.mxu0 %v3832
  %v3834 = vand.u32 %v3230, 4294901760
  %3835 = vmatprep.subr.mxu0 %v3834
  %v3836 = vand.u32 %v3229, 4294901760
  %3837 = vmatpush1.msra.mxu0 %v3836
  %v3838 = vand.u32 %v3233, 4294901760
  %3839 = vmatprep.subr.mxu0 %v3838
  %v3840 = vand.u32 %v3232, 4294901760
  %3841 = vmatpush1.msra.mxu0 %v3840
  %v3842 = vand.u32 %v3236, 4294901760
  %3843 = vmatprep.subr.mxu0 %v3842
  %v3844 = vand.u32 %v3235, 4294901760
  %3845 = vmatpush1.msra.mxu0 %v3844
  %3846 = vmatprep.subr.mxu0 0.0
  %3847 = vmatpush1.msra.mxu0 0.0
  %3848 = vmatprep.subr.mxu0 0.0
  %3849 = vmatpush1.msra.mxu0 0.0
  %3850 = vmatprep.subr.mxu0 0.0
  %3851 = vmatpush1.msra.mxu0 0.0
  %3852 = vmatprep.subr.mxu0 0.0
  %3853 = vmatpush1.msra.mxu0 0.0
  %3854 = vmatprep.subr.mxu0 0.0
  %3855 = vmatpush1.msra.mxu0 0.0
  %3856 = vmatprep.subr.mxu0 0.0
  %3857 = vmatpush1.msra.mxu0 0.0
  %3858 = vmatprep.subr.mxu0 0.0
  %3859 = vmatpush1.msra.mxu0 0.0
  %3860 = vmatprep.subr.mxu0 0.0
  %3861 = vmatpush1.msra.mxu0 0.0
  %3862 = vmatprep.subr.mxu0 0.0
  %3863 = vmatpush1.msra.mxu0 0.0
  %3864 = vmatprep.subr.mxu0 0.0
  %3865 = vmatpush1.msra.mxu0 0.0
  %3866 = vmatprep.subr.mxu0 0.0
  %3867 = vmatpush1.msra.mxu0 0.0
  %3868 = vmatprep.subr.mxu0 0.0
  %3869 = vmatpush1.msra.mxu0 0.0
  %3870 = vmatprep.subr.mxu0 0.0
  %3871 = vmatpush1.msra.mxu0 0.0
  %3872 = vmatprep.subr.mxu0 0.0
  %3873 = vmatpush1.msra.mxu0 0.0
  %3874 = vmatprep.subr.mxu0 0.0
  %3875 = vmatpush1.msra.mxu0 0.0
  %3876 = vmatprep.subr.mxu0 0.0
  %3877 = vmatpush1.msra.mxu0 0.0
  %3878 = vmatprep.mubr.f32.mxu0 0.0
  %v3879 = vand.u32 %v3288, 4294901760
  %v3880 = vsub.f32 %v3288, %v3879
  %v3881 = vand.u32 %v3880, 4294901760
  %3882 = vmatmul.mubr.f32.gmra.mrb[0].mxu0 %v3881
  %v3883 = vpop.f32.mrb[0].mxu0
  %v3884 = vadd.f32 %v3778, %v3883
  %v3885 = vpop.f32.mrb[0].mxu0
  %v3886 = vadd.f32 %v3780, %v3885
  %3887 = vdwg.mxu0
  %v3888 = vand.u32 %v3191, 4294901760
  %v3889 = vsub.f32 %v3191, %v3888
  %v3890 = vand.u32 %v3889, 4294901760
  %3891 = vmatprep.subr.mxu0 %v3890
  %v3892 = vand.u32 %v3190, 4294901760
  %v3893 = vsub.f32 %v3190, %v3892
  %v3894 = vand.u32 %v3893, 4294901760
  %3895 = vmatpush1.msra.mxu0 %v3894
  %v3896 = vand.u32 %v3194, 4294901760
  %v3897 = vsub.f32 %v3194, %v3896
  %v3898 = vand.u32 %v3897, 4294901760
  %3899 = vmatprep.subr.mxu0 %v3898
  %v3900 = vand.u32 %v3193, 4294901760
  %v3901 = vsub.f32 %v3193, %v3900
  %v3902 = vand.u32 %v3901, 4294901760
  %3903 = vmatpush1.msra.mxu0 %v3902
  %v3904 = vand.u32 %v3197, 4294901760
  %v3905 = vsub.f32 %v3197, %v3904
  %v3906 = vand.u32 %v3905, 4294901760
  %3907 = vmatprep.subr.mxu0 %v3906
  %v3908 = vand.u32 %v3196, 4294901760
  %v3909 = vsub.f32 %v3196, %v3908
  %v3910 = vand.u32 %v3909, 4294901760
  %3911 = vmatpush1.msra.mxu0 %v3910
  %v3912 = vand.u32 %v3200, 4294901760
  %v3913 = vsub.f32 %v3200, %v3912
  %v3914 = vand.u32 %v3913, 4294901760
  %3915 = vmatprep.subr.mxu0 %v3914
  %v3916 = vand.u32 %v3199, 4294901760
  %v3917 = vsub.f32 %v3199, %v3916
  %v3918 = vand.u32 %v3917, 4294901760
  %3919 = vmatpush1.msra.mxu0 %v3918
  %v3920 = vand.u32 %v3203, 4294901760
  %v3921 = vsub.f32 %v3203, %v3920
  %v3922 = vand.u32 %v3921, 4294901760
  %3923 = vmatprep.subr.mxu0 %v3922
  %v3924 = vand.u32 %v3202, 4294901760
  %v3925 = vsub.f32 %v3202, %v3924
  %v3926 = vand.u32 %v3925, 4294901760
  %3927 = vmatpush1.msra.mxu0 %v3926
  %v3928 = vand.u32 %v3206, 4294901760
  %v3929 = vsub.f32 %v3206, %v3928
  %v3930 = vand.u32 %v3929, 4294901760
  %3931 = vmatprep.subr.mxu0 %v3930
  %v3932 = vand.u32 %v3205, 4294901760
  %v3933 = vsub.f32 %v3205, %v3932
  %v3934 = vand.u32 %v3933, 4294901760
  %3935 = vmatpush1.msra.mxu0 %v3934
  %v3936 = vand.u32 %v3209, 4294901760
  %v3937 = vsub.f32 %v3209, %v3936
  %v3938 = vand.u32 %v3937, 4294901760
  %3939 = vmatprep.subr.mxu0 %v3938
  %v3940 = vand.u32 %v3208, 4294901760
  %v3941 = vsub.f32 %v3208, %v3940
  %v3942 = vand.u32 %v3941, 4294901760
  %3943 = vmatpush1.msra.mxu0 %v3942
  %v3944 = vand.u32 %v3212, 4294901760
  %v3945 = vsub.f32 %v3212, %v3944
  %v3946 = vand.u32 %v3945, 4294901760
  %3947 = vmatprep.subr.mxu0 %v3946
  %v3948 = vand.u32 %v3211, 4294901760
  %v3949 = vsub.f32 %v3211, %v3948
  %v3950 = vand.u32 %v3949, 4294901760
  %3951 = vmatpush1.msra.mxu0 %v3950
  %v3952 = vand.u32 %v3215, 4294901760
  %v3953 = vsub.f32 %v3215, %v3952
  %v3954 = vand.u32 %v3953, 4294901760
  %3955 = vmatprep.subr.mxu0 %v3954
  %v3956 = vand.u32 %v3214, 4294901760
  %v3957 = vsub.f32 %v3214, %v3956
  %v3958 = vand.u32 %v3957, 4294901760
  %3959 = vmatpush1.msra.mxu0 %v3958
  %v3960 = vand.u32 %v3218, 4294901760
  %v3961 = vsub.f32 %v3218, %v3960
  %v3962 = vand.u32 %v3961, 4294901760
  %3963 = vmatprep.subr.mxu0 %v3962
  %v3964 = vand.u32 %v3217, 4294901760
  %v3965 = vsub.f32 %v3217, %v3964
  %v3966 = vand.u32 %v3965, 4294901760
  %3967 = vmatpush1.msra.mxu0 %v3966
  %v3968 = vand.u32 %v3221, 4294901760
  %v3969 = vsub.f32 %v3221, %v3968
  %v3970 = vand.u32 %v3969, 4294901760
  %3971 = vmatprep.subr.mxu0 %v3970
  %v3972 = vand.u32 %v3220, 4294901760
  %v3973 = vsub.f32 %v3220, %v3972
  %v3974 = vand.u32 %v3973, 4294901760
  %3975 = vmatpush1.msra.mxu0 %v3974
  %v3976 = vand.u32 %v3224, 4294901760
  %v3977 = vsub.f32 %v3224, %v3976
  %v3978 = vand.u32 %v3977, 4294901760
  %3979 = vmatprep.subr.mxu0 %v3978
  %v3980 = vand.u32 %v3223, 4294901760
  %v3981 = vsub.f32 %v3223, %v3980
  %v3982 = vand.u32 %v3981, 4294901760
  %3983 = vmatpush1.msra.mxu0 %v3982
  %v3984 = vand.u32 %v3227, 4294901760
  %v3985 = vsub.f32 %v3227, %v3984
  %v3986 = vand.u32 %v3985, 4294901760
  %3987 = vmatprep.subr.mxu0 %v3986
  %v3988 = vand.u32 %v3226, 4294901760
  %v3989 = vsub.f32 %v3226, %v3988
  %v3990 = vand.u32 %v3989, 4294901760
  %3991 = vmatpush1.msra.mxu0 %v3990
  %v3992 = vand.u32 %v3230, 4294901760
  %v3993 = vsub.f32 %v3230, %v3992
  %v3994 = vand.u32 %v3993, 4294901760
  %3995 = vmatprep.subr.mxu0 %v3994
  %v3996 = vand.u32 %v3229, 4294901760
  %v3997 = vsub.f32 %v3229, %v3996
  %v3998 = vand.u32 %v3997, 4294901760
  %3999 = vmatpush1.msra.mxu0 %v3998
  %v4000 = vand.u32 %v3233, 4294901760
  %v4001 = vsub.f32 %v3233, %v4000
  %v4002 = vand.u32 %v4001, 4294901760
  %4003 = vmatprep.subr.mxu0 %v4002
  %v4004 = vand.u32 %v3232, 4294901760
  %v4005 = vsub.f32 %v3232, %v4004
  %v4006 = vand.u32 %v4005, 4294901760
  %4007 = vmatpush1.msra.mxu0 %v4006
  %v4008 = vand.u32 %v3236, 4294901760
  %v4009 = vsub.f32 %v3236, %v4008
  %v4010 = vand.u32 %v4009, 4294901760
  %4011 = vmatprep.subr.mxu0 %v4010
  %v4012 = vand.u32 %v3235, 4294901760
  %v4013 = vsub.f32 %v3235, %v4012
  %v4014 = vand.u32 %v4013, 4294901760
  %4015 = vmatpush1.msra.mxu0 %v4014
  %4016 = vmatprep.subr.mxu0 0.0
  %4017 = vmatpush1.msra.mxu0 0.0
  %4018 = vmatprep.subr.mxu0 0.0
  %4019 = vmatpush1.msra.mxu0 0.0
  %4020 = vmatprep.subr.mxu0 0.0
  %4021 = vmatpush1.msra.mxu0 0.0
  %4022 = vmatprep.subr.mxu0 0.0
  %4023 = vmatpush1.msra.mxu0 0.0
  %4024 = vmatprep.subr.mxu0 0.0
  %4025 = vmatpush1.msra.mxu0 0.0
  %4026 = vmatprep.subr.mxu0 0.0
  %4027 = vmatpush1.msra.mxu0 0.0
  %4028 = vmatprep.subr.mxu0 0.0
  %4029 = vmatpush1.msra.mxu0 0.0
  %4030 = vmatprep.subr.mxu0 0.0
  %4031 = vmatpush1.msra.mxu0 0.0
  %4032 = vmatprep.subr.mxu0 0.0
  %4033 = vmatpush1.msra.mxu0 0.0
  %4034 = vmatprep.subr.mxu0 0.0
  %4035 = vmatpush1.msra.mxu0 0.0
  %4036 = vmatprep.subr.mxu0 0.0
  %4037 = vmatpush1.msra.mxu0 0.0
  %4038 = vmatprep.subr.mxu0 0.0
  %4039 = vmatpush1.msra.mxu0 0.0
  %4040 = vmatprep.subr.mxu0 0.0
  %4041 = vmatpush1.msra.mxu0 0.0
  %4042 = vmatprep.subr.mxu0 0.0
  %4043 = vmatpush1.msra.mxu0 0.0
  %4044 = vmatprep.subr.mxu0 0.0
  %4045 = vmatpush1.msra.mxu0 0.0
  %4046 = vmatprep.subr.mxu0 0.0
  %4047 = vmatpush1.msra.mxu0 0.0
  %4048 = vmatprep.mubr.f32.mxu0 0.0
  %v4049 = vand.u32 %v3288, 4294901760
  %4050 = vmatmul.mubr.f32.gmra.mrb[0].mxu0 %v4049
  %v4051 = vpop.f32.mrb[0].mxu0
  %v4052 = vadd.f32 %v3884, %v4051
  %v4053 = vpop.f32.mrb[0].mxu0
  %v4054 = vadd.f32 %v3886, %v4053
  %4055 = vdwg.mxu0
  %v4056 = vand.u32 %v3191, 4294901760
  %4057 = vmatprep.subr.mxu0 %v4056
  %v4058 = vand.u32 %v3190, 4294901760
  %4059 = vmatpush1.msra.mxu0 %v4058
  %v4060 = vand.u32 %v3194, 4294901760
  %4061 = vmatprep.subr.mxu0 %v4060
  %v4062 = vand.u32 %v3193, 4294901760
  %4063 = vmatpush1.msra.mxu0 %v4062
  %v4064 = vand.u32 %v3197, 4294901760
  %4065 = vmatprep.subr.mxu0 %v4064
  %v4066 = vand.u32 %v3196, 4294901760
  %4067 = vmatpush1.msra.mxu0 %v4066
  %v4068 = vand.u32 %v3200, 4294901760
  %4069 = vmatprep.subr.mxu0 %v4068
  %v4070 = vand.u32 %v3199, 4294901760
  %4071 = vmatpush1.msra.mxu0 %v4070
  %v4072 = vand.u32 %v3203, 4294901760
  %4073 = vmatprep.subr.mxu0 %v4072
  %v4074 = vand.u32 %v3202, 4294901760
  %4075 = vmatpush1.msra.mxu0 %v4074
  %v4076 = vand.u32 %v3206, 4294901760
  %4077 = vmatprep.subr.mxu0 %v4076
  %v4078 = vand.u32 %v3205, 4294901760
  %4079 = vmatpush1.msra.mxu0 %v4078
  %v4080 = vand.u32 %v3209, 4294901760
  %4081 = vmatprep.subr.mxu0 %v4080
  %v4082 = vand.u32 %v3208, 4294901760
  %4083 = vmatpush1.msra.mxu0 %v4082
  %v4084 = vand.u32 %v3212, 4294901760
  %4085 = vmatprep.subr.mxu0 %v4084
  %v4086 = vand.u32 %v3211, 4294901760
  %4087 = vmatpush1.msra.mxu0 %v4086
  %v4088 = vand.u32 %v3215, 4294901760
  %4089 = vmatprep.subr.mxu0 %v4088
  %v4090 = vand.u32 %v3214, 4294901760
  %4091 = vmatpush1.msra.mxu0 %v4090
  %v4092 = vand.u32 %v3218, 4294901760
  %4093 = vmatprep.subr.mxu0 %v4092
  %v4094 = vand.u32 %v3217, 4294901760
  %4095 = vmatpush1.msra.mxu0 %v4094
  %v4096 = vand.u32 %v3221, 4294901760
  %4097 = vmatprep.subr.mxu0 %v4096
  %v4098 = vand.u32 %v3220, 4294901760
  %4099 = vmatpush1.msra.mxu0 %v4098
  %v4100 = vand.u32 %v3224, 4294901760
  %4101 = vmatprep.subr.mxu0 %v4100
  %v4102 = vand.u32 %v3223, 4294901760
  %4103 = vmatpush1.msra.mxu0 %v4102
  %v4104 = vand.u32 %v3227, 4294901760
  %4105 = vmatprep.subr.mxu0 %v4104
  %v4106 = vand.u32 %v3226, 4294901760
  %4107 = vmatpush1.msra.mxu0 %v4106
  %v4108 = vand.u32 %v3230, 4294901760
  %4109 = vmatprep.subr.mxu0 %v4108
  %v4110 = vand.u32 %v3229, 4294901760
  %4111 = vmatpush1.msra.mxu0 %v4110
  %v4112 = vand.u32 %v3233, 4294901760
  %4113 = vmatprep.subr.mxu0 %v4112
  %v4114 = vand.u32 %v3232, 4294901760
  %4115 = vmatpush1.msra.mxu0 %v4114
  %v4116 = vand.u32 %v3236, 4294901760
  %4117 = vmatprep.subr.mxu0 %v4116
  %v4118 = vand.u32 %v3235, 4294901760
  %4119 = vmatpush1.msra.mxu0 %v4118
  %4120 = vmatprep.subr.mxu0 0.0
  %4121 = vmatpush1.msra.mxu0 0.0
  %4122 = vmatprep.subr.mxu0 0.0
  %4123 = vmatpush1.msra.mxu0 0.0
  %4124 = vmatprep.subr.mxu0 0.0
  %4125 = vmatpush1.msra.mxu0 0.0
  %4126 = vmatprep.subr.mxu0 0.0
  %4127 = vmatpush1.msra.mxu0 0.0
  %4128 = vmatprep.subr.mxu0 0.0
  %4129 = vmatpush1.msra.mxu0 0.0
  %4130 = vmatprep.subr.mxu0 0.0
  %4131 = vmatpush1.msra.mxu0 0.0
  %4132 = vmatprep.subr.mxu0 0.0
  %4133 = vmatpush1.msra.mxu0 0.0
  %4134 = vmatprep.subr.mxu0 0.0
  %4135 = vmatpush1.msra.mxu0 0.0
  %4136 = vmatprep.subr.mxu0 0.0
  %4137 = vmatpush1.msra.mxu0 0.0
  %4138 = vmatprep.subr.mxu0 0.0
  %4139 = vmatpush1.msra.mxu0 0.0
  %4140 = vmatprep.subr.mxu0 0.0
  %4141 = vmatpush1.msra.mxu0 0.0
  %4142 = vmatprep.subr.mxu0 0.0
  %4143 = vmatpush1.msra.mxu0 0.0
  %4144 = vmatprep.subr.mxu0 0.0
  %4145 = vmatpush1.msra.mxu0 0.0
  %4146 = vmatprep.subr.mxu0 0.0
  %4147 = vmatpush1.msra.mxu0 0.0
  %4148 = vmatprep.subr.mxu0 0.0
  %4149 = vmatpush1.msra.mxu0 0.0
  %4150 = vmatprep.subr.mxu0 0.0
  %4151 = vmatpush1.msra.mxu0 0.0
  %4152 = vmatprep.mubr.f32.mxu0 0.0
  %v4153 = vand.u32 %v3288, 4294901760
  %4154 = vmatmul.mubr.f32.gmra.mrb[0].mxu0 %v4153
  %v4155 = vpop.f32.mrb[0].mxu0
  %v4156 = vadd.f32 %v4052, %v4155
  %v4157 = vpop.f32.mrb[0].mxu0
  %v4158 = vadd.f32 %v4054, %v4157
  %4159 = vdwg.mxu0
  %4160 = vmatprep.subr.mxu0 0.0
  %v4161 = vand.u32 %v3192, 4294901760
  %4162 = vmatpush1.msra.mxu0 %v4161
  %4163 = vmatprep.subr.mxu0 0.0
  %v4164 = vand.u32 %v3195, 4294901760
  %4165 = vmatpush1.msra.mxu0 %v4164
  %4166 = vmatprep.subr.mxu0 0.0
  %v4167 = vand.u32 %v3198, 4294901760
  %4168 = vmatpush1.msra.mxu0 %v4167
  %4169 = vmatprep.subr.mxu0 0.0
  %v4170 = vand.u32 %v3201, 4294901760
  %4171 = vmatpush1.msra.mxu0 %v4170
  %4172 = vmatprep.subr.mxu0 0.0
  %v4173 = vand.u32 %v3204, 4294901760
  %4174 = vmatpush1.msra.mxu0 %v4173
  %4175 = vmatprep.subr.mxu0 0.0
  %v4176 = vand.u32 %v3207, 4294901760
  %4177 = vmatpush1.msra.mxu0 %v4176
  %4178 = vmatprep.subr.mxu0 0.0
  %v4179 = vand.u32 %v3210, 4294901760
  %4180 = vmatpush1.msra.mxu0 %v4179
  %4181 = vmatprep.subr.mxu0 0.0
  %v4182 = vand.u32 %v3213, 4294901760
  %4183 = vmatpush1.msra.mxu0 %v4182
  %4184 = vmatprep.subr.mxu0 0.0
  %v4185 = vand.u32 %v3216, 4294901760
  %4186 = vmatpush1.msra.mxu0 %v4185
  %4187 = vmatprep.subr.mxu0 0.0
  %v4188 = vand.u32 %v3219, 4294901760
  %4189 = vmatpush1.msra.mxu0 %v4188
  %4190 = vmatprep.subr.mxu0 0.0
  %v4191 = vand.u32 %v3222, 4294901760
  %4192 = vmatpush1.msra.mxu0 %v4191
  %4193 = vmatprep.subr.mxu0 0.0
  %v4194 = vand.u32 %v3225, 4294901760
  %4195 = vmatpush1.msra.mxu0 %v4194
  %4196 = vmatprep.subr.mxu0 0.0
  %v4197 = vand.u32 %v3228, 4294901760
  %4198 = vmatpush1.msra.mxu0 %v4197
  %4199 = vmatprep.subr.mxu0 0.0
  %v4200 = vand.u32 %v3231, 4294901760
  %4201 = vmatpush1.msra.mxu0 %v4200
  %4202 = vmatprep.subr.mxu0 0.0
  %v4203 = vand.u32 %v3234, 4294901760
  %4204 = vmatpush1.msra.mxu0 %v4203
  %4205 = vmatprep.subr.mxu0 0.0
  %v4206 = vand.u32 %v3237, 4294901760
  %4207 = vmatpush1.msra.mxu0 %v4206
  %4208 = vmatprep.subr.mxu0 0.0
  %4209 = vmatpush1.msra.mxu0 0.0
  %4210 = vmatprep.subr.mxu0 0.0
  %4211 = vmatpush1.msra.mxu0 0.0
  %4212 = vmatprep.subr.mxu0 0.0
  %4213 = vmatpush1.msra.mxu0 0.0
  %4214 = vmatprep.subr.mxu0 0.0
  %4215 = vmatpush1.msra.mxu0 0.0
  %4216 = vmatprep.subr.mxu0 0.0
  %4217 = vmatpush1.msra.mxu0 0.0
  %4218 = vmatprep.subr.mxu0 0.0
  %4219 = vmatpush1.msra.mxu0 0.0
  %4220 = vmatprep.subr.mxu0 0.0
  %4221 = vmatpush1.msra.mxu0 0.0
  %4222 = vmatprep.subr.mxu0 0.0
  %4223 = vmatpush1.msra.mxu0 0.0
  %4224 = vmatprep.subr.mxu0 0.0
  %4225 = vmatpush1.msra.mxu0 0.0
  %4226 = vmatprep.subr.mxu0 0.0
  %4227 = vmatpush1.msra.mxu0 0.0
  %4228 = vmatprep.subr.mxu0 0.0
  %4229 = vmatpush1.msra.mxu0 0.0
  %4230 = vmatprep.subr.mxu0 0.0
  %4231 = vmatpush1.msra.mxu0 0.0
  %4232 = vmatprep.subr.mxu0 0.0
  %4233 = vmatpush1.msra.mxu0 0.0
  %4234 = vmatprep.subr.mxu0 0.0
  %4235 = vmatpush1.msra.mxu0 0.0
  %4236 = vmatprep.subr.mxu0 0.0
  %4237 = vmatpush1.msra.mxu0 0.0
  %4238 = vmatprep.subr.mxu0 0.0
  %4239 = vmatpush1.msra.mxu0 0.0
  %4240 = vmatprep.mubr.f32.mxu0 0.0
  %v4241 = vand.u32 %v3288, 4294901760
  %v4242 = vsub.f32 %v3288, %v4241
  %v4243 = vand.u32 %v4242, 4294901760
  %v4244 = vsub.f32 %v4242, %v4243
  %v4245 = vand.u32 %v4244, 4294901760
  %4246 = vmatmul.mubr.f32.gmra.mrb[0].mxu0 %v4245
  %v4247 = vpop.f32.mrb[0].mxu0
  %v4248 = vadd.f32 %v3301, %v4247
  %v4249 = vpop.f32.mrb[0].mxu0
  %4250 = vdwg.mxu0
  %4251 = vmatprep.subr.mxu0 0.0
  %v4252 = vand.u32 %v3192, 4294901760
  %v4253 = vsub.f32 %v3192, %v4252
  %v4254 = vand.u32 %v4253, 4294901760
  %v4255 = vsub.f32 %v4253, %v4254
  %v4256 = vand.u32 %v4255, 4294901760
  %4257 = vmatpush1.msra.mxu0 %v4256
  %4258 = vmatprep.subr.mxu0 0.0
  %v4259 = vand.u32 %v3195, 4294901760
  %v4260 = vsub.f32 %v3195, %v4259
  %v4261 = vand.u32 %v4260, 4294901760
  %v4262 = vsub.f32 %v4260, %v4261
  %v4263 = vand.u32 %v4262, 4294901760
  %4264 = vmatpush1.msra.mxu0 %v4263
  %4265 = vmatprep.subr.mxu0 0.0
  %v4266 = vand.u32 %v3198, 4294901760
  %v4267 = vsub.f32 %v3198, %v4266
  %v4268 = vand.u32 %v4267, 4294901760
  %v4269 = vsub.f32 %v4267, %v4268
  %v4270 = vand.u32 %v4269, 4294901760
  %4271 = vmatpush1.msra.mxu0 %v4270
  %4272 = vmatprep.subr.mxu0 0.0
  %v4273 = vand.u32 %v3201, 4294901760
  %v4274 = vsub.f32 %v3201, %v4273
  %v4275 = vand.u32 %v4274, 4294901760
  %v4276 = vsub.f32 %v4274, %v4275
  %v4277 = vand.u32 %v4276, 4294901760
  %4278 = vmatpush1.msra.mxu0 %v4277
  %4279 = vmatprep.subr.mxu0 0.0
  %v4280 = vand.u32 %v3204, 4294901760
  %v4281 = vsub.f32 %v3204, %v4280
  %v4282 = vand.u32 %v4281, 4294901760
  %v4283 = vsub.f32 %v4281, %v4282
  %v4284 = vand.u32 %v4283, 4294901760
  %4285 = vmatpush1.msra.mxu0 %v4284
  %4286 = vmatprep.subr.mxu0 0.0
  %v4287 = vand.u32 %v3207, 4294901760
  %v4288 = vsub.f32 %v3207, %v4287
  %v4289 = vand.u32 %v4288, 4294901760
  %v4290 = vsub.f32 %v4288, %v4289
  %v4291 = vand.u32 %v4290, 4294901760
  %4292 = vmatpush1.msra.mxu0 %v4291
  %4293 = vmatprep.subr.mxu0 0.0
  %v4294 = vand.u32 %v3210, 4294901760
  %v4295 = vsub.f32 %v3210, %v4294
  %v4296 = vand.u32 %v4295, 4294901760
  %v4297 = vsub.f32 %v4295, %v4296
  %v4298 = vand.u32 %v4297, 4294901760
  %4299 = vmatpush1.msra.mxu0 %v4298
  %4300 = vmatprep.subr.mxu0 0.0
  %v4301 = vand.u32 %v3213, 4294901760
  %v4302 = vsub.f32 %v3213, %v4301
  %v4303 = vand.u32 %v4302, 4294901760
  %v4304 = vsub.f32 %v4302, %v4303
  %v4305 = vand.u32 %v4304, 4294901760
  %4306 = vmatpush1.msra.mxu0 %v4305
  %4307 = vmatprep.subr.mxu0 0.0
  %v4308 = vand.u32 %v3216, 4294901760
  %v4309 = vsub.f32 %v3216, %v4308
  %v4310 = vand.u32 %v4309, 4294901760
  %v4311 = vsub.f32 %v4309, %v4310
  %v4312 = vand.u32 %v4311, 4294901760
  %4313 = vmatpush1.msra.mxu0 %v4312
  %4314 = vmatprep.subr.mxu0 0.0
  %v4315 = vand.u32 %v3219, 4294901760
  %v4316 = vsub.f32 %v3219, %v4315
  %v4317 = vand.u32 %v4316, 4294901760
  %v4318 = vsub.f32 %v4316, %v4317
  %v4319 = vand.u32 %v4318, 4294901760
  %4320 = vmatpush1.msra.mxu0 %v4319
  %4321 = vmatprep.subr.mxu0 0.0
  %v4322 = vand.u32 %v3222, 4294901760
  %v4323 = vsub.f32 %v3222, %v4322
  %v4324 = vand.u32 %v4323, 4294901760
  %v4325 = vsub.f32 %v4323, %v4324
  %v4326 = vand.u32 %v4325, 4294901760
  %4327 = vmatpush1.msra.mxu0 %v4326
  %4328 = vmatprep.subr.mxu0 0.0
  %v4329 = vand.u32 %v3225, 4294901760
  %v4330 = vsub.f32 %v3225, %v4329
  %v4331 = vand.u32 %v4330, 4294901760
  %v4332 = vsub.f32 %v4330, %v4331
  %v4333 = vand.u32 %v4332, 4294901760
  %4334 = vmatpush1.msra.mxu0 %v4333
  %4335 = vmatprep.subr.mxu0 0.0
  %v4336 = vand.u32 %v3228, 4294901760
  %v4337 = vsub.f32 %v3228, %v4336
  %v4338 = vand.u32 %v4337, 4294901760
  %v4339 = vsub.f32 %v4337, %v4338
  %v4340 = vand.u32 %v4339, 4294901760
  %4341 = vmatpush1.msra.mxu0 %v4340
  %4342 = vmatprep.subr.mxu0 0.0
  %v4343 = vand.u32 %v3231, 4294901760
  %v4344 = vsub.f32 %v3231, %v4343
  %v4345 = vand.u32 %v4344, 4294901760
  %v4346 = vsub.f32 %v4344, %v4345
  %v4347 = vand.u32 %v4346, 4294901760
  %4348 = vmatpush1.msra.mxu0 %v4347
  %4349 = vmatprep.subr.mxu0 0.0
  %v4350 = vand.u32 %v3234, 4294901760
  %v4351 = vsub.f32 %v3234, %v4350
  %v4352 = vand.u32 %v4351, 4294901760
  %v4353 = vsub.f32 %v4351, %v4352
  %v4354 = vand.u32 %v4353, 4294901760
  %4355 = vmatpush1.msra.mxu0 %v4354
  %4356 = vmatprep.subr.mxu0 0.0
  %v4357 = vand.u32 %v3237, 4294901760
  %v4358 = vsub.f32 %v3237, %v4357
  %v4359 = vand.u32 %v4358, 4294901760
  %v4360 = vsub.f32 %v4358, %v4359
  %v4361 = vand.u32 %v4360, 4294901760
  %4362 = vmatpush1.msra.mxu0 %v4361
  %4363 = vmatprep.subr.mxu0 0.0
  %4364 = vmatpush1.msra.mxu0 0.0
  %4365 = vmatprep.subr.mxu0 0.0
  %4366 = vmatpush1.msra.mxu0 0.0
  %4367 = vmatprep.subr.mxu0 0.0
  %4368 = vmatpush1.msra.mxu0 0.0
  %4369 = vmatprep.subr.mxu0 0.0
  %4370 = vmatpush1.msra.mxu0 0.0
  %4371 = vmatprep.subr.mxu0 0.0
  %4372 = vmatpush1.msra.mxu0 0.0
  %4373 = vmatprep.subr.mxu0 0.0
  %4374 = vmatpush1.msra.mxu0 0.0
  %4375 = vmatprep.subr.mxu0 0.0
  %4376 = vmatpush1.msra.mxu0 0.0
  %4377 = vmatprep.subr.mxu0 0.0
  %4378 = vmatpush1.msra.mxu0 0.0
  %4379 = vmatprep.subr.mxu0 0.0
  %4380 = vmatpush1.msra.mxu0 0.0
  %4381 = vmatprep.subr.mxu0 0.0
  %4382 = vmatpush1.msra.mxu0 0.0
  %4383 = vmatprep.subr.mxu0 0.0
  %4384 = vmatpush1.msra.mxu0 0.0
  %4385 = vmatprep.subr.mxu0 0.0
  %4386 = vmatpush1.msra.mxu0 0.0
  %4387 = vmatprep.subr.mxu0 0.0
  %4388 = vmatpush1.msra.mxu0 0.0
  %4389 = vmatprep.subr.mxu0 0.0
  %4390 = vmatpush1.msra.mxu0 0.0
  %4391 = vmatprep.subr.mxu0 0.0
  %4392 = vmatpush1.msra.mxu0 0.0
  %4393 = vmatprep.subr.mxu0 0.0
  %4394 = vmatpush1.msra.mxu0 0.0
  %4395 = vmatprep.mubr.f32.mxu0 0.0
  %v4396 = vand.u32 %v3288, 4294901760
  %4397 = vmatmul.mubr.f32.gmra.mrb[0].mxu0 %v4396
  %v4398 = vpop.f32.mrb[0].mxu0
  %v4399 = vadd.f32 %v4248, %v4398
  %v4400 = vpop.f32.mrb[0].mxu0
  %4401 = vdwg.mxu0
  %4402 = vmatprep.subr.mxu0 0.0
  %v4403 = vand.u32 %v3192, 4294901760
  %v4404 = vsub.f32 %v3192, %v4403
  %4405 = vmatpush1.msra.mxu0 %v4404
  %4406 = vmatprep.subr.mxu0 0.0
  %v4407 = vand.u32 %v3195, 4294901760
  %v4408 = vsub.f32 %v3195, %v4407
  %4409 = vmatpush1.msra.mxu0 %v4408
  %4410 = vmatprep.subr.mxu0 0.0
  %v4411 = vand.u32 %v3198, 4294901760
  %v4412 = vsub.f32 %v3198, %v4411
  %4413 = vmatpush1.msra.mxu0 %v4412
  %4414 = vmatprep.subr.mxu0 0.0
  %v4415 = vand.u32 %v3201, 4294901760
  %v4416 = vsub.f32 %v3201, %v4415
  %4417 = vmatpush1.msra.mxu0 %v4416
  %4418 = vmatprep.subr.mxu0 0.0
  %v4419 = vand.u32 %v3204, 4294901760
  %v4420 = vsub.f32 %v3204, %v4419
  %4421 = vmatpush1.msra.mxu0 %v4420
  %4422 = vmatprep.subr.mxu0 0.0
  %v4423 = vand.u32 %v3207, 4294901760
  %v4424 = vsub.f32 %v3207, %v4423
  %4425 = vmatpush1.msra.mxu0 %v4424
  %4426 = vmatprep.subr.mxu0 0.0
  %v4427 = vand.u32 %v3210, 4294901760
  %v4428 = vsub.f32 %v3210, %v4427
  %4429 = vmatpush1.msra.mxu0 %v4428
  %4430 = vmatprep.subr.mxu0 0.0
  %v4431 = vand.u32 %v3213, 4294901760
  %v4432 = vsub.f32 %v3213, %v4431
  %4433 = vmatpush1.msra.mxu0 %v4432
  %4434 = vmatprep.subr.mxu0 0.0
  %v4435 = vand.u32 %v3216, 4294901760
  %v4436 = vsub.f32 %v3216, %v4435
  %4437 = vmatpush1.msra.mxu0 %v4436
  %4438 = vmatprep.subr.mxu0 0.0
  %v4439 = vand.u32 %v3219, 4294901760
  %v4440 = vsub.f32 %v3219, %v4439
  %4441 = vmatpush1.msra.mxu0 %v4440
  %4442 = vmatprep.subr.mxu0 0.0
  %v4443 = vand.u32 %v3222, 4294901760
  %v4444 = vsub.f32 %v3222, %v4443
  %4445 = vmatpush1.msra.mxu0 %v4444
  %4446 = vmatprep.subr.mxu0 0.0
  %v4447 = vand.u32 %v3225, 4294901760
  %v4448 = vsub.f32 %v3225, %v4447
  %4449 = vmatpush1.msra.mxu0 %v4448
  %4450 = vmatprep.subr.mxu0 0.0
  %v4451 = vand.u32 %v3228, 4294901760
  %v4452 = vsub.f32 %v3228, %v4451
  %4453 = vmatpush1.msra.mxu0 %v4452
  %4454 = vmatprep.subr.mxu0 0.0
  %v4455 = vand.u32 %v3231, 4294901760
  %v4456 = vsub.f32 %v3231, %v4455
  %4457 = vmatpush1.msra.mxu0 %v4456
  %4458 = vmatprep.subr.mxu0 0.0
  %v4459 = vand.u32 %v3234, 4294901760
  %v4460 = vsub.f32 %v3234, %v4459
  %4461 = vmatpush1.msra.mxu0 %v4460
  %4462 = vmatprep.subr.mxu0 0.0
  %v4463 = vand.u32 %v3237, 4294901760
  %v4464 = vsub.f32 %v3237, %v4463
  %4465 = vmatpush1.msra.mxu0 %v4464
  %4466 = vmatprep.subr.mxu0 0.0
  %4467 = vmatpush1.msra.mxu0 0.0
  %4468 = vmatprep.subr.mxu0 0.0
  %4469 = vmatpush1.msra.mxu0 0.0
  %4470 = vmatprep.subr.mxu0 0.0
  %4471 = vmatpush1.msra.mxu0 0.0
  %4472 = vmatprep.subr.mxu0 0.0
  %4473 = vmatpush1.msra.mxu0 0.0
  %4474 = vmatprep.subr.mxu0 0.0
  %4475 = vmatpush1.msra.mxu0 0.0
  %4476 = vmatprep.subr.mxu0 0.0
  %4477 = vmatpush1.msra.mxu0 0.0
  %4478 = vmatprep.subr.mxu0 0.0
  %4479 = vmatpush1.msra.mxu0 0.0
  %4480 = vmatprep.subr.mxu0 0.0
  %4481 = vmatpush1.msra.mxu0 0.0
  %4482 = vmatprep.subr.mxu0 0.0
  %4483 = vmatpush1.msra.mxu0 0.0
  %4484 = vmatprep.subr.mxu0 0.0
  %4485 = vmatpush1.msra.mxu0 0.0
  %4486 = vmatprep.subr.mxu0 0.0
  %4487 = vmatpush1.msra.mxu0 0.0
  %4488 = vmatprep.subr.mxu0 0.0
  %4489 = vmatpush1.msra.mxu0 0.0
  %4490 = vmatprep.subr.mxu0 0.0
  %4491 = vmatpush1.msra.mxu0 0.0
  %4492 = vmatprep.subr.mxu0 0.0
  %4493 = vmatpush1.msra.mxu0 0.0
  %4494 = vmatprep.subr.mxu0 0.0
  %4495 = vmatpush1.msra.mxu0 0.0
  %4496 = vmatprep.subr.mxu0 0.0
  %4497 = vmatpush1.msra.mxu0 0.0
  %4498 = vmatprep.mubr.f32.mxu0 0.0
  %v4499 = vand.u32 %v3288, 4294901760
  %v4500 = vsub.f32 %v3288, %v4499
  %4501 = vmatmul.mubr.f32.gmra.mrb[0].mxu0 %v4500
  %v4502 = vpop.f32.mrb[0].mxu0
  %v4503 = vadd.f32 %v4399, %v4502
  %v4504 = vpop.f32.mrb[0].mxu0
  %4505 = vdwg.mxu0
  %4506 = vmatprep.subr.mxu0 0.0
  %v4507 = vand.u32 %v3192, 4294901760
  %4508 = vmatpush1.msra.mxu0 %v4507
  %4509 = vmatprep.subr.mxu0 0.0
  %v4510 = vand.u32 %v3195, 4294901760
  %4511 = vmatpush1.msra.mxu0 %v4510
  %4512 = vmatprep.subr.mxu0 0.0
  %v4513 = vand.u32 %v3198, 4294901760
  %4514 = vmatpush1.msra.mxu0 %v4513
  %4515 = vmatprep.subr.mxu0 0.0
  %v4516 = vand.u32 %v3201, 4294901760
  %4517 = vmatpush1.msra.mxu0 %v4516
  %4518 = vmatprep.subr.mxu0 0.0
  %v4519 = vand.u32 %v3204, 4294901760
  %4520 = vmatpush1.msra.mxu0 %v4519
  %4521 = vmatprep.subr.mxu0 0.0
  %v4522 = vand.u32 %v3207, 4294901760
  %4523 = vmatpush1.msra.mxu0 %v4522
  %4524 = vmatprep.subr.mxu0 0.0
  %v4525 = vand.u32 %v3210, 4294901760
  %4526 = vmatpush1.msra.mxu0 %v4525
  %4527 = vmatprep.subr.mxu0 0.0
  %v4528 = vand.u32 %v3213, 4294901760
  %4529 = vmatpush1.msra.mxu0 %v4528
  %4530 = vmatprep.subr.mxu0 0.0
  %v4531 = vand.u32 %v3216, 4294901760
  %4532 = vmatpush1.msra.mxu0 %v4531
  %4533 = vmatprep.subr.mxu0 0.0
  %v4534 = vand.u32 %v3219, 4294901760
  %4535 = vmatpush1.msra.mxu0 %v4534
  %4536 = vmatprep.subr.mxu0 0.0
  %v4537 = vand.u32 %v3222, 4294901760
  %4538 = vmatpush1.msra.mxu0 %v4537
  %4539 = vmatprep.subr.mxu0 0.0
  %v4540 = vand.u32 %v3225, 4294901760
  %4541 = vmatpush1.msra.mxu0 %v4540
  %4542 = vmatprep.subr.mxu0 0.0
  %v4543 = vand.u32 %v3228, 4294901760
  %4544 = vmatpush1.msra.mxu0 %v4543
  %4545 = vmatprep.subr.mxu0 0.0
  %v4546 = vand.u32 %v3231, 4294901760
  %4547 = vmatpush1.msra.mxu0 %v4546
  %4548 = vmatprep.subr.mxu0 0.0
  %v4549 = vand.u32 %v3234, 4294901760
  %4550 = vmatpush1.msra.mxu0 %v4549
  %4551 = vmatprep.subr.mxu0 0.0
  %v4552 = vand.u32 %v3237, 4294901760
  %4553 = vmatpush1.msra.mxu0 %v4552
  %4554 = vmatprep.subr.mxu0 0.0
  %4555 = vmatpush1.msra.mxu0 0.0
  %4556 = vmatprep.subr.mxu0 0.0
  %4557 = vmatpush1.msra.mxu0 0.0
  %4558 = vmatprep.subr.mxu0 0.0
  %4559 = vmatpush1.msra.mxu0 0.0
  %4560 = vmatprep.subr.mxu0 0.0
  %4561 = vmatpush1.msra.mxu0 0.0
  %4562 = vmatprep.subr.mxu0 0.0
  %4563 = vmatpush1.msra.mxu0 0.0
  %4564 = vmatprep.subr.mxu0 0.0
  %4565 = vmatpush1.msra.mxu0 0.0
  %4566 = vmatprep.subr.mxu0 0.0
  %4567 = vmatpush1.msra.mxu0 0.0
  %4568 = vmatprep.subr.mxu0 0.0
  %4569 = vmatpush1.msra.mxu0 0.0
  %4570 = vmatprep.subr.mxu0 0.0
  %4571 = vmatpush1.msra.mxu0 0.0
  %4572 = vmatprep.subr.mxu0 0.0
  %4573 = vmatpush1.msra.mxu0 0.0
  %4574 = vmatprep.subr.mxu0 0.0
  %4575 = vmatpush1.msra.mxu0 0.0
  %4576 = vmatprep.subr.mxu0 0.0
  %4577 = vmatpush1.msra.mxu0 0.0
  %4578 = vmatprep.subr.mxu0 0.0
  %4579 = vmatpush1.msra.mxu0 0.0
  %4580 = vmatprep.subr.mxu0 0.0
  %4581 = vmatpush1.msra.mxu0 0.0
  %4582 = vmatprep.subr.mxu0 0.0
  %4583 = vmatpush1.msra.mxu0 0.0
  %4584 = vmatprep.subr.mxu0 0.0
  %4585 = vmatpush1.msra.mxu0 0.0
  %4586 = vmatprep.mubr.f32.mxu0 0.0
  %v4587 = vand.u32 %v3288, 4294901760
  %v4588 = vsub.f32 %v3288, %v4587
  %v4589 = vand.u32 %v4588, 4294901760
  %4590 = vmatmul.mubr.f32.gmra.mrb[0].mxu0 %v4589
  %v4591 = vpop.f32.mrb[0].mxu0
  %v4592 = vadd.f32 %v4503, %v4591
  %v4593 = vpop.f32.mrb[0].mxu0
  %4594 = vdwg.mxu0
  %4595 = vmatprep.subr.mxu0 0.0
  %v4596 = vand.u32 %v3192, 4294901760
  %v4597 = vsub.f32 %v3192, %v4596
  %v4598 = vand.u32 %v4597, 4294901760
  %4599 = vmatpush1.msra.mxu0 %v4598
  %4600 = vmatprep.subr.mxu0 0.0
  %v4601 = vand.u32 %v3195, 4294901760
  %v4602 = vsub.f32 %v3195, %v4601
  %v4603 = vand.u32 %v4602, 4294901760
  %4604 = vmatpush1.msra.mxu0 %v4603
  %4605 = vmatprep.subr.mxu0 0.0
  %v4606 = vand.u32 %v3198, 4294901760
  %v4607 = vsub.f32 %v3198, %v4606
  %v4608 = vand.u32 %v4607, 4294901760
  %4609 = vmatpush1.msra.mxu0 %v4608
  %4610 = vmatprep.subr.mxu0 0.0
  %v4611 = vand.u32 %v3201, 4294901760
  %v4612 = vsub.f32 %v3201, %v4611
  %v4613 = vand.u32 %v4612, 4294901760
  %4614 = vmatpush1.msra.mxu0 %v4613
  %4615 = vmatprep.subr.mxu0 0.0
  %v4616 = vand.u32 %v3204, 4294901760
  %v4617 = vsub.f32 %v3204, %v4616
  %v4618 = vand.u32 %v4617, 4294901760
  %4619 = vmatpush1.msra.mxu0 %v4618
  %4620 = vmatprep.subr.mxu0 0.0
  %v4621 = vand.u32 %v3207, 4294901760
  %v4622 = vsub.f32 %v3207, %v4621
  %v4623 = vand.u32 %v4622, 4294901760
  %4624 = vmatpush1.msra.mxu0 %v4623
  %4625 = vmatprep.subr.mxu0 0.0
  %v4626 = vand.u32 %v3210, 4294901760
  %v4627 = vsub.f32 %v3210, %v4626
  %v4628 = vand.u32 %v4627, 4294901760
  %4629 = vmatpush1.msra.mxu0 %v4628
  %4630 = vmatprep.subr.mxu0 0.0
  %v4631 = vand.u32 %v3213, 4294901760
  %v4632 = vsub.f32 %v3213, %v4631
  %v4633 = vand.u32 %v4632, 4294901760
  %4634 = vmatpush1.msra.mxu0 %v4633
  %4635 = vmatprep.subr.mxu0 0.0
  %v4636 = vand.u32 %v3216, 4294901760
  %v4637 = vsub.f32 %v3216, %v4636
  %v4638 = vand.u32 %v4637, 4294901760
  %4639 = vmatpush1.msra.mxu0 %v4638
  %4640 = vmatprep.subr.mxu0 0.0
  %v4641 = vand.u32 %v3219, 4294901760
  %v4642 = vsub.f32 %v3219, %v4641
  %v4643 = vand.u32 %v4642, 4294901760
  %4644 = vmatpush1.msra.mxu0 %v4643
  %4645 = vmatprep.subr.mxu0 0.0
  %v4646 = vand.u32 %v3222, 4294901760
  %v4647 = vsub.f32 %v3222, %v4646
  %v4648 = vand.u32 %v4647, 4294901760
  %4649 = vmatpush1.msra.mxu0 %v4648
  %4650 = vmatprep.subr.mxu0 0.0
  %v4651 = vand.u32 %v3225, 4294901760
  %v4652 = vsub.f32 %v3225, %v4651
  %v4653 = vand.u32 %v4652, 4294901760
  %4654 = vmatpush1.msra.mxu0 %v4653
  %4655 = vmatprep.subr.mxu0 0.0
  %v4656 = vand.u32 %v3228, 4294901760
  %v4657 = vsub.f32 %v3228, %v4656
  %v4658 = vand.u32 %v4657, 4294901760
  %4659 = vmatpush1.msra.mxu0 %v4658
  %4660 = vmatprep.subr.mxu0 0.0
  %v4661 = vand.u32 %v3231, 4294901760
  %v4662 = vsub.f32 %v3231, %v4661
  %v4663 = vand.u32 %v4662, 4294901760
  %4664 = vmatpush1.msra.mxu0 %v4663
  %4665 = vmatprep.subr.mxu0 0.0
  %v4666 = vand.u32 %v3234, 4294901760
  %v4667 = vsub.f32 %v3234, %v4666
  %v4668 = vand.u32 %v4667, 4294901760
  %4669 = vmatpush1.msra.mxu0 %v4668
  %4670 = vmatprep.subr.mxu0 0.0
  %v4671 = vand.u32 %v3237, 4294901760
  %v4672 = vsub.f32 %v3237, %v4671
  %v4673 = vand.u32 %v4672, 4294901760
  %4674 = vmatpush1.msra.mxu0 %v4673
  %4675 = vmatprep.subr.mxu0 0.0
  %4676 = vmatpush1.msra.mxu0 0.0
  %4677 = vmatprep.subr.mxu0 0.0
  %4678 = vmatpush1.msra.mxu0 0.0
  %4679 = vmatprep.subr.mxu0 0.0
  %4680 = vmatpush1.msra.mxu0 0.0
  %4681 = vmatprep.subr.mxu0 0.0
  %4682 = vmatpush1.msra.mxu0 0.0
  %4683 = vmatprep.subr.mxu0 0.0
  %4684 = vmatpush1.msra.mxu0 0.0
  %4685 = vmatprep.subr.mxu0 0.0
  %4686 = vmatpush1.msra.mxu0 0.0
  %4687 = vmatprep.subr.mxu0 0.0
  %4688 = vmatpush1.msra.mxu0 0.0
  %4689 = vmatprep.subr.mxu0 0.0
  %4690 = vmatpush1.msra.mxu0 0.0
  %4691 = vmatprep.subr.mxu0 0.0
  %4692 = vmatpush1.msra.mxu0 0.0
  %4693 = vmatprep.subr.mxu0 0.0
  %4694 = vmatpush1.msra.mxu0 0.0
  %4695 = vmatprep.subr.mxu0 0.0
  %4696 = vmatpush1.msra.mxu0 0.0
  %4697 = vmatprep.subr.mxu0 0.0
  %4698 = vmatpush1.msra.mxu0 0.0
  %4699 = vmatprep.subr.mxu0 0.0
  %4700 = vmatpush1.msra.mxu0 0.0
  %4701 = vmatprep.subr.mxu0 0.0
  %4702 = vmatpush1.msra.mxu0 0.0
  %4703 = vmatprep.subr.mxu0 0.0
  %4704 = vmatpush1.msra.mxu0 0.0
  %4705 = vmatprep.subr.mxu0 0.0
  %4706 = vmatpush1.msra.mxu0 0.0
  %4707 = vmatprep.mubr.f32.mxu0 0.0
  %v4708 = vand.u32 %v3288, 4294901760
  %4709 = vmatmul.mubr.f32.gmra.mrb[0].mxu0 %v4708
  %v4710 = vpop.f32.mrb[0].mxu0
  %v4711 = vadd.f32 %v4592, %v4710
  %v4712 = vpop.f32.mrb[0].mxu0
  %4713 = vdwg.mxu0
  %4714 = vmatprep.subr.mxu0 0.0
  %v4715 = vand.u32 %v3192, 4294901760
  %4716 = vmatpush1.msra.mxu0 %v4715
  %4717 = vmatprep.subr.mxu0 0.0
  %v4718 = vand.u32 %v3195, 4294901760
  %4719 = vmatpush1.msra.mxu0 %v4718
  %4720 = vmatprep.subr.mxu0 0.0
  %v4721 = vand.u32 %v3198, 4294901760
  %4722 = vmatpush1.msra.mxu0 %v4721
  %4723 = vmatprep.subr.mxu0 0.0
  %v4724 = vand.u32 %v3201, 4294901760
  %4725 = vmatpush1.msra.mxu0 %v4724
  %4726 = vmatprep.subr.mxu0 0.0
  %v4727 = vand.u32 %v3204, 4294901760
  %4728 = vmatpush1.msra.mxu0 %v4727
  %4729 = vmatprep.subr.mxu0 0.0
  %v4730 = vand.u32 %v3207, 4294901760
  %4731 = vmatpush1.msra.mxu0 %v4730
  %4732 = vmatprep.subr.mxu0 0.0
  %v4733 = vand.u32 %v3210, 4294901760
  %4734 = vmatpush1.msra.mxu0 %v4733
  %4735 = vmatprep.subr.mxu0 0.0
  %v4736 = vand.u32 %v3213, 4294901760
  %4737 = vmatpush1.msra.mxu0 %v4736
  %4738 = vmatprep.subr.mxu0 0.0
  %v4739 = vand.u32 %v3216, 4294901760
  %4740 = vmatpush1.msra.mxu0 %v4739
  %4741 = vmatprep.subr.mxu0 0.0
  %v4742 = vand.u32 %v3219, 4294901760
  %4743 = vmatpush1.msra.mxu0 %v4742
  %4744 = vmatprep.subr.mxu0 0.0
  %v4745 = vand.u32 %v3222, 4294901760
  %4746 = vmatpush1.msra.mxu0 %v4745
  %4747 = vmatprep.subr.mxu0 0.0
  %v4748 = vand.u32 %v3225, 4294901760
  %4749 = vmatpush1.msra.mxu0 %v4748
  %4750 = vmatprep.subr.mxu0 0.0
  %v4751 = vand.u32 %v3228, 4294901760
  %4752 = vmatpush1.msra.mxu0 %v4751
  %4753 = vmatprep.subr.mxu0 0.0
  %v4754 = vand.u32 %v3231, 4294901760
  %4755 = vmatpush1.msra.mxu0 %v4754
  %4756 = vmatprep.subr.mxu0 0.0
  %v4757 = vand.u32 %v3234, 4294901760
  %4758 = vmatpush1.msra.mxu0 %v4757
  %4759 = vmatprep.subr.mxu0 0.0
  %v4760 = vand.u32 %v3237, 4294901760
  %4761 = vmatpush1.msra.mxu0 %v4760
  %4762 = vmatprep.subr.mxu0 0.0
  %4763 = vmatpush1.msra.mxu0 0.0
  %4764 = vmatprep.subr.mxu0 0.0
  %4765 = vmatpush1.msra.mxu0 0.0
  %4766 = vmatprep.subr.mxu0 0.0
  %4767 = vmatpush1.msra.mxu0 0.0
  %4768 = vmatprep.subr.mxu0 0.0
  %4769 = vmatpush1.msra.mxu0 0.0
  %4770 = vmatprep.subr.mxu0 0.0
  %4771 = vmatpush1.msra.mxu0 0.0
  %4772 = vmatprep.subr.mxu0 0.0
  %4773 = vmatpush1.msra.mxu0 0.0
  %4774 = vmatprep.subr.mxu0 0.0
  %4775 = vmatpush1.msra.mxu0 0.0
  %4776 = vmatprep.subr.mxu0 0.0
  %4777 = vmatpush1.msra.mxu0 0.0
  %4778 = vmatprep.subr.mxu0 0.0
  %4779 = vmatpush1.msra.mxu0 0.0
  %4780 = vmatprep.subr.mxu0 0.0
  %4781 = vmatpush1.msra.mxu0 0.0
  %4782 = vmatprep.subr.mxu0 0.0
  %4783 = vmatpush1.msra.mxu0 0.0
  %4784 = vmatprep.subr.mxu0 0.0
  %4785 = vmatpush1.msra.mxu0 0.0
  %4786 = vmatprep.subr.mxu0 0.0
  %4787 = vmatpush1.msra.mxu0 0.0
  %4788 = vmatprep.subr.mxu0 0.0
  %4789 = vmatpush1.msra.mxu0 0.0
  %4790 = vmatprep.subr.mxu0 0.0
  %4791 = vmatpush1.msra.mxu0 0.0
  %4792 = vmatprep.subr.mxu0 0.0
  %4793 = vmatpush1.msra.mxu0 0.0
  %4794 = vmatprep.mubr.f32.mxu0 0.0
  %v4795 = vand.u32 %v3288, 4294901760
  %4796 = vmatmul.mubr.f32.gmra.mrb[0].mxu0 %v4795
  %v4797 = vpop.f32.mrb[0].mxu0
  %v4798 = vadd.f32 %v4711, %v4797
  %v4799 = vpop.f32.mrb[0].mxu0
  %4800 = vdwg.mxu0
  %s4801 = scalar_lea.vmem %s1, 8
  %v4802 = vld [vmem:[%s4801] sm:$0xff]
  %v4804 = vlaneseq
  %v4805 = vshrl.u32 %v4804, 7
  %v4806 = vsub.s32 0, %v4805
  %v4807 = vrot.slane %v3287, %v4806
  %v4808 = vlaneseq
  %v4809 = vshrl.u32 %v4808, 7
  %v4810 = vsub.s32 1, %v4809
  %v4811 = vrot.slane %v3287, %v4810
  %v4812 = vlaneseq
  %v4813 = vshrl.u32 %v4812, 7
  %v4814 = vsub.s32 2, %v4813
  %v4815 = vrot.slane %v3287, %v4814
  %v4819 = vand.u32 %v3239, 4294901760
  %4820 = vmatprep.subr.mxu0 %v4819
  %v4821 = vand.u32 %v3238, 4294901760
  %4822 = vmatpush1.msra.mxu0 %v4821
  %v4823 = vand.u32 %v3242, 4294901760
  %4824 = vmatprep.subr.mxu0 %v4823
  %v4825 = vand.u32 %v3241, 4294901760
  %4826 = vmatpush1.msra.mxu0 %v4825
  %v4827 = vand.u32 %v3245, 4294901760
  %4828 = vmatprep.subr.mxu0 %v4827
  %v4829 = vand.u32 %v3244, 4294901760
  %4830 = vmatpush1.msra.mxu0 %v4829
  %v4831 = vand.u32 %v3248, 4294901760
  %4832 = vmatprep.subr.mxu0 %v4831
  %v4833 = vand.u32 %v3247, 4294901760
  %4834 = vmatpush1.msra.mxu0 %v4833
  %v4835 = vand.u32 %v3251, 4294901760
  %4836 = vmatprep.subr.mxu0 %v4835
  %v4837 = vand.u32 %v3250, 4294901760
  %4838 = vmatpush1.msra.mxu0 %v4837
  %v4839 = vand.u32 %v3254, 4294901760
  %4840 = vmatprep.subr.mxu0 %v4839
  %v4841 = vand.u32 %v3253, 4294901760
  %4842 = vmatpush1.msra.mxu0 %v4841
  %v4843 = vand.u32 %v3257, 4294901760
  %4844 = vmatprep.subr.mxu0 %v4843
  %v4845 = vand.u32 %v3256, 4294901760
  %4846 = vmatpush1.msra.mxu0 %v4845
  %v4847 = vand.u32 %v3260, 4294901760
  %4848 = vmatprep.subr.mxu0 %v4847
  %v4849 = vand.u32 %v3259, 4294901760
  %4850 = vmatpush1.msra.mxu0 %v4849
  %v4851 = vand.u32 %v3263, 4294901760
  %4852 = vmatprep.subr.mxu0 %v4851
  %v4853 = vand.u32 %v3262, 4294901760
  %4854 = vmatpush1.msra.mxu0 %v4853
  %v4855 = vand.u32 %v3266, 4294901760
  %4856 = vmatprep.subr.mxu0 %v4855
  %v4857 = vand.u32 %v3265, 4294901760
  %4858 = vmatpush1.msra.mxu0 %v4857
  %v4859 = vand.u32 %v3269, 4294901760
  %4860 = vmatprep.subr.mxu0 %v4859
  %v4861 = vand.u32 %v3268, 4294901760
  %4862 = vmatpush1.msra.mxu0 %v4861
  %v4863 = vand.u32 %v3272, 4294901760
  %4864 = vmatprep.subr.mxu0 %v4863
  %v4865 = vand.u32 %v3271, 4294901760
  %4866 = vmatpush1.msra.mxu0 %v4865
  %v4867 = vand.u32 %v3275, 4294901760
  %4868 = vmatprep.subr.mxu0 %v4867
  %v4869 = vand.u32 %v3274, 4294901760
  %4870 = vmatpush1.msra.mxu0 %v4869
  %v4871 = vand.u32 %v3278, 4294901760
  %4872 = vmatprep.subr.mxu0 %v4871
  %v4873 = vand.u32 %v3277, 4294901760
  %4874 = vmatpush1.msra.mxu0 %v4873
  %v4875 = vand.u32 %v3281, 4294901760
  %4876 = vmatprep.subr.mxu0 %v4875
  %v4877 = vand.u32 %v3280, 4294901760
  %4878 = vmatpush1.msra.mxu0 %v4877
  %v4879 = vand.u32 %v3284, 4294901760
  %4880 = vmatprep.subr.mxu0 %v4879
  %v4881 = vand.u32 %v3283, 4294901760
  %4882 = vmatpush1.msra.mxu0 %v4881
  %4883 = vmatprep.subr.mxu0 0.0
  %4884 = vmatpush1.msra.mxu0 0.0
  %4885 = vmatprep.subr.mxu0 0.0
  %4886 = vmatpush1.msra.mxu0 0.0
  %4887 = vmatprep.subr.mxu0 0.0
  %4888 = vmatpush1.msra.mxu0 0.0
  %4889 = vmatprep.subr.mxu0 0.0
  %4890 = vmatpush1.msra.mxu0 0.0
  %4891 = vmatprep.subr.mxu0 0.0
  %4892 = vmatpush1.msra.mxu0 0.0
  %4893 = vmatprep.subr.mxu0 0.0
  %4894 = vmatpush1.msra.mxu0 0.0
  %4895 = vmatprep.subr.mxu0 0.0
  %4896 = vmatpush1.msra.mxu0 0.0
  %4897 = vmatprep.subr.mxu0 0.0
  %4898 = vmatpush1.msra.mxu0 0.0
  %4899 = vmatprep.subr.mxu0 0.0
  %4900 = vmatpush1.msra.mxu0 0.0
  %4901 = vmatprep.subr.mxu0 0.0
  %4902 = vmatpush1.msra.mxu0 0.0
  %4903 = vmatprep.subr.mxu0 0.0
  %4904 = vmatpush1.msra.mxu0 0.0
  %4905 = vmatprep.subr.mxu0 0.0
  %4906 = vmatpush1.msra.mxu0 0.0
  %4907 = vmatprep.subr.mxu0 0.0
  %4908 = vmatpush1.msra.mxu0 0.0
  %4909 = vmatprep.subr.mxu0 0.0
  %4910 = vmatpush1.msra.mxu0 0.0
  %4911 = vmatprep.subr.mxu0 0.0
  %4912 = vmatpush1.msra.mxu0 0.0
  %4913 = vmatprep.subr.mxu0 0.0
  %4914 = vmatpush1.msra.mxu0 0.0
  %4915 = vmatprep.mubr.f32.mxu0 0.0
  %v4916 = vand.u32 %v4802, 4294901760
  %v4917 = vsub.f32 %v4802, %v4916
  %v4918 = vand.u32 %v4917, 4294901760
  %v4919 = vsub.f32 %v4917, %v4918
  %v4920 = vand.u32 %v4919, 4294901760
  %4921 = vmatmul.mubr.f32.gmra.mrb[0].mxu0 %v4920
  %v4922 = vpop.f32.mrb[0].mxu0
  %v4923 = vadd.f32 %v4807, %v4922
  %v4924 = vpop.f32.mrb[0].mxu0
  %v4925 = vadd.f32 %v4811, %v4924
  %4926 = vdwg.mxu0
  %v4927 = vand.u32 %v3239, 4294901760
  %v4928 = vsub.f32 %v3239, %v4927
  %v4929 = vand.u32 %v4928, 4294901760
  %v4930 = vsub.f32 %v4928, %v4929
  %v4931 = vand.u32 %v4930, 4294901760
  %4932 = vmatprep.subr.mxu0 %v4931
  %v4933 = vand.u32 %v3238, 4294901760
  %v4934 = vsub.f32 %v3238, %v4933
  %v4935 = vand.u32 %v4934, 4294901760
  %v4936 = vsub.f32 %v4934, %v4935
  %v4937 = vand.u32 %v4936, 4294901760
  %4938 = vmatpush1.msra.mxu0 %v4937
  %v4939 = vand.u32 %v3242, 4294901760
  %v4940 = vsub.f32 %v3242, %v4939
  %v4941 = vand.u32 %v4940, 4294901760
  %v4942 = vsub.f32 %v4940, %v4941
  %v4943 = vand.u32 %v4942, 4294901760
  %4944 = vmatprep.subr.mxu0 %v4943
  %v4945 = vand.u32 %v3241, 4294901760
  %v4946 = vsub.f32 %v3241, %v4945
  %v4947 = vand.u32 %v4946, 4294901760
  %v4948 = vsub.f32 %v4946, %v4947
  %v4949 = vand.u32 %v4948, 4294901760
  %4950 = vmatpush1.msra.mxu0 %v4949
  %v4951 = vand.u32 %v3245, 4294901760
  %v4952 = vsub.f32 %v3245, %v4951
  %v4953 = vand.u32 %v4952, 4294901760
  %v4954 = vsub.f32 %v4952, %v4953
  %v4955 = vand.u32 %v4954, 4294901760
  %4956 = vmatprep.subr.mxu0 %v4955
  %v4957 = vand.u32 %v3244, 4294901760
  %v4958 = vsub.f32 %v3244, %v4957
  %v4959 = vand.u32 %v4958, 4294901760
  %v4960 = vsub.f32 %v4958, %v4959
  %v4961 = vand.u32 %v4960, 4294901760
  %4962 = vmatpush1.msra.mxu0 %v4961
  %v4963 = vand.u32 %v3248, 4294901760
  %v4964 = vsub.f32 %v3248, %v4963
  %v4965 = vand.u32 %v4964, 4294901760
  %v4966 = vsub.f32 %v4964, %v4965
  %v4967 = vand.u32 %v4966, 4294901760
  %4968 = vmatprep.subr.mxu0 %v4967
  %v4969 = vand.u32 %v3247, 4294901760
  %v4970 = vsub.f32 %v3247, %v4969
  %v4971 = vand.u32 %v4970, 4294901760
  %v4972 = vsub.f32 %v4970, %v4971
  %v4973 = vand.u32 %v4972, 4294901760
  %4974 = vmatpush1.msra.mxu0 %v4973
  %v4975 = vand.u32 %v3251, 4294901760
  %v4976 = vsub.f32 %v3251, %v4975
  %v4977 = vand.u32 %v4976, 4294901760
  %v4978 = vsub.f32 %v4976, %v4977
  %v4979 = vand.u32 %v4978, 4294901760
  %4980 = vmatprep.subr.mxu0 %v4979
  %v4981 = vand.u32 %v3250, 4294901760
  %v4982 = vsub.f32 %v3250, %v4981
  %v4983 = vand.u32 %v4982, 4294901760
  %v4984 = vsub.f32 %v4982, %v4983
  %v4985 = vand.u32 %v4984, 4294901760
  %4986 = vmatpush1.msra.mxu0 %v4985
  %v4987 = vand.u32 %v3254, 4294901760
  %v4988 = vsub.f32 %v3254, %v4987
  %v4989 = vand.u32 %v4988, 4294901760
  %v4990 = vsub.f32 %v4988, %v4989
  %v4991 = vand.u32 %v4990, 4294901760
  %4992 = vmatprep.subr.mxu0 %v4991
  %v4993 = vand.u32 %v3253, 4294901760
  %v4994 = vsub.f32 %v3253, %v4993
  %v4995 = vand.u32 %v4994, 4294901760
  %v4996 = vsub.f32 %v4994, %v4995
  %v4997 = vand.u32 %v4996, 4294901760
  %4998 = vmatpush1.msra.mxu0 %v4997
  %v4999 = vand.u32 %v3257, 4294901760
  %v5000 = vsub.f32 %v3257, %v4999
  %v5001 = vand.u32 %v5000, 4294901760
  %v5002 = vsub.f32 %v5000, %v5001
  %v5003 = vand.u32 %v5002, 4294901760
  %5004 = vmatprep.subr.mxu0 %v5003
  %v5005 = vand.u32 %v3256, 4294901760
  %v5006 = vsub.f32 %v3256, %v5005
  %v5007 = vand.u32 %v5006, 4294901760
  %v5008 = vsub.f32 %v5006, %v5007
  %v5009 = vand.u32 %v5008, 4294901760
  %5010 = vmatpush1.msra.mxu0 %v5009
  %v5011 = vand.u32 %v3260, 4294901760
  %v5012 = vsub.f32 %v3260, %v5011
  %v5013 = vand.u32 %v5012, 4294901760
  %v5014 = vsub.f32 %v5012, %v5013
  %v5015 = vand.u32 %v5014, 4294901760
  %5016 = vmatprep.subr.mxu0 %v5015
  %v5017 = vand.u32 %v3259, 4294901760
  %v5018 = vsub.f32 %v3259, %v5017
  %v5019 = vand.u32 %v5018, 4294901760
  %v5020 = vsub.f32 %v5018, %v5019
  %v5021 = vand.u32 %v5020, 4294901760
  %5022 = vmatpush1.msra.mxu0 %v5021
  %v5023 = vand.u32 %v3263, 4294901760
  %v5024 = vsub.f32 %v3263, %v5023
  %v5025 = vand.u32 %v5024, 4294901760
  %v5026 = vsub.f32 %v5024, %v5025
  %v5027 = vand.u32 %v5026, 4294901760
  %5028 = vmatprep.subr.mxu0 %v5027
  %v5029 = vand.u32 %v3262, 4294901760
  %v5030 = vsub.f32 %v3262, %v5029
  %v5031 = vand.u32 %v5030, 4294901760
  %v5032 = vsub.f32 %v5030, %v5031
  %v5033 = vand.u32 %v5032, 4294901760
  %5034 = vmatpush1.msra.mxu0 %v5033
  %v5035 = vand.u32 %v3266, 4294901760
  %v5036 = vsub.f32 %v3266, %v5035
  %v5037 = vand.u32 %v5036, 4294901760
  %v5038 = vsub.f32 %v5036, %v5037
  %v5039 = vand.u32 %v5038, 4294901760
  %5040 = vmatprep.subr.mxu0 %v5039
  %v5041 = vand.u32 %v3265, 4294901760
  %v5042 = vsub.f32 %v3265, %v5041
  %v5043 = vand.u32 %v5042, 4294901760
  %v5044 = vsub.f32 %v5042, %v5043
  %v5045 = vand.u32 %v5044, 4294901760
  %5046 = vmatpush1.msra.mxu0 %v5045
  %v5047 = vand.u32 %v3269, 4294901760
  %v5048 = vsub.f32 %v3269, %v5047
  %v5049 = vand.u32 %v5048, 4294901760
  %v5050 = vsub.f32 %v5048, %v5049
  %v5051 = vand.u32 %v5050, 4294901760
  %5052 = vmatprep.subr.mxu0 %v5051
  %v5053 = vand.u32 %v3268, 4294901760
  %v5054 = vsub.f32 %v3268, %v5053
  %v5055 = vand.u32 %v5054, 4294901760
  %v5056 = vsub.f32 %v5054, %v5055
  %v5057 = vand.u32 %v5056, 4294901760
  %5058 = vmatpush1.msra.mxu0 %v5057
  %v5059 = vand.u32 %v3272, 4294901760
  %v5060 = vsub.f32 %v3272, %v5059
  %v5061 = vand.u32 %v5060, 4294901760
  %v5062 = vsub.f32 %v5060, %v5061
  %v5063 = vand.u32 %v5062, 4294901760
  %5064 = vmatprep.subr.mxu0 %v5063
  %v5065 = vand.u32 %v3271, 4294901760
  %v5066 = vsub.f32 %v3271, %v5065
  %v5067 = vand.u32 %v5066, 4294901760
  %v5068 = vsub.f32 %v5066, %v5067
  %v5069 = vand.u32 %v5068, 4294901760
  %5070 = vmatpush1.msra.mxu0 %v5069
  %v5071 = vand.u32 %v3275, 4294901760
  %v5072 = vsub.f32 %v3275, %v5071
  %v5073 = vand.u32 %v5072, 4294901760
  %v5074 = vsub.f32 %v5072, %v5073
  %v5075 = vand.u32 %v5074, 4294901760
  %5076 = vmatprep.subr.mxu0 %v5075
  %v5077 = vand.u32 %v3274, 4294901760
  %v5078 = vsub.f32 %v3274, %v5077
  %v5079 = vand.u32 %v5078, 4294901760
  %v5080 = vsub.f32 %v5078, %v5079
  %v5081 = vand.u32 %v5080, 4294901760
  %5082 = vmatpush1.msra.mxu0 %v5081
  %v5083 = vand.u32 %v3278, 4294901760
  %v5084 = vsub.f32 %v3278, %v5083
  %v5085 = vand.u32 %v5084, 4294901760
  %v5086 = vsub.f32 %v5084, %v5085
  %v5087 = vand.u32 %v5086, 4294901760
  %5088 = vmatprep.subr.mxu0 %v5087
  %v5089 = vand.u32 %v3277, 4294901760
  %v5090 = vsub.f32 %v3277, %v5089
  %v5091 = vand.u32 %v5090, 4294901760
  %v5092 = vsub.f32 %v5090, %v5091
  %v5093 = vand.u32 %v5092, 4294901760
  %5094 = vmatpush1.msra.mxu0 %v5093
  %v5095 = vand.u32 %v3281, 4294901760
  %v5096 = vsub.f32 %v3281, %v5095
  %v5097 = vand.u32 %v5096, 4294901760
  %v5098 = vsub.f32 %v5096, %v5097
  %v5099 = vand.u32 %v5098, 4294901760
  %5100 = vmatprep.subr.mxu0 %v5099
  %v5101 = vand.u32 %v3280, 4294901760
  %v5102 = vsub.f32 %v3280, %v5101
  %v5103 = vand.u32 %v5102, 4294901760
  %v5104 = vsub.f32 %v5102, %v5103
  %v5105 = vand.u32 %v5104, 4294901760
  %5106 = vmatpush1.msra.mxu0 %v5105
  %v5107 = vand.u32 %v3284, 4294901760
  %v5108 = vsub.f32 %v3284, %v5107
  %v5109 = vand.u32 %v5108, 4294901760
  %v5110 = vsub.f32 %v5108, %v5109
  %v5111 = vand.u32 %v5110, 4294901760
  %5112 = vmatprep.subr.mxu0 %v5111
  %v5113 = vand.u32 %v3283, 4294901760
  %v5114 = vsub.f32 %v3283, %v5113
  %v5115 = vand.u32 %v5114, 4294901760
  %v5116 = vsub.f32 %v5114, %v5115
  %v5117 = vand.u32 %v5116, 4294901760
  %5118 = vmatpush1.msra.mxu0 %v5117
  %5119 = vmatprep.subr.mxu0 0.0
  %5120 = vmatpush1.msra.mxu0 0.0
  %5121 = vmatprep.subr.mxu0 0.0
  %5122 = vmatpush1.msra.mxu0 0.0
  %5123 = vmatprep.subr.mxu0 0.0
  %5124 = vmatpush1.msra.mxu0 0.0
  %5125 = vmatprep.subr.mxu0 0.0
  %5126 = vmatpush1.msra.mxu0 0.0
  %5127 = vmatprep.subr.mxu0 0.0
  %5128 = vmatpush1.msra.mxu0 0.0
  %5129 = vmatprep.subr.mxu0 0.0
  %5130 = vmatpush1.msra.mxu0 0.0
  %5131 = vmatprep.subr.mxu0 0.0
  %5132 = vmatpush1.msra.mxu0 0.0
  %5133 = vmatprep.subr.mxu0 0.0
  %5134 = vmatpush1.msra.mxu0 0.0
  %5135 = vmatprep.subr.mxu0 0.0
  %5136 = vmatpush1.msra.mxu0 0.0
  %5137 = vmatprep.subr.mxu0 0.0
  %5138 = vmatpush1.msra.mxu0 0.0
  %5139 = vmatprep.subr.mxu0 0.0
  %5140 = vmatpush1.msra.mxu0 0.0
  %5141 = vmatprep.subr.mxu0 0.0
  %5142 = vmatpush1.msra.mxu0 0.0
  %5143 = vmatprep.subr.mxu0 0.0
  %5144 = vmatpush1.msra.mxu0 0.0
  %5145 = vmatprep.subr.mxu0 0.0
  %5146 = vmatpush1.msra.mxu0 0.0
  %5147 = vmatprep.subr.mxu0 0.0
  %5148 = vmatpush1.msra.mxu0 0.0
  %5149 = vmatprep.subr.mxu0 0.0
  %5150 = vmatpush1.msra.mxu0 0.0
  %5151 = vmatprep.mubr.f32.mxu0 0.0
  %v5152 = vand.u32 %v4802, 4294901760
  %5153 = vmatmul.mubr.f32.gmra.mrb[0].mxu0 %v5152
  %v5154 = vpop.f32.mrb[0].mxu0
  %v5155 = vadd.f32 %v4923, %v5154
  %v5156 = vpop.f32.mrb[0].mxu0
  %v5157 = vadd.f32 %v4925, %v5156
  %5158 = vdwg.mxu0
  %v5159 = vand.u32 %v3239, 4294901760
  %v5160 = vsub.f32 %v3239, %v5159
  %5161 = vmatprep.subr.mxu0 %v5160
  %v5162 = vand.u32 %v3238, 4294901760
  %v5163 = vsub.f32 %v3238, %v5162
  %5164 = vmatpush1.msra.mxu0 %v5163
  %v5165 = vand.u32 %v3242, 4294901760
  %v5166 = vsub.f32 %v3242, %v5165
  %5167 = vmatprep.subr.mxu0 %v5166
  %v5168 = vand.u32 %v3241, 4294901760
  %v5169 = vsub.f32 %v3241, %v5168
  %5170 = vmatpush1.msra.mxu0 %v5169
  %v5171 = vand.u32 %v3245, 4294901760
  %v5172 = vsub.f32 %v3245, %v5171
  %5173 = vmatprep.subr.mxu0 %v5172
  %v5174 = vand.u32 %v3244, 4294901760
  %v5175 = vsub.f32 %v3244, %v5174
  %5176 = vmatpush1.msra.mxu0 %v5175
  %v5177 = vand.u32 %v3248, 4294901760
  %v5178 = vsub.f32 %v3248, %v5177
  %5179 = vmatprep.subr.mxu0 %v5178
  %v5180 = vand.u32 %v3247, 4294901760
  %v5181 = vsub.f32 %v3247, %v5180
  %5182 = vmatpush1.msra.mxu0 %v5181
  %v5183 = vand.u32 %v3251, 4294901760
  %v5184 = vsub.f32 %v3251, %v5183
  %5185 = vmatprep.subr.mxu0 %v5184
  %v5186 = vand.u32 %v3250, 4294901760
  %v5187 = vsub.f32 %v3250, %v5186
  %5188 = vmatpush1.msra.mxu0 %v5187
  %v5189 = vand.u32 %v3254, 4294901760
  %v5190 = vsub.f32 %v3254, %v5189
  %5191 = vmatprep.subr.mxu0 %v5190
  %v5192 = vand.u32 %v3253, 4294901760
  %v5193 = vsub.f32 %v3253, %v5192
  %5194 = vmatpush1.msra.mxu0 %v5193
  %v5195 = vand.u32 %v3257, 4294901760
  %v5196 = vsub.f32 %v3257, %v5195
  %5197 = vmatprep.subr.mxu0 %v5196
  %v5198 = vand.u32 %v3256, 4294901760
  %v5199 = vsub.f32 %v3256, %v5198
  %5200 = vmatpush1.msra.mxu0 %v5199
  %v5201 = vand.u32 %v3260, 4294901760
  %v5202 = vsub.f32 %v3260, %v5201
  %5203 = vmatprep.subr.mxu0 %v5202
  %v5204 = vand.u32 %v3259, 4294901760
  %v5205 = vsub.f32 %v3259, %v5204
  %5206 = vmatpush1.msra.mxu0 %v5205
  %v5207 = vand.u32 %v3263, 4294901760
  %v5208 = vsub.f32 %v3263, %v5207
  %5209 = vmatprep.subr.mxu0 %v5208
  %v5210 = vand.u32 %v3262, 4294901760
  %v5211 = vsub.f32 %v3262, %v5210
  %5212 = vmatpush1.msra.mxu0 %v5211
  %v5213 = vand.u32 %v3266, 4294901760
  %v5214 = vsub.f32 %v3266, %v5213
  %5215 = vmatprep.subr.mxu0 %v5214
  %v5216 = vand.u32 %v3265, 4294901760
  %v5217 = vsub.f32 %v3265, %v5216
  %5218 = vmatpush1.msra.mxu0 %v5217
  %v5219 = vand.u32 %v3269, 4294901760
  %v5220 = vsub.f32 %v3269, %v5219
  %5221 = vmatprep.subr.mxu0 %v5220
  %v5222 = vand.u32 %v3268, 4294901760
  %v5223 = vsub.f32 %v3268, %v5222
  %5224 = vmatpush1.msra.mxu0 %v5223
  %v5225 = vand.u32 %v3272, 4294901760
  %v5226 = vsub.f32 %v3272, %v5225
  %5227 = vmatprep.subr.mxu0 %v5226
  %v5228 = vand.u32 %v3271, 4294901760
  %v5229 = vsub.f32 %v3271, %v5228
  %5230 = vmatpush1.msra.mxu0 %v5229
  %v5231 = vand.u32 %v3275, 4294901760
  %v5232 = vsub.f32 %v3275, %v5231
  %5233 = vmatprep.subr.mxu0 %v5232
  %v5234 = vand.u32 %v3274, 4294901760
  %v5235 = vsub.f32 %v3274, %v5234
  %5236 = vmatpush1.msra.mxu0 %v5235
  %v5237 = vand.u32 %v3278, 4294901760
  %v5238 = vsub.f32 %v3278, %v5237
  %5239 = vmatprep.subr.mxu0 %v5238
  %v5240 = vand.u32 %v3277, 4294901760
  %v5241 = vsub.f32 %v3277, %v5240
  %5242 = vmatpush1.msra.mxu0 %v5241
  %v5243 = vand.u32 %v3281, 4294901760
  %v5244 = vsub.f32 %v3281, %v5243
  %5245 = vmatprep.subr.mxu0 %v5244
  %v5246 = vand.u32 %v3280, 4294901760
  %v5247 = vsub.f32 %v3280, %v5246
  %5248 = vmatpush1.msra.mxu0 %v5247
  %v5249 = vand.u32 %v3284, 4294901760
  %v5250 = vsub.f32 %v3284, %v5249
  %5251 = vmatprep.subr.mxu0 %v5250
  %v5252 = vand.u32 %v3283, 4294901760
  %v5253 = vsub.f32 %v3283, %v5252
  %5254 = vmatpush1.msra.mxu0 %v5253
  %5255 = vmatprep.subr.mxu0 0.0
  %5256 = vmatpush1.msra.mxu0 0.0
  %5257 = vmatprep.subr.mxu0 0.0
  %5258 = vmatpush1.msra.mxu0 0.0
  %5259 = vmatprep.subr.mxu0 0.0
  %5260 = vmatpush1.msra.mxu0 0.0
  %5261 = vmatprep.subr.mxu0 0.0
  %5262 = vmatpush1.msra.mxu0 0.0
  %5263 = vmatprep.subr.mxu0 0.0
  %5264 = vmatpush1.msra.mxu0 0.0
  %5265 = vmatprep.subr.mxu0 0.0
  %5266 = vmatpush1.msra.mxu0 0.0
  %5267 = vmatprep.subr.mxu0 0.0
  %5268 = vmatpush1.msra.mxu0 0.0
  %5269 = vmatprep.subr.mxu0 0.0
  %5270 = vmatpush1.msra.mxu0 0.0
  %5271 = vmatprep.subr.mxu0 0.0
  %5272 = vmatpush1.msra.mxu0 0.0
  %5273 = vmatprep.subr.mxu0 0.0
  %5274 = vmatpush1.msra.mxu0 0.0
  %5275 = vmatprep.subr.mxu0 0.0
  %5276 = vmatpush1.msra.mxu0 0.0
  %5277 = vmatprep.subr.mxu0 0.0
  %5278 = vmatpush1.msra.mxu0 0.0
  %5279 = vmatprep.subr.mxu0 0.0
  %5280 = vmatpush1.msra.mxu0 0.0
  %5281 = vmatprep.subr.mxu0 0.0
  %5282 = vmatpush1.msra.mxu0 0.0
  %5283 = vmatprep.subr.mxu0 0.0
  %5284 = vmatpush1.msra.mxu0 0.0
  %5285 = vmatprep.subr.mxu0 0.0
  %5286 = vmatpush1.msra.mxu0 0.0
  %5287 = vmatprep.mubr.f32.mxu0 0.0
  %v5288 = vand.u32 %v4802, 4294901760
  %v5289 = vsub.f32 %v4802, %v5288
  %5290 = vmatmul.mubr.f32.gmra.mrb[0].mxu0 %v5289
  %v5291 = vpop.f32.mrb[0].mxu0
  %v5292 = vadd.f32 %v5155, %v5291
  %v5293 = vpop.f32.mrb[0].mxu0
  %v5294 = vadd.f32 %v5157, %v5293
  %5295 = vdwg.mxu0
  %v5296 = vand.u32 %v3239, 4294901760
  %5297 = vmatprep.subr.mxu0 %v5296
  %v5298 = vand.u32 %v3238, 4294901760
  %5299 = vmatpush1.msra.mxu0 %v5298
  %v5300 = vand.u32 %v3242, 4294901760
  %5301 = vmatprep.subr.mxu0 %v5300
  %v5302 = vand.u32 %v3241, 4294901760
  %5303 = vmatpush1.msra.mxu0 %v5302
  %v5304 = vand.u32 %v3245, 4294901760
  %5305 = vmatprep.subr.mxu0 %v5304
  %v5306 = vand.u32 %v3244, 4294901760
  %5307 = vmatpush1.msra.mxu0 %v5306
  %v5308 = vand.u32 %v3248, 4294901760
  %5309 = vmatprep.subr.mxu0 %v5308
  %v5310 = vand.u32 %v3247, 4294901760
  %5311 = vmatpush1.msra.mxu0 %v5310
  %v5312 = vand.u32 %v3251, 4294901760
  %5313 = vmatprep.subr.mxu0 %v5312
  %v5314 = vand.u32 %v3250, 4294901760
  %5315 = vmatpush1.msra.mxu0 %v5314
  %v5316 = vand.u32 %v3254, 4294901760
  %5317 = vmatprep.subr.mxu0 %v5316
  %v5318 = vand.u32 %v3253, 4294901760
  %5319 = vmatpush1.msra.mxu0 %v5318
  %v5320 = vand.u32 %v3257, 4294901760
  %5321 = vmatprep.subr.mxu0 %v5320
  %v5322 = vand.u32 %v3256, 4294901760
  %5323 = vmatpush1.msra.mxu0 %v5322
  %v5324 = vand.u32 %v3260, 4294901760
  %5325 = vmatprep.subr.mxu0 %v5324
  %v5326 = vand.u32 %v3259, 4294901760
  %5327 = vmatpush1.msra.mxu0 %v5326
  %v5328 = vand.u32 %v3263, 4294901760
  %5329 = vmatprep.subr.mxu0 %v5328
  %v5330 = vand.u32 %v3262, 4294901760
  %5331 = vmatpush1.msra.mxu0 %v5330
  %v5332 = vand.u32 %v3266, 4294901760
  %5333 = vmatprep.subr.mxu0 %v5332
  %v5334 = vand.u32 %v3265, 4294901760
  %5335 = vmatpush1.msra.mxu0 %v5334
  %v5336 = vand.u32 %v3269, 4294901760
  %5337 = vmatprep.subr.mxu0 %v5336
  %v5338 = vand.u32 %v3268, 4294901760
  %5339 = vmatpush1.msra.mxu0 %v5338
  %v5340 = vand.u32 %v3272, 4294901760
  %5341 = vmatprep.subr.mxu0 %v5340
  %v5342 = vand.u32 %v3271, 4294901760
  %5343 = vmatpush1.msra.mxu0 %v5342
  %v5344 = vand.u32 %v3275, 4294901760
  %5345 = vmatprep.subr.mxu0 %v5344
  %v5346 = vand.u32 %v3274, 4294901760
  %5347 = vmatpush1.msra.mxu0 %v5346
  %v5348 = vand.u32 %v3278, 4294901760
  %5349 = vmatprep.subr.mxu0 %v5348
  %v5350 = vand.u32 %v3277, 4294901760
  %5351 = vmatpush1.msra.mxu0 %v5350
  %v5352 = vand.u32 %v3281, 4294901760
  %5353 = vmatprep.subr.mxu0 %v5352
  %v5354 = vand.u32 %v3280, 4294901760
  %5355 = vmatpush1.msra.mxu0 %v5354
  %v5356 = vand.u32 %v3284, 4294901760
  %5357 = vmatprep.subr.mxu0 %v5356
  %v5358 = vand.u32 %v3283, 4294901760
  %5359 = vmatpush1.msra.mxu0 %v5358
  %5360 = vmatprep.subr.mxu0 0.0
  %5361 = vmatpush1.msra.mxu0 0.0
  %5362 = vmatprep.subr.mxu0 0.0
  %5363 = vmatpush1.msra.mxu0 0.0
  %5364 = vmatprep.subr.mxu0 0.0
  %5365 = vmatpush1.msra.mxu0 0.0
  %5366 = vmatprep.subr.mxu0 0.0
  %5367 = vmatpush1.msra.mxu0 0.0
  %5368 = vmatprep.subr.mxu0 0.0
  %5369 = vmatpush1.msra.mxu0 0.0
  %5370 = vmatprep.subr.mxu0 0.0
  %5371 = vmatpush1.msra.mxu0 0.0
  %5372 = vmatprep.subr.mxu0 0.0
  %5373 = vmatpush1.msra.mxu0 0.0
  %5374 = vmatprep.subr.mxu0 0.0
  %5375 = vmatpush1.msra.mxu0 0.0
  %5376 = vmatprep.subr.mxu0 0.0
  %5377 = vmatpush1.msra.mxu0 0.0
  %5378 = vmatprep.subr.mxu0 0.0
  %5379 = vmatpush1.msra.mxu0 0.0
  %5380 = vmatprep.subr.mxu0 0.0
  %5381 = vmatpush1.msra.mxu0 0.0
  %5382 = vmatprep.subr.mxu0 0.0
  %5383 = vmatpush1.msra.mxu0 0.0
  %5384 = vmatprep.subr.mxu0 0.0
  %5385 = vmatpush1.msra.mxu0 0.0
  %5386 = vmatprep.subr.mxu0 0.0
  %5387 = vmatpush1.msra.mxu0 0.0
  %5388 = vmatprep.subr.mxu0 0.0
  %5389 = vmatpush1.msra.mxu0 0.0
  %5390 = vmatprep.subr.mxu0 0.0
  %5391 = vmatpush1.msra.mxu0 0.0
  %5392 = vmatprep.mubr.f32.mxu0 0.0
  %v5393 = vand.u32 %v4802, 4294901760
  %v5394 = vsub.f32 %v4802, %v5393
  %v5395 = vand.u32 %v5394, 4294901760
  %5396 = vmatmul.mubr.f32.gmra.mrb[0].mxu0 %v5395
  %v5397 = vpop.f32.mrb[0].mxu0
  %v5398 = vadd.f32 %v5292, %v5397
  %v5399 = vpop.f32.mrb[0].mxu0
  %v5400 = vadd.f32 %v5294, %v5399
  %5401 = vdwg.mxu0
  %v5402 = vand.u32 %v3239, 4294901760
  %v5403 = vsub.f32 %v3239, %v5402
  %v5404 = vand.u32 %v5403, 4294901760
  %5405 = vmatprep.subr.mxu0 %v5404
  %v5406 = vand.u32 %v3238, 4294901760
  %v5407 = vsub.f32 %v3238, %v5406
  %v5408 = vand.u32 %v5407, 4294901760
  %5409 = vmatpush1.msra.mxu0 %v5408
  %v5410 = vand.u32 %v3242, 4294901760
  %v5411 = vsub.f32 %v3242, %v5410
  %v5412 = vand.u32 %v5411, 4294901760
  %5413 = vmatprep.subr.mxu0 %v5412
  %v5414 = vand.u32 %v3241, 4294901760
  %v5415 = vsub.f32 %v3241, %v5414
  %v5416 = vand.u32 %v5415, 4294901760
  %5417 = vmatpush1.msra.mxu0 %v5416
  %v5418 = vand.u32 %v3245, 4294901760
  %v5419 = vsub.f32 %v3245, %v5418
  %v5420 = vand.u32 %v5419, 4294901760
  %5421 = vmatprep.subr.mxu0 %v5420
  %v5422 = vand.u32 %v3244, 4294901760
  %v5423 = vsub.f32 %v3244, %v5422
  %v5424 = vand.u32 %v5423, 4294901760
  %5425 = vmatpush1.msra.mxu0 %v5424
  %v5426 = vand.u32 %v3248, 4294901760
  %v5427 = vsub.f32 %v3248, %v5426
  %v5428 = vand.u32 %v5427, 4294901760
  %5429 = vmatprep.subr.mxu0 %v5428
  %v5430 = vand.u32 %v3247, 4294901760
  %v5431 = vsub.f32 %v3247, %v5430
  %v5432 = vand.u32 %v5431, 4294901760
  %5433 = vmatpush1.msra.mxu0 %v5432
  %v5434 = vand.u32 %v3251, 4294901760
  %v5435 = vsub.f32 %v3251, %v5434
  %v5436 = vand.u32 %v5435, 4294901760
  %5437 = vmatprep.subr.mxu0 %v5436
  %v5438 = vand.u32 %v3250, 4294901760
  %v5439 = vsub.f32 %v3250, %v5438
  %v5440 = vand.u32 %v5439, 4294901760
  %5441 = vmatpush1.msra.mxu0 %v5440
  %v5442 = vand.u32 %v3254, 4294901760
  %v5443 = vsub.f32 %v3254, %v5442
  %v5444 = vand.u32 %v5443, 4294901760
  %5445 = vmatprep.subr.mxu0 %v5444
  %v5446 = vand.u32 %v3253, 4294901760
  %v5447 = vsub.f32 %v3253, %v5446
  %v5448 = vand.u32 %v5447, 4294901760
  %5449 = vmatpush1.msra.mxu0 %v5448
  %v5450 = vand.u32 %v3257, 4294901760
  %v5451 = vsub.f32 %v3257, %v5450
  %v5452 = vand.u32 %v5451, 4294901760
  %5453 = vmatprep.subr.mxu0 %v5452
  %v5454 = vand.u32 %v3256, 4294901760
  %v5455 = vsub.f32 %v3256, %v5454
  %v5456 = vand.u32 %v5455, 4294901760
  %5457 = vmatpush1.msra.mxu0 %v5456
  %v5458 = vand.u32 %v3260, 4294901760
  %v5459 = vsub.f32 %v3260, %v5458
  %v5460 = vand.u32 %v5459, 4294901760
  %5461 = vmatprep.subr.mxu0 %v5460
  %v5462 = vand.u32 %v3259, 4294901760
  %v5463 = vsub.f32 %v3259, %v5462
  %v5464 = vand.u32 %v5463, 4294901760
  %5465 = vmatpush1.msra.mxu0 %v5464
  %v5466 = vand.u32 %v3263, 4294901760
  %v5467 = vsub.f32 %v3263, %v5466
  %v5468 = vand.u32 %v5467, 4294901760
  %5469 = vmatprep.subr.mxu0 %v5468
  %v5470 = vand.u32 %v3262, 4294901760
  %v5471 = vsub.f32 %v3262, %v5470
  %v5472 = vand.u32 %v5471, 4294901760
  %5473 = vmatpush1.msra.mxu0 %v5472
  %v5474 = vand.u32 %v3266, 4294901760
  %v5475 = vsub.f32 %v3266, %v5474
  %v5476 = vand.u32 %v5475, 4294901760
  %5477 = vmatprep.subr.mxu0 %v5476
  %v5478 = vand.u32 %v3265, 4294901760
  %v5479 = vsub.f32 %v3265, %v5478
  %v5480 = vand.u32 %v5479, 4294901760
  %5481 = vmatpush1.msra.mxu0 %v5480
  %v5482 = vand.u32 %v3269, 4294901760
  %v5483 = vsub.f32 %v3269, %v5482
  %v5484 = vand.u32 %v5483, 4294901760
  %5485 = vmatprep.subr.mxu0 %v5484
  %v5486 = vand.u32 %v3268, 4294901760
  %v5487 = vsub.f32 %v3268, %v5486
  %v5488 = vand.u32 %v5487, 4294901760
  %5489 = vmatpush1.msra.mxu0 %v5488
  %v5490 = vand.u32 %v3272, 4294901760
  %v5491 = vsub.f32 %v3272, %v5490
  %v5492 = vand.u32 %v5491, 4294901760
  %5493 = vmatprep.subr.mxu0 %v5492
  %v5494 = vand.u32 %v3271, 4294901760
  %v5495 = vsub.f32 %v3271, %v5494
  %v5496 = vand.u32 %v5495, 4294901760
  %5497 = vmatpush1.msra.mxu0 %v5496
  %v5498 = vand.u32 %v3275, 4294901760
  %v5499 = vsub.f32 %v3275, %v5498
  %v5500 = vand.u32 %v5499, 4294901760
  %5501 = vmatprep.subr.mxu0 %v5500
  %v5502 = vand.u32 %v3274, 4294901760
  %v5503 = vsub.f32 %v3274, %v5502
  %v5504 = vand.u32 %v5503, 4294901760
  %5505 = vmatpush1.msra.mxu0 %v5504
  %v5506 = vand.u32 %v3278, 4294901760
  %v5507 = vsub.f32 %v3278, %v5506
  %v5508 = vand.u32 %v5507, 4294901760
  %5509 = vmatprep.subr.mxu0 %v5508
  %v5510 = vand.u32 %v3277, 4294901760
  %v5511 = vsub.f32 %v3277, %v5510
  %v5512 = vand.u32 %v5511, 4294901760
  %5513 = vmatpush1.msra.mxu0 %v5512
  %v5514 = vand.u32 %v3281, 4294901760
  %v5515 = vsub.f32 %v3281, %v5514
  %v5516 = vand.u32 %v5515, 4294901760
  %5517 = vmatprep.subr.mxu0 %v5516
  %v5518 = vand.u32 %v3280, 4294901760
  %v5519 = vsub.f32 %v3280, %v5518
  %v5520 = vand.u32 %v5519, 4294901760
  %5521 = vmatpush1.msra.mxu0 %v5520
  %v5522 = vand.u32 %v3284, 4294901760
  %v5523 = vsub.f32 %v3284, %v5522
  %v5524 = vand.u32 %v5523, 4294901760
  %5525 = vmatprep.subr.mxu0 %v5524
  %v5526 = vand.u32 %v3283, 4294901760
  %v5527 = vsub.f32 %v3283, %v5526
  %v5528 = vand.u32 %v5527, 4294901760
  %5529 = vmatpush1.msra.mxu0 %v5528
  %5530 = vmatprep.subr.mxu0 0.0
  %5531 = vmatpush1.msra.mxu0 0.0
  %5532 = vmatprep.subr.mxu0 0.0
  %5533 = vmatpush1.msra.mxu0 0.0
  %5534 = vmatprep.subr.mxu0 0.0
  %5535 = vmatpush1.msra.mxu0 0.0
  %5536 = vmatprep.subr.mxu0 0.0
  %5537 = vmatpush1.msra.mxu0 0.0
  %5538 = vmatprep.subr.mxu0 0.0
  %5539 = vmatpush1.msra.mxu0 0.0
  %5540 = vmatprep.subr.mxu0 0.0
  %5541 = vmatpush1.msra.mxu0 0.0
  %5542 = vmatprep.subr.mxu0 0.0
  %5543 = vmatpush1.msra.mxu0 0.0
  %5544 = vmatprep.subr.mxu0 0.0
  %5545 = vmatpush1.msra.mxu0 0.0
  %5546 = vmatprep.subr.mxu0 0.0
  %5547 = vmatpush1.msra.mxu0 0.0
  %5548 = vmatprep.subr.mxu0 0.0
  %5549 = vmatpush1.msra.mxu0 0.0
  %5550 = vmatprep.subr.mxu0 0.0
  %5551 = vmatpush1.msra.mxu0 0.0
  %5552 = vmatprep.subr.mxu0 0.0
  %5553 = vmatpush1.msra.mxu0 0.0
  %5554 = vmatprep.subr.mxu0 0.0
  %5555 = vmatpush1.msra.mxu0 0.0
  %5556 = vmatprep.subr.mxu0 0.0
  %5557 = vmatpush1.msra.mxu0 0.0
  %5558 = vmatprep.subr.mxu0 0.0
  %5559 = vmatpush1.msra.mxu0 0.0
  %5560 = vmatprep.subr.mxu0 0.0
  %5561 = vmatpush1.msra.mxu0 0.0
  %5562 = vmatprep.mubr.f32.mxu0 0.0
  %v5563 = vand.u32 %v4802, 4294901760
  %5564 = vmatmul.mubr.f32.gmra.mrb[0].mxu0 %v5563
  %v5565 = vpop.f32.mrb[0].mxu0
  %v5566 = vadd.f32 %v5398, %v5565
  %v5567 = vpop.f32.mrb[0].mxu0
  %v5568 = vadd.f32 %v5400, %v5567
  %5569 = vdwg.mxu0
  %v5570 = vand.u32 %v3239, 4294901760
  %5571 = vmatprep.subr.mxu0 %v5570
  %v5572 = vand.u32 %v3238, 4294901760
  %5573 = vmatpush1.msra.mxu0 %v5572
  %v5574 = vand.u32 %v3242, 4294901760
  %5575 = vmatprep.subr.mxu0 %v5574
  %v5576 = vand.u32 %v3241, 4294901760
  %5577 = vmatpush1.msra.mxu0 %v5576
  %v5578 = vand.u32 %v3245, 4294901760
  %5579 = vmatprep.subr.mxu0 %v5578
  %v5580 = vand.u32 %v3244, 4294901760
  %5581 = vmatpush1.msra.mxu0 %v5580
  %v5582 = vand.u32 %v3248, 4294901760
  %5583 = vmatprep.subr.mxu0 %v5582
  %v5584 = vand.u32 %v3247, 4294901760
  %5585 = vmatpush1.msra.mxu0 %v5584
  %v5586 = vand.u32 %v3251, 4294901760
  %5587 = vmatprep.subr.mxu0 %v5586
  %v5588 = vand.u32 %v3250, 4294901760
  %5589 = vmatpush1.msra.mxu0 %v5588
  %v5590 = vand.u32 %v3254, 4294901760
  %5591 = vmatprep.subr.mxu0 %v5590
  %v5592 = vand.u32 %v3253, 4294901760
  %5593 = vmatpush1.msra.mxu0 %v5592
  %v5594 = vand.u32 %v3257, 4294901760
  %5595 = vmatprep.subr.mxu0 %v5594
  %v5596 = vand.u32 %v3256, 4294901760
  %5597 = vmatpush1.msra.mxu0 %v5596
  %v5598 = vand.u32 %v3260, 4294901760
  %5599 = vmatprep.subr.mxu0 %v5598
  %v5600 = vand.u32 %v3259, 4294901760
  %5601 = vmatpush1.msra.mxu0 %v5600
  %v5602 = vand.u32 %v3263, 4294901760
  %5603 = vmatprep.subr.mxu0 %v5602
  %v5604 = vand.u32 %v3262, 4294901760
  %5605 = vmatpush1.msra.mxu0 %v5604
  %v5606 = vand.u32 %v3266, 4294901760
  %5607 = vmatprep.subr.mxu0 %v5606
  %v5608 = vand.u32 %v3265, 4294901760
  %5609 = vmatpush1.msra.mxu0 %v5608
  %v5610 = vand.u32 %v3269, 4294901760
  %5611 = vmatprep.subr.mxu0 %v5610
  %v5612 = vand.u32 %v3268, 4294901760
  %5613 = vmatpush1.msra.mxu0 %v5612
  %v5614 = vand.u32 %v3272, 4294901760
  %5615 = vmatprep.subr.mxu0 %v5614
  %v5616 = vand.u32 %v3271, 4294901760
  %5617 = vmatpush1.msra.mxu0 %v5616
  %v5618 = vand.u32 %v3275, 4294901760
  %5619 = vmatprep.subr.mxu0 %v5618
  %v5620 = vand.u32 %v3274, 4294901760
  %5621 = vmatpush1.msra.mxu0 %v5620
  %v5622 = vand.u32 %v3278, 4294901760
  %5623 = vmatprep.subr.mxu0 %v5622
  %v5624 = vand.u32 %v3277, 4294901760
  %5625 = vmatpush1.msra.mxu0 %v5624
  %v5626 = vand.u32 %v3281, 4294901760
  %5627 = vmatprep.subr.mxu0 %v5626
  %v5628 = vand.u32 %v3280, 4294901760
  %5629 = vmatpush1.msra.mxu0 %v5628
  %v5630 = vand.u32 %v3284, 4294901760
  %5631 = vmatprep.subr.mxu0 %v5630
  %v5632 = vand.u32 %v3283, 4294901760
  %5633 = vmatpush1.msra.mxu0 %v5632
  %5634 = vmatprep.subr.mxu0 0.0
  %5635 = vmatpush1.msra.mxu0 0.0
  %5636 = vmatprep.subr.mxu0 0.0
  %5637 = vmatpush1.msra.mxu0 0.0
  %5638 = vmatprep.subr.mxu0 0.0
  %5639 = vmatpush1.msra.mxu0 0.0
  %5640 = vmatprep.subr.mxu0 0.0
  %5641 = vmatpush1.msra.mxu0 0.0
  %5642 = vmatprep.subr.mxu0 0.0
  %5643 = vmatpush1.msra.mxu0 0.0
  %5644 = vmatprep.subr.mxu0 0.0
  %5645 = vmatpush1.msra.mxu0 0.0
  %5646 = vmatprep.subr.mxu0 0.0
  %5647 = vmatpush1.msra.mxu0 0.0
  %5648 = vmatprep.subr.mxu0 0.0
  %5649 = vmatpush1.msra.mxu0 0.0
  %5650 = vmatprep.subr.mxu0 0.0
  %5651 = vmatpush1.msra.mxu0 0.0
  %5652 = vmatprep.subr.mxu0 0.0
  %5653 = vmatpush1.msra.mxu0 0.0
  %5654 = vmatprep.subr.mxu0 0.0
  %5655 = vmatpush1.msra.mxu0 0.0
  %5656 = vmatprep.subr.mxu0 0.0
  %5657 = vmatpush1.msra.mxu0 0.0
  %5658 = vmatprep.subr.mxu0 0.0
  %5659 = vmatpush1.msra.mxu0 0.0
  %5660 = vmatprep.subr.mxu0 0.0
  %5661 = vmatpush1.msra.mxu0 0.0
  %5662 = vmatprep.subr.mxu0 0.0
  %5663 = vmatpush1.msra.mxu0 0.0
  %5664 = vmatprep.subr.mxu0 0.0
  %5665 = vmatpush1.msra.mxu0 0.0
  %5666 = vmatprep.mubr.f32.mxu0 0.0
  %v5667 = vand.u32 %v4802, 4294901760
  %5668 = vmatmul.mubr.f32.gmra.mrb[0].mxu0 %v5667
  %v5669 = vpop.f32.mrb[0].mxu0
  %v5670 = vadd.f32 %v5566, %v5669
  %v5671 = vpop.f32.mrb[0].mxu0
  %v5672 = vadd.f32 %v5568, %v5671
  %5673 = vdwg.mxu0
  %5674 = vmatprep.subr.mxu0 0.0
  %v5675 = vand.u32 %v3240, 4294901760
  %5676 = vmatpush1.msra.mxu0 %v5675
  %5677 = vmatprep.subr.mxu0 0.0
  %v5678 = vand.u32 %v3243, 4294901760
  %5679 = vmatpush1.msra.mxu0 %v5678
  %5680 = vmatprep.subr.mxu0 0.0
  %v5681 = vand.u32 %v3246, 4294901760
  %5682 = vmatpush1.msra.mxu0 %v5681
  %5683 = vmatprep.subr.mxu0 0.0
  %v5684 = vand.u32 %v3249, 4294901760
  %5685 = vmatpush1.msra.mxu0 %v5684
  %5686 = vmatprep.subr.mxu0 0.0
  %v5687 = vand.u32 %v3252, 4294901760
  %5688 = vmatpush1.msra.mxu0 %v5687
  %5689 = vmatprep.subr.mxu0 0.0
  %v5690 = vand.u32 %v3255, 4294901760
  %5691 = vmatpush1.msra.mxu0 %v5690
  %5692 = vmatprep.subr.mxu0 0.0
  %v5693 = vand.u32 %v3258, 4294901760
  %5694 = vmatpush1.msra.mxu0 %v5693
  %5695 = vmatprep.subr.mxu0 0.0
  %v5696 = vand.u32 %v3261, 4294901760
  %5697 = vmatpush1.msra.mxu0 %v5696
  %5698 = vmatprep.subr.mxu0 0.0
  %v5699 = vand.u32 %v3264, 4294901760
  %5700 = vmatpush1.msra.mxu0 %v5699
  %5701 = vmatprep.subr.mxu0 0.0
  %v5702 = vand.u32 %v3267, 4294901760
  %5703 = vmatpush1.msra.mxu0 %v5702
  %5704 = vmatprep.subr.mxu0 0.0
  %v5705 = vand.u32 %v3270, 4294901760
  %5706 = vmatpush1.msra.mxu0 %v5705
  %5707 = vmatprep.subr.mxu0 0.0
  %v5708 = vand.u32 %v3273, 4294901760
  %5709 = vmatpush1.msra.mxu0 %v5708
  %5710 = vmatprep.subr.mxu0 0.0
  %v5711 = vand.u32 %v3276, 4294901760
  %5712 = vmatpush1.msra.mxu0 %v5711
  %5713 = vmatprep.subr.mxu0 0.0
  %v5714 = vand.u32 %v3279, 4294901760
  %5715 = vmatpush1.msra.mxu0 %v5714
  %5716 = vmatprep.subr.mxu0 0.0
  %v5717 = vand.u32 %v3282, 4294901760
  %5718 = vmatpush1.msra.mxu0 %v5717
  %5719 = vmatprep.subr.mxu0 0.0
  %v5720 = vand.u32 %v3285, 4294901760
  %5721 = vmatpush1.msra.mxu0 %v5720
  %5722 = vmatprep.subr.mxu0 0.0
  %5723 = vmatpush1.msra.mxu0 0.0
  %5724 = vmatprep.subr.mxu0 0.0
  %5725 = vmatpush1.msra.mxu0 0.0
  %5726 = vmatprep.subr.mxu0 0.0
  %5727 = vmatpush1.msra.mxu0 0.0
  %5728 = vmatprep.subr.mxu0 0.0
  %5729 = vmatpush1.msra.mxu0 0.0
  %5730 = vmatprep.subr.mxu0 0.0
  %5731 = vmatpush1.msra.mxu0 0.0
  %5732 = vmatprep.subr.mxu0 0.0
  %5733 = vmatpush1.msra.mxu0 0.0
  %5734 = vmatprep.subr.mxu0 0.0
  %5735 = vmatpush1.msra.mxu0 0.0
  %5736 = vmatprep.subr.mxu0 0.0
  %5737 = vmatpush1.msra.mxu0 0.0
  %5738 = vmatprep.subr.mxu0 0.0
  %5739 = vmatpush1.msra.mxu0 0.0
  %5740 = vmatprep.subr.mxu0 0.0
  %5741 = vmatpush1.msra.mxu0 0.0
  %5742 = vmatprep.subr.mxu0 0.0
  %5743 = vmatpush1.msra.mxu0 0.0
  %5744 = vmatprep.subr.mxu0 0.0
  %5745 = vmatpush1.msra.mxu0 0.0
  %5746 = vmatprep.subr.mxu0 0.0
  %5747 = vmatpush1.msra.mxu0 0.0
  %5748 = vmatprep.subr.mxu0 0.0
  %5749 = vmatpush1.msra.mxu0 0.0
  %5750 = vmatprep.subr.mxu0 0.0
  %5751 = vmatpush1.msra.mxu0 0.0
  %5752 = vmatprep.subr.mxu0 0.0
  %5753 = vmatpush1.msra.mxu0 0.0
  %5754 = vmatprep.mubr.f32.mxu0 0.0
  %v5755 = vand.u32 %v4802, 4294901760
  %v5756 = vsub.f32 %v4802, %v5755
  %v5757 = vand.u32 %v5756, 4294901760
  %v5758 = vsub.f32 %v5756, %v5757
  %v5759 = vand.u32 %v5758, 4294901760
  %5760 = vmatmul.mubr.f32.gmra.mrb[0].mxu0 %v5759
  %v5761 = vpop.f32.mrb[0].mxu0
  %v5762 = vadd.f32 %v4815, %v5761
  %v5763 = vpop.f32.mrb[0].mxu0
  %5764 = vdwg.mxu0
  %5765 = vmatprep.subr.mxu0 0.0
  %v5766 = vand.u32 %v3240, 4294901760
  %v5767 = vsub.f32 %v3240, %v5766
  %v5768 = vand.u32 %v5767, 4294901760
  %v5769 = vsub.f32 %v5767, %v5768
  %v5770 = vand.u32 %v5769, 4294901760
  %5771 = vmatpush1.msra.mxu0 %v5770
  %5772 = vmatprep.subr.mxu0 0.0
  %v5773 = vand.u32 %v3243, 4294901760
  %v5774 = vsub.f32 %v3243, %v5773
  %v5775 = vand.u32 %v5774, 4294901760
  %v5776 = vsub.f32 %v5774, %v5775
  %v5777 = vand.u32 %v5776, 4294901760
  %5778 = vmatpush1.msra.mxu0 %v5777
  %5779 = vmatprep.subr.mxu0 0.0
  %v5780 = vand.u32 %v3246, 4294901760
  %v5781 = vsub.f32 %v3246, %v5780
  %v5782 = vand.u32 %v5781, 4294901760
  %v5783 = vsub.f32 %v5781, %v5782
  %v5784 = vand.u32 %v5783, 4294901760
  %5785 = vmatpush1.msra.mxu0 %v5784
  %5786 = vmatprep.subr.mxu0 0.0
  %v5787 = vand.u32 %v3249, 4294901760
  %v5788 = vsub.f32 %v3249, %v5787
  %v5789 = vand.u32 %v5788, 4294901760
  %v5790 = vsub.f32 %v5788, %v5789
  %v5791 = vand.u32 %v5790, 4294901760
  %5792 = vmatpush1.msra.mxu0 %v5791
  %5793 = vmatprep.subr.mxu0 0.0
  %v5794 = vand.u32 %v3252, 4294901760
  %v5795 = vsub.f32 %v3252, %v5794
  %v5796 = vand.u32 %v5795, 4294901760
  %v5797 = vsub.f32 %v5795, %v5796
  %v5798 = vand.u32 %v5797, 4294901760
  %5799 = vmatpush1.msra.mxu0 %v5798
  %5800 = vmatprep.subr.mxu0 0.0
  %v5801 = vand.u32 %v3255, 4294901760
  %v5802 = vsub.f32 %v3255, %v5801
  %v5803 = vand.u32 %v5802, 4294901760
  %v5804 = vsub.f32 %v5802, %v5803
  %v5805 = vand.u32 %v5804, 4294901760
  %5806 = vmatpush1.msra.mxu0 %v5805
  %5807 = vmatprep.subr.mxu0 0.0
  %v5808 = vand.u32 %v3258, 4294901760
  %v5809 = vsub.f32 %v3258, %v5808
  %v5810 = vand.u32 %v5809, 4294901760
  %v5811 = vsub.f32 %v5809, %v5810
  %v5812 = vand.u32 %v5811, 4294901760
  %5813 = vmatpush1.msra.mxu0 %v5812
  %5814 = vmatprep.subr.mxu0 0.0
  %v5815 = vand.u32 %v3261, 4294901760
  %v5816 = vsub.f32 %v3261, %v5815
  %v5817 = vand.u32 %v5816, 4294901760
  %v5818 = vsub.f32 %v5816, %v5817
  %v5819 = vand.u32 %v5818, 4294901760
  %5820 = vmatpush1.msra.mxu0 %v5819
  %5821 = vmatprep.subr.mxu0 0.0
  %v5822 = vand.u32 %v3264, 4294901760
  %v5823 = vsub.f32 %v3264, %v5822
  %v5824 = vand.u32 %v5823, 4294901760
  %v5825 = vsub.f32 %v5823, %v5824
  %v5826 = vand.u32 %v5825, 4294901760
  %5827 = vmatpush1.msra.mxu0 %v5826
  %5828 = vmatprep.subr.mxu0 0.0
  %v5829 = vand.u32 %v3267, 4294901760
  %v5830 = vsub.f32 %v3267, %v5829
  %v5831 = vand.u32 %v5830, 4294901760
  %v5832 = vsub.f32 %v5830, %v5831
  %v5833 = vand.u32 %v5832, 4294901760
  %5834 = vmatpush1.msra.mxu0 %v5833
  %5835 = vmatprep.subr.mxu0 0.0
  %v5836 = vand.u32 %v3270, 4294901760
  %v5837 = vsub.f32 %v3270, %v5836
  %v5838 = vand.u32 %v5837, 4294901760
  %v5839 = vsub.f32 %v5837, %v5838
  %v5840 = vand.u32 %v5839, 4294901760
  %5841 = vmatpush1.msra.mxu0 %v5840
  %5842 = vmatprep.subr.mxu0 0.0
  %v5843 = vand.u32 %v3273, 4294901760
  %v5844 = vsub.f32 %v3273, %v5843
  %v5845 = vand.u32 %v5844, 4294901760
  %v5846 = vsub.f32 %v5844, %v5845
  %v5847 = vand.u32 %v5846, 4294901760
  %5848 = vmatpush1.msra.mxu0 %v5847
  %5849 = vmatprep.subr.mxu0 0.0
  %v5850 = vand.u32 %v3276, 4294901760
  %v5851 = vsub.f32 %v3276, %v5850
  %v5852 = vand.u32 %v5851, 4294901760
  %v5853 = vsub.f32 %v5851, %v5852
  %v5854 = vand.u32 %v5853, 4294901760
  %5855 = vmatpush1.msra.mxu0 %v5854
  %5856 = vmatprep.subr.mxu0 0.0
  %v5857 = vand.u32 %v3279, 4294901760
  %v5858 = vsub.f32 %v3279, %v5857
  %v5859 = vand.u32 %v5858, 4294901760
  %v5860 = vsub.f32 %v5858, %v5859
  %v5861 = vand.u32 %v5860, 4294901760
  %5862 = vmatpush1.msra.mxu0 %v5861
  %5863 = vmatprep.subr.mxu0 0.0
  %v5864 = vand.u32 %v3282, 4294901760
  %v5865 = vsub.f32 %v3282, %v5864
  %v5866 = vand.u32 %v5865, 4294901760
  %v5867 = vsub.f32 %v5865, %v5866
  %v5868 = vand.u32 %v5867, 4294901760
  %5869 = vmatpush1.msra.mxu0 %v5868
  %5870 = vmatprep.subr.mxu0 0.0
  %v5871 = vand.u32 %v3285, 4294901760
  %v5872 = vsub.f32 %v3285, %v5871
  %v5873 = vand.u32 %v5872, 4294901760
  %v5874 = vsub.f32 %v5872, %v5873
  %v5875 = vand.u32 %v5874, 4294901760
  %5876 = vmatpush1.msra.mxu0 %v5875
  %5877 = vmatprep.subr.mxu0 0.0
  %5878 = vmatpush1.msra.mxu0 0.0
  %5879 = vmatprep.subr.mxu0 0.0
  %5880 = vmatpush1.msra.mxu0 0.0
  %5881 = vmatprep.subr.mxu0 0.0
  %5882 = vmatpush1.msra.mxu0 0.0
  %5883 = vmatprep.subr.mxu0 0.0
  %5884 = vmatpush1.msra.mxu0 0.0
  %5885 = vmatprep.subr.mxu0 0.0
  %5886 = vmatpush1.msra.mxu0 0.0
  %5887 = vmatprep.subr.mxu0 0.0
  %5888 = vmatpush1.msra.mxu0 0.0
  %5889 = vmatprep.subr.mxu0 0.0
  %5890 = vmatpush1.msra.mxu0 0.0
  %5891 = vmatprep.subr.mxu0 0.0
  %5892 = vmatpush1.msra.mxu0 0.0
  %5893 = vmatprep.subr.mxu0 0.0
  %5894 = vmatpush1.msra.mxu0 0.0
  %5895 = vmatprep.subr.mxu0 0.0
  %5896 = vmatpush1.msra.mxu0 0.0
  %5897 = vmatprep.subr.mxu0 0.0
  %5898 = vmatpush1.msra.mxu0 0.0
  %5899 = vmatprep.subr.mxu0 0.0
  %5900 = vmatpush1.msra.mxu0 0.0
  %5901 = vmatprep.subr.mxu0 0.0
  %5902 = vmatpush1.msra.mxu0 0.0
  %5903 = vmatprep.subr.mxu0 0.0
  %5904 = vmatpush1.msra.mxu0 0.0
  %5905 = vmatprep.subr.mxu0 0.0
  %5906 = vmatpush1.msra.mxu0 0.0
  %5907 = vmatprep.subr.mxu0 0.0
  %5908 = vmatpush1.msra.mxu0 0.0
  %5909 = vmatprep.mubr.f32.mxu0 0.0
  %v5910 = vand.u32 %v4802, 4294901760
  %5911 = vmatmul.mubr.f32.gmra.mrb[0].mxu0 %v5910
  %v5912 = vpop.f32.mrb[0].mxu0
  %v5913 = vadd.f32 %v5762, %v5912
  %v5914 = vpop.f32.mrb[0].mxu0
  %5915 = vdwg.mxu0
  %5916 = vmatprep.subr.mxu0 0.0
  %v5917 = vand.u32 %v3240, 4294901760
  %v5918 = vsub.f32 %v3240, %v5917
  %5919 = vmatpush1.msra.mxu0 %v5918
  %5920 = vmatprep.subr.mxu0 0.0
  %v5921 = vand.u32 %v3243, 4294901760
  %v5922 = vsub.f32 %v3243, %v5921
  %5923 = vmatpush1.msra.mxu0 %v5922
  %5924 = vmatprep.subr.mxu0 0.0
  %v5925 = vand.u32 %v3246, 4294901760
  %v5926 = vsub.f32 %v3246, %v5925
  %5927 = vmatpush1.msra.mxu0 %v5926
  %5928 = vmatprep.subr.mxu0 0.0
  %v5929 = vand.u32 %v3249, 4294901760
  %v5930 = vsub.f32 %v3249, %v5929
  %5931 = vmatpush1.msra.mxu0 %v5930
  %5932 = vmatprep.subr.mxu0 0.0
  %v5933 = vand.u32 %v3252, 4294901760
  %v5934 = vsub.f32 %v3252, %v5933
  %5935 = vmatpush1.msra.mxu0 %v5934
  %5936 = vmatprep.subr.mxu0 0.0
  %v5937 = vand.u32 %v3255, 4294901760
  %v5938 = vsub.f32 %v3255, %v5937
  %5939 = vmatpush1.msra.mxu0 %v5938
  %5940 = vmatprep.subr.mxu0 0.0
  %v5941 = vand.u32 %v3258, 4294901760
  %v5942 = vsub.f32 %v3258, %v5941
  %5943 = vmatpush1.msra.mxu0 %v5942
  %5944 = vmatprep.subr.mxu0 0.0
  %v5945 = vand.u32 %v3261, 4294901760
  %v5946 = vsub.f32 %v3261, %v5945
  %5947 = vmatpush1.msra.mxu0 %v5946
  %5948 = vmatprep.subr.mxu0 0.0
  %v5949 = vand.u32 %v3264, 4294901760
  %v5950 = vsub.f32 %v3264, %v5949
  %5951 = vmatpush1.msra.mxu0 %v5950
  %5952 = vmatprep.subr.mxu0 0.0
  %v5953 = vand.u32 %v3267, 4294901760
  %v5954 = vsub.f32 %v3267, %v5953
  %5955 = vmatpush1.msra.mxu0 %v5954
  %5956 = vmatprep.subr.mxu0 0.0
  %v5957 = vand.u32 %v3270, 4294901760
  %v5958 = vsub.f32 %v3270, %v5957
  %5959 = vmatpush1.msra.mxu0 %v5958
  %5960 = vmatprep.subr.mxu0 0.0
  %v5961 = vand.u32 %v3273, 4294901760
  %v5962 = vsub.f32 %v3273, %v5961
  %5963 = vmatpush1.msra.mxu0 %v5962
  %5964 = vmatprep.subr.mxu0 0.0
  %v5965 = vand.u32 %v3276, 4294901760
  %v5966 = vsub.f32 %v3276, %v5965
  %5967 = vmatpush1.msra.mxu0 %v5966
  %5968 = vmatprep.subr.mxu0 0.0
  %v5969 = vand.u32 %v3279, 4294901760
  %v5970 = vsub.f32 %v3279, %v5969
  %5971 = vmatpush1.msra.mxu0 %v5970
  %5972 = vmatprep.subr.mxu0 0.0
  %v5973 = vand.u32 %v3282, 4294901760
  %v5974 = vsub.f32 %v3282, %v5973
  %5975 = vmatpush1.msra.mxu0 %v5974
  %5976 = vmatprep.subr.mxu0 0.0
  %v5977 = vand.u32 %v3285, 4294901760
  %v5978 = vsub.f32 %v3285, %v5977
  %5979 = vmatpush1.msra.mxu0 %v5978
  %5980 = vmatprep.subr.mxu0 0.0
  %5981 = vmatpush1.msra.mxu0 0.0
  %5982 = vmatprep.subr.mxu0 0.0
  %5983 = vmatpush1.msra.mxu0 0.0
  %5984 = vmatprep.subr.mxu0 0.0
  %5985 = vmatpush1.msra.mxu0 0.0
  %5986 = vmatprep.subr.mxu0 0.0
  %5987 = vmatpush1.msra.mxu0 0.0
  %5988 = vmatprep.subr.mxu0 0.0
  %5989 = vmatpush1.msra.mxu0 0.0
  %5990 = vmatprep.subr.mxu0 0.0
  %5991 = vmatpush1.msra.mxu0 0.0
  %5992 = vmatprep.subr.mxu0 0.0
  %5993 = vmatpush1.msra.mxu0 0.0
  %5994 = vmatprep.subr.mxu0 0.0
  %5995 = vmatpush1.msra.mxu0 0.0
  %5996 = vmatprep.subr.mxu0 0.0
  %5997 = vmatpush1.msra.mxu0 0.0
  %5998 = vmatprep.subr.mxu0 0.0
  %5999 = vmatpush1.msra.mxu0 0.0
  %6000 = vmatprep.subr.mxu0 0.0
  %6001 = vmatpush1.msra.mxu0 0.0
  %6002 = vmatprep.subr.mxu0 0.0
  %6003 = vmatpush1.msra.mxu0 0.0
  %6004 = vmatprep.subr.mxu0 0.0
  %6005 = vmatpush1.msra.mxu0 0.0
  %6006 = vmatprep.subr.mxu0 0.0
  %6007 = vmatpush1.msra.mxu0 0.0
  %6008 = vmatprep.subr.mxu0 0.0
  %6009 = vmatpush1.msra.mxu0 0.0
  %6010 = vmatprep.subr.mxu0 0.0
  %6011 = vmatpush1.msra.mxu0 0.0
  %6012 = vmatprep.mubr.f32.mxu0 0.0
  %v6013 = vand.u32 %v4802, 4294901760
  %v6014 = vsub.f32 %v4802, %v6013
  %6015 = vmatmul.mubr.f32.gmra.mrb[0].mxu0 %v6014
  %v6016 = vpop.f32.mrb[0].mxu0
  %v6017 = vadd.f32 %v5913, %v6016
  %v6018 = vpop.f32.mrb[0].mxu0
  %6019 = vdwg.mxu0
  %6020 = vmatprep.subr.mxu0 0.0
  %v6021 = vand.u32 %v3240, 4294901760
  %6022 = vmatpush1.msra.mxu0 %v6021
  %6023 = vmatprep.subr.mxu0 0.0
  %v6024 = vand.u32 %v3243, 4294901760
  %6025 = vmatpush1.msra.mxu0 %v6024
  %6026 = vmatprep.subr.mxu0 0.0
  %v6027 = vand.u32 %v3246, 4294901760
  %6028 = vmatpush1.msra.mxu0 %v6027
  %6029 = vmatprep.subr.mxu0 0.0
  %v6030 = vand.u32 %v3249, 4294901760
  %6031 = vmatpush1.msra.mxu0 %v6030
  %6032 = vmatprep.subr.mxu0 0.0
  %v6033 = vand.u32 %v3252, 4294901760
  %6034 = vmatpush1.msra.mxu0 %v6033
  %6035 = vmatprep.subr.mxu0 0.0
  %v6036 = vand.u32 %v3255, 4294901760
  %6037 = vmatpush1.msra.mxu0 %v6036
  %6038 = vmatprep.subr.mxu0 0.0
  %v6039 = vand.u32 %v3258, 4294901760
  %6040 = vmatpush1.msra.mxu0 %v6039
  %6041 = vmatprep.subr.mxu0 0.0
  %v6042 = vand.u32 %v3261, 4294901760
  %6043 = vmatpush1.msra.mxu0 %v6042
  %6044 = vmatprep.subr.mxu0 0.0
  %v6045 = vand.u32 %v3264, 4294901760
  %6046 = vmatpush1.msra.mxu0 %v6045
  %6047 = vmatprep.subr.mxu0 0.0
  %v6048 = vand.u32 %v3267, 4294901760
  %6049 = vmatpush1.msra.mxu0 %v6048
  %6050 = vmatprep.subr.mxu0 0.0
  %v6051 = vand.u32 %v3270, 4294901760
  %6052 = vmatpush1.msra.mxu0 %v6051
  %6053 = vmatprep.subr.mxu0 0.0
  %v6054 = vand.u32 %v3273, 4294901760
  %6055 = vmatpush1.msra.mxu0 %v6054
  %6056 = vmatprep.subr.mxu0 0.0
  %v6057 = vand.u32 %v3276, 4294901760
  %6058 = vmatpush1.msra.mxu0 %v6057
  %6059 = vmatprep.subr.mxu0 0.0
  %v6060 = vand.u32 %v3279, 4294901760
  %6061 = vmatpush1.msra.mxu0 %v6060
  %6062 = vmatprep.subr.mxu0 0.0
  %v6063 = vand.u32 %v3282, 4294901760
  %6064 = vmatpush1.msra.mxu0 %v6063
  %6065 = vmatprep.subr.mxu0 0.0
  %v6066 = vand.u32 %v3285, 4294901760
  %6067 = vmatpush1.msra.mxu0 %v6066
  %6068 = vmatprep.subr.mxu0 0.0
  %6069 = vmatpush1.msra.mxu0 0.0
  %6070 = vmatprep.subr.mxu0 0.0
  %6071 = vmatpush1.msra.mxu0 0.0
  %6072 = vmatprep.subr.mxu0 0.0
  %6073 = vmatpush1.msra.mxu0 0.0
  %6074 = vmatprep.subr.mxu0 0.0
  %6075 = vmatpush1.msra.mxu0 0.0
  %6076 = vmatprep.subr.mxu0 0.0
  %6077 = vmatpush1.msra.mxu0 0.0
  %6078 = vmatprep.subr.mxu0 0.0
  %6079 = vmatpush1.msra.mxu0 0.0
  %6080 = vmatprep.subr.mxu0 0.0
  %6081 = vmatpush1.msra.mxu0 0.0
  %6082 = vmatprep.subr.mxu0 0.0
  %6083 = vmatpush1.msra.mxu0 0.0
  %6084 = vmatprep.subr.mxu0 0.0
  %6085 = vmatpush1.msra.mxu0 0.0
  %6086 = vmatprep.subr.mxu0 0.0
  %6087 = vmatpush1.msra.mxu0 0.0
  %6088 = vmatprep.subr.mxu0 0.0
  %6089 = vmatpush1.msra.mxu0 0.0
  %6090 = vmatprep.subr.mxu0 0.0
  %6091 = vmatpush1.msra.mxu0 0.0
  %6092 = vmatprep.subr.mxu0 0.0
  %6093 = vmatpush1.msra.mxu0 0.0
  %6094 = vmatprep.subr.mxu0 0.0
  %6095 = vmatpush1.msra.mxu0 0.0
  %6096 = vmatprep.subr.mxu0 0.0
  %6097 = vmatpush1.msra.mxu0 0.0
  %6098 = vmatprep.subr.mxu0 0.0
  %6099 = vmatpush1.msra.mxu0 0.0
  %6100 = vmatprep.mubr.f32.mxu0 0.0
  %v6101 = vand.u32 %v4802, 4294901760
  %v6102 = vsub.f32 %v4802, %v6101
  %v6103 = vand.u32 %v6102, 4294901760
  %6104 = vmatmul.mubr.f32.gmra.mrb[0].mxu0 %v6103
  %v6105 = vpop.f32.mrb[0].mxu0
  %v6106 = vadd.f32 %v6017, %v6105
  %v6107 = vpop.f32.mrb[0].mxu0
  %6108 = vdwg.mxu0
  %6109 = vmatprep.subr.mxu0 0.0
  %v6110 = vand.u32 %v3240, 4294901760
  %v6111 = vsub.f32 %v3240, %v6110
  %v6112 = vand.u32 %v6111, 4294901760
  %6113 = vmatpush1.msra.mxu0 %v6112
  %6114 = vmatprep.subr.mxu0 0.0
  %v6115 = vand.u32 %v3243, 4294901760
  %v6116 = vsub.f32 %v3243, %v6115
  %v6117 = vand.u32 %v6116, 4294901760
  %6118 = vmatpush1.msra.mxu0 %v6117
  %6119 = vmatprep.subr.mxu0 0.0
  %v6120 = vand.u32 %v3246, 4294901760
  %v6121 = vsub.f32 %v3246, %v6120
  %v6122 = vand.u32 %v6121, 4294901760
  %6123 = vmatpush1.msra.mxu0 %v6122
  %6124 = vmatprep.subr.mxu0 0.0
  %v6125 = vand.u32 %v3249, 4294901760
  %v6126 = vsub.f32 %v3249, %v6125
  %v6127 = vand.u32 %v6126, 4294901760
  %6128 = vmatpush1.msra.mxu0 %v6127
  %6129 = vmatprep.subr.mxu0 0.0
  %v6130 = vand.u32 %v3252, 4294901760
  %v6131 = vsub.f32 %v3252, %v6130
  %v6132 = vand.u32 %v6131, 4294901760
  %6133 = vmatpush1.msra.mxu0 %v6132
  %6134 = vmatprep.subr.mxu0 0.0
  %v6135 = vand.u32 %v3255, 4294901760
  %v6136 = vsub.f32 %v3255, %v6135
  %v6137 = vand.u32 %v6136, 4294901760
  %6138 = vmatpush1.msra.mxu0 %v6137
  %6139 = vmatprep.subr.mxu0 0.0
  %v6140 = vand.u32 %v3258, 4294901760
  %v6141 = vsub.f32 %v3258, %v6140
  %v6142 = vand.u32 %v6141, 4294901760
  %6143 = vmatpush1.msra.mxu0 %v6142
  %6144 = vmatprep.subr.mxu0 0.0
  %v6145 = vand.u32 %v3261, 4294901760
  %v6146 = vsub.f32 %v3261, %v6145
  %v6147 = vand.u32 %v6146, 4294901760
  %6148 = vmatpush1.msra.mxu0 %v6147
  %6149 = vmatprep.subr.mxu0 0.0
  %v6150 = vand.u32 %v3264, 4294901760
  %v6151 = vsub.f32 %v3264, %v6150
  %v6152 = vand.u32 %v6151, 4294901760
  %6153 = vmatpush1.msra.mxu0 %v6152
  %6154 = vmatprep.subr.mxu0 0.0
  %v6155 = vand.u32 %v3267, 4294901760
  %v6156 = vsub.f32 %v3267, %v6155
  %v6157 = vand.u32 %v6156, 4294901760
  %6158 = vmatpush1.msra.mxu0 %v6157
  %6159 = vmatprep.subr.mxu0 0.0
  %v6160 = vand.u32 %v3270, 4294901760
  %v6161 = vsub.f32 %v3270, %v6160
  %v6162 = vand.u32 %v6161, 4294901760
  %6163 = vmatpush1.msra.mxu0 %v6162
  %6164 = vmatprep.subr.mxu0 0.0
  %v6165 = vand.u32 %v3273, 4294901760
  %v6166 = vsub.f32 %v3273, %v6165
  %v6167 = vand.u32 %v6166, 4294901760
  %6168 = vmatpush1.msra.mxu0 %v6167
  %6169 = vmatprep.subr.mxu0 0.0
  %v6170 = vand.u32 %v3276, 4294901760
  %v6171 = vsub.f32 %v3276, %v6170
  %v6172 = vand.u32 %v6171, 4294901760
  %6173 = vmatpush1.msra.mxu0 %v6172
  %6174 = vmatprep.subr.mxu0 0.0
  %v6175 = vand.u32 %v3279, 4294901760
  %v6176 = vsub.f32 %v3279, %v6175
  %v6177 = vand.u32 %v6176, 4294901760
  %6178 = vmatpush1.msra.mxu0 %v6177
  %6179 = vmatprep.subr.mxu0 0.0
  %v6180 = vand.u32 %v3282, 4294901760
  %v6181 = vsub.f32 %v3282, %v6180
  %v6182 = vand.u32 %v6181, 4294901760
  %6183 = vmatpush1.msra.mxu0 %v6182
  %6184 = vmatprep.subr.mxu0 0.0
  %v6185 = vand.u32 %v3285, 4294901760
  %v6186 = vsub.f32 %v3285, %v6185
  %v6187 = vand.u32 %v6186, 4294901760
  %6188 = vmatpush1.msra.mxu0 %v6187
  %6189 = vmatprep.subr.mxu0 0.0
  %6190 = vmatpush1.msra.mxu0 0.0
  %6191 = vmatprep.subr.mxu0 0.0
  %6192 = vmatpush1.msra.mxu0 0.0
  %6193 = vmatprep.subr.mxu0 0.0
  %6194 = vmatpush1.msra.mxu0 0.0
  %6195 = vmatprep.subr.mxu0 0.0
  %6196 = vmatpush1.msra.mxu0 0.0
  %6197 = vmatprep.subr.mxu0 0.0
  %6198 = vmatpush1.msra.mxu0 0.0
  %6199 = vmatprep.subr.mxu0 0.0
  %6200 = vmatpush1.msra.mxu0 0.0
  %6201 = vmatprep.subr.mxu0 0.0
  %6202 = vmatpush1.msra.mxu0 0.0
  %6203 = vmatprep.subr.mxu0 0.0
  %6204 = vmatpush1.msra.mxu0 0.0
  %6205 = vmatprep.subr.mxu0 0.0
  %6206 = vmatpush1.msra.mxu0 0.0
  %6207 = vmatprep.subr.mxu0 0.0
  %6208 = vmatpush1.msra.mxu0 0.0
  %6209 = vmatprep.subr.mxu0 0.0
  %6210 = vmatpush1.msra.mxu0 0.0
  %6211 = vmatprep.subr.mxu0 0.0
  %6212 = vmatpush1.msra.mxu0 0.0
  %6213 = vmatprep.subr.mxu0 0.0
  %6214 = vmatpush1.msra.mxu0 0.0
  %6215 = vmatprep.subr.mxu0 0.0
  %6216 = vmatpush1.msra.mxu0 0.0
  %6217 = vmatprep.subr.mxu0 0.0
  %6218 = vmatpush1.msra.mxu0 0.0
  %6219 = vmatprep.subr.mxu0 0.0
  %6220 = vmatpush1.msra.mxu0 0.0
  %6221 = vmatprep.mubr.f32.mxu0 0.0
  %v6222 = vand.u32 %v4802, 4294901760
  %6223 = vmatmul.mubr.f32.gmra.mrb[0].mxu0 %v6222
  %v6224 = vpop.f32.mrb[0].mxu0
  %v6225 = vadd.f32 %v6106, %v6224
  %v6226 = vpop.f32.mrb[0].mxu0
  %6227 = vdwg.mxu0
  %6228 = vmatprep.subr.mxu0 0.0
  %v6229 = vand.u32 %v3240, 4294901760
  %6230 = vmatpush1.msra.mxu0 %v6229
  %6231 = vmatprep.subr.mxu0 0.0
  %v6232 = vand.u32 %v3243, 4294901760
  %6233 = vmatpush1.msra.mxu0 %v6232
  %6234 = vmatprep.subr.mxu0 0.0
  %v6235 = vand.u32 %v3246, 4294901760
  %6236 = vmatpush1.msra.mxu0 %v6235
  %6237 = vmatprep.subr.mxu0 0.0
  %v6238 = vand.u32 %v3249, 4294901760
  %6239 = vmatpush1.msra.mxu0 %v6238
  %6240 = vmatprep.subr.mxu0 0.0
  %v6241 = vand.u32 %v3252, 4294901760
  %6242 = vmatpush1.msra.mxu0 %v6241
  %6243 = vmatprep.subr.mxu0 0.0
  %v6244 = vand.u32 %v3255, 4294901760
  %6245 = vmatpush1.msra.mxu0 %v6244
  %6246 = vmatprep.subr.mxu0 0.0
  %v6247 = vand.u32 %v3258, 4294901760
  %6248 = vmatpush1.msra.mxu0 %v6247
  %6249 = vmatprep.subr.mxu0 0.0
  %v6250 = vand.u32 %v3261, 4294901760
  %6251 = vmatpush1.msra.mxu0 %v6250
  %6252 = vmatprep.subr.mxu0 0.0
  %v6253 = vand.u32 %v3264, 4294901760
  %6254 = vmatpush1.msra.mxu0 %v6253
  %6255 = vmatprep.subr.mxu0 0.0
  %v6256 = vand.u32 %v3267, 4294901760
  %6257 = vmatpush1.msra.mxu0 %v6256
  %6258 = vmatprep.subr.mxu0 0.0
  %v6259 = vand.u32 %v3270, 4294901760
  %6260 = vmatpush1.msra.mxu0 %v6259
  %6261 = vmatprep.subr.mxu0 0.0
  %v6262 = vand.u32 %v3273, 4294901760
  %6263 = vmatpush1.msra.mxu0 %v6262
  %6264 = vmatprep.subr.mxu0 0.0
  %v6265 = vand.u32 %v3276, 4294901760
  %6266 = vmatpush1.msra.mxu0 %v6265
  %6267 = vmatprep.subr.mxu0 0.0
  %v6268 = vand.u32 %v3279, 4294901760
  %6269 = vmatpush1.msra.mxu0 %v6268
  %6270 = vmatprep.subr.mxu0 0.0
  %v6271 = vand.u32 %v3282, 4294901760
  %6272 = vmatpush1.msra.mxu0 %v6271
  %6273 = vmatprep.subr.mxu0 0.0
  %v6274 = vand.u32 %v3285, 4294901760
  %6275 = vmatpush1.msra.mxu0 %v6274
  %6276 = vmatprep.subr.mxu0 0.0
  %6277 = vmatpush1.msra.mxu0 0.0
  %6278 = vmatprep.subr.mxu0 0.0
  %6279 = vmatpush1.msra.mxu0 0.0
  %6280 = vmatprep.subr.mxu0 0.0
  %6281 = vmatpush1.msra.mxu0 0.0
  %6282 = vmatprep.subr.mxu0 0.0
  %6283 = vmatpush1.msra.mxu0 0.0
  %6284 = vmatprep.subr.mxu0 0.0
  %6285 = vmatpush1.msra.mxu0 0.0
  %6286 = vmatprep.subr.mxu0 0.0
  %6287 = vmatpush1.msra.mxu0 0.0
  %6288 = vmatprep.subr.mxu0 0.0
  %6289 = vmatpush1.msra.mxu0 0.0
  %6290 = vmatprep.subr.mxu0 0.0
  %6291 = vmatpush1.msra.mxu0 0.0
  %6292 = vmatprep.subr.mxu0 0.0
  %6293 = vmatpush1.msra.mxu0 0.0
  %6294 = vmatprep.subr.mxu0 0.0
  %6295 = vmatpush1.msra.mxu0 0.0
  %6296 = vmatprep.subr.mxu0 0.0
  %6297 = vmatpush1.msra.mxu0 0.0
  %6298 = vmatprep.subr.mxu0 0.0
  %6299 = vmatpush1.msra.mxu0 0.0
  %6300 = vmatprep.subr.mxu0 0.0
  %6301 = vmatpush1.msra.mxu0 0.0
  %6302 = vmatprep.subr.mxu0 0.0
  %6303 = vmatpush1.msra.mxu0 0.0
  %6304 = vmatprep.subr.mxu0 0.0
  %6305 = vmatpush1.msra.mxu0 0.0
  %6306 = vmatprep.subr.mxu0 0.0
  %6307 = vmatpush1.msra.mxu0 0.0
  %6308 = vmatprep.mubr.f32.mxu0 0.0
  %v6309 = vand.u32 %v4802, 4294901760
  %6310 = vmatmul.mubr.f32.gmra.mrb[0].mxu0 %v6309
  %v6311 = vpop.f32.mrb[0].mxu0
  %v6312 = vadd.f32 %v6225, %v6311
  %v6313 = vpop.f32.mrb[0].mxu0
  %6314 = vdwg.mxu0
  %v6315 = vadd.f32 %v4156, %v5670
  %v6316 = vxor.u32 %v6315, 2147483648
  %v6317 = vmul.f32 %v6316, 1.442695
  %v6318 = vpow.pop %v6317
  %v6319 = vadd.f32 %v6318, 1.0
  %v6320 = vrcp.pop %v6319
  %v6321 = vmul.f32 1.0, %v6320
  %v6322 = vadd.f32 %v4158, %v5672
  %v6323 = vxor.u32 %v6322, 2147483648
  %v6324 = vmul.f32 %v6323, 1.442695
  %v6325 = vpow.pop %v6324
  %v6326 = vadd.f32 %v6325, 1.0
  %v6327 = vrcp.pop %v6326
  %v6328 = vmul.f32 1.0, %v6327
  %v6329 = vmul.f32 %v6321, %v6312
  %v6330 = vadd.f32 %v4798, %v6329
  %v6331 = vtanh.pop %v6330
  %v6332 = vsub.f32 1.0, %v6328
  %v6333 = vmul.f32 %v6332, %v6331
  %v6334 = vmul.f32 %v6328, %v4802
  %v6335 = vadd.f32 %v6333, %v6334
  %s6336 = scalar_lea.vmem %s12, 8
  %6337 = vst [vmem:[%s6336] sm:$0xff] %v6335
  %v6338 = vld [vmem:[%s2] sm:$0xff]
  %v6339 = vld [vmem:[%s2 + $0x8] sm:$0xff]
  %v6340 = vld [vmem:[%s2 + $0x10] sm:$0xff]
  %v6341 = vld [vmem:[%s2 + $0x18] sm:$0xff]
  %v6342 = vld [vmem:[%s2 + $0x20] sm:$0xff]
  %v6343 = vld [vmem:[%s2 + $0x28] sm:$0xff]
  %v6344 = vld [vmem:[%s2 + $0x30] sm:$0xff]
  %v6345 = vld [vmem:[%s2 + $0x38] sm:$0xff]
  %v6346 = vld [vmem:[%s2 + $0x40] sm:$0xff]
  %v6347 = vld [vmem:[%s2 + $0x48] sm:$0xff]
  %v6348 = vld [vmem:[%s2 + $0x50] sm:$0xff]
  %v6349 = vld [vmem:[%s2 + $0x58] sm:$0xff]
  %v6350 = vld [vmem:[%s2 + $0x60] sm:$0xff]
  %v6351 = vld [vmem:[%s2 + $0x68] sm:$0xff]
  %v6352 = vld [vmem:[%s2 + $0x70] sm:$0xff]
  %v6353 = vld [vmem:[%s2 + $0x78] sm:$0xff]
  %v6354 = vld [vmem:[%s2 + $0x80] sm:$0xff]
  %v6355 = vld [vmem:[%s2 + $0x88] sm:$0xff]
  %v6356 = vld [vmem:[%s2 + $0x90] sm:$0xff]
  %v6357 = vld [vmem:[%s2 + $0x98] sm:$0xff]
  %v6358 = vld [vmem:[%s2 + $0xa0] sm:$0xff]
  %v6359 = vld [vmem:[%s2 + $0xa8] sm:$0xff]
  %v6360 = vld [vmem:[%s2 + $0xb0] sm:$0xff]
  %v6361 = vld [vmem:[%s2 + $0xb8] sm:$0xff]
  %v6362 = vld [vmem:[%s2 + $0xc0] sm:$0xff]
  %v6363 = vld [vmem:[%s2 + $0xc8] sm:$0xff]
  %v6364 = vld [vmem:[%s2 + $0xd0] sm:$0xff]
  %v6365 = vld [vmem:[%s2 + $0xd8] sm:$0xff]
  %v6366 = vld [vmem:[%s2 + $0xe0] sm:$0xff]
  %v6367 = vld [vmem:[%s2 + $0xe8] sm:$0xff]
  %v6368 = vld [vmem:[%s2 + $0xf0] sm:$0xff]
  %v6369 = vld [vmem:[%s2 + $0xf8] sm:$0xff]
  %v6370 = vld [vmem:[%s2 + $0x100] sm:$0xff]
  %v6371 = vld [vmem:[%s2 + $0x108] sm:$0xff]
  %v6372 = vld [vmem:[%s2 + $0x110] sm:$0xff]
  %v6373 = vld [vmem:[%s2 + $0x118] sm:$0xff]
  %v6374 = vld [vmem:[%s2 + $0x120] sm:$0xff]
  %v6375 = vld [vmem:[%s2 + $0x128] sm:$0xff]
  %v6376 = vld [vmem:[%s2 + $0x130] sm:$0xff]
  %v6377 = vld [vmem:[%s2 + $0x138] sm:$0xff]
  %v6378 = vld [vmem:[%s2 + $0x140] sm:$0xff]
  %v6379 = vld [vmem:[%s2 + $0x148] sm:$0xff]
  %v6380 = vld [vmem:[%s2 + $0x150] sm:$0xff]
  %v6381 = vld [vmem:[%s2 + $0x158] sm:$0xff]
  %v6382 = vld [vmem:[%s2 + $0x160] sm:$0xff]
  %v6383 = vld [vmem:[%s2 + $0x168] sm:$0xff]
  %v6384 = vld [vmem:[%s2 + $0x170] sm:$0xff]
  %v6385 = vld [vmem:[%s2 + $0x178] sm:$0xff]
  %v6386 = vld [vmem:[%s2 + $0x180] sm:$0xff]
  %v6387 = vld [vmem:[%s2 + $0x188] sm:$0xff]
  %v6388 = vld [vmem:[%s2 + $0x190] sm:$0xff]
  %v6389 = vld [vmem:[%s2 + $0x198] sm:$0xff]
  %v6390 = vld [vmem:[%s2 + $0x1a0] sm:$0xff]
  %v6391 = vld [vmem:[%s2 + $0x1a8] sm:$0xff]
  %v6392 = vld [vmem:[%s2 + $0x1b0] sm:$0xff]
  %v6393 = vld [vmem:[%s2 + $0x1b8] sm:$0xff]
  %v6394 = vld [vmem:[%s2 + $0x1c0] sm:$0xff]
  %v6395 = vld [vmem:[%s2 + $0x1c8] sm:$0xff]
  %v6396 = vld [vmem:[%s2 + $0x1d0] sm:$0xff]
  %v6397 = vld [vmem:[%s2 + $0x1d8] sm:$0xff]
  %v6398 = vld [vmem:[%s2 + $0x1e0] sm:$0xff]
  %v6399 = vld [vmem:[%s2 + $0x1e8] sm:$0xff]
  %v6400 = vld [vmem:[%s2 + $0x1f0] sm:$0xff]
  %v6401 = vld [vmem:[%s2 + $0x1f8] sm:$0xff]
  %v6402 = vld [vmem:[%s2 + $0x200] sm:$0xff]
  %v6403 = vld [vmem:[%s2 + $0x208] sm:$0xff]
  %v6404 = vld [vmem:[%s2 + $0x210] sm:$0xff]
  %v6405 = vld [vmem:[%s2 + $0x218] sm:$0xff]
  %v6406 = vld [vmem:[%s2 + $0x220] sm:$0xff]
  %v6407 = vld [vmem:[%s2 + $0x228] sm:$0xff]
  %v6408 = vld [vmem:[%s2 + $0x230] sm:$0xff]
  %v6409 = vld [vmem:[%s2 + $0x238] sm:$0xff]
  %v6410 = vld [vmem:[%s2 + $0x240] sm:$0xff]
  %v6411 = vld [vmem:[%s2 + $0x248] sm:$0xff]
  %v6412 = vld [vmem:[%s2 + $0x250] sm:$0xff]
  %v6413 = vld [vmem:[%s2 + $0x258] sm:$0xff]
  %v6414 = vld [vmem:[%s2 + $0x260] sm:$0xff]
  %v6415 = vld [vmem:[%s2 + $0x268] sm:$0xff]
  %v6416 = vld [vmem:[%s2 + $0x270] sm:$0xff]
  %v6417 = vld [vmem:[%s2 + $0x278] sm:$0xff]
  %v6418 = vld [vmem:[%s2 + $0x280] sm:$0xff]
  %v6419 = vld [vmem:[%s2 + $0x288] sm:$0xff]
  %v6420 = vld [vmem:[%s2 + $0x290] sm:$0xff]
  %v6421 = vld [vmem:[%s2 + $0x298] sm:$0xff]
  %v6422 = vld [vmem:[%s2 + $0x2a0] sm:$0xff]
  %v6423 = vld [vmem:[%s2 + $0x2a8] sm:$0xff]
  %v6424 = vld [vmem:[%s2 + $0x2b0] sm:$0xff]
  %v6425 = vld [vmem:[%s2 + $0x2b8] sm:$0xff]
  %v6426 = vld [vmem:[%s2 + $0x2c0] sm:$0xff]
  %v6427 = vld [vmem:[%s2 + $0x2c8] sm:$0xff]
  %v6428 = vld [vmem:[%s2 + $0x2d0] sm:$0xff]
  %v6429 = vld [vmem:[%s2 + $0x2d8] sm:$0xff]
  %v6430 = vld [vmem:[%s2 + $0x2e0] sm:$0xff]
  %v6431 = vld [vmem:[%s2 + $0x2e8] sm:$0xff]
  %v6432 = vld [vmem:[%s2 + $0x2f0] sm:$0xff]
  %v6433 = vld [vmem:[%s2 + $0x2f8] sm:$0xff]
  %v6434 = vld [vmem:[%s2 + $0x300] sm:$0xff]
  %v6435 = vld [vmem:[%s2 + $0x308] sm:$0xff]
  %v6436 = vld [vmem:[%s2 + $0x310] sm:$0xff]
  %v6437 = vld [vmem:[%s2 + $0x318] sm:$0xff]
  %v6438 = vld [vmem:[%s2 + $0x320] sm:$0xff]
  %v6439 = vld [vmem:[%s2 + $0x328] sm:$0xff]
  %v6440 = vld [vmem:[%s2 + $0x330] sm:$0xff]
  %v6441 = vld [vmem:[%s2 + $0x338] sm:$0xff]
  %v6442 = vld [vmem:[%s2 + $0x340] sm:$0xff]
  %v6443 = vld [vmem:[%s2 + $0x348] sm:$0xff]
  %v6444 = vld [vmem:[%s2 + $0x350] sm:$0xff]
  %v6445 = vld [vmem:[%s2 + $0x358] sm:$0xff]
  %v6446 = vld [vmem:[%s2 + $0x360] sm:$0xff]
  %v6447 = vld [vmem:[%s2 + $0x368] sm:$0xff]
  %v6448 = vld [vmem:[%s2 + $0x370] sm:$0xff]
  %v6449 = vld [vmem:[%s2 + $0x378] sm:$0xff]
  %v6450 = vld [vmem:[%s2 + $0x380] sm:$0xff]
  %v6451 = vld [vmem:[%s2 + $0x388] sm:$0xff]
  %v6452 = vld [vmem:[%s2 + $0x390] sm:$0xff]
  %v6453 = vld [vmem:[%s2 + $0x398] sm:$0xff]
  %v6454 = vld [vmem:[%s2 + $0x3a0] sm:$0xff]
  %v6455 = vld [vmem:[%s2 + $0x3a8] sm:$0xff]
  %v6456 = vld [vmem:[%s2 + $0x3b0] sm:$0xff]
  %v6457 = vld [vmem:[%s2 + $0x3b8] sm:$0xff]
  %v6458 = vld [vmem:[%s2 + $0x3c0] sm:$0xff]
  %v6459 = vld [vmem:[%s2 + $0x3c8] sm:$0xff]
  %v6460 = vld [vmem:[%s2 + $0x3d0] sm:$0xff]
  %v6461 = vld [vmem:[%s2 + $0x3d8] sm:$0xff]
  %v6462 = vld [vmem:[%s2 + $0x3e0] sm:$0xff]
  %v6463 = vld [vmem:[%s2 + $0x3e8] sm:$0xff]
  %v6464 = vld [vmem:[%s2 + $0x3f0] sm:$0xff]
  %v6465 = vld [vmem:[%s2 + $0x3f8] sm:$0xff]
  %v6467 = vcombine.high %v6335, %v6335
  %v6469 = vunpack.c.l.s4 1966171168
  %v6470 = vunpack.c.0.s8 %v6469
  %v6471 = vlaneseq
  %v6472 = vshrl.u32 %v6471, 7
  %v6473 = vsub.s32 %v6470, %v6472
  %v6474 = vrot.slane %v6335, %v6473
  %v6476 = vunpack.c.l.s4 1966171168
  %v6477 = vunpack.c.0.s8 %v6476
  %v6478 = vlaneseq
  %v6479 = vshrl.u32 %v6478, 7
  %v6480 = vsub.s32 %v6477, %v6479
  %v6481 = vrot.slane %v6467, %v6480
  %v6482 = vcombine.high %v6474, %v6474
  %v6483 = vcombine.high %v6481, %v6481
  %v6485 = vunpack.c.l.s4 1966171168
  %v6486 = vunpack.c.0.s8 %v6485
  %v6487 = vlaneseq
  %v6488 = vshrl.u32 %v6487, 7
  %v6489 = vsub.s32 %v6486, %v6488
  %v6490 = vrot.slane %v6474, %v6489
  %v6492 = vunpack.c.l.s4 1966171168
  %v6493 = vunpack.c.0.s8 %v6492
  %v6494 = vlaneseq
  %v6495 = vshrl.u32 %v6494, 7
  %v6496 = vsub.s32 %v6493, %v6495
  %v6497 = vrot.slane %v6481, %v6496
  %v6499 = vunpack.c.l.s4 1966171168
  %v6500 = vunpack.c.0.s8 %v6499
  %v6501 = vlaneseq
  %v6502 = vshrl.u32 %v6501, 7
  %v6503 = vsub.s32 %v6500, %v6502
  %v6504 = vrot.slane %v6482, %v6503
  %v6506 = vunpack.c.l.s4 1966171168
  %v6507 = vunpack.c.0.s8 %v6506
  %v6508 = vlaneseq
  %v6509 = vshrl.u32 %v6508, 7
  %v6510 = vsub.s32 %v6507, %v6509
  %v6511 = vrot.slane %v6483, %v6510
  %v6512 = vcombine.high %v6490, %v6490
  %v6513 = vcombine.high %v6497, %v6497
  %v6514 = vcombine.high %v6504, %v6504
  %v6515 = vcombine.high %v6511, %v6511
  %v6516 = vlaneseq
  %v6517 = vshrl.u32 %v6516, 7
  %v6518 = vsub.s32 0, %v6517
  %v6519 = vrot.slane %v6490, %v6518
  %v6520 = vlaneseq
  %v6521 = vshrl.u32 %v6520, 7
  %v6522 = vsub.s32 0, %v6521
  %v6523 = vrot.slane %v6504, %v6522
  %v6524 = vlaneseq
  %v6525 = vshrl.u32 %v6524, 7
  %v6526 = vsub.s32 0, %v6525
  %v6527 = vrot.slane %v6512, %v6526
  %v6528 = vlaneseq
  %v6529 = vshrl.u32 %v6528, 7
  %v6530 = vsub.s32 0, %v6529
  %v6531 = vrot.slane %v6514, %v6530
  %v6532 = vlaneseq
  %v6533 = vshrl.u32 %v6532, 7
  %v6534 = vsub.s32 0, %v6533
  %v6535 = vrot.slane %v6497, %v6534
  %v6536 = vlaneseq
  %v6537 = vshrl.u32 %v6536, 7
  %v6538 = vsub.s32 0, %v6537
  %v6539 = vrot.slane %v6511, %v6538
  %v6540 = vlaneseq
  %v6541 = vshrl.u32 %v6540, 7
  %v6542 = vsub.s32 0, %v6541
  %v6543 = vrot.slane %v6513, %v6542
  %v6544 = vlaneseq
  %v6545 = vshrl.u32 %v6544, 7
  %v6546 = vsub.s32 0, %v6545
  %v6547 = vrot.slane %v6515, %v6546
  %v6556 = vmul.f32 %v6519, %v6338
  %v6557 = vmul.f32 %v6519, %v6339
  %v6558 = vmul.f32 %v6519, %v6340
  %v6559 = vmul.f32 %v6519, %v6341
  %v6560 = vmul.f32 %v6519, %v6342
  %v6561 = vmul.f32 %v6519, %v6343
  %v6562 = vmul.f32 %v6519, %v6344
  %v6563 = vmul.f32 %v6519, %v6345
  %v6564 = vmul.f32 %v6519, %v6346
  %v6565 = vmul.f32 %v6519, %v6347
  %v6566 = vmul.f32 %v6519, %v6348
  %v6567 = vmul.f32 %v6519, %v6349
  %v6568 = vmul.f32 %v6519, %v6350
  %v6569 = vmul.f32 %v6519, %v6351
  %v6570 = vmul.f32 %v6519, %v6352
  %v6571 = vmul.f32 %v6519, %v6353
  %v6572 = vmul.f32 %v6523, %v6354
  %v6573 = vmul.f32 %v6523, %v6355
  %v6574 = vmul.f32 %v6523, %v6356
  %v6575 = vmul.f32 %v6523, %v6357
  %v6576 = vmul.f32 %v6523, %v6358
  %v6577 = vmul.f32 %v6523, %v6359
  %v6578 = vmul.f32 %v6523, %v6360
  %v6579 = vmul.f32 %v6523, %v6361
  %v6580 = vmul.f32 %v6523, %v6362
  %v6581 = vmul.f32 %v6523, %v6363
  %v6582 = vmul.f32 %v6523, %v6364
  %v6583 = vmul.f32 %v6523, %v6365
  %v6584 = vmul.f32 %v6523, %v6366
  %v6585 = vmul.f32 %v6523, %v6367
  %v6586 = vmul.f32 %v6523, %v6368
  %v6587 = vmul.f32 %v6523, %v6369
  %v6588 = vmul.f32 %v6527, %v6370
  %v6589 = vmul.f32 %v6527, %v6371
  %v6590 = vmul.f32 %v6527, %v6372
  %v6591 = vmul.f32 %v6527, %v6373
  %v6592 = vmul.f32 %v6527, %v6374
  %v6593 = vmul.f32 %v6527, %v6375
  %v6594 = vmul.f32 %v6527, %v6376
  %v6595 = vmul.f32 %v6527, %v6377
  %v6596 = vmul.f32 %v6527, %v6378
  %v6597 = vmul.f32 %v6527, %v6379
  %v6598 = vmul.f32 %v6527, %v6380
  %v6599 = vmul.f32 %v6527, %v6381
  %v6600 = vmul.f32 %v6527, %v6382
  %v6601 = vmul.f32 %v6527, %v6383
  %v6602 = vmul.f32 %v6527, %v6384
  %v6603 = vmul.f32 %v6527, %v6385
  %v6604 = vmul.f32 %v6531, %v6386
  %v6605 = vmul.f32 %v6531, %v6387
  %v6606 = vmul.f32 %v6531, %v6388
  %v6607 = vmul.f32 %v6531, %v6389
  %v6608 = vmul.f32 %v6531, %v6390
  %v6609 = vmul.f32 %v6531, %v6391
  %v6610 = vmul.f32 %v6531, %v6392
  %v6611 = vmul.f32 %v6531, %v6393
  %v6612 = vmul.f32 %v6531, %v6394
  %v6613 = vmul.f32 %v6531, %v6395
  %v6614 = vmul.f32 %v6531, %v6396
  %v6615 = vmul.f32 %v6531, %v6397
  %v6616 = vmul.f32 %v6531, %v6398
  %v6617 = vmul.f32 %v6531, %v6399
  %v6618 = vmul.f32 %v6531, %v6400
  %v6619 = vmul.f32 %v6531, %v6401
  %v6620 = vmul.f32 %v6535, %v6402
  %v6621 = vmul.f32 %v6535, %v6403
  %v6622 = vmul.f32 %v6535, %v6404
  %v6623 = vmul.f32 %v6535, %v6405
  %v6624 = vmul.f32 %v6535, %v6406
  %v6625 = vmul.f32 %v6535, %v6407
  %v6626 = vmul.f32 %v6535, %v6408
  %v6627 = vmul.f32 %v6535, %v6409
  %v6628 = vmul.f32 %v6535, %v6410
  %v6629 = vmul.f32 %v6535, %v6411
  %v6630 = vmul.f32 %v6535, %v6412
  %v6631 = vmul.f32 %v6535, %v6413
  %v6632 = vmul.f32 %v6535, %v6414
  %v6633 = vmul.f32 %v6535, %v6415
  %v6634 = vmul.f32 %v6535, %v6416
  %v6635 = vmul.f32 %v6535, %v6417
  %v6636 = vmul.f32 %v6539, %v6418
  %v6637 = vmul.f32 %v6539, %v6419
  %v6638 = vmul.f32 %v6539, %v6420
  %v6639 = vmul.f32 %v6539, %v6421
  %v6640 = vmul.f32 %v6539, %v6422
  %v6641 = vmul.f32 %v6539, %v6423
  %v6642 = vmul.f32 %v6539, %v6424
  %v6643 = vmul.f32 %v6539, %v6425
  %v6644 = vmul.f32 %v6539, %v6426
  %v6645 = vmul.f32 %v6539, %v6427
  %v6646 = vmul.f32 %v6539, %v6428
  %v6647 = vmul.f32 %v6539, %v6429
  %v6648 = vmul.f32 %v6539, %v6430
  %v6649 = vmul.f32 %v6539, %v6431
  %v6650 = vmul.f32 %v6539, %v6432
  %v6651 = vmul.f32 %v6539, %v6433
  %v6652 = vmul.f32 %v6543, %v6434
  %v6653 = vmul.f32 %v6543, %v6435
  %v6654 = vmul.f32 %v6543, %v6436
  %v6655 = vmul.f32 %v6543, %v6437
  %v6656 = vmul.f32 %v6543, %v6438
  %v6657 = vmul.f32 %v6543, %v6439
  %v6658 = vmul.f32 %v6543, %v6440
  %v6659 = vmul.f32 %v6543, %v6441
  %v6660 = vmul.f32 %v6543, %v6442
  %v6661 = vmul.f32 %v6543, %v6443
  %v6662 = vmul.f32 %v6543, %v6444
  %v6663 = vmul.f32 %v6543, %v6445
  %v6664 = vmul.f32 %v6543, %v6446
  %v6665 = vmul.f32 %v6543, %v6447
  %v6666 = vmul.f32 %v6543, %v6448
  %v6667 = vmul.f32 %v6543, %v6449
  %v6668 = vmul.f32 %v6547, %v6450
  %v6669 = vmul.f32 %v6547, %v6451
  %v6670 = vmul.f32 %v6547, %v6452
  %v6671 = vmul.f32 %v6547, %v6453
  %v6672 = vmul.f32 %v6547, %v6454
  %v6673 = vmul.f32 %v6547, %v6455
  %v6674 = vmul.f32 %v6547, %v6456
  %v6675 = vmul.f32 %v6547, %v6457
  %v6676 = vmul.f32 %v6547, %v6458
  %v6677 = vmul.f32 %v6547, %v6459
  %v6678 = vmul.f32 %v6547, %v6460
  %v6679 = vmul.f32 %v6547, %v6461
  %v6680 = vmul.f32 %v6547, %v6462
  %v6681 = vmul.f32 %v6547, %v6463
  %v6682 = vmul.f32 %v6547, %v6464
  %v6683 = vmul.f32 %v6547, %v6465
  %6684 = vadd.xlane.f32.xlu0 %v6556
  %v6685 = vpop.xlane.xlu0 %6684
  %6686 = vadd.xlane.f32.xlu0 %v6557
  %v6687 = vpop.xlane.xlu0 %6686
  %6688 = vadd.xlane.f32.xlu0 %v6558
  %v6689 = vpop.xlane.xlu0 %6688
  %6690 = vadd.xlane.f32.xlu0 %v6559
  %v6691 = vpop.xlane.xlu0 %6690
  %6692 = vadd.xlane.f32.xlu0 %v6560
  %v6693 = vpop.xlane.xlu0 %6692
  %6694 = vadd.xlane.f32.xlu0 %v6561
  %v6695 = vpop.xlane.xlu0 %6694
  %6696 = vadd.xlane.f32.xlu0 %v6562
  %v6697 = vpop.xlane.xlu0 %6696
  %6698 = vadd.xlane.f32.xlu0 %v6563
  %v6699 = vpop.xlane.xlu0 %6698
  %6700 = vadd.xlane.f32.xlu0 %v6564
  %v6701 = vpop.xlane.xlu0 %6700
  %6702 = vadd.xlane.f32.xlu0 %v6565
  %v6703 = vpop.xlane.xlu0 %6702
  %6704 = vadd.xlane.f32.xlu0 %v6566
  %v6705 = vpop.xlane.xlu0 %6704
  %6706 = vadd.xlane.f32.xlu0 %v6567
  %v6707 = vpop.xlane.xlu0 %6706
  %6708 = vadd.xlane.f32.xlu0 %v6568
  %v6709 = vpop.xlane.xlu0 %6708
  %6710 = vadd.xlane.f32.xlu0 %v6569
  %v6711 = vpop.xlane.xlu0 %6710
  %6712 = vadd.xlane.f32.xlu0 %v6570
  %v6713 = vpop.xlane.xlu0 %6712
  %6714 = vadd.xlane.f32.xlu0 %v6571
  %v6715 = vpop.xlane.xlu0 %6714
  %6716 = vadd.xlane.f32.xlu0 %v6572
  %v6717 = vpop.xlane.xlu0 %6716
  %6718 = vadd.xlane.f32.xlu0 %v6573
  %v6719 = vpop.xlane.xlu0 %6718
  %6720 = vadd.xlane.f32.xlu0 %v6574
  %v6721 = vpop.xlane.xlu0 %6720
  %6722 = vadd.xlane.f32.xlu0 %v6575
  %v6723 = vpop.xlane.xlu0 %6722
  %6724 = vadd.xlane.f32.xlu0 %v6576
  %v6725 = vpop.xlane.xlu0 %6724
  %6726 = vadd.xlane.f32.xlu0 %v6577
  %v6727 = vpop.xlane.xlu0 %6726
  %6728 = vadd.xlane.f32.xlu0 %v6578
  %v6729 = vpop.xlane.xlu0 %6728
  %6730 = vadd.xlane.f32.xlu0 %v6579
  %v6731 = vpop.xlane.xlu0 %6730
  %6732 = vadd.xlane.f32.xlu0 %v6580
  %v6733 = vpop.xlane.xlu0 %6732
  %6734 = vadd.xlane.f32.xlu0 %v6581
  %v6735 = vpop.xlane.xlu0 %6734
  %6736 = vadd.xlane.f32.xlu0 %v6582
  %v6737 = vpop.xlane.xlu0 %6736
  %6738 = vadd.xlane.f32.xlu0 %v6583
  %v6739 = vpop.xlane.xlu0 %6738
  %6740 = vadd.xlane.f32.xlu0 %v6584
  %v6741 = vpop.xlane.xlu0 %6740
  %6742 = vadd.xlane.f32.xlu0 %v6585
  %v6743 = vpop.xlane.xlu0 %6742
  %6744 = vadd.xlane.f32.xlu0 %v6586
  %v6745 = vpop.xlane.xlu0 %6744
  %6746 = vadd.xlane.f32.xlu0 %v6587
  %v6747 = vpop.xlane.xlu0 %6746
  %6748 = vadd.xlane.f32.xlu0 %v6588
  %v6749 = vpop.xlane.xlu0 %6748
  %6750 = vadd.xlane.f32.xlu0 %v6589
  %v6751 = vpop.xlane.xlu0 %6750
  %6752 = vadd.xlane.f32.xlu0 %v6590
  %v6753 = vpop.xlane.xlu0 %6752
  %6754 = vadd.xlane.f32.xlu0 %v6591
  %v6755 = vpop.xlane.xlu0 %6754
  %6756 = vadd.xlane.f32.xlu0 %v6592
  %v6757 = vpop.xlane.xlu0 %6756
  %6758 = vadd.xlane.f32.xlu0 %v6593
  %v6759 = vpop.xlane.xlu0 %6758
  %6760 = vadd.xlane.f32.xlu0 %v6594
  %v6761 = vpop.xlane.xlu0 %6760
  %6762 = vadd.xlane.f32.xlu0 %v6595
  %v6763 = vpop.xlane.xlu0 %6762
  %6764 = vadd.xlane.f32.xlu0 %v6596
  %v6765 = vpop.xlane.xlu0 %6764
  %6766 = vadd.xlane.f32.xlu0 %v6597
  %v6767 = vpop.xlane.xlu0 %6766
  %6768 = vadd.xlane.f32.xlu0 %v6598
  %v6769 = vpop.xlane.xlu0 %6768
  %6770 = vadd.xlane.f32.xlu0 %v6599
  %v6771 = vpop.xlane.xlu0 %6770
  %6772 = vadd.xlane.f32.xlu0 %v6600
  %v6773 = vpop.xlane.xlu0 %6772
  %6774 = vadd.xlane.f32.xlu0 %v6601
  %v6775 = vpop.xlane.xlu0 %6774
  %6776 = vadd.xlane.f32.xlu0 %v6602
  %v6777 = vpop.xlane.xlu0 %6776
  %6778 = vadd.xlane.f32.xlu0 %v6603
  %v6779 = vpop.xlane.xlu0 %6778
  %6780 = vadd.xlane.f32.xlu0 %v6604
  %v6781 = vpop.xlane.xlu0 %6780
  %6782 = vadd.xlane.f32.xlu0 %v6605
  %v6783 = vpop.xlane.xlu0 %6782
  %6784 = vadd.xlane.f32.xlu0 %v6606
  %v6785 = vpop.xlane.xlu0 %6784
  %6786 = vadd.xlane.f32.xlu0 %v6607
  %v6787 = vpop.xlane.xlu0 %6786
  %6788 = vadd.xlane.f32.xlu0 %v6608
  %v6789 = vpop.xlane.xlu0 %6788
  %6790 = vadd.xlane.f32.xlu0 %v6609
  %v6791 = vpop.xlane.xlu0 %6790
  %6792 = vadd.xlane.f32.xlu0 %v6610
  %v6793 = vpop.xlane.xlu0 %6792
  %6794 = vadd.xlane.f32.xlu0 %v6611
  %v6795 = vpop.xlane.xlu0 %6794
  %6796 = vadd.xlane.f32.xlu0 %v6612
  %v6797 = vpop.xlane.xlu0 %6796
  %6798 = vadd.xlane.f32.xlu0 %v6613
  %v6799 = vpop.xlane.xlu0 %6798
  %6800 = vadd.xlane.f32.xlu0 %v6614
  %v6801 = vpop.xlane.xlu0 %6800
  %6802 = vadd.xlane.f32.xlu0 %v6615
  %v6803 = vpop.xlane.xlu0 %6802
  %6804 = vadd.xlane.f32.xlu0 %v6616
  %v6805 = vpop.xlane.xlu0 %6804
  %6806 = vadd.xlane.f32.xlu0 %v6617
  %v6807 = vpop.xlane.xlu0 %6806
  %6808 = vadd.xlane.f32.xlu0 %v6618
  %v6809 = vpop.xlane.xlu0 %6808
  %6810 = vadd.xlane.f32.xlu0 %v6619
  %v6811 = vpop.xlane.xlu0 %6810
  %6812 = vadd.xlane.f32.xlu0 %v6620
  %v6813 = vpop.xlane.xlu0 %6812
  %6814 = vadd.xlane.f32.xlu0 %v6621
  %v6815 = vpop.xlane.xlu0 %6814
  %6816 = vadd.xlane.f32.xlu0 %v6622
  %v6817 = vpop.xlane.xlu0 %6816
  %6818 = vadd.xlane.f32.xlu0 %v6623
  %v6819 = vpop.xlane.xlu0 %6818
  %6820 = vadd.xlane.f32.xlu0 %v6624
  %v6821 = vpop.xlane.xlu0 %6820
  %6822 = vadd.xlane.f32.xlu0 %v6625
  %v6823 = vpop.xlane.xlu0 %6822
  %6824 = vadd.xlane.f32.xlu0 %v6626
  %v6825 = vpop.xlane.xlu0 %6824
  %6826 = vadd.xlane.f32.xlu0 %v6627
  %v6827 = vpop.xlane.xlu0 %6826
  %6828 = vadd.xlane.f32.xlu0 %v6628
  %v6829 = vpop.xlane.xlu0 %6828
  %6830 = vadd.xlane.f32.xlu0 %v6629
  %v6831 = vpop.xlane.xlu0 %6830
  %6832 = vadd.xlane.f32.xlu0 %v6630
  %v6833 = vpop.xlane.xlu0 %6832
  %6834 = vadd.xlane.f32.xlu0 %v6631
  %v6835 = vpop.xlane.xlu0 %6834
  %6836 = vadd.xlane.f32.xlu0 %v6632
  %v6837 = vpop.xlane.xlu0 %6836
  %6838 = vadd.xlane.f32.xlu0 %v6633
  %v6839 = vpop.xlane.xlu0 %6838
  %6840 = vadd.xlane.f32.xlu0 %v6634
  %v6841 = vpop.xlane.xlu0 %6840
  %6842 = vadd.xlane.f32.xlu0 %v6635
  %v6843 = vpop.xlane.xlu0 %6842
  %6844 = vadd.xlane.f32.xlu0 %v6636
  %v6845 = vpop.xlane.xlu0 %6844
  %6846 = vadd.xlane.f32.xlu0 %v6637
  %v6847 = vpop.xlane.xlu0 %6846
  %6848 = vadd.xlane.f32.xlu0 %v6638
  %v6849 = vpop.xlane.xlu0 %6848
  %6850 = vadd.xlane.f32.xlu0 %v6639
  %v6851 = vpop.xlane.xlu0 %6850
  %6852 = vadd.xlane.f32.xlu0 %v6640
  %v6853 = vpop.xlane.xlu0 %6852
  %6854 = vadd.xlane.f32.xlu0 %v6641
  %v6855 = vpop.xlane.xlu0 %6854
  %6856 = vadd.xlane.f32.xlu0 %v6642
  %v6857 = vpop.xlane.xlu0 %6856
  %6858 = vadd.xlane.f32.xlu0 %v6643
  %v6859 = vpop.xlane.xlu0 %6858
  %6860 = vadd.xlane.f32.xlu0 %v6644
  %v6861 = vpop.xlane.xlu0 %6860
  %6862 = vadd.xlane.f32.xlu0 %v6645
  %v6863 = vpop.xlane.xlu0 %6862
  %6864 = vadd.xlane.f32.xlu0 %v6646
  %v6865 = vpop.xlane.xlu0 %6864
  %6866 = vadd.xlane.f32.xlu0 %v6647
  %v6867 = vpop.xlane.xlu0 %6866
  %6868 = vadd.xlane.f32.xlu0 %v6648
  %v6869 = vpop.xlane.xlu0 %6868
  %6870 = vadd.xlane.f32.xlu0 %v6649
  %v6871 = vpop.xlane.xlu0 %6870
  %6872 = vadd.xlane.f32.xlu0 %v6650
  %v6873 = vpop.xlane.xlu0 %6872
  %6874 = vadd.xlane.f32.xlu0 %v6651
  %v6875 = vpop.xlane.xlu0 %6874
  %6876 = vadd.xlane.f32.xlu0 %v6652
  %v6877 = vpop.xlane.xlu0 %6876
  %6878 = vadd.xlane.f32.xlu0 %v6653
  %v6879 = vpop.xlane.xlu0 %6878
  %6880 = vadd.xlane.f32.xlu0 %v6654
  %v6881 = vpop.xlane.xlu0 %6880
  %6882 = vadd.xlane.f32.xlu0 %v6655
  %v6883 = vpop.xlane.xlu0 %6882
  %6884 = vadd.xlane.f32.xlu0 %v6656
  %v6885 = vpop.xlane.xlu0 %6884
  %6886 = vadd.xlane.f32.xlu0 %v6657
  %v6887 = vpop.xlane.xlu0 %6886
  %6888 = vadd.xlane.f32.xlu0 %v6658
  %v6889 = vpop.xlane.xlu0 %6888
  %6890 = vadd.xlane.f32.xlu0 %v6659
  %v6891 = vpop.xlane.xlu0 %6890
  %6892 = vadd.xlane.f32.xlu0 %v6660
  %v6893 = vpop.xlane.xlu0 %6892
  %6894 = vadd.xlane.f32.xlu0 %v6661
  %v6895 = vpop.xlane.xlu0 %6894
  %6896 = vadd.xlane.f32.xlu0 %v6662
  %v6897 = vpop.xlane.xlu0 %6896
  %6898 = vadd.xlane.f32.xlu0 %v6663
  %v6899 = vpop.xlane.xlu0 %6898
  %6900 = vadd.xlane.f32.xlu0 %v6664
  %v6901 = vpop.xlane.xlu0 %6900
  %6902 = vadd.xlane.f32.xlu0 %v6665
  %v6903 = vpop.xlane.xlu0 %6902
  %6904 = vadd.xlane.f32.xlu0 %v6666
  %v6905 = vpop.xlane.xlu0 %6904
  %6906 = vadd.xlane.f32.xlu0 %v6667
  %v6907 = vpop.xlane.xlu0 %6906
  %6908 = vadd.xlane.f32.xlu0 %v6668
  %v6909 = vpop.xlane.xlu0 %6908
  %6910 = vadd.xlane.f32.xlu0 %v6669
  %v6911 = vpop.xlane.xlu0 %6910
  %6912 = vadd.xlane.f32.xlu0 %v6670
  %v6913 = vpop.xlane.xlu0 %6912
  %6914 = vadd.xlane.f32.xlu0 %v6671
  %v6915 = vpop.xlane.xlu0 %6914
  %6916 = vadd.xlane.f32.xlu0 %v6672
  %v6917 = vpop.xlane.xlu0 %6916
  %6918 = vadd.xlane.f32.xlu0 %v6673
  %v6919 = vpop.xlane.xlu0 %6918
  %6920 = vadd.xlane.f32.xlu0 %v6674
  %v6921 = vpop.xlane.xlu0 %6920
  %6922 = vadd.xlane.f32.xlu0 %v6675
  %v6923 = vpop.xlane.xlu0 %6922
  %6924 = vadd.xlane.f32.xlu0 %v6676
  %v6925 = vpop.xlane.xlu0 %6924
  %6926 = vadd.xlane.f32.xlu0 %v6677
  %v6927 = vpop.xlane.xlu0 %6926
  %6928 = vadd.xlane.f32.xlu0 %v6678
  %v6929 = vpop.xlane.xlu0 %6928
  %6930 = vadd.xlane.f32.xlu0 %v6679
  %v6931 = vpop.xlane.xlu0 %6930
  %6932 = vadd.xlane.f32.xlu0 %v6680
  %v6933 = vpop.xlane.xlu0 %6932
  %6934 = vadd.xlane.f32.xlu0 %v6681
  %v6935 = vpop.xlane.xlu0 %6934
  %6936 = vadd.xlane.f32.xlu0 %v6682
  %v6937 = vpop.xlane.xlu0 %6936
  %6938 = vadd.xlane.f32.xlu0 %v6683
  %v6939 = vpop.xlane.xlu0 %6938
  %v6940 = vld [vmem:[%s3] sm:$0xff]
  %v6942 = vlaneseq
  %v6943 = vshrl.u32 %v6942, 7
  %v6944 = vsub.s32 0, %v6943
  %v6945 = vrot.slane %v6940, %v6944
  %6947 = vbcast.lane.b32.xlu0 %v6945, 256
  %v6948 = vpop.permute.xlu0 %6947
  %s6950 = sor.u32 256, 8
  %6951 = vbcast.lane.b32.xlu0 %v6945, %s6950
  %v6952 = vpop.permute.xlu0 %6951
  %s6954 = sor.u32 256, 16
  %6955 = vbcast.lane.b32.xlu0 %v6945, %s6954
  %v6956 = vpop.permute.xlu0 %6955
  %s6958 = sor.u32 256, 24
  %6959 = vbcast.lane.b32.xlu0 %v6945, %s6958
  %v6960 = vpop.permute.xlu0 %6959
  %s6962 = sor.u32 256, 32
  %6963 = vbcast.lane.b32.xlu0 %v6945, %s6962
  %v6964 = vpop.permute.xlu0 %6963
  %s6966 = sor.u32 256, 40
  %6967 = vbcast.lane.b32.xlu0 %v6945, %s6966
  %v6968 = vpop.permute.xlu0 %6967
  %s6970 = sor.u32 256, 48
  %6971 = vbcast.lane.b32.xlu0 %v6945, %s6970
  %v6972 = vpop.permute.xlu0 %6971
  %s6974 = sor.u32 256, 56
  %6975 = vbcast.lane.b32.xlu0 %v6945, %s6974
  %v6976 = vpop.permute.xlu0 %6975
  %s6978 = sor.u32 256, 64
  %6979 = vbcast.lane.b32.xlu0 %v6945, %s6978
  %v6980 = vpop.permute.xlu0 %6979
  %s6982 = sor.u32 256, 72
  %6983 = vbcast.lane.b32.xlu0 %v6945, %s6982
  %v6984 = vpop.permute.xlu0 %6983
  %s6986 = sor.u32 256, 80
  %6987 = vbcast.lane.b32.xlu0 %v6945, %s6986
  %v6988 = vpop.permute.xlu0 %6987
  %s6990 = sor.u32 256, 88
  %6991 = vbcast.lane.b32.xlu0 %v6945, %s6990
  %v6992 = vpop.permute.xlu0 %6991
  %s6994 = sor.u32 256, 96
  %6995 = vbcast.lane.b32.xlu0 %v6945, %s6994
  %v6996 = vpop.permute.xlu0 %6995
  %s6998 = sor.u32 256, 104
  %6999 = vbcast.lane.b32.xlu0 %v6945, %s6998
  %v7000 = vpop.permute.xlu0 %6999
  %s7002 = sor.u32 256, 112
  %7003 = vbcast.lane.b32.xlu0 %v6945, %s7002
  %v7004 = vpop.permute.xlu0 %7003
  %s7006 = sor.u32 256, 120
  %7007 = vbcast.lane.b32.xlu0 %v6945, %s7006
  %v7008 = vpop.permute.xlu0 %7007
  %v7009 = vlaneseq
  %v7010 = vshrl.u32 %v7009, 7
  %v7011 = vsub.s32 1, %v7010
  %v7012 = vrot.slane %v6940, %v7011
  %7014 = vbcast.lane.b32.xlu0 %v7012, 256
  %v7015 = vpop.permute.xlu0 %7014
  %s7017 = sor.u32 256, 8
  %7018 = vbcast.lane.b32.xlu0 %v7012, %s7017
  %v7019 = vpop.permute.xlu0 %7018
  %s7021 = sor.u32 256, 16
  %7022 = vbcast.lane.b32.xlu0 %v7012, %s7021
  %v7023 = vpop.permute.xlu0 %7022
  %s7025 = sor.u32 256, 24
  %7026 = vbcast.lane.b32.xlu0 %v7012, %s7025
  %v7027 = vpop.permute.xlu0 %7026
  %s7029 = sor.u32 256, 32
  %7030 = vbcast.lane.b32.xlu0 %v7012, %s7029
  %v7031 = vpop.permute.xlu0 %7030
  %s7033 = sor.u32 256, 40
  %7034 = vbcast.lane.b32.xlu0 %v7012, %s7033
  %v7035 = vpop.permute.xlu0 %7034
  %s7037 = sor.u32 256, 48
  %7038 = vbcast.lane.b32.xlu0 %v7012, %s7037
  %v7039 = vpop.permute.xlu0 %7038
  %s7041 = sor.u32 256, 56
  %7042 = vbcast.lane.b32.xlu0 %v7012, %s7041
  %v7043 = vpop.permute.xlu0 %7042
  %s7045 = sor.u32 256, 64
  %7046 = vbcast.lane.b32.xlu0 %v7012, %s7045
  %v7047 = vpop.permute.xlu0 %7046
  %s7049 = sor.u32 256, 72
  %7050 = vbcast.lane.b32.xlu0 %v7012, %s7049
  %v7051 = vpop.permute.xlu0 %7050
  %s7053 = sor.u32 256, 80
  %7054 = vbcast.lane.b32.xlu0 %v7012, %s7053
  %v7055 = vpop.permute.xlu0 %7054
  %s7057 = sor.u32 256, 88
  %7058 = vbcast.lane.b32.xlu0 %v7012, %s7057
  %v7059 = vpop.permute.xlu0 %7058
  %s7061 = sor.u32 256, 96
  %7062 = vbcast.lane.b32.xlu0 %v7012, %s7061
  %v7063 = vpop.permute.xlu0 %7062
  %s7065 = sor.u32 256, 104
  %7066 = vbcast.lane.b32.xlu0 %v7012, %s7065
  %v7067 = vpop.permute.xlu0 %7066
  %s7069 = sor.u32 256, 112
  %7070 = vbcast.lane.b32.xlu0 %v7012, %s7069
  %v7071 = vpop.permute.xlu0 %7070
  %s7073 = sor.u32 256, 120
  %7074 = vbcast.lane.b32.xlu0 %v7012, %s7073
  %v7075 = vpop.permute.xlu0 %7074
  %v7076 = vlaneseq
  %v7077 = vshrl.u32 %v7076, 7
  %v7078 = vsub.s32 2, %v7077
  %v7079 = vrot.slane %v6940, %v7078
  %7081 = vbcast.lane.b32.xlu0 %v7079, 256
  %v7082 = vpop.permute.xlu0 %7081
  %s7084 = sor.u32 256, 8
  %7085 = vbcast.lane.b32.xlu0 %v7079, %s7084
  %v7086 = vpop.permute.xlu0 %7085
  %s7088 = sor.u32 256, 16
  %7089 = vbcast.lane.b32.xlu0 %v7079, %s7088
  %v7090 = vpop.permute.xlu0 %7089
  %s7092 = sor.u32 256, 24
  %7093 = vbcast.lane.b32.xlu0 %v7079, %s7092
  %v7094 = vpop.permute.xlu0 %7093
  %s7096 = sor.u32 256, 32
  %7097 = vbcast.lane.b32.xlu0 %v7079, %s7096
  %v7098 = vpop.permute.xlu0 %7097
  %s7100 = sor.u32 256, 40
  %7101 = vbcast.lane.b32.xlu0 %v7079, %s7100
  %v7102 = vpop.permute.xlu0 %7101
  %s7104 = sor.u32 256, 48
  %7105 = vbcast.lane.b32.xlu0 %v7079, %s7104
  %v7106 = vpop.permute.xlu0 %7105
  %s7108 = sor.u32 256, 56
  %7109 = vbcast.lane.b32.xlu0 %v7079, %s7108
  %v7110 = vpop.permute.xlu0 %7109
  %s7112 = sor.u32 256, 64
  %7113 = vbcast.lane.b32.xlu0 %v7079, %s7112
  %v7114 = vpop.permute.xlu0 %7113
  %s7116 = sor.u32 256, 72
  %7117 = vbcast.lane.b32.xlu0 %v7079, %s7116
  %v7118 = vpop.permute.xlu0 %7117
  %s7120 = sor.u32 256, 80
  %7121 = vbcast.lane.b32.xlu0 %v7079, %s7120
  %v7122 = vpop.permute.xlu0 %7121
  %s7124 = sor.u32 256, 88
  %7125 = vbcast.lane.b32.xlu0 %v7079, %s7124
  %v7126 = vpop.permute.xlu0 %7125
  %s7128 = sor.u32 256, 96
  %7129 = vbcast.lane.b32.xlu0 %v7079, %s7128
  %v7130 = vpop.permute.xlu0 %7129
  %s7132 = sor.u32 256, 104
  %7133 = vbcast.lane.b32.xlu0 %v7079, %s7132
  %v7134 = vpop.permute.xlu0 %7133
  %s7136 = sor.u32 256, 112
  %7137 = vbcast.lane.b32.xlu0 %v7079, %s7136
  %v7138 = vpop.permute.xlu0 %7137
  %s7140 = sor.u32 256, 120
  %7141 = vbcast.lane.b32.xlu0 %v7079, %s7140
  %v7142 = vpop.permute.xlu0 %7141
  %v7143 = vlaneseq
  %v7144 = vshrl.u32 %v7143, 7
  %v7145 = vsub.s32 3, %v7144
  %v7146 = vrot.slane %v6940, %v7145
  %7148 = vbcast.lane.b32.xlu0 %v7146, 256
  %v7149 = vpop.permute.xlu0 %7148
  %s7151 = sor.u32 256, 8
  %7152 = vbcast.lane.b32.xlu0 %v7146, %s7151
  %v7153 = vpop.permute.xlu0 %7152
  %s7155 = sor.u32 256, 16
  %7156 = vbcast.lane.b32.xlu0 %v7146, %s7155
  %v7157 = vpop.permute.xlu0 %7156
  %s7159 = sor.u32 256, 24
  %7160 = vbcast.lane.b32.xlu0 %v7146, %s7159
  %v7161 = vpop.permute.xlu0 %7160
  %s7163 = sor.u32 256, 32
  %7164 = vbcast.lane.b32.xlu0 %v7146, %s7163
  %v7165 = vpop.permute.xlu0 %7164
  %s7167 = sor.u32 256, 40
  %7168 = vbcast.lane.b32.xlu0 %v7146, %s7167
  %v7169 = vpop.permute.xlu0 %7168
  %s7171 = sor.u32 256, 48
  %7172 = vbcast.lane.b32.xlu0 %v7146, %s7171
  %v7173 = vpop.permute.xlu0 %7172
  %s7175 = sor.u32 256, 56
  %7176 = vbcast.lane.b32.xlu0 %v7146, %s7175
  %v7177 = vpop.permute.xlu0 %7176
  %s7179 = sor.u32 256, 64
  %7180 = vbcast.lane.b32.xlu0 %v7146, %s7179
  %v7181 = vpop.permute.xlu0 %7180
  %s7183 = sor.u32 256, 72
  %7184 = vbcast.lane.b32.xlu0 %v7146, %s7183
  %v7185 = vpop.permute.xlu0 %7184
  %s7187 = sor.u32 256, 80
  %7188 = vbcast.lane.b32.xlu0 %v7146, %s7187
  %v7189 = vpop.permute.xlu0 %7188
  %s7191 = sor.u32 256, 88
  %7192 = vbcast.lane.b32.xlu0 %v7146, %s7191
  %v7193 = vpop.permute.xlu0 %7192
  %s7195 = sor.u32 256, 96
  %7196 = vbcast.lane.b32.xlu0 %v7146, %s7195
  %v7197 = vpop.permute.xlu0 %7196
  %s7199 = sor.u32 256, 104
  %7200 = vbcast.lane.b32.xlu0 %v7146, %s7199
  %v7201 = vpop.permute.xlu0 %7200
  %s7203 = sor.u32 256, 112
  %7204 = vbcast.lane.b32.xlu0 %v7146, %s7203
  %v7205 = vpop.permute.xlu0 %7204
  %s7207 = sor.u32 256, 120
  %7208 = vbcast.lane.b32.xlu0 %v7146, %s7207
  %v7209 = vpop.permute.xlu0 %7208
  %v7210 = vlaneseq
  %v7211 = vshrl.u32 %v7210, 7
  %v7212 = vsub.s32 4, %v7211
  %v7213 = vrot.slane %v6940, %v7212
  %7215 = vbcast.lane.b32.xlu0 %v7213, 256
  %v7216 = vpop.permute.xlu0 %7215
  %s7218 = sor.u32 256, 8
  %7219 = vbcast.lane.b32.xlu0 %v7213, %s7218
  %v7220 = vpop.permute.xlu0 %7219
  %s7222 = sor.u32 256, 16
  %7223 = vbcast.lane.b32.xlu0 %v7213, %s7222
  %v7224 = vpop.permute.xlu0 %7223
  %s7226 = sor.u32 256, 24
  %7227 = vbcast.lane.b32.xlu0 %v7213, %s7226
  %v7228 = vpop.permute.xlu0 %7227
  %s7230 = sor.u32 256, 32
  %7231 = vbcast.lane.b32.xlu0 %v7213, %s7230
  %v7232 = vpop.permute.xlu0 %7231
  %s7234 = sor.u32 256, 40
  %7235 = vbcast.lane.b32.xlu0 %v7213, %s7234
  %v7236 = vpop.permute.xlu0 %7235
  %s7238 = sor.u32 256, 48
  %7239 = vbcast.lane.b32.xlu0 %v7213, %s7238
  %v7240 = vpop.permute.xlu0 %7239
  %s7242 = sor.u32 256, 56
  %7243 = vbcast.lane.b32.xlu0 %v7213, %s7242
  %v7244 = vpop.permute.xlu0 %7243
  %s7246 = sor.u32 256, 64
  %7247 = vbcast.lane.b32.xlu0 %v7213, %s7246
  %v7248 = vpop.permute.xlu0 %7247
  %s7250 = sor.u32 256, 72
  %7251 = vbcast.lane.b32.xlu0 %v7213, %s7250
  %v7252 = vpop.permute.xlu0 %7251
  %s7254 = sor.u32 256, 80
  %7255 = vbcast.lane.b32.xlu0 %v7213, %s7254
  %v7256 = vpop.permute.xlu0 %7255
  %s7258 = sor.u32 256, 88
  %7259 = vbcast.lane.b32.xlu0 %v7213, %s7258
  %v7260 = vpop.permute.xlu0 %7259
  %s7262 = sor.u32 256, 96
  %7263 = vbcast.lane.b32.xlu0 %v7213, %s7262
  %v7264 = vpop.permute.xlu0 %7263
  %s7266 = sor.u32 256, 104
  %7267 = vbcast.lane.b32.xlu0 %v7213, %s7266
  %v7268 = vpop.permute.xlu0 %7267
  %s7270 = sor.u32 256, 112
  %7271 = vbcast.lane.b32.xlu0 %v7213, %s7270
  %v7272 = vpop.permute.xlu0 %7271
  %s7274 = sor.u32 256, 120
  %7275 = vbcast.lane.b32.xlu0 %v7213, %s7274
  %v7276 = vpop.permute.xlu0 %7275
  %v7277 = vlaneseq
  %v7278 = vshrl.u32 %v7277, 7
  %v7279 = vsub.s32 5, %v7278
  %v7280 = vrot.slane %v6940, %v7279
  %7282 = vbcast.lane.b32.xlu0 %v7280, 256
  %v7283 = vpop.permute.xlu0 %7282
  %s7285 = sor.u32 256, 8
  %7286 = vbcast.lane.b32.xlu0 %v7280, %s7285
  %v7287 = vpop.permute.xlu0 %7286
  %s7289 = sor.u32 256, 16
  %7290 = vbcast.lane.b32.xlu0 %v7280, %s7289
  %v7291 = vpop.permute.xlu0 %7290
  %s7293 = sor.u32 256, 24
  %7294 = vbcast.lane.b32.xlu0 %v7280, %s7293
  %v7295 = vpop.permute.xlu0 %7294
  %s7297 = sor.u32 256, 32
  %7298 = vbcast.lane.b32.xlu0 %v7280, %s7297
  %v7299 = vpop.permute.xlu0 %7298
  %s7301 = sor.u32 256, 40
  %7302 = vbcast.lane.b32.xlu0 %v7280, %s7301
  %v7303 = vpop.permute.xlu0 %7302
  %s7305 = sor.u32 256, 48
  %7306 = vbcast.lane.b32.xlu0 %v7280, %s7305
  %v7307 = vpop.permute.xlu0 %7306
  %s7309 = sor.u32 256, 56
  %7310 = vbcast.lane.b32.xlu0 %v7280, %s7309
  %v7311 = vpop.permute.xlu0 %7310
  %s7313 = sor.u32 256, 64
  %7314 = vbcast.lane.b32.xlu0 %v7280, %s7313
  %v7315 = vpop.permute.xlu0 %7314
  %s7317 = sor.u32 256, 72
  %7318 = vbcast.lane.b32.xlu0 %v7280, %s7317
  %v7319 = vpop.permute.xlu0 %7318
  %s7321 = sor.u32 256, 80
  %7322 = vbcast.lane.b32.xlu0 %v7280, %s7321
  %v7323 = vpop.permute.xlu0 %7322
  %s7325 = sor.u32 256, 88
  %7326 = vbcast.lane.b32.xlu0 %v7280, %s7325
  %v7327 = vpop.permute.xlu0 %7326
  %s7329 = sor.u32 256, 96
  %7330 = vbcast.lane.b32.xlu0 %v7280, %s7329
  %v7331 = vpop.permute.xlu0 %7330
  %s7333 = sor.u32 256, 104
  %7334 = vbcast.lane.b32.xlu0 %v7280, %s7333
  %v7335 = vpop.permute.xlu0 %7334
  %s7337 = sor.u32 256, 112
  %7338 = vbcast.lane.b32.xlu0 %v7280, %s7337
  %v7339 = vpop.permute.xlu0 %7338
  %s7341 = sor.u32 256, 120
  %7342 = vbcast.lane.b32.xlu0 %v7280, %s7341
  %v7343 = vpop.permute.xlu0 %7342
  %v7344 = vlaneseq
  %v7345 = vshrl.u32 %v7344, 7
  %v7346 = vsub.s32 6, %v7345
  %v7347 = vrot.slane %v6940, %v7346
  %7349 = vbcast.lane.b32.xlu0 %v7347, 256
  %v7350 = vpop.permute.xlu0 %7349
  %s7352 = sor.u32 256, 8
  %7353 = vbcast.lane.b32.xlu0 %v7347, %s7352
  %v7354 = vpop.permute.xlu0 %7353
  %s7356 = sor.u32 256, 16
  %7357 = vbcast.lane.b32.xlu0 %v7347, %s7356
  %v7358 = vpop.permute.xlu0 %7357
  %s7360 = sor.u32 256, 24
  %7361 = vbcast.lane.b32.xlu0 %v7347, %s7360
  %v7362 = vpop.permute.xlu0 %7361
  %s7364 = sor.u32 256, 32
  %7365 = vbcast.lane.b32.xlu0 %v7347, %s7364
  %v7366 = vpop.permute.xlu0 %7365
  %s7368 = sor.u32 256, 40
  %7369 = vbcast.lane.b32.xlu0 %v7347, %s7368
  %v7370 = vpop.permute.xlu0 %7369
  %s7372 = sor.u32 256, 48
  %7373 = vbcast.lane.b32.xlu0 %v7347, %s7372
  %v7374 = vpop.permute.xlu0 %7373
  %s7376 = sor.u32 256, 56
  %7377 = vbcast.lane.b32.xlu0 %v7347, %s7376
  %v7378 = vpop.permute.xlu0 %7377
  %s7380 = sor.u32 256, 64
  %7381 = vbcast.lane.b32.xlu0 %v7347, %s7380
  %v7382 = vpop.permute.xlu0 %7381
  %s7384 = sor.u32 256, 72
  %7385 = vbcast.lane.b32.xlu0 %v7347, %s7384
  %v7386 = vpop.permute.xlu0 %7385
  %s7388 = sor.u32 256, 80
  %7389 = vbcast.lane.b32.xlu0 %v7347, %s7388
  %v7390 = vpop.permute.xlu0 %7389
  %s7392 = sor.u32 256, 88
  %7393 = vbcast.lane.b32.xlu0 %v7347, %s7392
  %v7394 = vpop.permute.xlu0 %7393
  %s7396 = sor.u32 256, 96
  %7397 = vbcast.lane.b32.xlu0 %v7347, %s7396
  %v7398 = vpop.permute.xlu0 %7397
  %s7400 = sor.u32 256, 104
  %7401 = vbcast.lane.b32.xlu0 %v7347, %s7400
  %v7402 = vpop.permute.xlu0 %7401
  %s7404 = sor.u32 256, 112
  %7405 = vbcast.lane.b32.xlu0 %v7347, %s7404
  %v7406 = vpop.permute.xlu0 %7405
  %s7408 = sor.u32 256, 120
  %7409 = vbcast.lane.b32.xlu0 %v7347, %s7408
  %v7410 = vpop.permute.xlu0 %7409
  %v7411 = vlaneseq
  %v7412 = vshrl.u32 %v7411, 7
  %v7413 = vsub.s32 7, %v7412
  %v7414 = vrot.slane %v6940, %v7413
  %7416 = vbcast.lane.b32.xlu0 %v7414, 256
  %v7417 = vpop.permute.xlu0 %7416
  %s7419 = sor.u32 256, 8
  %7420 = vbcast.lane.b32.xlu0 %v7414, %s7419
  %v7421 = vpop.permute.xlu0 %7420
  %s7423 = sor.u32 256, 16
  %7424 = vbcast.lane.b32.xlu0 %v7414, %s7423
  %v7425 = vpop.permute.xlu0 %7424
  %s7427 = sor.u32 256, 24
  %7428 = vbcast.lane.b32.xlu0 %v7414, %s7427
  %v7429 = vpop.permute.xlu0 %7428
  %s7431 = sor.u32 256, 32
  %7432 = vbcast.lane.b32.xlu0 %v7414, %s7431
  %v7433 = vpop.permute.xlu0 %7432
  %s7435 = sor.u32 256, 40
  %7436 = vbcast.lane.b32.xlu0 %v7414, %s7435
  %v7437 = vpop.permute.xlu0 %7436
  %s7439 = sor.u32 256, 48
  %7440 = vbcast.lane.b32.xlu0 %v7414, %s7439
  %v7441 = vpop.permute.xlu0 %7440
  %s7443 = sor.u32 256, 56
  %7444 = vbcast.lane.b32.xlu0 %v7414, %s7443
  %v7445 = vpop.permute.xlu0 %7444
  %s7447 = sor.u32 256, 64
  %7448 = vbcast.lane.b32.xlu0 %v7414, %s7447
  %v7449 = vpop.permute.xlu0 %7448
  %s7451 = sor.u32 256, 72
  %7452 = vbcast.lane.b32.xlu0 %v7414, %s7451
  %v7453 = vpop.permute.xlu0 %7452
  %s7455 = sor.u32 256, 80
  %7456 = vbcast.lane.b32.xlu0 %v7414, %s7455
  %v7457 = vpop.permute.xlu0 %7456
  %s7459 = sor.u32 256, 88
  %7460 = vbcast.lane.b32.xlu0 %v7414, %s7459
  %v7461 = vpop.permute.xlu0 %7460
  %s7463 = sor.u32 256, 96
  %7464 = vbcast.lane.b32.xlu0 %v7414, %s7463
  %v7465 = vpop.permute.xlu0 %7464
  %s7467 = sor.u32 256, 104
  %7468 = vbcast.lane.b32.xlu0 %v7414, %s7467
  %v7469 = vpop.permute.xlu0 %7468
  %s7471 = sor.u32 256, 112
  %7472 = vbcast.lane.b32.xlu0 %v7414, %s7471
  %v7473 = vpop.permute.xlu0 %7472
  %s7475 = sor.u32 256, 120
  %7476 = vbcast.lane.b32.xlu0 %v7414, %s7475
  %v7477 = vpop.permute.xlu0 %7476
  %v7606 = vadd.f32 %v6685, %v6948
  %v7607 = vadd.f32 %v6687, %v6952
  %v7608 = vadd.f32 %v6689, %v6956
  %v7609 = vadd.f32 %v6691, %v6960
  %v7610 = vadd.f32 %v6693, %v6964
  %v7611 = vadd.f32 %v6695, %v6968
  %v7612 = vadd.f32 %v6697, %v6972
  %v7613 = vadd.f32 %v6699, %v6976
  %v7614 = vadd.f32 %v6701, %v6980
  %v7615 = vadd.f32 %v6703, %v6984
  %v7616 = vadd.f32 %v6705, %v6988
  %v7617 = vadd.f32 %v6707, %v6992
  %v7618 = vadd.f32 %v6709, %v6996
  %v7619 = vadd.f32 %v6711, %v7000
  %v7620 = vadd.f32 %v6713, %v7004
  %v7621 = vadd.f32 %v6715, %v7008
  %v7622 = vadd.f32 %v6717, %v7015
  %v7623 = vadd.f32 %v6719, %v7019
  %v7624 = vadd.f32 %v6721, %v7023
  %v7625 = vadd.f32 %v6723, %v7027
  %v7626 = vadd.f32 %v6725, %v7031
  %v7627 = vadd.f32 %v6727, %v7035
  %v7628 = vadd.f32 %v6729, %v7039
  %v7629 = vadd.f32 %v6731, %v7043
  %v7630 = vadd.f32 %v6733, %v7047
  %v7631 = vadd.f32 %v6735, %v7051
  %v7632 = vadd.f32 %v6737, %v7055
  %v7633 = vadd.f32 %v6739, %v7059
  %v7634 = vadd.f32 %v6741, %v7063
  %v7635 = vadd.f32 %v6743, %v7067
  %v7636 = vadd.f32 %v6745, %v7071
  %v7637 = vadd.f32 %v6747, %v7075
  %v7638 = vadd.f32 %v6749, %v7082
  %v7639 = vadd.f32 %v6751, %v7086
  %v7640 = vadd.f32 %v6753, %v7090
  %v7641 = vadd.f32 %v6755, %v7094
  %v7642 = vadd.f32 %v6757, %v7098
  %v7643 = vadd.f32 %v6759, %v7102
  %v7644 = vadd.f32 %v6761, %v7106
  %v7645 = vadd.f32 %v6763, %v7110
  %v7646 = vadd.f32 %v6765, %v7114
  %v7647 = vadd.f32 %v6767, %v7118
  %v7648 = vadd.f32 %v6769, %v7122
  %v7649 = vadd.f32 %v6771, %v7126
  %v7650 = vadd.f32 %v6773, %v7130
  %v7651 = vadd.f32 %v6775, %v7134
  %v7652 = vadd.f32 %v6777, %v7138
  %v7653 = vadd.f32 %v6779, %v7142
  %v7654 = vadd.f32 %v6781, %v7149
  %v7655 = vadd.f32 %v6783, %v7153
  %v7656 = vadd.f32 %v6785, %v7157
  %v7657 = vadd.f32 %v6787, %v7161
  %v7658 = vadd.f32 %v6789, %v7165
  %v7659 = vadd.f32 %v6791, %v7169
  %v7660 = vadd.f32 %v6793, %v7173
  %v7661 = vadd.f32 %v6795, %v7177
  %v7662 = vadd.f32 %v6797, %v7181
  %v7663 = vadd.f32 %v6799, %v7185
  %v7664 = vadd.f32 %v6801, %v7189
  %v7665 = vadd.f32 %v6803, %v7193
  %v7666 = vadd.f32 %v6805, %v7197
  %v7667 = vadd.f32 %v6807, %v7201
  %v7668 = vadd.f32 %v6809, %v7205
  %v7669 = vadd.f32 %v6811, %v7209
  %v7670 = vadd.f32 %v6813, %v7216
  %v7671 = vadd.f32 %v6815, %v7220
  %v7672 = vadd.f32 %v6817, %v7224
  %v7673 = vadd.f32 %v6819, %v7228
  %v7674 = vadd.f32 %v6821, %v7232
  %v7675 = vadd.f32 %v6823, %v7236
  %v7676 = vadd.f32 %v6825, %v7240
  %v7677 = vadd.f32 %v6827, %v7244
  %v7678 = vadd.f32 %v6829, %v7248
  %v7679 = vadd.f32 %v6831, %v7252
  %v7680 = vadd.f32 %v6833, %v7256
  %v7681 = vadd.f32 %v6835, %v7260
  %v7682 = vadd.f32 %v6837, %v7264
  %v7683 = vadd.f32 %v6839, %v7268
  %v7684 = vadd.f32 %v6841, %v7272
  %v7685 = vadd.f32 %v6843, %v7276
  %v7686 = vadd.f32 %v6845, %v7283
  %v7687 = vadd.f32 %v6847, %v7287
  %v7688 = vadd.f32 %v6849, %v7291
  %v7689 = vadd.f32 %v6851, %v7295
  %v7690 = vadd.f32 %v6853, %v7299
  %v7691 = vadd.f32 %v6855, %v7303
  %v7692 = vadd.f32 %v6857, %v7307
  %v7693 = vadd.f32 %v6859, %v7311
  %v7694 = vadd.f32 %v6861, %v7315
  %v7695 = vadd.f32 %v6863, %v7319
  %v7696 = vadd.f32 %v6865, %v7323
  %v7697 = vadd.f32 %v6867, %v7327
  %v7698 = vadd.f32 %v6869, %v7331
  %v7699 = vadd.f32 %v6871, %v7335
  %v7700 = vadd.f32 %v6873, %v7339
  %v7701 = vadd.f32 %v6875, %v7343
  %v7702 = vadd.f32 %v6877, %v7350
  %v7703 = vadd.f32 %v6879, %v7354
  %v7704 = vadd.f32 %v6881, %v7358
  %v7705 = vadd.f32 %v6883, %v7362
  %v7706 = vadd.f32 %v6885, %v7366
  %v7707 = vadd.f32 %v6887, %v7370
  %v7708 = vadd.f32 %v6889, %v7374
  %v7709 = vadd.f32 %v6891, %v7378
  %v7710 = vadd.f32 %v6893, %v7382
  %v7711 = vadd.f32 %v6895, %v7386
  %v7712 = vadd.f32 %v6897, %v7390
  %v7713 = vadd.f32 %v6899, %v7394
  %v7714 = vadd.f32 %v6901, %v7398
  %v7715 = vadd.f32 %v6903, %v7402
  %v7716 = vadd.f32 %v6905, %v7406
  %v7717 = vadd.f32 %v6907, %v7410
  %v7718 = vadd.f32 %v6909, %v7417
  %v7719 = vadd.f32 %v6911, %v7421
  %v7720 = vadd.f32 %v6913, %v7425
  %v7721 = vadd.f32 %v6915, %v7429
  %v7722 = vadd.f32 %v6917, %v7433
  %v7723 = vadd.f32 %v6919, %v7437
  %v7724 = vadd.f32 %v6921, %v7441
  %v7725 = vadd.f32 %v6923, %v7445
  %v7726 = vadd.f32 %v6925, %v7449
  %v7727 = vadd.f32 %v6927, %v7453
  %v7728 = vadd.f32 %v6929, %v7457
  %v7729 = vadd.f32 %v6931, %v7461
  %v7730 = vadd.f32 %v6933, %v7465
  %v7731 = vadd.f32 %v6935, %v7469
  %v7732 = vadd.f32 %v6937, %v7473
  %v7733 = vadd.f32 %v6939, %v7477
  %7862 = vset.pattern.permute.xlu0 0
  %7863 = vperm.xlu0 %7862, %v7606
  %v7864 = vpop.permute.xlu0 %7863
  %7865 = vset.pattern.permute.xlu0 0
  %7866 = vperm.xlu0 %7865, %v7607
  %v7867 = vpop.permute.xlu0 %7866
  %7868 = vset.pattern.permute.xlu0 0
  %7869 = vperm.xlu0 %7868, %v7608
  %v7870 = vpop.permute.xlu0 %7869
  %7871 = vset.pattern.permute.xlu0 0
  %7872 = vperm.xlu0 %7871, %v7609
  %v7873 = vpop.permute.xlu0 %7872
  %7874 = vset.pattern.permute.xlu0 0
  %7875 = vperm.xlu0 %7874, %v7610
  %v7876 = vpop.permute.xlu0 %7875
  %7877 = vset.pattern.permute.xlu0 0
  %7878 = vperm.xlu0 %7877, %v7611
  %v7879 = vpop.permute.xlu0 %7878
  %7880 = vset.pattern.permute.xlu0 0
  %7881 = vperm.xlu0 %7880, %v7612
  %v7882 = vpop.permute.xlu0 %7881
  %7883 = vset.pattern.permute.xlu0 0
  %7884 = vperm.xlu0 %7883, %v7613
  %v7885 = vpop.permute.xlu0 %7884
  %7886 = vset.pattern.permute.xlu0 0
  %7887 = vperm.xlu0 %7886, %v7614
  %v7888 = vpop.permute.xlu0 %7887
  %7889 = vset.pattern.permute.xlu0 0
  %7890 = vperm.xlu0 %7889, %v7615
  %v7891 = vpop.permute.xlu0 %7890
  %7892 = vset.pattern.permute.xlu0 0
  %7893 = vperm.xlu0 %7892, %v7616
  %v7894 = vpop.permute.xlu0 %7893
  %7895 = vset.pattern.permute.xlu0 0
  %7896 = vperm.xlu0 %7895, %v7617
  %v7897 = vpop.permute.xlu0 %7896
  %7898 = vset.pattern.permute.xlu0 0
  %7899 = vperm.xlu0 %7898, %v7618
  %v7900 = vpop.permute.xlu0 %7899
  %7901 = vset.pattern.permute.xlu0 0
  %7902 = vperm.xlu0 %7901, %v7619
  %v7903 = vpop.permute.xlu0 %7902
  %7904 = vset.pattern.permute.xlu0 0
  %7905 = vperm.xlu0 %7904, %v7620
  %v7906 = vpop.permute.xlu0 %7905
  %7907 = vset.pattern.permute.xlu0 0
  %7908 = vperm.xlu0 %7907, %v7621
  %v7909 = vpop.permute.xlu0 %7908
  %7910 = vset.pattern.permute.xlu0 0
  %7911 = vperm.xlu0 %7910, %v7622
  %v7912 = vpop.permute.xlu0 %7911
  %7913 = vset.pattern.permute.xlu0 0
  %7914 = vperm.xlu0 %7913, %v7623
  %v7915 = vpop.permute.xlu0 %7914
  %7916 = vset.pattern.permute.xlu0 0
  %7917 = vperm.xlu0 %7916, %v7624
  %v7918 = vpop.permute.xlu0 %7917
  %7919 = vset.pattern.permute.xlu0 0
  %7920 = vperm.xlu0 %7919, %v7625
  %v7921 = vpop.permute.xlu0 %7920
  %7922 = vset.pattern.permute.xlu0 0
  %7923 = vperm.xlu0 %7922, %v7626
  %v7924 = vpop.permute.xlu0 %7923
  %7925 = vset.pattern.permute.xlu0 0
  %7926 = vperm.xlu0 %7925, %v7627
  %v7927 = vpop.permute.xlu0 %7926
  %7928 = vset.pattern.permute.xlu0 0
  %7929 = vperm.xlu0 %7928, %v7628
  %v7930 = vpop.permute.xlu0 %7929
  %7931 = vset.pattern.permute.xlu0 0
  %7932 = vperm.xlu0 %7931, %v7629
  %v7933 = vpop.permute.xlu0 %7932
  %7934 = vset.pattern.permute.xlu0 0
  %7935 = vperm.xlu0 %7934, %v7630
  %v7936 = vpop.permute.xlu0 %7935
  %7937 = vset.pattern.permute.xlu0 0
  %7938 = vperm.xlu0 %7937, %v7631
  %v7939 = vpop.permute.xlu0 %7938
  %7940 = vset.pattern.permute.xlu0 0
  %7941 = vperm.xlu0 %7940, %v7632
  %v7942 = vpop.permute.xlu0 %7941
  %7943 = vset.pattern.permute.xlu0 0
  %7944 = vperm.xlu0 %7943, %v7633
  %v7945 = vpop.permute.xlu0 %7944
  %7946 = vset.pattern.permute.xlu0 0
  %7947 = vperm.xlu0 %7946, %v7634
  %v7948 = vpop.permute.xlu0 %7947
  %7949 = vset.pattern.permute.xlu0 0
  %7950 = vperm.xlu0 %7949, %v7635
  %v7951 = vpop.permute.xlu0 %7950
  %7952 = vset.pattern.permute.xlu0 0
  %7953 = vperm.xlu0 %7952, %v7636
  %v7954 = vpop.permute.xlu0 %7953
  %7955 = vset.pattern.permute.xlu0 0
  %7956 = vperm.xlu0 %7955, %v7637
  %v7957 = vpop.permute.xlu0 %7956
  %7958 = vset.pattern.permute.xlu0 0
  %7959 = vperm.xlu0 %7958, %v7638
  %v7960 = vpop.permute.xlu0 %7959
  %7961 = vset.pattern.permute.xlu0 0
  %7962 = vperm.xlu0 %7961, %v7639
  %v7963 = vpop.permute.xlu0 %7962
  %7964 = vset.pattern.permute.xlu0 0
  %7965 = vperm.xlu0 %7964, %v7640
  %v7966 = vpop.permute.xlu0 %7965
  %7967 = vset.pattern.permute.xlu0 0
  %7968 = vperm.xlu0 %7967, %v7641
  %v7969 = vpop.permute.xlu0 %7968
  %7970 = vset.pattern.permute.xlu0 0
  %7971 = vperm.xlu0 %7970, %v7642
  %v7972 = vpop.permute.xlu0 %7971
  %7973 = vset.pattern.permute.xlu0 0
  %7974 = vperm.xlu0 %7973, %v7643
  %v7975 = vpop.permute.xlu0 %7974
  %7976 = vset.pattern.permute.xlu0 0
  %7977 = vperm.xlu0 %7976, %v7644
  %v7978 = vpop.permute.xlu0 %7977
  %7979 = vset.pattern.permute.xlu0 0
  %7980 = vperm.xlu0 %7979, %v7645
  %v7981 = vpop.permute.xlu0 %7980
  %7982 = vset.pattern.permute.xlu0 0
  %7983 = vperm.xlu0 %7982, %v7646
  %v7984 = vpop.permute.xlu0 %7983
  %7985 = vset.pattern.permute.xlu0 0
  %7986 = vperm.xlu0 %7985, %v7647
  %v7987 = vpop.permute.xlu0 %7986
  %7988 = vset.pattern.permute.xlu0 0
  %7989 = vperm.xlu0 %7988, %v7648
  %v7990 = vpop.permute.xlu0 %7989
  %7991 = vset.pattern.permute.xlu0 0
  %7992 = vperm.xlu0 %7991, %v7649
  %v7993 = vpop.permute.xlu0 %7992
  %7994 = vset.pattern.permute.xlu0 0
  %7995 = vperm.xlu0 %7994, %v7650
  %v7996 = vpop.permute.xlu0 %7995
  %7997 = vset.pattern.permute.xlu0 0
  %7998 = vperm.xlu0 %7997, %v7651
  %v7999 = vpop.permute.xlu0 %7998
  %8000 = vset.pattern.permute.xlu0 0
  %8001 = vperm.xlu0 %8000, %v7652
  %v8002 = vpop.permute.xlu0 %8001
  %8003 = vset.pattern.permute.xlu0 0
  %8004 = vperm.xlu0 %8003, %v7653
  %v8005 = vpop.permute.xlu0 %8004
  %8006 = vset.pattern.permute.xlu0 0
  %8007 = vperm.xlu0 %8006, %v7654
  %v8008 = vpop.permute.xlu0 %8007
  %8009 = vset.pattern.permute.xlu0 0
  %8010 = vperm.xlu0 %8009, %v7655
  %v8011 = vpop.permute.xlu0 %8010
  %8012 = vset.pattern.permute.xlu0 0
  %8013 = vperm.xlu0 %8012, %v7656
  %v8014 = vpop.permute.xlu0 %8013
  %8015 = vset.pattern.permute.xlu0 0
  %8016 = vperm.xlu0 %8015, %v7657
  %v8017 = vpop.permute.xlu0 %8016
  %8018 = vset.pattern.permute.xlu0 0
  %8019 = vperm.xlu0 %8018, %v7658
  %v8020 = vpop.permute.xlu0 %8019
  %8021 = vset.pattern.permute.xlu0 0
  %8022 = vperm.xlu0 %8021, %v7659
  %v8023 = vpop.permute.xlu0 %8022
  %8024 = vset.pattern.permute.xlu0 0
  %8025 = vperm.xlu0 %8024, %v7660
  %v8026 = vpop.permute.xlu0 %8025
  %8027 = vset.pattern.permute.xlu0 0
  %8028 = vperm.xlu0 %8027, %v7661
  %v8029 = vpop.permute.xlu0 %8028
  %8030 = vset.pattern.permute.xlu0 0
  %8031 = vperm.xlu0 %8030, %v7662
  %v8032 = vpop.permute.xlu0 %8031
  %8033 = vset.pattern.permute.xlu0 0
  %8034 = vperm.xlu0 %8033, %v7663
  %v8035 = vpop.permute.xlu0 %8034
  %8036 = vset.pattern.permute.xlu0 0
  %8037 = vperm.xlu0 %8036, %v7664
  %v8038 = vpop.permute.xlu0 %8037
  %8039 = vset.pattern.permute.xlu0 0
  %8040 = vperm.xlu0 %8039, %v7665
  %v8041 = vpop.permute.xlu0 %8040
  %8042 = vset.pattern.permute.xlu0 0
  %8043 = vperm.xlu0 %8042, %v7666
  %v8044 = vpop.permute.xlu0 %8043
  %8045 = vset.pattern.permute.xlu0 0
  %8046 = vperm.xlu0 %8045, %v7667
  %v8047 = vpop.permute.xlu0 %8046
  %8048 = vset.pattern.permute.xlu0 0
  %8049 = vperm.xlu0 %8048, %v7668
  %v8050 = vpop.permute.xlu0 %8049
  %8051 = vset.pattern.permute.xlu0 0
  %8052 = vperm.xlu0 %8051, %v7669
  %v8053 = vpop.permute.xlu0 %8052
  %8054 = vset.pattern.permute.xlu0 0
  %8055 = vperm.xlu0 %8054, %v7670
  %v8056 = vpop.permute.xlu0 %8055
  %8057 = vset.pattern.permute.xlu0 0
  %8058 = vperm.xlu0 %8057, %v7671
  %v8059 = vpop.permute.xlu0 %8058
  %8060 = vset.pattern.permute.xlu0 0
  %8061 = vperm.xlu0 %8060, %v7672
  %v8062 = vpop.permute.xlu0 %8061
  %8063 = vset.pattern.permute.xlu0 0
  %8064 = vperm.xlu0 %8063, %v7673
  %v8065 = vpop.permute.xlu0 %8064
  %8066 = vset.pattern.permute.xlu0 0
  %8067 = vperm.xlu0 %8066, %v7674
  %v8068 = vpop.permute.xlu0 %8067
  %8069 = vset.pattern.permute.xlu0 0
  %8070 = vperm.xlu0 %8069, %v7675
  %v8071 = vpop.permute.xlu0 %8070
  %8072 = vset.pattern.permute.xlu0 0
  %8073 = vperm.xlu0 %8072, %v7676
  %v8074 = vpop.permute.xlu0 %8073
  %8075 = vset.pattern.permute.xlu0 0
  %8076 = vperm.xlu0 %8075, %v7677
  %v8077 = vpop.permute.xlu0 %8076
  %8078 = vset.pattern.permute.xlu0 0
  %8079 = vperm.xlu0 %8078, %v7678
  %v8080 = vpop.permute.xlu0 %8079
  %8081 = vset.pattern.permute.xlu0 0
  %8082 = vperm.xlu0 %8081, %v7679
  %v8083 = vpop.permute.xlu0 %8082
  %8084 = vset.pattern.permute.xlu0 0
  %8085 = vperm.xlu0 %8084, %v7680
  %v8086 = vpop.permute.xlu0 %8085
  %8087 = vset.pattern.permute.xlu0 0
  %8088 = vperm.xlu0 %8087, %v7681
  %v8089 = vpop.permute.xlu0 %8088
  %8090 = vset.pattern.permute.xlu0 0
  %8091 = vperm.xlu0 %8090, %v7682
  %v8092 = vpop.permute.xlu0 %8091
  %8093 = vset.pattern.permute.xlu0 0
  %8094 = vperm.xlu0 %8093, %v7683
  %v8095 = vpop.permute.xlu0 %8094
  %8096 = vset.pattern.permute.xlu0 0
  %8097 = vperm.xlu0 %8096, %v7684
  %v8098 = vpop.permute.xlu0 %8097
  %8099 = vset.pattern.permute.xlu0 0
  %8100 = vperm.xlu0 %8099, %v7685
  %v8101 = vpop.permute.xlu0 %8100
  %8102 = vset.pattern.permute.xlu0 0
  %8103 = vperm.xlu0 %8102, %v7686
  %v8104 = vpop.permute.xlu0 %8103
  %8105 = vset.pattern.permute.xlu0 0
  %8106 = vperm.xlu0 %8105, %v7687
  %v8107 = vpop.permute.xlu0 %8106
  %8108 = vset.pattern.permute.xlu0 0
  %8109 = vperm.xlu0 %8108, %v7688
  %v8110 = vpop.permute.xlu0 %8109
  %8111 = vset.pattern.permute.xlu0 0
  %8112 = vperm.xlu0 %8111, %v7689
  %v8113 = vpop.permute.xlu0 %8112
  %8114 = vset.pattern.permute.xlu0 0
  %8115 = vperm.xlu0 %8114, %v7690
  %v8116 = vpop.permute.xlu0 %8115
  %8117 = vset.pattern.permute.xlu0 0
  %8118 = vperm.xlu0 %8117, %v7691
  %v8119 = vpop.permute.xlu0 %8118
  %8120 = vset.pattern.permute.xlu0 0
  %8121 = vperm.xlu0 %8120, %v7692
  %v8122 = vpop.permute.xlu0 %8121
  %8123 = vset.pattern.permute.xlu0 0
  %8124 = vperm.xlu0 %8123, %v7693
  %v8125 = vpop.permute.xlu0 %8124
  %8126 = vset.pattern.permute.xlu0 0
  %8127 = vperm.xlu0 %8126, %v7694
  %v8128 = vpop.permute.xlu0 %8127
  %8129 = vset.pattern.permute.xlu0 0
  %8130 = vperm.xlu0 %8129, %v7695
  %v8131 = vpop.permute.xlu0 %8130
  %8132 = vset.pattern.permute.xlu0 0
  %8133 = vperm.xlu0 %8132, %v7696
  %v8134 = vpop.permute.xlu0 %8133
  %8135 = vset.pattern.permute.xlu0 0
  %8136 = vperm.xlu0 %8135, %v7697
  %v8137 = vpop.permute.xlu0 %8136
  %8138 = vset.pattern.permute.xlu0 0
  %8139 = vperm.xlu0 %8138, %v7698
  %v8140 = vpop.permute.xlu0 %8139
  %8141 = vset.pattern.permute.xlu0 0
  %8142 = vperm.xlu0 %8141, %v7699
  %v8143 = vpop.permute.xlu0 %8142
  %8144 = vset.pattern.permute.xlu0 0
  %8145 = vperm.xlu0 %8144, %v7700
  %v8146 = vpop.permute.xlu0 %8145
  %8147 = vset.pattern.permute.xlu0 0
  %8148 = vperm.xlu0 %8147, %v7701
  %v8149 = vpop.permute.xlu0 %8148
  %8150 = vset.pattern.permute.xlu0 0
  %8151 = vperm.xlu0 %8150, %v7702
  %v8152 = vpop.permute.xlu0 %8151
  %8153 = vset.pattern.permute.xlu0 0
  %8154 = vperm.xlu0 %8153, %v7703
  %v8155 = vpop.permute.xlu0 %8154
  %8156 = vset.pattern.permute.xlu0 0
  %8157 = vperm.xlu0 %8156, %v7704
  %v8158 = vpop.permute.xlu0 %8157
  %8159 = vset.pattern.permute.xlu0 0
  %8160 = vperm.xlu0 %8159, %v7705
  %v8161 = vpop.permute.xlu0 %8160
  %8162 = vset.pattern.permute.xlu0 0
  %8163 = vperm.xlu0 %8162, %v7706
  %v8164 = vpop.permute.xlu0 %8163
  %8165 = vset.pattern.permute.xlu0 0
  %8166 = vperm.xlu0 %8165, %v7707
  %v8167 = vpop.permute.xlu0 %8166
  %8168 = vset.pattern.permute.xlu0 0
  %8169 = vperm.xlu0 %8168, %v7708
  %v8170 = vpop.permute.xlu0 %8169
  %8171 = vset.pattern.permute.xlu0 0
  %8172 = vperm.xlu0 %8171, %v7709
  %v8173 = vpop.permute.xlu0 %8172
  %8174 = vset.pattern.permute.xlu0 0
  %8175 = vperm.xlu0 %8174, %v7710
  %v8176 = vpop.permute.xlu0 %8175
  %8177 = vset.pattern.permute.xlu0 0
  %8178 = vperm.xlu0 %8177, %v7711
  %v8179 = vpop.permute.xlu0 %8178
  %8180 = vset.pattern.permute.xlu0 0
  %8181 = vperm.xlu0 %8180, %v7712
  %v8182 = vpop.permute.xlu0 %8181
  %8183 = vset.pattern.permute.xlu0 0
  %8184 = vperm.xlu0 %8183, %v7713
  %v8185 = vpop.permute.xlu0 %8184
  %8186 = vset.pattern.permute.xlu0 0
  %8187 = vperm.xlu0 %8186, %v7714
  %v8188 = vpop.permute.xlu0 %8187
  %8189 = vset.pattern.permute.xlu0 0
  %8190 = vperm.xlu0 %8189, %v7715
  %v8191 = vpop.permute.xlu0 %8190
  %8192 = vset.pattern.permute.xlu0 0
  %8193 = vperm.xlu0 %8192, %v7716
  %v8194 = vpop.permute.xlu0 %8193
  %8195 = vset.pattern.permute.xlu0 0
  %8196 = vperm.xlu0 %8195, %v7717
  %v8197 = vpop.permute.xlu0 %8196
  %8198 = vset.pattern.permute.xlu0 0
  %8199 = vperm.xlu0 %8198, %v7718
  %v8200 = vpop.permute.xlu0 %8199
  %8201 = vset.pattern.permute.xlu0 0
  %8202 = vperm.xlu0 %8201, %v7719
  %v8203 = vpop.permute.xlu0 %8202
  %8204 = vset.pattern.permute.xlu0 0
  %8205 = vperm.xlu0 %8204, %v7720
  %v8206 = vpop.permute.xlu0 %8205
  %8207 = vset.pattern.permute.xlu0 0
  %8208 = vperm.xlu0 %8207, %v7721
  %v8209 = vpop.permute.xlu0 %8208
  %8210 = vset.pattern.permute.xlu0 0
  %8211 = vperm.xlu0 %8210, %v7722
  %v8212 = vpop.permute.xlu0 %8211
  %8213 = vset.pattern.permute.xlu0 0
  %8214 = vperm.xlu0 %8213, %v7723
  %v8215 = vpop.permute.xlu0 %8214
  %8216 = vset.pattern.permute.xlu0 0
  %8217 = vperm.xlu0 %8216, %v7724
  %v8218 = vpop.permute.xlu0 %8217
  %8219 = vset.pattern.permute.xlu0 0
  %8220 = vperm.xlu0 %8219, %v7725
  %v8221 = vpop.permute.xlu0 %8220
  %8222 = vset.pattern.permute.xlu0 0
  %8223 = vperm.xlu0 %8222, %v7726
  %v8224 = vpop.permute.xlu0 %8223
  %8225 = vset.pattern.permute.xlu0 0
  %8226 = vperm.xlu0 %8225, %v7727
  %v8227 = vpop.permute.xlu0 %8226
  %8228 = vset.pattern.permute.xlu0 0
  %8229 = vperm.xlu0 %8228, %v7728
  %v8230 = vpop.permute.xlu0 %8229
  %8231 = vset.pattern.permute.xlu0 0
  %8232 = vperm.xlu0 %8231, %v7729
  %v8233 = vpop.permute.xlu0 %8232
  %8234 = vset.pattern.permute.xlu0 0
  %8235 = vperm.xlu0 %8234, %v7730
  %v8236 = vpop.permute.xlu0 %8235
  %8237 = vset.pattern.permute.xlu0 0
  %8238 = vperm.xlu0 %8237, %v7731
  %v8239 = vpop.permute.xlu0 %8238
  %8240 = vset.pattern.permute.xlu0 0
  %8241 = vperm.xlu0 %8240, %v7732
  %v8242 = vpop.permute.xlu0 %8241
  %8243 = vset.pattern.permute.xlu0 0
  %8244 = vperm.xlu0 %8243, %v7733
  %v8245 = vpop.permute.xlu0 %8244
  %v8246 = vlaneseq
  %v8247 = vand.u32 %v8246, 127
  %v8248 = vlaneseq
  %v8249 = vshrl.u32 %v8248, 7
  %v8250 = vsub.s32 %v8247, %v8249
  %v8251 = vrot.slane %v7864, %v8250
  %v8252 = vadd.s32 %v8247, 4294967288
  %v8253 = vlaneseq
  %v8254 = vshrl.u32 %v8253, 7
  %v8255 = vsub.s32 %v8252, %v8254
  %v8256 = vrot.slane %v7867, %v8255
  %vm8257 = vcmask 130112
  %v8258 = vsel %vm8257, %v8256, %v8251
  %v8259 = vadd.s32 %v8247, 4294967280
  %v8260 = vlaneseq
  %v8261 = vshrl.u32 %v8260, 7
  %v8262 = vsub.s32 %v8259, %v8261
  %v8263 = vrot.slane %v7870, %v8262
  %vm8264 = vcmask 195712
  %v8265 = vsel %vm8264, %v8263, %v8258
  %v8266 = vadd.s32 %v8247, 4294967272
  %v8267 = vlaneseq
  %v8268 = vshrl.u32 %v8267, 7
  %v8269 = vsub.s32 %v8266, %v8268
  %v8270 = vrot.slane %v7873, %v8269
  %vm8271 = vcmask 261312
  %v8272 = vsel %vm8271, %v8270, %v8265
  %v8273 = vadd.s32 %v8247, 4294967264
  %v8274 = vlaneseq
  %v8275 = vshrl.u32 %v8274, 7
  %v8276 = vsub.s32 %v8273, %v8275
  %v8277 = vrot.slane %v7876, %v8276
  %vm8278 = vcmask 326912
  %v8279 = vsel %vm8278, %v8277, %v8272
  %v8280 = vadd.s32 %v8247, 4294967256
  %v8281 = vlaneseq
  %v8282 = vshrl.u32 %v8281, 7
  %v8283 = vsub.s32 %v8280, %v8282
  %v8284 = vrot.slane %v7879, %v8283
  %vm8285 = vcmask 392512
  %v8286 = vsel %vm8285, %v8284, %v8279
  %v8287 = vadd.s32 %v8247, 4294967248
  %v8288 = vlaneseq
  %v8289 = vshrl.u32 %v8288, 7
  %v8290 = vsub.s32 %v8287, %v8289
  %v8291 = vrot.slane %v7882, %v8290
  %vm8292 = vcmask 458112
  %v8293 = vsel %vm8292, %v8291, %v8286
  %v8294 = vadd.s32 %v8247, 4294967240
  %v8295 = vlaneseq
  %v8296 = vshrl.u32 %v8295, 7
  %v8297 = vsub.s32 %v8294, %v8296
  %v8298 = vrot.slane %v7885, %v8297
  %vm8299 = vcmask 523712
  %v8300 = vsel %vm8299, %v8298, %v8293
  %v8301 = vadd.s32 %v8247, 4294967232
  %v8302 = vlaneseq
  %v8303 = vshrl.u32 %v8302, 7
  %v8304 = vsub.s32 %v8301, %v8303
  %v8305 = vrot.slane %v7888, %v8304
  %vm8306 = vcmask 589312
  %v8307 = vsel %vm8306, %v8305, %v8300
  %v8308 = vadd.s32 %v8247, 4294967224
  %v8309 = vlaneseq
  %v8310 = vshrl.u32 %v8309, 7
  %v8311 = vsub.s32 %v8308, %v8310
  %v8312 = vrot.slane %v7891, %v8311
  %vm8313 = vcmask 654912
  %v8314 = vsel %vm8313, %v8312, %v8307
  %v8315 = vadd.s32 %v8247, 4294967216
  %v8316 = vlaneseq
  %v8317 = vshrl.u32 %v8316, 7
  %v8318 = vsub.s32 %v8315, %v8317
  %v8319 = vrot.slane %v7894, %v8318
  %vm8320 = vcmask 720512
  %v8321 = vsel %vm8320, %v8319, %v8314
  %v8322 = vadd.s32 %v8247, 4294967208
  %v8323 = vlaneseq
  %v8324 = vshrl.u32 %v8323, 7
  %v8325 = vsub.s32 %v8322, %v8324
  %v8326 = vrot.slane %v7897, %v8325
  %vm8327 = vcmask 786112
  %v8328 = vsel %vm8327, %v8326, %v8321
  %v8329 = vadd.s32 %v8247, 4294967200
  %v8330 = vlaneseq
  %v8331 = vshrl.u32 %v8330, 7
  %v8332 = vsub.s32 %v8329, %v8331
  %v8333 = vrot.slane %v7900, %v8332
  %vm8334 = vcmask 851712
  %v8335 = vsel %vm8334, %v8333, %v8328
  %v8336 = vadd.s32 %v8247, 4294967192
  %v8337 = vlaneseq
  %v8338 = vshrl.u32 %v8337, 7
  %v8339 = vsub.s32 %v8336, %v8338
  %v8340 = vrot.slane %v7903, %v8339
  %vm8341 = vcmask 917312
  %v8342 = vsel %vm8341, %v8340, %v8335
  %v8343 = vadd.s32 %v8247, 4294967184
  %v8344 = vlaneseq
  %v8345 = vshrl.u32 %v8344, 7
  %v8346 = vsub.s32 %v8343, %v8345
  %v8347 = vrot.slane %v7906, %v8346
  %vm8348 = vcmask 982912
  %v8349 = vsel %vm8348, %v8347, %v8342
  %v8350 = vadd.s32 %v8247, 4294967176
  %v8351 = vlaneseq
  %v8352 = vshrl.u32 %v8351, 7
  %v8353 = vsub.s32 %v8350, %v8352
  %v8354 = vrot.slane %v7909, %v8353
  %vm8355 = vcmask 1048512
  %v8356 = vsel %vm8355, %v8354, %v8349
  %v8357 = vlaneseq
  %v8358 = vshrl.u32 %v8357, 7
  %v8359 = vsub.s32 %v8247, %v8358
  %v8360 = vrot.slane %v7912, %v8359
  %v8361 = vlaneseq
  %v8362 = vshrl.u32 %v8361, 7
  %v8363 = vsub.s32 %v8252, %v8362
  %v8364 = vrot.slane %v7915, %v8363
  %v8365 = vsel %vm8257, %v8364, %v8360
  %v8366 = vlaneseq
  %v8367 = vshrl.u32 %v8366, 7
  %v8368 = vsub.s32 %v8259, %v8367
  %v8369 = vrot.slane %v7918, %v8368
  %v8370 = vsel %vm8264, %v8369, %v8365
  %v8371 = vlaneseq
  %v8372 = vshrl.u32 %v8371, 7
  %v8373 = vsub.s32 %v8266, %v8372
  %v8374 = vrot.slane %v7921, %v8373
  %v8375 = vsel %vm8271, %v8374, %v8370
  %v8376 = vlaneseq
  %v8377 = vshrl.u32 %v8376, 7
  %v8378 = vsub.s32 %v8273, %v8377
  %v8379 = vrot.slane %v7924, %v8378
  %v8380 = vsel %vm8278, %v8379, %v8375
  %v8381 = vlaneseq
  %v8382 = vshrl.u32 %v8381, 7
  %v8383 = vsub.s32 %v8280, %v8382
  %v8384 = vrot.slane %v7927, %v8383
  %v8385 = vsel %vm8285, %v8384, %v8380
  %v8386 = vlaneseq
  %v8387 = vshrl.u32 %v8386, 7
  %v8388 = vsub.s32 %v8287, %v8387
  %v8389 = vrot.slane %v7930, %v8388
  %v8390 = vsel %vm8292, %v8389, %v8385
  %v8391 = vlaneseq
  %v8392 = vshrl.u32 %v8391, 7
  %v8393 = vsub.s32 %v8294, %v8392
  %v8394 = vrot.slane %v7933, %v8393
  %v8395 = vsel %vm8299, %v8394, %v8390
  %v8396 = vlaneseq
  %v8397 = vshrl.u32 %v8396, 7
  %v8398 = vsub.s32 %v8301, %v8397
  %v8399 = vrot.slane %v7936, %v8398
  %v8400 = vsel %vm8306, %v8399, %v8395
  %v8401 = vlaneseq
  %v8402 = vshrl.u32 %v8401, 7
  %v8403 = vsub.s32 %v8308, %v8402
  %v8404 = vrot.slane %v7939, %v8403
  %v8405 = vsel %vm8313, %v8404, %v8400
  %v8406 = vlaneseq
  %v8407 = vshrl.u32 %v8406, 7
  %v8408 = vsub.s32 %v8315, %v8407
  %v8409 = vrot.slane %v7942, %v8408
  %v8410 = vsel %vm8320, %v8409, %v8405
  %v8411 = vlaneseq
  %v8412 = vshrl.u32 %v8411, 7
  %v8413 = vsub.s32 %v8322, %v8412
  %v8414 = vrot.slane %v7945, %v8413
  %v8415 = vsel %vm8327, %v8414, %v8410
  %v8416 = vlaneseq
  %v8417 = vshrl.u32 %v8416, 7
  %v8418 = vsub.s32 %v8329, %v8417
  %v8419 = vrot.slane %v7948, %v8418
  %v8420 = vsel %vm8334, %v8419, %v8415
  %v8421 = vlaneseq
  %v8422 = vshrl.u32 %v8421, 7
  %v8423 = vsub.s32 %v8336, %v8422
  %v8424 = vrot.slane %v7951, %v8423
  %v8425 = vsel %vm8341, %v8424, %v8420
  %v8426 = vlaneseq
  %v8427 = vshrl.u32 %v8426, 7
  %v8428 = vsub.s32 %v8343, %v8427
  %v8429 = vrot.slane %v7954, %v8428
  %v8430 = vsel %vm8348, %v8429, %v8425
  %v8431 = vlaneseq
  %v8432 = vshrl.u32 %v8431, 7
  %v8433 = vsub.s32 %v8350, %v8432
  %v8434 = vrot.slane %v7957, %v8433
  %v8435 = vsel %vm8355, %v8434, %v8430
  %v8436 = vlaneseq
  %v8437 = vshrl.u32 %v8436, 7
  %v8438 = vsub.s32 %v8247, %v8437
  %v8439 = vrot.slane %v7960, %v8438
  %v8440 = vlaneseq
  %v8441 = vshrl.u32 %v8440, 7
  %v8442 = vsub.s32 %v8252, %v8441
  %v8443 = vrot.slane %v7963, %v8442
  %v8444 = vsel %vm8257, %v8443, %v8439
  %v8445 = vlaneseq
  %v8446 = vshrl.u32 %v8445, 7
  %v8447 = vsub.s32 %v8259, %v8446
  %v8448 = vrot.slane %v7966, %v8447
  %v8449 = vsel %vm8264, %v8448, %v8444
  %v8450 = vlaneseq
  %v8451 = vshrl.u32 %v8450, 7
  %v8452 = vsub.s32 %v8266, %v8451
  %v8453 = vrot.slane %v7969, %v8452
  %v8454 = vsel %vm8271, %v8453, %v8449
  %v8455 = vlaneseq
  %v8456 = vshrl.u32 %v8455, 7
  %v8457 = vsub.s32 %v8273, %v8456
  %v8458 = vrot.slane %v7972, %v8457
  %v8459 = vsel %vm8278, %v8458, %v8454
  %v8460 = vlaneseq
  %v8461 = vshrl.u32 %v8460, 7
  %v8462 = vsub.s32 %v8280, %v8461
  %v8463 = vrot.slane %v7975, %v8462
  %v8464 = vsel %vm8285, %v8463, %v8459
  %v8465 = vlaneseq
  %v8466 = vshrl.u32 %v8465, 7
  %v8467 = vsub.s32 %v8287, %v8466
  %v8468 = vrot.slane %v7978, %v8467
  %v8469 = vsel %vm8292, %v8468, %v8464
  %v8470 = vlaneseq
  %v8471 = vshrl.u32 %v8470, 7
  %v8472 = vsub.s32 %v8294, %v8471
  %v8473 = vrot.slane %v7981, %v8472
  %v8474 = vsel %vm8299, %v8473, %v8469
  %v8475 = vlaneseq
  %v8476 = vshrl.u32 %v8475, 7
  %v8477 = vsub.s32 %v8301, %v8476
  %v8478 = vrot.slane %v7984, %v8477
  %v8479 = vsel %vm8306, %v8478, %v8474
  %v8480 = vlaneseq
  %v8481 = vshrl.u32 %v8480, 7
  %v8482 = vsub.s32 %v8308, %v8481
  %v8483 = vrot.slane %v7987, %v8482
  %v8484 = vsel %vm8313, %v8483, %v8479
  %v8485 = vlaneseq
  %v8486 = vshrl.u32 %v8485, 7
  %v8487 = vsub.s32 %v8315, %v8486
  %v8488 = vrot.slane %v7990, %v8487
  %v8489 = vsel %vm8320, %v8488, %v8484
  %v8490 = vlaneseq
  %v8491 = vshrl.u32 %v8490, 7
  %v8492 = vsub.s32 %v8322, %v8491
  %v8493 = vrot.slane %v7993, %v8492
  %v8494 = vsel %vm8327, %v8493, %v8489
  %v8495 = vlaneseq
  %v8496 = vshrl.u32 %v8495, 7
  %v8497 = vsub.s32 %v8329, %v8496
  %v8498 = vrot.slane %v7996, %v8497
  %v8499 = vsel %vm8334, %v8498, %v8494
  %v8500 = vlaneseq
  %v8501 = vshrl.u32 %v8500, 7
  %v8502 = vsub.s32 %v8336, %v8501
  %v8503 = vrot.slane %v7999, %v8502
  %v8504 = vsel %vm8341, %v8503, %v8499
  %v8505 = vlaneseq
  %v8506 = vshrl.u32 %v8505, 7
  %v8507 = vsub.s32 %v8343, %v8506
  %v8508 = vrot.slane %v8002, %v8507
  %v8509 = vsel %vm8348, %v8508, %v8504
  %v8510 = vlaneseq
  %v8511 = vshrl.u32 %v8510, 7
  %v8512 = vsub.s32 %v8350, %v8511
  %v8513 = vrot.slane %v8005, %v8512
  %v8514 = vsel %vm8355, %v8513, %v8509
  %v8515 = vlaneseq
  %v8516 = vshrl.u32 %v8515, 7
  %v8517 = vsub.s32 %v8247, %v8516
  %v8518 = vrot.slane %v8008, %v8517
  %v8519 = vlaneseq
  %v8520 = vshrl.u32 %v8519, 7
  %v8521 = vsub.s32 %v8252, %v8520
  %v8522 = vrot.slane %v8011, %v8521
  %v8523 = vsel %vm8257, %v8522, %v8518
  %v8524 = vlaneseq
  %v8525 = vshrl.u32 %v8524, 7
  %v8526 = vsub.s32 %v8259, %v8525
  %v8527 = vrot.slane %v8014, %v8526
  %v8528 = vsel %vm8264, %v8527, %v8523
  %v8529 = vlaneseq
  %v8530 = vshrl.u32 %v8529, 7
  %v8531 = vsub.s32 %v8266, %v8530
  %v8532 = vrot.slane %v8017, %v8531
  %v8533 = vsel %vm8271, %v8532, %v8528
  %v8534 = vlaneseq
  %v8535 = vshrl.u32 %v8534, 7
  %v8536 = vsub.s32 %v8273, %v8535
  %v8537 = vrot.slane %v8020, %v8536
  %v8538 = vsel %vm8278, %v8537, %v8533
  %v8539 = vlaneseq
  %v8540 = vshrl.u32 %v8539, 7
  %v8541 = vsub.s32 %v8280, %v8540
  %v8542 = vrot.slane %v8023, %v8541
  %v8543 = vsel %vm8285, %v8542, %v8538
  %v8544 = vlaneseq
  %v8545 = vshrl.u32 %v8544, 7
  %v8546 = vsub.s32 %v8287, %v8545
  %v8547 = vrot.slane %v8026, %v8546
  %v8548 = vsel %vm8292, %v8547, %v8543
  %v8549 = vlaneseq
  %v8550 = vshrl.u32 %v8549, 7
  %v8551 = vsub.s32 %v8294, %v8550
  %v8552 = vrot.slane %v8029, %v8551
  %v8553 = vsel %vm8299, %v8552, %v8548
  %v8554 = vlaneseq
  %v8555 = vshrl.u32 %v8554, 7
  %v8556 = vsub.s32 %v8301, %v8555
  %v8557 = vrot.slane %v8032, %v8556
  %v8558 = vsel %vm8306, %v8557, %v8553
  %v8559 = vlaneseq
  %v8560 = vshrl.u32 %v8559, 7
  %v8561 = vsub.s32 %v8308, %v8560
  %v8562 = vrot.slane %v8035, %v8561
  %v8563 = vsel %vm8313, %v8562, %v8558
  %v8564 = vlaneseq
  %v8565 = vshrl.u32 %v8564, 7
  %v8566 = vsub.s32 %v8315, %v8565
  %v8567 = vrot.slane %v8038, %v8566
  %v8568 = vsel %vm8320, %v8567, %v8563
  %v8569 = vlaneseq
  %v8570 = vshrl.u32 %v8569, 7
  %v8571 = vsub.s32 %v8322, %v8570
  %v8572 = vrot.slane %v8041, %v8571
  %v8573 = vsel %vm8327, %v8572, %v8568
  %v8574 = vlaneseq
  %v8575 = vshrl.u32 %v8574, 7
  %v8576 = vsub.s32 %v8329, %v8575
  %v8577 = vrot.slane %v8044, %v8576
  %v8578 = vsel %vm8334, %v8577, %v8573
  %v8579 = vlaneseq
  %v8580 = vshrl.u32 %v8579, 7
  %v8581 = vsub.s32 %v8336, %v8580
  %v8582 = vrot.slane %v8047, %v8581
  %v8583 = vsel %vm8341, %v8582, %v8578
  %v8584 = vlaneseq
  %v8585 = vshrl.u32 %v8584, 7
  %v8586 = vsub.s32 %v8343, %v8585
  %v8587 = vrot.slane %v8050, %v8586
  %v8588 = vsel %vm8348, %v8587, %v8583
  %v8589 = vlaneseq
  %v8590 = vshrl.u32 %v8589, 7
  %v8591 = vsub.s32 %v8350, %v8590
  %v8592 = vrot.slane %v8053, %v8591
  %v8593 = vsel %vm8355, %v8592, %v8588
  %v8594 = vlaneseq
  %v8595 = vshrl.u32 %v8594, 7
  %v8596 = vsub.s32 %v8247, %v8595
  %v8597 = vrot.slane %v8056, %v8596
  %v8598 = vlaneseq
  %v8599 = vshrl.u32 %v8598, 7
  %v8600 = vsub.s32 %v8252, %v8599
  %v8601 = vrot.slane %v8059, %v8600
  %v8602 = vsel %vm8257, %v8601, %v8597
  %v8603 = vlaneseq
  %v8604 = vshrl.u32 %v8603, 7
  %v8605 = vsub.s32 %v8259, %v8604
  %v8606 = vrot.slane %v8062, %v8605
  %v8607 = vsel %vm8264, %v8606, %v8602
  %v8608 = vlaneseq
  %v8609 = vshrl.u32 %v8608, 7
  %v8610 = vsub.s32 %v8266, %v8609
  %v8611 = vrot.slane %v8065, %v8610
  %v8612 = vsel %vm8271, %v8611, %v8607
  %v8613 = vlaneseq
  %v8614 = vshrl.u32 %v8613, 7
  %v8615 = vsub.s32 %v8273, %v8614
  %v8616 = vrot.slane %v8068, %v8615
  %v8617 = vsel %vm8278, %v8616, %v8612
  %v8618 = vlaneseq
  %v8619 = vshrl.u32 %v8618, 7
  %v8620 = vsub.s32 %v8280, %v8619
  %v8621 = vrot.slane %v8071, %v8620
  %v8622 = vsel %vm8285, %v8621, %v8617
  %v8623 = vlaneseq
  %v8624 = vshrl.u32 %v8623, 7
  %v8625 = vsub.s32 %v8287, %v8624
  %v8626 = vrot.slane %v8074, %v8625
  %v8627 = vsel %vm8292, %v8626, %v8622
  %v8628 = vlaneseq
  %v8629 = vshrl.u32 %v8628, 7
  %v8630 = vsub.s32 %v8294, %v8629
  %v8631 = vrot.slane %v8077, %v8630
  %v8632 = vsel %vm8299, %v8631, %v8627
  %v8633 = vlaneseq
  %v8634 = vshrl.u32 %v8633, 7
  %v8635 = vsub.s32 %v8301, %v8634
  %v8636 = vrot.slane %v8080, %v8635
  %v8637 = vsel %vm8306, %v8636, %v8632
  %v8638 = vlaneseq
  %v8639 = vshrl.u32 %v8638, 7
  %v8640 = vsub.s32 %v8308, %v8639
  %v8641 = vrot.slane %v8083, %v8640
  %v8642 = vsel %vm8313, %v8641, %v8637
  %v8643 = vlaneseq
  %v8644 = vshrl.u32 %v8643, 7
  %v8645 = vsub.s32 %v8315, %v8644
  %v8646 = vrot.slane %v8086, %v8645
  %v8647 = vsel %vm8320, %v8646, %v8642
  %v8648 = vlaneseq
  %v8649 = vshrl.u32 %v8648, 7
  %v8650 = vsub.s32 %v8322, %v8649
  %v8651 = vrot.slane %v8089, %v8650
  %v8652 = vsel %vm8327, %v8651, %v8647
  %v8653 = vlaneseq
  %v8654 = vshrl.u32 %v8653, 7
  %v8655 = vsub.s32 %v8329, %v8654
  %v8656 = vrot.slane %v8092, %v8655
  %v8657 = vsel %vm8334, %v8656, %v8652
  %v8658 = vlaneseq
  %v8659 = vshrl.u32 %v8658, 7
  %v8660 = vsub.s32 %v8336, %v8659
  %v8661 = vrot.slane %v8095, %v8660
  %v8662 = vsel %vm8341, %v8661, %v8657
  %v8663 = vlaneseq
  %v8664 = vshrl.u32 %v8663, 7
  %v8665 = vsub.s32 %v8343, %v8664
  %v8666 = vrot.slane %v8098, %v8665
  %v8667 = vsel %vm8348, %v8666, %v8662
  %v8668 = vlaneseq
  %v8669 = vshrl.u32 %v8668, 7
  %v8670 = vsub.s32 %v8350, %v8669
  %v8671 = vrot.slane %v8101, %v8670
  %v8672 = vsel %vm8355, %v8671, %v8667
  %v8673 = vlaneseq
  %v8674 = vshrl.u32 %v8673, 7
  %v8675 = vsub.s32 %v8247, %v8674
  %v8676 = vrot.slane %v8104, %v8675
  %v8677 = vlaneseq
  %v8678 = vshrl.u32 %v8677, 7
  %v8679 = vsub.s32 %v8252, %v8678
  %v8680 = vrot.slane %v8107, %v8679
  %v8681 = vsel %vm8257, %v8680, %v8676
  %v8682 = vlaneseq
  %v8683 = vshrl.u32 %v8682, 7
  %v8684 = vsub.s32 %v8259, %v8683
  %v8685 = vrot.slane %v8110, %v8684
  %v8686 = vsel %vm8264, %v8685, %v8681
  %v8687 = vlaneseq
  %v8688 = vshrl.u32 %v8687, 7
  %v8689 = vsub.s32 %v8266, %v8688
  %v8690 = vrot.slane %v8113, %v8689
  %v8691 = vsel %vm8271, %v8690, %v8686
  %v8692 = vlaneseq
  %v8693 = vshrl.u32 %v8692, 7
  %v8694 = vsub.s32 %v8273, %v8693
  %v8695 = vrot.slane %v8116, %v8694
  %v8696 = vsel %vm8278, %v8695, %v8691
  %v8697 = vlaneseq
  %v8698 = vshrl.u32 %v8697, 7
  %v8699 = vsub.s32 %v8280, %v8698
  %v8700 = vrot.slane %v8119, %v8699
  %v8701 = vsel %vm8285, %v8700, %v8696
  %v8702 = vlaneseq
  %v8703 = vshrl.u32 %v8702, 7
  %v8704 = vsub.s32 %v8287, %v8703
  %v8705 = vrot.slane %v8122, %v8704
  %v8706 = vsel %vm8292, %v8705, %v8701
  %v8707 = vlaneseq
  %v8708 = vshrl.u32 %v8707, 7
  %v8709 = vsub.s32 %v8294, %v8708
  %v8710 = vrot.slane %v8125, %v8709
  %v8711 = vsel %vm8299, %v8710, %v8706
  %v8712 = vlaneseq
  %v8713 = vshrl.u32 %v8712, 7
  %v8714 = vsub.s32 %v8301, %v8713
  %v8715 = vrot.slane %v8128, %v8714
  %v8716 = vsel %vm8306, %v8715, %v8711
  %v8717 = vlaneseq
  %v8718 = vshrl.u32 %v8717, 7
  %v8719 = vsub.s32 %v8308, %v8718
  %v8720 = vrot.slane %v8131, %v8719
  %v8721 = vsel %vm8313, %v8720, %v8716
  %v8722 = vlaneseq
  %v8723 = vshrl.u32 %v8722, 7
  %v8724 = vsub.s32 %v8315, %v8723
  %v8725 = vrot.slane %v8134, %v8724
  %v8726 = vsel %vm8320, %v8725, %v8721
  %v8727 = vlaneseq
  %v8728 = vshrl.u32 %v8727, 7
  %v8729 = vsub.s32 %v8322, %v8728
  %v8730 = vrot.slane %v8137, %v8729
  %v8731 = vsel %vm8327, %v8730, %v8726
  %v8732 = vlaneseq
  %v8733 = vshrl.u32 %v8732, 7
  %v8734 = vsub.s32 %v8329, %v8733
  %v8735 = vrot.slane %v8140, %v8734
  %v8736 = vsel %vm8334, %v8735, %v8731
  %v8737 = vlaneseq
  %v8738 = vshrl.u32 %v8737, 7
  %v8739 = vsub.s32 %v8336, %v8738
  %v8740 = vrot.slane %v8143, %v8739
  %v8741 = vsel %vm8341, %v8740, %v8736
  %v8742 = vlaneseq
  %v8743 = vshrl.u32 %v8742, 7
  %v8744 = vsub.s32 %v8343, %v8743
  %v8745 = vrot.slane %v8146, %v8744
  %v8746 = vsel %vm8348, %v8745, %v8741
  %v8747 = vlaneseq
  %v8748 = vshrl.u32 %v8747, 7
  %v8749 = vsub.s32 %v8350, %v8748
  %v8750 = vrot.slane %v8149, %v8749
  %v8751 = vsel %vm8355, %v8750, %v8746
  %v8752 = vlaneseq
  %v8753 = vshrl.u32 %v8752, 7
  %v8754 = vsub.s32 %v8247, %v8753
  %v8755 = vrot.slane %v8152, %v8754
  %v8756 = vlaneseq
  %v8757 = vshrl.u32 %v8756, 7
  %v8758 = vsub.s32 %v8252, %v8757
  %v8759 = vrot.slane %v8155, %v8758
  %v8760 = vsel %vm8257, %v8759, %v8755
  %v8761 = vlaneseq
  %v8762 = vshrl.u32 %v8761, 7
  %v8763 = vsub.s32 %v8259, %v8762
  %v8764 = vrot.slane %v8158, %v8763
  %v8765 = vsel %vm8264, %v8764, %v8760
  %v8766 = vlaneseq
  %v8767 = vshrl.u32 %v8766, 7
  %v8768 = vsub.s32 %v8266, %v8767
  %v8769 = vrot.slane %v8161, %v8768
  %v8770 = vsel %vm8271, %v8769, %v8765
  %v8771 = vlaneseq
  %v8772 = vshrl.u32 %v8771, 7
  %v8773 = vsub.s32 %v8273, %v8772
  %v8774 = vrot.slane %v8164, %v8773
  %v8775 = vsel %vm8278, %v8774, %v8770
  %v8776 = vlaneseq
  %v8777 = vshrl.u32 %v8776, 7
  %v8778 = vsub.s32 %v8280, %v8777
  %v8779 = vrot.slane %v8167, %v8778
  %v8780 = vsel %vm8285, %v8779, %v8775
  %v8781 = vlaneseq
  %v8782 = vshrl.u32 %v8781, 7
  %v8783 = vsub.s32 %v8287, %v8782
  %v8784 = vrot.slane %v8170, %v8783
  %v8785 = vsel %vm8292, %v8784, %v8780
  %v8786 = vlaneseq
  %v8787 = vshrl.u32 %v8786, 7
  %v8788 = vsub.s32 %v8294, %v8787
  %v8789 = vrot.slane %v8173, %v8788
  %v8790 = vsel %vm8299, %v8789, %v8785
  %v8791 = vlaneseq
  %v8792 = vshrl.u32 %v8791, 7
  %v8793 = vsub.s32 %v8301, %v8792
  %v8794 = vrot.slane %v8176, %v8793
  %v8795 = vsel %vm8306, %v8794, %v8790
  %v8796 = vlaneseq
  %v8797 = vshrl.u32 %v8796, 7
  %v8798 = vsub.s32 %v8308, %v8797
  %v8799 = vrot.slane %v8179, %v8798
  %v8800 = vsel %vm8313, %v8799, %v8795
  %v8801 = vlaneseq
  %v8802 = vshrl.u32 %v8801, 7
  %v8803 = vsub.s32 %v8315, %v8802
  %v8804 = vrot.slane %v8182, %v8803
  %v8805 = vsel %vm8320, %v8804, %v8800
  %v8806 = vlaneseq
  %v8807 = vshrl.u32 %v8806, 7
  %v8808 = vsub.s32 %v8322, %v8807
  %v8809 = vrot.slane %v8185, %v8808
  %v8810 = vsel %vm8327, %v8809, %v8805
  %v8811 = vlaneseq
  %v8812 = vshrl.u32 %v8811, 7
  %v8813 = vsub.s32 %v8329, %v8812
  %v8814 = vrot.slane %v8188, %v8813
  %v8815 = vsel %vm8334, %v8814, %v8810
  %v8816 = vlaneseq
  %v8817 = vshrl.u32 %v8816, 7
  %v8818 = vsub.s32 %v8336, %v8817
  %v8819 = vrot.slane %v8191, %v8818
  %v8820 = vsel %vm8341, %v8819, %v8815
  %v8821 = vlaneseq
  %v8822 = vshrl.u32 %v8821, 7
  %v8823 = vsub.s32 %v8343, %v8822
  %v8824 = vrot.slane %v8194, %v8823
  %v8825 = vsel %vm8348, %v8824, %v8820
  %v8826 = vlaneseq
  %v8827 = vshrl.u32 %v8826, 7
  %v8828 = vsub.s32 %v8350, %v8827
  %v8829 = vrot.slane %v8197, %v8828
  %v8830 = vsel %vm8355, %v8829, %v8825
  %v8831 = vlaneseq
  %v8832 = vshrl.u32 %v8831, 7
  %v8833 = vsub.s32 %v8247, %v8832
  %v8834 = vrot.slane %v8200, %v8833
  %v8835 = vlaneseq
  %v8836 = vshrl.u32 %v8835, 7
  %v8837 = vsub.s32 %v8252, %v8836
  %v8838 = vrot.slane %v8203, %v8837
  %v8839 = vsel %vm8257, %v8838, %v8834
  %v8840 = vlaneseq
  %v8841 = vshrl.u32 %v8840, 7
  %v8842 = vsub.s32 %v8259, %v8841
  %v8843 = vrot.slane %v8206, %v8842
  %v8844 = vsel %vm8264, %v8843, %v8839
  %v8845 = vlaneseq
  %v8846 = vshrl.u32 %v8845, 7
  %v8847 = vsub.s32 %v8266, %v8846
  %v8848 = vrot.slane %v8209, %v8847
  %v8849 = vsel %vm8271, %v8848, %v8844
  %v8850 = vlaneseq
  %v8851 = vshrl.u32 %v8850, 7
  %v8852 = vsub.s32 %v8273, %v8851
  %v8853 = vrot.slane %v8212, %v8852
  %v8854 = vsel %vm8278, %v8853, %v8849
  %v8855 = vlaneseq
  %v8856 = vshrl.u32 %v8855, 7
  %v8857 = vsub.s32 %v8280, %v8856
  %v8858 = vrot.slane %v8215, %v8857
  %v8859 = vsel %vm8285, %v8858, %v8854
  %v8860 = vlaneseq
  %v8861 = vshrl.u32 %v8860, 7
  %v8862 = vsub.s32 %v8287, %v8861
  %v8863 = vrot.slane %v8218, %v8862
  %v8864 = vsel %vm8292, %v8863, %v8859
  %v8865 = vlaneseq
  %v8866 = vshrl.u32 %v8865, 7
  %v8867 = vsub.s32 %v8294, %v8866
  %v8868 = vrot.slane %v8221, %v8867
  %v8869 = vsel %vm8299, %v8868, %v8864
  %v8870 = vlaneseq
  %v8871 = vshrl.u32 %v8870, 7
  %v8872 = vsub.s32 %v8301, %v8871
  %v8873 = vrot.slane %v8224, %v8872
  %v8874 = vsel %vm8306, %v8873, %v8869
  %v8875 = vlaneseq
  %v8876 = vshrl.u32 %v8875, 7
  %v8877 = vsub.s32 %v8308, %v8876
  %v8878 = vrot.slane %v8227, %v8877
  %v8879 = vsel %vm8313, %v8878, %v8874
  %v8880 = vlaneseq
  %v8881 = vshrl.u32 %v8880, 7
  %v8882 = vsub.s32 %v8315, %v8881
  %v8883 = vrot.slane %v8230, %v8882
  %v8884 = vsel %vm8320, %v8883, %v8879
  %v8885 = vlaneseq
  %v8886 = vshrl.u32 %v8885, 7
  %v8887 = vsub.s32 %v8322, %v8886
  %v8888 = vrot.slane %v8233, %v8887
  %v8889 = vsel %vm8327, %v8888, %v8884
  %v8890 = vlaneseq
  %v8891 = vshrl.u32 %v8890, 7
  %v8892 = vsub.s32 %v8329, %v8891
  %v8893 = vrot.slane %v8236, %v8892
  %v8894 = vsel %vm8334, %v8893, %v8889
  %v8895 = vlaneseq
  %v8896 = vshrl.u32 %v8895, 7
  %v8897 = vsub.s32 %v8336, %v8896
  %v8898 = vrot.slane %v8239, %v8897
  %v8899 = vsel %vm8341, %v8898, %v8894
  %v8900 = vlaneseq
  %v8901 = vshrl.u32 %v8900, 7
  %v8902 = vsub.s32 %v8343, %v8901
  %v8903 = vrot.slane %v8242, %v8902
  %v8904 = vsel %vm8348, %v8903, %v8899
  %v8905 = vlaneseq
  %v8906 = vshrl.u32 %v8905, 7
  %v8907 = vsub.s32 %v8350, %v8906
  %v8908 = vrot.slane %v8245, %v8907
  %v8909 = vsel %vm8355, %v8908, %v8904
  %vm8910 = vcmask 1041409
  %v8911 = vsel %vm8910, %v8435, %v8356
  %vm8912 = vcmask 1042434
  %v8913 = vsel %vm8912, %v8514, %v8911
  %vm8914 = vcmask 1043459
  %v8915 = vsel %vm8914, %v8593, %v8913
  %vm8916 = vcmask 1044484
  %v8917 = vsel %vm8916, %v8672, %v8915
  %vm8918 = vcmask 1045509
  %v8919 = vsel %vm8918, %v8751, %v8917
  %vm8920 = vcmask 1046534
  %v8921 = vsel %vm8920, %v8830, %v8919
  %vm8922 = vcmask 1047559
  %v8923 = vsel %vm8922, %v8909, %v8921
  %8925 = vmax.xlane.f32.xlu0 %v8923
  %v8926 = vpop.xlane.xlu0 %8925
  %v8928 = vlaneseq
  %v8929 = vshrl.u32 %v8928, 7
  %v8930 = vsub.s32 0, %v8929
  %v8931 = vrot.slane %v8926, %v8930
  %v8932 = vlaneseq
  %v8933 = vshrl.u32 %v8932, 7
  %v8934 = vsub.s32 1, %v8933
  %v8935 = vrot.slane %v8926, %v8934
  %v8936 = vlaneseq
  %v8937 = vshrl.u32 %v8936, 7
  %v8938 = vsub.s32 2, %v8937
  %v8939 = vrot.slane %v8926, %v8938
  %v8940 = vlaneseq
  %v8941 = vshrl.u32 %v8940, 7
  %v8942 = vsub.s32 3, %v8941
  %v8943 = vrot.slane %v8926, %v8942
  %v8944 = vlaneseq
  %v8945 = vshrl.u32 %v8944, 7
  %v8946 = vsub.s32 4, %v8945
  %v8947 = vrot.slane %v8926, %v8946
  %v8948 = vlaneseq
  %v8949 = vshrl.u32 %v8948, 7
  %v8950 = vsub.s32 5, %v8949
  %v8951 = vrot.slane %v8926, %v8950
  %v8952 = vlaneseq
  %v8953 = vshrl.u32 %v8952, 7
  %v8954 = vsub.s32 6, %v8953
  %v8955 = vrot.slane %v8926, %v8954
  %v8956 = vlaneseq
  %v8957 = vshrl.u32 %v8956, 7
  %v8958 = vsub.s32 7, %v8957
  %v8959 = vrot.slane %v8926, %v8958
  %v8968 = vsub.f32 %v7606, %v8931
  %v8969 = vsub.f32 %v7607, %v8931
  %v8970 = vsub.f32 %v7608, %v8931
  %v8971 = vsub.f32 %v7609, %v8931
  %v8972 = vsub.f32 %v7610, %v8931
  %v8973 = vsub.f32 %v7611, %v8931
  %v8974 = vsub.f32 %v7612, %v8931
  %v8975 = vsub.f32 %v7613, %v8931
  %v8976 = vsub.f32 %v7614, %v8931
  %v8977 = vsub.f32 %v7615, %v8931
  %v8978 = vsub.f32 %v7616, %v8931
  %v8979 = vsub.f32 %v7617, %v8931
  %v8980 = vsub.f32 %v7618, %v8931
  %v8981 = vsub.f32 %v7619, %v8931
  %v8982 = vsub.f32 %v7620, %v8931
  %v8983 = vsub.f32 %v7621, %v8931
  %v8984 = vsub.f32 %v7622, %v8935
  %v8985 = vsub.f32 %v7623, %v8935
  %v8986 = vsub.f32 %v7624, %v8935
  %v8987 = vsub.f32 %v7625, %v8935
  %v8988 = vsub.f32 %v7626, %v8935
  %v8989 = vsub.f32 %v7627, %v8935
  %v8990 = vsub.f32 %v7628, %v8935
  %v8991 = vsub.f32 %v7629, %v8935
  %v8992 = vsub.f32 %v7630, %v8935
  %v8993 = vsub.f32 %v7631, %v8935
  %v8994 = vsub.f32 %v7632, %v8935
  %v8995 = vsub.f32 %v7633, %v8935
  %v8996 = vsub.f32 %v7634, %v8935
  %v8997 = vsub.f32 %v7635, %v8935
  %v8998 = vsub.f32 %v7636, %v8935
  %v8999 = vsub.f32 %v7637, %v8935
  %v9000 = vsub.f32 %v7638, %v8939
  %v9001 = vsub.f32 %v7639, %v8939
  %v9002 = vsub.f32 %v7640, %v8939
  %v9003 = vsub.f32 %v7641, %v8939
  %v9004 = vsub.f32 %v7642, %v8939
  %v9005 = vsub.f32 %v7643, %v8939
  %v9006 = vsub.f32 %v7644, %v8939
  %v9007 = vsub.f32 %v7645, %v8939
  %v9008 = vsub.f32 %v7646, %v8939
  %v9009 = vsub.f32 %v7647, %v8939
  %v9010 = vsub.f32 %v7648, %v8939
  %v9011 = vsub.f32 %v7649, %v8939
  %v9012 = vsub.f32 %v7650, %v8939
  %v9013 = vsub.f32 %v7651, %v8939
  %v9014 = vsub.f32 %v7652, %v8939
  %v9015 = vsub.f32 %v7653, %v8939
  %v9016 = vsub.f32 %v7654, %v8943
  %v9017 = vsub.f32 %v7655, %v8943
  %v9018 = vsub.f32 %v7656, %v8943
  %v9019 = vsub.f32 %v7657, %v8943
  %v9020 = vsub.f32 %v7658, %v8943
  %v9021 = vsub.f32 %v7659, %v8943
  %v9022 = vsub.f32 %v7660, %v8943
  %v9023 = vsub.f32 %v7661, %v8943
  %v9024 = vsub.f32 %v7662, %v8943
  %v9025 = vsub.f32 %v7663, %v8943
  %v9026 = vsub.f32 %v7664, %v8943
  %v9027 = vsub.f32 %v7665, %v8943
  %v9028 = vsub.f32 %v7666, %v8943
  %v9029 = vsub.f32 %v7667, %v8943
  %v9030 = vsub.f32 %v7668, %v8943
  %v9031 = vsub.f32 %v7669, %v8943
  %v9032 = vsub.f32 %v7670, %v8947
  %v9033 = vsub.f32 %v7671, %v8947
  %v9034 = vsub.f32 %v7672, %v8947
  %v9035 = vsub.f32 %v7673, %v8947
  %v9036 = vsub.f32 %v7674, %v8947
  %v9037 = vsub.f32 %v7675, %v8947
  %v9038 = vsub.f32 %v7676, %v8947
  %v9039 = vsub.f32 %v7677, %v8947
  %v9040 = vsub.f32 %v7678, %v8947
  %v9041 = vsub.f32 %v7679, %v8947
  %v9042 = vsub.f32 %v7680, %v8947
  %v9043 = vsub.f32 %v7681, %v8947
  %v9044 = vsub.f32 %v7682, %v8947
  %v9045 = vsub.f32 %v7683, %v8947
  %v9046 = vsub.f32 %v7684, %v8947
  %v9047 = vsub.f32 %v7685, %v8947
  %v9048 = vsub.f32 %v7686, %v8951
  %v9049 = vsub.f32 %v7687, %v8951
  %v9050 = vsub.f32 %v7688, %v8951
  %v9051 = vsub.f32 %v7689, %v8951
  %v9052 = vsub.f32 %v7690, %v8951
  %v9053 = vsub.f32 %v7691, %v8951
  %v9054 = vsub.f32 %v7692, %v8951
  %v9055 = vsub.f32 %v7693, %v8951
  %v9056 = vsub.f32 %v7694, %v8951
  %v9057 = vsub.f32 %v7695, %v8951
  %v9058 = vsub.f32 %v7696, %v8951
  %v9059 = vsub.f32 %v7697, %v8951
  %v9060 = vsub.f32 %v7698, %v8951
  %v9061 = vsub.f32 %v7699, %v8951
  %v9062 = vsub.f32 %v7700, %v8951
  %v9063 = vsub.f32 %v7701, %v8951
  %v9064 = vsub.f32 %v7702, %v8955
  %v9065 = vsub.f32 %v7703, %v8955
  %v9066 = vsub.f32 %v7704, %v8955
  %v9067 = vsub.f32 %v7705, %v8955
  %v9068 = vsub.f32 %v7706, %v8955
  %v9069 = vsub.f32 %v7707, %v8955
  %v9070 = vsub.f32 %v7708, %v8955
  %v9071 = vsub.f32 %v7709, %v8955
  %v9072 = vsub.f32 %v7710, %v8955
  %v9073 = vsub.f32 %v7711, %v8955
  %v9074 = vsub.f32 %v7712, %v8955
  %v9075 = vsub.f32 %v7713, %v8955
  %v9076 = vsub.f32 %v7714, %v8955
  %v9077 = vsub.f32 %v7715, %v8955
  %v9078 = vsub.f32 %v7716, %v8955
  %v9079 = vsub.f32 %v7717, %v8955
  %v9080 = vsub.f32 %v7718, %v8959
  %v9081 = vsub.f32 %v7719, %v8959
  %v9082 = vsub.f32 %v7720, %v8959
  %v9083 = vsub.f32 %v7721, %v8959
  %v9084 = vsub.f32 %v7722, %v8959
  %v9085 = vsub.f32 %v7723, %v8959
  %v9086 = vsub.f32 %v7724, %v8959
  %v9087 = vsub.f32 %v7725, %v8959
  %v9088 = vsub.f32 %v7726, %v8959
  %v9089 = vsub.f32 %v7727, %v8959
  %v9090 = vsub.f32 %v7728, %v8959
  %v9091 = vsub.f32 %v7729, %v8959
  %v9092 = vsub.f32 %v7730, %v8959
  %v9093 = vsub.f32 %v7731, %v8959
  %v9094 = vsub.f32 %v7732, %v8959
  %v9095 = vsub.f32 %v7733, %v8959
  %v9096 = vmul.f32 %v8968, 1.442695
  %v9097 = vpow.pop %v9096
  %v9098 = vmul.f32 %v8969, 1.442695
  %v9099 = vpow.pop %v9098
  %v9100 = vmul.f32 %v8970, 1.442695
  %v9101 = vpow.pop %v9100
  %v9102 = vmul.f32 %v8971, 1.442695
  %v9103 = vpow.pop %v9102
  %v9104 = vmul.f32 %v8972, 1.442695
  %v9105 = vpow.pop %v9104
  %v9106 = vmul.f32 %v8973, 1.442695
  %v9107 = vpow.pop %v9106
  %v9108 = vmul.f32 %v8974, 1.442695
  %v9109 = vpow.pop %v9108
  %v9110 = vmul.f32 %v8975, 1.442695
  %v9111 = vpow.pop %v9110
  %v9112 = vmul.f32 %v8976, 1.442695
  %v9113 = vpow.pop %v9112
  %v9114 = vmul.f32 %v8977, 1.442695
  %v9115 = vpow.pop %v9114
  %v9116 = vmul.f32 %v8978, 1.442695
  %v9117 = vpow.pop %v9116
  %v9118 = vmul.f32 %v8979, 1.442695
  %v9119 = vpow.pop %v9118
  %v9120 = vmul.f32 %v8980, 1.442695
  %v9121 = vpow.pop %v9120
  %v9122 = vmul.f32 %v8981, 1.442695
  %v9123 = vpow.pop %v9122
  %v9124 = vmul.f32 %v8982, 1.442695
  %v9125 = vpow.pop %v9124
  %v9126 = vmul.f32 %v8983, 1.442695
  %v9127 = vpow.pop %v9126
  %v9128 = vmul.f32 %v8984, 1.442695
  %v9129 = vpow.pop %v9128
  %v9130 = vmul.f32 %v8985, 1.442695
  %v9131 = vpow.pop %v9130
  %v9132 = vmul.f32 %v8986, 1.442695
  %v9133 = vpow.pop %v9132
  %v9134 = vmul.f32 %v8987, 1.442695
  %v9135 = vpow.pop %v9134
  %v9136 = vmul.f32 %v8988, 1.442695
  %v9137 = vpow.pop %v9136
  %v9138 = vmul.f32 %v8989, 1.442695
  %v9139 = vpow.pop %v9138
  %v9140 = vmul.f32 %v8990, 1.442695
  %v9141 = vpow.pop %v9140
  %v9142 = vmul.f32 %v8991, 1.442695
  %v9143 = vpow.pop %v9142
  %v9144 = vmul.f32 %v8992, 1.442695
  %v9145 = vpow.pop %v9144
  %v9146 = vmul.f32 %v8993, 1.442695
  %v9147 = vpow.pop %v9146
  %v9148 = vmul.f32 %v8994, 1.442695
  %v9149 = vpow.pop %v9148
  %v9150 = vmul.f32 %v8995, 1.442695
  %v9151 = vpow.pop %v9150
  %v9152 = vmul.f32 %v8996, 1.442695
  %v9153 = vpow.pop %v9152
  %v9154 = vmul.f32 %v8997, 1.442695
  %v9155 = vpow.pop %v9154
  %v9156 = vmul.f32 %v8998, 1.442695
  %v9157 = vpow.pop %v9156
  %v9158 = vmul.f32 %v8999, 1.442695
  %v9159 = vpow.pop %v9158
  %v9160 = vmul.f32 %v9000, 1.442695
  %v9161 = vpow.pop %v9160
  %v9162 = vmul.f32 %v9001, 1.442695
  %v9163 = vpow.pop %v9162
  %v9164 = vmul.f32 %v9002, 1.442695
  %v9165 = vpow.pop %v9164
  %v9166 = vmul.f32 %v9003, 1.442695
  %v9167 = vpow.pop %v9166
  %v9168 = vmul.f32 %v9004, 1.442695
  %v9169 = vpow.pop %v9168
  %v9170 = vmul.f32 %v9005, 1.442695
  %v9171 = vpow.pop %v9170
  %v9172 = vmul.f32 %v9006, 1.442695
  %v9173 = vpow.pop %v9172
  %v9174 = vmul.f32 %v9007, 1.442695
  %v9175 = vpow.pop %v9174
  %v9176 = vmul.f32 %v9008, 1.442695
  %v9177 = vpow.pop %v9176
  %v9178 = vmul.f32 %v9009, 1.442695
  %v9179 = vpow.pop %v9178
  %v9180 = vmul.f32 %v9010, 1.442695
  %v9181 = vpow.pop %v9180
  %v9182 = vmul.f32 %v9011, 1.442695
  %v9183 = vpow.pop %v9182
  %v9184 = vmul.f32 %v9012, 1.442695
  %v9185 = vpow.pop %v9184
  %v9186 = vmul.f32 %v9013, 1.442695
  %v9187 = vpow.pop %v9186
  %v9188 = vmul.f32 %v9014, 1.442695
  %v9189 = vpow.pop %v9188
  %v9190 = vmul.f32 %v9015, 1.442695
  %v9191 = vpow.pop %v9190
  %v9192 = vmul.f32 %v9016, 1.442695
  %v9193 = vpow.pop %v9192
  %v9194 = vmul.f32 %v9017, 1.442695
  %v9195 = vpow.pop %v9194
  %v9196 = vmul.f32 %v9018, 1.442695
  %v9197 = vpow.pop %v9196
  %v9198 = vmul.f32 %v9019, 1.442695
  %v9199 = vpow.pop %v9198
  %v9200 = vmul.f32 %v9020, 1.442695
  %v9201 = vpow.pop %v9200
  %v9202 = vmul.f32 %v9021, 1.442695
  %v9203 = vpow.pop %v9202
  %v9204 = vmul.f32 %v9022, 1.442695
  %v9205 = vpow.pop %v9204
  %v9206 = vmul.f32 %v9023, 1.442695
  %v9207 = vpow.pop %v9206
  %v9208 = vmul.f32 %v9024, 1.442695
  %v9209 = vpow.pop %v9208
  %v9210 = vmul.f32 %v9025, 1.442695
  %v9211 = vpow.pop %v9210
  %v9212 = vmul.f32 %v9026, 1.442695
  %v9213 = vpow.pop %v9212
  %v9214 = vmul.f32 %v9027, 1.442695
  %v9215 = vpow.pop %v9214
  %v9216 = vmul.f32 %v9028, 1.442695
  %v9217 = vpow.pop %v9216
  %v9218 = vmul.f32 %v9029, 1.442695
  %v9219 = vpow.pop %v9218
  %v9220 = vmul.f32 %v9030, 1.442695
  %v9221 = vpow.pop %v9220
  %v9222 = vmul.f32 %v9031, 1.442695
  %v9223 = vpow.pop %v9222
  %v9224 = vmul.f32 %v9032, 1.442695
  %v9225 = vpow.pop %v9224
  %v9226 = vmul.f32 %v9033, 1.442695
  %v9227 = vpow.pop %v9226
  %v9228 = vmul.f32 %v9034, 1.442695
  %v9229 = vpow.pop %v9228
  %v9230 = vmul.f32 %v9035, 1.442695
  %v9231 = vpow.pop %v9230
  %v9232 = vmul.f32 %v9036, 1.442695
  %v9233 = vpow.pop %v9232
  %v9234 = vmul.f32 %v9037, 1.442695
  %v9235 = vpow.pop %v9234
  %v9236 = vmul.f32 %v9038, 1.442695
  %v9237 = vpow.pop %v9236
  %v9238 = vmul.f32 %v9039, 1.442695
  %v9239 = vpow.pop %v9238
  %v9240 = vmul.f32 %v9040, 1.442695
  %v9241 = vpow.pop %v9240
  %v9242 = vmul.f32 %v9041, 1.442695
  %v9243 = vpow.pop %v9242
  %v9244 = vmul.f32 %v9042, 1.442695
  %v9245 = vpow.pop %v9244
  %v9246 = vmul.f32 %v9043, 1.442695
  %v9247 = vpow.pop %v9246
  %v9248 = vmul.f32 %v9044, 1.442695
  %v9249 = vpow.pop %v9248
  %v9250 = vmul.f32 %v9045, 1.442695
  %v9251 = vpow.pop %v9250
  %v9252 = vmul.f32 %v9046, 1.442695
  %v9253 = vpow.pop %v9252
  %v9254 = vmul.f32 %v9047, 1.442695
  %v9255 = vpow.pop %v9254
  %v9256 = vmul.f32 %v9048, 1.442695
  %v9257 = vpow.pop %v9256
  %v9258 = vmul.f32 %v9049, 1.442695
  %v9259 = vpow.pop %v9258
  %v9260 = vmul.f32 %v9050, 1.442695
  %v9261 = vpow.pop %v9260
  %v9262 = vmul.f32 %v9051, 1.442695
  %v9263 = vpow.pop %v9262
  %v9264 = vmul.f32 %v9052, 1.442695
  %v9265 = vpow.pop %v9264
  %v9266 = vmul.f32 %v9053, 1.442695
  %v9267 = vpow.pop %v9266
  %v9268 = vmul.f32 %v9054, 1.442695
  %v9269 = vpow.pop %v9268
  %v9270 = vmul.f32 %v9055, 1.442695
  %v9271 = vpow.pop %v9270
  %v9272 = vmul.f32 %v9056, 1.442695
  %v9273 = vpow.pop %v9272
  %v9274 = vmul.f32 %v9057, 1.442695
  %v9275 = vpow.pop %v9274
  %v9276 = vmul.f32 %v9058, 1.442695
  %v9277 = vpow.pop %v9276
  %v9278 = vmul.f32 %v9059, 1.442695
  %v9279 = vpow.pop %v9278
  %v9280 = vmul.f32 %v9060, 1.442695
  %v9281 = vpow.pop %v9280
  %v9282 = vmul.f32 %v9061, 1.442695
  %v9283 = vpow.pop %v9282
  %v9284 = vmul.f32 %v9062, 1.442695
  %v9285 = vpow.pop %v9284
  %v9286 = vmul.f32 %v9063, 1.442695
  %v9287 = vpow.pop %v9286
  %v9288 = vmul.f32 %v9064, 1.442695
  %v9289 = vpow.pop %v9288
  %v9290 = vmul.f32 %v9065, 1.442695
  %v9291 = vpow.pop %v9290
  %v9292 = vmul.f32 %v9066, 1.442695
  %v9293 = vpow.pop %v9292
  %v9294 = vmul.f32 %v9067, 1.442695
  %v9295 = vpow.pop %v9294
  %v9296 = vmul.f32 %v9068, 1.442695
  %v9297 = vpow.pop %v9296
  %v9298 = vmul.f32 %v9069, 1.442695
  %v9299 = vpow.pop %v9298
  %v9300 = vmul.f32 %v9070, 1.442695
  %v9301 = vpow.pop %v9300
  %v9302 = vmul.f32 %v9071, 1.442695
  %v9303 = vpow.pop %v9302
  %v9304 = vmul.f32 %v9072, 1.442695
  %v9305 = vpow.pop %v9304
  %v9306 = vmul.f32 %v9073, 1.442695
  %v9307 = vpow.pop %v9306
  %v9308 = vmul.f32 %v9074, 1.442695
  %v9309 = vpow.pop %v9308
  %v9310 = vmul.f32 %v9075, 1.442695
  %v9311 = vpow.pop %v9310
  %v9312 = vmul.f32 %v9076, 1.442695
  %v9313 = vpow.pop %v9312
  %v9314 = vmul.f32 %v9077, 1.442695
  %v9315 = vpow.pop %v9314
  %v9316 = vmul.f32 %v9078, 1.442695
  %v9317 = vpow.pop %v9316
  %v9318 = vmul.f32 %v9079, 1.442695
  %v9319 = vpow.pop %v9318
  %v9320 = vmul.f32 %v9080, 1.442695
  %v9321 = vpow.pop %v9320
  %v9322 = vmul.f32 %v9081, 1.442695
  %v9323 = vpow.pop %v9322
  %v9324 = vmul.f32 %v9082, 1.442695
  %v9325 = vpow.pop %v9324
  %v9326 = vmul.f32 %v9083, 1.442695
  %v9327 = vpow.pop %v9326
  %v9328 = vmul.f32 %v9084, 1.442695
  %v9329 = vpow.pop %v9328
  %v9330 = vmul.f32 %v9085, 1.442695
  %v9331 = vpow.pop %v9330
  %v9332 = vmul.f32 %v9086, 1.442695
  %v9333 = vpow.pop %v9332
  %v9334 = vmul.f32 %v9087, 1.442695
  %v9335 = vpow.pop %v9334
  %v9336 = vmul.f32 %v9088, 1.442695
  %v9337 = vpow.pop %v9336
  %v9338 = vmul.f32 %v9089, 1.442695
  %v9339 = vpow.pop %v9338
  %v9340 = vmul.f32 %v9090, 1.442695
  %v9341 = vpow.pop %v9340
  %v9342 = vmul.f32 %v9091, 1.442695
  %v9343 = vpow.pop %v9342
  %v9344 = vmul.f32 %v9092, 1.442695
  %v9345 = vpow.pop %v9344
  %v9346 = vmul.f32 %v9093, 1.442695
  %v9347 = vpow.pop %v9346
  %v9348 = vmul.f32 %v9094, 1.442695
  %v9349 = vpow.pop %v9348
  %v9350 = vmul.f32 %v9095, 1.442695
  %v9351 = vpow.pop %v9350
  %9480 = vset.pattern.permute.xlu0 0
  %9481 = vperm.xlu0 %9480, %v9097
  %v9482 = vpop.permute.xlu0 %9481
  %9483 = vset.pattern.permute.xlu0 0
  %9484 = vperm.xlu0 %9483, %v9099
  %v9485 = vpop.permute.xlu0 %9484
  %9486 = vset.pattern.permute.xlu0 0
  %9487 = vperm.xlu0 %9486, %v9101
  %v9488 = vpop.permute.xlu0 %9487
  %9489 = vset.pattern.permute.xlu0 0
  %9490 = vperm.xlu0 %9489, %v9103
  %v9491 = vpop.permute.xlu0 %9490
  %9492 = vset.pattern.permute.xlu0 0
  %9493 = vperm.xlu0 %9492, %v9105
  %v9494 = vpop.permute.xlu0 %9493
  %9495 = vset.pattern.permute.xlu0 0
  %9496 = vperm.xlu0 %9495, %v9107
  %v9497 = vpop.permute.xlu0 %9496
  %9498 = vset.pattern.permute.xlu0 0
  %9499 = vperm.xlu0 %9498, %v9109
  %v9500 = vpop.permute.xlu0 %9499
  %9501 = vset.pattern.permute.xlu0 0
  %9502 = vperm.xlu0 %9501, %v9111
  %v9503 = vpop.permute.xlu0 %9502
  %9504 = vset.pattern.permute.xlu0 0
  %9505 = vperm.xlu0 %9504, %v9113
  %v9506 = vpop.permute.xlu0 %9505
  %9507 = vset.pattern.permute.xlu0 0
  %9508 = vperm.xlu0 %9507, %v9115
  %v9509 = vpop.permute.xlu0 %9508
  %9510 = vset.pattern.permute.xlu0 0
  %9511 = vperm.xlu0 %9510, %v9117
  %v9512 = vpop.permute.xlu0 %9511
  %9513 = vset.pattern.permute.xlu0 0
  %9514 = vperm.xlu0 %9513, %v9119
  %v9515 = vpop.permute.xlu0 %9514
  %9516 = vset.pattern.permute.xlu0 0
  %9517 = vperm.xlu0 %9516, %v9121
  %v9518 = vpop.permute.xlu0 %9517
  %9519 = vset.pattern.permute.xlu0 0
  %9520 = vperm.xlu0 %9519, %v9123
  %v9521 = vpop.permute.xlu0 %9520
  %9522 = vset.pattern.permute.xlu0 0
  %9523 = vperm.xlu0 %9522, %v9125
  %v9524 = vpop.permute.xlu0 %9523
  %9525 = vset.pattern.permute.xlu0 0
  %9526 = vperm.xlu0 %9525, %v9127
  %v9527 = vpop.permute.xlu0 %9526
  %9528 = vset.pattern.permute.xlu0 0
  %9529 = vperm.xlu0 %9528, %v9129
  %v9530 = vpop.permute.xlu0 %9529
  %9531 = vset.pattern.permute.xlu0 0
  %9532 = vperm.xlu0 %9531, %v9131
  %v9533 = vpop.permute.xlu0 %9532
  %9534 = vset.pattern.permute.xlu0 0
  %9535 = vperm.xlu0 %9534, %v9133
  %v9536 = vpop.permute.xlu0 %9535
  %9537 = vset.pattern.permute.xlu0 0
  %9538 = vperm.xlu0 %9537, %v9135
  %v9539 = vpop.permute.xlu0 %9538
  %9540 = vset.pattern.permute.xlu0 0
  %9541 = vperm.xlu0 %9540, %v9137
  %v9542 = vpop.permute.xlu0 %9541
  %9543 = vset.pattern.permute.xlu0 0
  %9544 = vperm.xlu0 %9543, %v9139
  %v9545 = vpop.permute.xlu0 %9544
  %9546 = vset.pattern.permute.xlu0 0
  %9547 = vperm.xlu0 %9546, %v9141
  %v9548 = vpop.permute.xlu0 %9547
  %9549 = vset.pattern.permute.xlu0 0
  %9550 = vperm.xlu0 %9549, %v9143
  %v9551 = vpop.permute.xlu0 %9550
  %9552 = vset.pattern.permute.xlu0 0
  %9553 = vperm.xlu0 %9552, %v9145
  %v9554 = vpop.permute.xlu0 %9553
  %9555 = vset.pattern.permute.xlu0 0
  %9556 = vperm.xlu0 %9555, %v9147
  %v9557 = vpop.permute.xlu0 %9556
  %9558 = vset.pattern.permute.xlu0 0
  %9559 = vperm.xlu0 %9558, %v9149
  %v9560 = vpop.permute.xlu0 %9559
  %9561 = vset.pattern.permute.xlu0 0
  %9562 = vperm.xlu0 %9561, %v9151
  %v9563 = vpop.permute.xlu0 %9562
  %9564 = vset.pattern.permute.xlu0 0
  %9565 = vperm.xlu0 %9564, %v9153
  %v9566 = vpop.permute.xlu0 %9565
  %9567 = vset.pattern.permute.xlu0 0
  %9568 = vperm.xlu0 %9567, %v9155
  %v9569 = vpop.permute.xlu0 %9568
  %9570 = vset.pattern.permute.xlu0 0
  %9571 = vperm.xlu0 %9570, %v9157
  %v9572 = vpop.permute.xlu0 %9571
  %9573 = vset.pattern.permute.xlu0 0
  %9574 = vperm.xlu0 %9573, %v9159
  %v9575 = vpop.permute.xlu0 %9574
  %9576 = vset.pattern.permute.xlu0 0
  %9577 = vperm.xlu0 %9576, %v9161
  %v9578 = vpop.permute.xlu0 %9577
  %9579 = vset.pattern.permute.xlu0 0
  %9580 = vperm.xlu0 %9579, %v9163
  %v9581 = vpop.permute.xlu0 %9580
  %9582 = vset.pattern.permute.xlu0 0
  %9583 = vperm.xlu0 %9582, %v9165
  %v9584 = vpop.permute.xlu0 %9583
  %9585 = vset.pattern.permute.xlu0 0
  %9586 = vperm.xlu0 %9585, %v9167
  %v9587 = vpop.permute.xlu0 %9586
  %9588 = vset.pattern.permute.xlu0 0
  %9589 = vperm.xlu0 %9588, %v9169
  %v9590 = vpop.permute.xlu0 %9589
  %9591 = vset.pattern.permute.xlu0 0
  %9592 = vperm.xlu0 %9591, %v9171
  %v9593 = vpop.permute.xlu0 %9592
  %9594 = vset.pattern.permute.xlu0 0
  %9595 = vperm.xlu0 %9594, %v9173
  %v9596 = vpop.permute.xlu0 %9595
  %9597 = vset.pattern.permute.xlu0 0
  %9598 = vperm.xlu0 %9597, %v9175
  %v9599 = vpop.permute.xlu0 %9598
  %9600 = vset.pattern.permute.xlu0 0
  %9601 = vperm.xlu0 %9600, %v9177
  %v9602 = vpop.permute.xlu0 %9601
  %9603 = vset.pattern.permute.xlu0 0
  %9604 = vperm.xlu0 %9603, %v9179
  %v9605 = vpop.permute.xlu0 %9604
  %9606 = vset.pattern.permute.xlu0 0
  %9607 = vperm.xlu0 %9606, %v9181
  %v9608 = vpop.permute.xlu0 %9607
  %9609 = vset.pattern.permute.xlu0 0
  %9610 = vperm.xlu0 %9609, %v9183
  %v9611 = vpop.permute.xlu0 %9610
  %9612 = vset.pattern.permute.xlu0 0
  %9613 = vperm.xlu0 %9612, %v9185
  %v9614 = vpop.permute.xlu0 %9613
  %9615 = vset.pattern.permute.xlu0 0
  %9616 = vperm.xlu0 %9615, %v9187
  %v9617 = vpop.permute.xlu0 %9616
  %9618 = vset.pattern.permute.xlu0 0
  %9619 = vperm.xlu0 %9618, %v9189
  %v9620 = vpop.permute.xlu0 %9619
  %9621 = vset.pattern.permute.xlu0 0
  %9622 = vperm.xlu0 %9621, %v9191
  %v9623 = vpop.permute.xlu0 %9622
  %9624 = vset.pattern.permute.xlu0 0
  %9625 = vperm.xlu0 %9624, %v9193
  %v9626 = vpop.permute.xlu0 %9625
  %9627 = vset.pattern.permute.xlu0 0
  %9628 = vperm.xlu0 %9627, %v9195
  %v9629 = vpop.permute.xlu0 %9628
  %9630 = vset.pattern.permute.xlu0 0
  %9631 = vperm.xlu0 %9630, %v9197
  %v9632 = vpop.permute.xlu0 %9631
  %9633 = vset.pattern.permute.xlu0 0
  %9634 = vperm.xlu0 %9633, %v9199
  %v9635 = vpop.permute.xlu0 %9634
  %9636 = vset.pattern.permute.xlu0 0
  %9637 = vperm.xlu0 %9636, %v9201
  %v9638 = vpop.permute.xlu0 %9637
  %9639 = vset.pattern.permute.xlu0 0
  %9640 = vperm.xlu0 %9639, %v9203
  %v9641 = vpop.permute.xlu0 %9640
  %9642 = vset.pattern.permute.xlu0 0
  %9643 = vperm.xlu0 %9642, %v9205
  %v9644 = vpop.permute.xlu0 %9643
  %9645 = vset.pattern.permute.xlu0 0
  %9646 = vperm.xlu0 %9645, %v9207
  %v9647 = vpop.permute.xlu0 %9646
  %9648 = vset.pattern.permute.xlu0 0
  %9649 = vperm.xlu0 %9648, %v9209
  %v9650 = vpop.permute.xlu0 %9649
  %9651 = vset.pattern.permute.xlu0 0
  %9652 = vperm.xlu0 %9651, %v9211
  %v9653 = vpop.permute.xlu0 %9652
  %9654 = vset.pattern.permute.xlu0 0
  %9655 = vperm.xlu0 %9654, %v9213
  %v9656 = vpop.permute.xlu0 %9655
  %9657 = vset.pattern.permute.xlu0 0
  %9658 = vperm.xlu0 %9657, %v9215
  %v9659 = vpop.permute.xlu0 %9658
  %9660 = vset.pattern.permute.xlu0 0
  %9661 = vperm.xlu0 %9660, %v9217
  %v9662 = vpop.permute.xlu0 %9661
  %9663 = vset.pattern.permute.xlu0 0
  %9664 = vperm.xlu0 %9663, %v9219
  %v9665 = vpop.permute.xlu0 %9664
  %9666 = vset.pattern.permute.xlu0 0
  %9667 = vperm.xlu0 %9666, %v9221
  %v9668 = vpop.permute.xlu0 %9667
  %9669 = vset.pattern.permute.xlu0 0
  %9670 = vperm.xlu0 %9669, %v9223
  %v9671 = vpop.permute.xlu0 %9670
  %9672 = vset.pattern.permute.xlu0 0
  %9673 = vperm.xlu0 %9672, %v9225
  %v9674 = vpop.permute.xlu0 %9673
  %9675 = vset.pattern.permute.xlu0 0
  %9676 = vperm.xlu0 %9675, %v9227
  %v9677 = vpop.permute.xlu0 %9676
  %9678 = vset.pattern.permute.xlu0 0
  %9679 = vperm.xlu0 %9678, %v9229
  %v9680 = vpop.permute.xlu0 %9679
  %9681 = vset.pattern.permute.xlu0 0
  %9682 = vperm.xlu0 %9681, %v9231
  %v9683 = vpop.permute.xlu0 %9682
  %9684 = vset.pattern.permute.xlu0 0
  %9685 = vperm.xlu0 %9684, %v9233
  %v9686 = vpop.permute.xlu0 %9685
  %9687 = vset.pattern.permute.xlu0 0
  %9688 = vperm.xlu0 %9687, %v9235
  %v9689 = vpop.permute.xlu0 %9688
  %9690 = vset.pattern.permute.xlu0 0
  %9691 = vperm.xlu0 %9690, %v9237
  %v9692 = vpop.permute.xlu0 %9691
  %9693 = vset.pattern.permute.xlu0 0
  %9694 = vperm.xlu0 %9693, %v9239
  %v9695 = vpop.permute.xlu0 %9694
  %9696 = vset.pattern.permute.xlu0 0
  %9697 = vperm.xlu0 %9696, %v9241
  %v9698 = vpop.permute.xlu0 %9697
  %9699 = vset.pattern.permute.xlu0 0
  %9700 = vperm.xlu0 %9699, %v9243
  %v9701 = vpop.permute.xlu0 %9700
  %9702 = vset.pattern.permute.xlu0 0
  %9703 = vperm.xlu0 %9702, %v9245
  %v9704 = vpop.permute.xlu0 %9703
  %9705 = vset.pattern.permute.xlu0 0
  %9706 = vperm.xlu0 %9705, %v9247
  %v9707 = vpop.permute.xlu0 %9706
  %9708 = vset.pattern.permute.xlu0 0
  %9709 = vperm.xlu0 %9708, %v9249
  %v9710 = vpop.permute.xlu0 %9709
  %9711 = vset.pattern.permute.xlu0 0
  %9712 = vperm.xlu0 %9711, %v9251
  %v9713 = vpop.permute.xlu0 %9712
  %9714 = vset.pattern.permute.xlu0 0
  %9715 = vperm.xlu0 %9714, %v9253
  %v9716 = vpop.permute.xlu0 %9715
  %9717 = vset.pattern.permute.xlu0 0
  %9718 = vperm.xlu0 %9717, %v9255
  %v9719 = vpop.permute.xlu0 %9718
  %9720 = vset.pattern.permute.xlu0 0
  %9721 = vperm.xlu0 %9720, %v9257
  %v9722 = vpop.permute.xlu0 %9721
  %9723 = vset.pattern.permute.xlu0 0
  %9724 = vperm.xlu0 %9723, %v9259
  %v9725 = vpop.permute.xlu0 %9724
  %9726 = vset.pattern.permute.xlu0 0
  %9727 = vperm.xlu0 %9726, %v9261
  %v9728 = vpop.permute.xlu0 %9727
  %9729 = vset.pattern.permute.xlu0 0
  %9730 = vperm.xlu0 %9729, %v9263
  %v9731 = vpop.permute.xlu0 %9730
  %9732 = vset.pattern.permute.xlu0 0
  %9733 = vperm.xlu0 %9732, %v9265
  %v9734 = vpop.permute.xlu0 %9733
  %9735 = vset.pattern.permute.xlu0 0
  %9736 = vperm.xlu0 %9735, %v9267
  %v9737 = vpop.permute.xlu0 %9736
  %9738 = vset.pattern.permute.xlu0 0
  %9739 = vperm.xlu0 %9738, %v9269
  %v9740 = vpop.permute.xlu0 %9739
  %9741 = vset.pattern.permute.xlu0 0
  %9742 = vperm.xlu0 %9741, %v9271
  %v9743 = vpop.permute.xlu0 %9742
  %9744 = vset.pattern.permute.xlu0 0
  %9745 = vperm.xlu0 %9744, %v9273
  %v9746 = vpop.permute.xlu0 %9745
  %9747 = vset.pattern.permute.xlu0 0
  %9748 = vperm.xlu0 %9747, %v9275
  %v9749 = vpop.permute.xlu0 %9748
  %9750 = vset.pattern.permute.xlu0 0
  %9751 = vperm.xlu0 %9750, %v9277
  %v9752 = vpop.permute.xlu0 %9751
  %9753 = vset.pattern.permute.xlu0 0
  %9754 = vperm.xlu0 %9753, %v9279
  %v9755 = vpop.permute.xlu0 %9754
  %9756 = vset.pattern.permute.xlu0 0
  %9757 = vperm.xlu0 %9756, %v9281
  %v9758 = vpop.permute.xlu0 %9757
  %9759 = vset.pattern.permute.xlu0 0
  %9760 = vperm.xlu0 %9759, %v9283
  %v9761 = vpop.permute.xlu0 %9760
  %9762 = vset.pattern.permute.xlu0 0
  %9763 = vperm.xlu0 %9762, %v9285
  %v9764 = vpop.permute.xlu0 %9763
  %9765 = vset.pattern.permute.xlu0 0
  %9766 = vperm.xlu0 %9765, %v9287
  %v9767 = vpop.permute.xlu0 %9766
  %9768 = vset.pattern.permute.xlu0 0
  %9769 = vperm.xlu0 %9768, %v9289
  %v9770 = vpop.permute.xlu0 %9769
  %9771 = vset.pattern.permute.xlu0 0
  %9772 = vperm.xlu0 %9771, %v9291
  %v9773 = vpop.permute.xlu0 %9772
  %9774 = vset.pattern.permute.xlu0 0
  %9775 = vperm.xlu0 %9774, %v9293
  %v9776 = vpop.permute.xlu0 %9775
  %9777 = vset.pattern.permute.xlu0 0
  %9778 = vperm.xlu0 %9777, %v9295
  %v9779 = vpop.permute.xlu0 %9778
  %9780 = vset.pattern.permute.xlu0 0
  %9781 = vperm.xlu0 %9780, %v9297
  %v9782 = vpop.permute.xlu0 %9781
  %9783 = vset.pattern.permute.xlu0 0
  %9784 = vperm.xlu0 %9783, %v9299
  %v9785 = vpop.permute.xlu0 %9784
  %9786 = vset.pattern.permute.xlu0 0
  %9787 = vperm.xlu0 %9786, %v9301
  %v9788 = vpop.permute.xlu0 %9787
  %9789 = vset.pattern.permute.xlu0 0
  %9790 = vperm.xlu0 %9789, %v9303
  %v9791 = vpop.permute.xlu0 %9790
  %9792 = vset.pattern.permute.xlu0 0
  %9793 = vperm.xlu0 %9792, %v9305
  %v9794 = vpop.permute.xlu0 %9793
  %9795 = vset.pattern.permute.xlu0 0
  %9796 = vperm.xlu0 %9795, %v9307
  %v9797 = vpop.permute.xlu0 %9796
  %9798 = vset.pattern.permute.xlu0 0
  %9799 = vperm.xlu0 %9798, %v9309
  %v9800 = vpop.permute.xlu0 %9799
  %9801 = vset.pattern.permute.xlu0 0
  %9802 = vperm.xlu0 %9801, %v9311
  %v9803 = vpop.permute.xlu0 %9802
  %9804 = vset.pattern.permute.xlu0 0
  %9805 = vperm.xlu0 %9804, %v9313
  %v9806 = vpop.permute.xlu0 %9805
  %9807 = vset.pattern.permute.xlu0 0
  %9808 = vperm.xlu0 %9807, %v9315
  %v9809 = vpop.permute.xlu0 %9808
  %9810 = vset.pattern.permute.xlu0 0
  %9811 = vperm.xlu0 %9810, %v9317
  %v9812 = vpop.permute.xlu0 %9811
  %9813 = vset.pattern.permute.xlu0 0
  %9814 = vperm.xlu0 %9813, %v9319
  %v9815 = vpop.permute.xlu0 %9814
  %9816 = vset.pattern.permute.xlu0 0
  %9817 = vperm.xlu0 %9816, %v9321
  %v9818 = vpop.permute.xlu0 %9817
  %9819 = vset.pattern.permute.xlu0 0
  %9820 = vperm.xlu0 %9819, %v9323
  %v9821 = vpop.permute.xlu0 %9820
  %9822 = vset.pattern.permute.xlu0 0
  %9823 = vperm.xlu0 %9822, %v9325
  %v9824 = vpop.permute.xlu0 %9823
  %9825 = vset.pattern.permute.xlu0 0
  %9826 = vperm.xlu0 %9825, %v9327
  %v9827 = vpop.permute.xlu0 %9826
  %9828 = vset.pattern.permute.xlu0 0
  %9829 = vperm.xlu0 %9828, %v9329
  %v9830 = vpop.permute.xlu0 %9829
  %9831 = vset.pattern.permute.xlu0 0
  %9832 = vperm.xlu0 %9831, %v9331
  %v9833 = vpop.permute.xlu0 %9832
  %9834 = vset.pattern.permute.xlu0 0
  %9835 = vperm.xlu0 %9834, %v9333
  %v9836 = vpop.permute.xlu0 %9835
  %9837 = vset.pattern.permute.xlu0 0
  %9838 = vperm.xlu0 %9837, %v9335
  %v9839 = vpop.permute.xlu0 %9838
  %9840 = vset.pattern.permute.xlu0 0
  %9841 = vperm.xlu0 %9840, %v9337
  %v9842 = vpop.permute.xlu0 %9841
  %9843 = vset.pattern.permute.xlu0 0
  %9844 = vperm.xlu0 %9843, %v9339
  %v9845 = vpop.permute.xlu0 %9844
  %9846 = vset.pattern.permute.xlu0 0
  %9847 = vperm.xlu0 %9846, %v9341
  %v9848 = vpop.permute.xlu0 %9847
  %9849 = vset.pattern.permute.xlu0 0
  %9850 = vperm.xlu0 %9849, %v9343
  %v9851 = vpop.permute.xlu0 %9850
  %9852 = vset.pattern.permute.xlu0 0
  %9853 = vperm.xlu0 %9852, %v9345
  %v9854 = vpop.permute.xlu0 %9853
  %9855 = vset.pattern.permute.xlu0 0
  %9856 = vperm.xlu0 %9855, %v9347
  %v9857 = vpop.permute.xlu0 %9856
  %9858 = vset.pattern.permute.xlu0 0
  %9859 = vperm.xlu0 %9858, %v9349
  %v9860 = vpop.permute.xlu0 %9859
  %9861 = vset.pattern.permute.xlu0 0
  %9862 = vperm.xlu0 %9861, %v9351
  %v9863 = vpop.permute.xlu0 %9862
  %v9864 = vlaneseq
  %v9865 = vshrl.u32 %v9864, 7
  %v9866 = vsub.s32 %v8247, %v9865
  %v9867 = vrot.slane %v9482, %v9866
  %v9868 = vlaneseq
  %v9869 = vshrl.u32 %v9868, 7
  %v9870 = vsub.s32 %v8252, %v9869
  %v9871 = vrot.slane %v9485, %v9870
  %v9872 = vsel %vm8257, %v9871, %v9867
  %v9873 = vlaneseq
  %v9874 = vshrl.u32 %v9873, 7
  %v9875 = vsub.s32 %v8259, %v9874
  %v9876 = vrot.slane %v9488, %v9875
  %v9877 = vsel %vm8264, %v9876, %v9872
  %v9878 = vlaneseq
  %v9879 = vshrl.u32 %v9878, 7
  %v9880 = vsub.s32 %v8266, %v9879
  %v9881 = vrot.slane %v9491, %v9880
  %v9882 = vsel %vm8271, %v9881, %v9877
  %v9883 = vlaneseq
  %v9884 = vshrl.u32 %v9883, 7
  %v9885 = vsub.s32 %v8273, %v9884
  %v9886 = vrot.slane %v9494, %v9885
  %v9887 = vsel %vm8278, %v9886, %v9882
  %v9888 = vlaneseq
  %v9889 = vshrl.u32 %v9888, 7
  %v9890 = vsub.s32 %v8280, %v9889
  %v9891 = vrot.slane %v9497, %v9890
  %v9892 = vsel %vm8285, %v9891, %v9887
  %v9893 = vlaneseq
  %v9894 = vshrl.u32 %v9893, 7
  %v9895 = vsub.s32 %v8287, %v9894
  %v9896 = vrot.slane %v9500, %v9895
  %v9897 = vsel %vm8292, %v9896, %v9892
  %v9898 = vlaneseq
  %v9899 = vshrl.u32 %v9898, 7
  %v9900 = vsub.s32 %v8294, %v9899
  %v9901 = vrot.slane %v9503, %v9900
  %v9902 = vsel %vm8299, %v9901, %v9897
  %v9903 = vlaneseq
  %v9904 = vshrl.u32 %v9903, 7
  %v9905 = vsub.s32 %v8301, %v9904
  %v9906 = vrot.slane %v9506, %v9905
  %v9907 = vsel %vm8306, %v9906, %v9902
  %v9908 = vlaneseq
  %v9909 = vshrl.u32 %v9908, 7
  %v9910 = vsub.s32 %v8308, %v9909
  %v9911 = vrot.slane %v9509, %v9910
  %v9912 = vsel %vm8313, %v9911, %v9907
  %v9913 = vlaneseq
  %v9914 = vshrl.u32 %v9913, 7
  %v9915 = vsub.s32 %v8315, %v9914
  %v9916 = vrot.slane %v9512, %v9915
  %v9917 = vsel %vm8320, %v9916, %v9912
  %v9918 = vlaneseq
  %v9919 = vshrl.u32 %v9918, 7
  %v9920 = vsub.s32 %v8322, %v9919
  %v9921 = vrot.slane %v9515, %v9920
  %v9922 = vsel %vm8327, %v9921, %v9917
  %v9923 = vlaneseq
  %v9924 = vshrl.u32 %v9923, 7
  %v9925 = vsub.s32 %v8329, %v9924
  %v9926 = vrot.slane %v9518, %v9925
  %v9927 = vsel %vm8334, %v9926, %v9922
  %v9928 = vlaneseq
  %v9929 = vshrl.u32 %v9928, 7
  %v9930 = vsub.s32 %v8336, %v9929
  %v9931 = vrot.slane %v9521, %v9930
  %v9932 = vsel %vm8341, %v9931, %v9927
  %v9933 = vlaneseq
  %v9934 = vshrl.u32 %v9933, 7
  %v9935 = vsub.s32 %v8343, %v9934
  %v9936 = vrot.slane %v9524, %v9935
  %v9937 = vsel %vm8348, %v9936, %v9932
  %v9938 = vlaneseq
  %v9939 = vshrl.u32 %v9938, 7
  %v9940 = vsub.s32 %v8350, %v9939
  %v9941 = vrot.slane %v9527, %v9940
  %v9942 = vsel %vm8355, %v9941, %v9937
  %v9943 = vlaneseq
  %v9944 = vshrl.u32 %v9943, 7
  %v9945 = vsub.s32 %v8247, %v9944
  %v9946 = vrot.slane %v9530, %v9945
  %v9947 = vlaneseq
  %v9948 = vshrl.u32 %v9947, 7
  %v9949 = vsub.s32 %v8252, %v9948
  %v9950 = vrot.slane %v9533, %v9949
  %v9951 = vsel %vm8257, %v9950, %v9946
  %v9952 = vlaneseq
  %v9953 = vshrl.u32 %v9952, 7
  %v9954 = vsub.s32 %v8259, %v9953
  %v9955 = vrot.slane %v9536, %v9954
  %v9956 = vsel %vm8264, %v9955, %v9951
  %v9957 = vlaneseq
  %v9958 = vshrl.u32 %v9957, 7
  %v9959 = vsub.s32 %v8266, %v9958
  %v9960 = vrot.slane %v9539, %v9959
  %v9961 = vsel %vm8271, %v9960, %v9956
  %v9962 = vlaneseq
  %v9963 = vshrl.u32 %v9962, 7
  %v9964 = vsub.s32 %v8273, %v9963
  %v9965 = vrot.slane %v9542, %v9964
  %v9966 = vsel %vm8278, %v9965, %v9961
  %v9967 = vlaneseq
  %v9968 = vshrl.u32 %v9967, 7
  %v9969 = vsub.s32 %v8280, %v9968
  %v9970 = vrot.slane %v9545, %v9969
  %v9971 = vsel %vm8285, %v9970, %v9966
  %v9972 = vlaneseq
  %v9973 = vshrl.u32 %v9972, 7
  %v9974 = vsub.s32 %v8287, %v9973
  %v9975 = vrot.slane %v9548, %v9974
  %v9976 = vsel %vm8292, %v9975, %v9971
  %v9977 = vlaneseq
  %v9978 = vshrl.u32 %v9977, 7
  %v9979 = vsub.s32 %v8294, %v9978
  %v9980 = vrot.slane %v9551, %v9979
  %v9981 = vsel %vm8299, %v9980, %v9976
  %v9982 = vlaneseq
  %v9983 = vshrl.u32 %v9982, 7
  %v9984 = vsub.s32 %v8301, %v9983
  %v9985 = vrot.slane %v9554, %v9984
  %v9986 = vsel %vm8306, %v9985, %v9981
  %v9987 = vlaneseq
  %v9988 = vshrl.u32 %v9987, 7
  %v9989 = vsub.s32 %v8308, %v9988
  %v9990 = vrot.slane %v9557, %v9989
  %v9991 = vsel %vm8313, %v9990, %v9986
  %v9992 = vlaneseq
  %v9993 = vshrl.u32 %v9992, 7
  %v9994 = vsub.s32 %v8315, %v9993
  %v9995 = vrot.slane %v9560, %v9994
  %v9996 = vsel %vm8320, %v9995, %v9991
  %v9997 = vlaneseq
  %v9998 = vshrl.u32 %v9997, 7
  %v9999 = vsub.s32 %v8322, %v9998
  %v10000 = vrot.slane %v9563, %v9999
  %v10001 = vsel %vm8327, %v10000, %v9996
  %v10002 = vlaneseq
  %v10003 = vshrl.u32 %v10002, 7
  %v10004 = vsub.s32 %v8329, %v10003
  %v10005 = vrot.slane %v9566, %v10004
  %v10006 = vsel %vm8334, %v10005, %v10001
  %v10007 = vlaneseq
  %v10008 = vshrl.u32 %v10007, 7
  %v10009 = vsub.s32 %v8336, %v10008
  %v10010 = vrot.slane %v9569, %v10009
  %v10011 = vsel %vm8341, %v10010, %v10006
  %v10012 = vlaneseq
  %v10013 = vshrl.u32 %v10012, 7
  %v10014 = vsub.s32 %v8343, %v10013
  %v10015 = vrot.slane %v9572, %v10014
  %v10016 = vsel %vm8348, %v10015, %v10011
  %v10017 = vlaneseq
  %v10018 = vshrl.u32 %v10017, 7
  %v10019 = vsub.s32 %v8350, %v10018
  %v10020 = vrot.slane %v9575, %v10019
  %v10021 = vsel %vm8355, %v10020, %v10016
  %v10022 = vlaneseq
  %v10023 = vshrl.u32 %v10022, 7
  %v10024 = vsub.s32 %v8247, %v10023
  %v10025 = vrot.slane %v9578, %v10024
  %v10026 = vlaneseq
  %v10027 = vshrl.u32 %v10026, 7
  %v10028 = vsub.s32 %v8252, %v10027
  %v10029 = vrot.slane %v9581, %v10028
  %v10030 = vsel %vm8257, %v10029, %v10025
  %v10031 = vlaneseq
  %v10032 = vshrl.u32 %v10031, 7
  %v10033 = vsub.s32 %v8259, %v10032
  %v10034 = vrot.slane %v9584, %v10033
  %v10035 = vsel %vm8264, %v10034, %v10030
  %v10036 = vlaneseq
  %v10037 = vshrl.u32 %v10036, 7
  %v10038 = vsub.s32 %v8266, %v10037
  %v10039 = vrot.slane %v9587, %v10038
  %v10040 = vsel %vm8271, %v10039, %v10035
  %v10041 = vlaneseq
  %v10042 = vshrl.u32 %v10041, 7
  %v10043 = vsub.s32 %v8273, %v10042
  %v10044 = vrot.slane %v9590, %v10043
  %v10045 = vsel %vm8278, %v10044, %v10040
  %v10046 = vlaneseq
  %v10047 = vshrl.u32 %v10046, 7
  %v10048 = vsub.s32 %v8280, %v10047
  %v10049 = vrot.slane %v9593, %v10048
  %v10050 = vsel %vm8285, %v10049, %v10045
  %v10051 = vlaneseq
  %v10052 = vshrl.u32 %v10051, 7
  %v10053 = vsub.s32 %v8287, %v10052
  %v10054 = vrot.slane %v9596, %v10053
  %v10055 = vsel %vm8292, %v10054, %v10050
  %v10056 = vlaneseq
  %v10057 = vshrl.u32 %v10056, 7
  %v10058 = vsub.s32 %v8294, %v10057
  %v10059 = vrot.slane %v9599, %v10058
  %v10060 = vsel %vm8299, %v10059, %v10055
  %v10061 = vlaneseq
  %v10062 = vshrl.u32 %v10061, 7
  %v10063 = vsub.s32 %v8301, %v10062
  %v10064 = vrot.slane %v9602, %v10063
  %v10065 = vsel %vm8306, %v10064, %v10060
  %v10066 = vlaneseq
  %v10067 = vshrl.u32 %v10066, 7
  %v10068 = vsub.s32 %v8308, %v10067
  %v10069 = vrot.slane %v9605, %v10068
  %v10070 = vsel %vm8313, %v10069, %v10065
  %v10071 = vlaneseq
  %v10072 = vshrl.u32 %v10071, 7
  %v10073 = vsub.s32 %v8315, %v10072
  %v10074 = vrot.slane %v9608, %v10073
  %v10075 = vsel %vm8320, %v10074, %v10070
  %v10076 = vlaneseq
  %v10077 = vshrl.u32 %v10076, 7
  %v10078 = vsub.s32 %v8322, %v10077
  %v10079 = vrot.slane %v9611, %v10078
  %v10080 = vsel %vm8327, %v10079, %v10075
  %v10081 = vlaneseq
  %v10082 = vshrl.u32 %v10081, 7
  %v10083 = vsub.s32 %v8329, %v10082
  %v10084 = vrot.slane %v9614, %v10083
  %v10085 = vsel %vm8334, %v10084, %v10080
  %v10086 = vlaneseq
  %v10087 = vshrl.u32 %v10086, 7
  %v10088 = vsub.s32 %v8336, %v10087
  %v10089 = vrot.slane %v9617, %v10088
  %v10090 = vsel %vm8341, %v10089, %v10085
  %v10091 = vlaneseq
  %v10092 = vshrl.u32 %v10091, 7
  %v10093 = vsub.s32 %v8343, %v10092
  %v10094 = vrot.slane %v9620, %v10093
  %v10095 = vsel %vm8348, %v10094, %v10090
  %v10096 = vlaneseq
  %v10097 = vshrl.u32 %v10096, 7
  %v10098 = vsub.s32 %v8350, %v10097
  %v10099 = vrot.slane %v9623, %v10098
  %v10100 = vsel %vm8355, %v10099, %v10095
  %v10101 = vlaneseq
  %v10102 = vshrl.u32 %v10101, 7
  %v10103 = vsub.s32 %v8247, %v10102
  %v10104 = vrot.slane %v9626, %v10103
  %v10105 = vlaneseq
  %v10106 = vshrl.u32 %v10105, 7
  %v10107 = vsub.s32 %v8252, %v10106
  %v10108 = vrot.slane %v9629, %v10107
  %v10109 = vsel %vm8257, %v10108, %v10104
  %v10110 = vlaneseq
  %v10111 = vshrl.u32 %v10110, 7
  %v10112 = vsub.s32 %v8259, %v10111
  %v10113 = vrot.slane %v9632, %v10112
  %v10114 = vsel %vm8264, %v10113, %v10109
  %v10115 = vlaneseq
  %v10116 = vshrl.u32 %v10115, 7
  %v10117 = vsub.s32 %v8266, %v10116
  %v10118 = vrot.slane %v9635, %v10117
  %v10119 = vsel %vm8271, %v10118, %v10114
  %v10120 = vlaneseq
  %v10121 = vshrl.u32 %v10120, 7
  %v10122 = vsub.s32 %v8273, %v10121
  %v10123 = vrot.slane %v9638, %v10122
  %v10124 = vsel %vm8278, %v10123, %v10119
  %v10125 = vlaneseq
  %v10126 = vshrl.u32 %v10125, 7
  %v10127 = vsub.s32 %v8280, %v10126
  %v10128 = vrot.slane %v9641, %v10127
  %v10129 = vsel %vm8285, %v10128, %v10124
  %v10130 = vlaneseq
  %v10131 = vshrl.u32 %v10130, 7
  %v10132 = vsub.s32 %v8287, %v10131
  %v10133 = vrot.slane %v9644, %v10132
  %v10134 = vsel %vm8292, %v10133, %v10129
  %v10135 = vlaneseq
  %v10136 = vshrl.u32 %v10135, 7
  %v10137 = vsub.s32 %v8294, %v10136
  %v10138 = vrot.slane %v9647, %v10137
  %v10139 = vsel %vm8299, %v10138, %v10134
  %v10140 = vlaneseq
  %v10141 = vshrl.u32 %v10140, 7
  %v10142 = vsub.s32 %v8301, %v10141
  %v10143 = vrot.slane %v9650, %v10142
  %v10144 = vsel %vm8306, %v10143, %v10139
  %v10145 = vlaneseq
  %v10146 = vshrl.u32 %v10145, 7
  %v10147 = vsub.s32 %v8308, %v10146
  %v10148 = vrot.slane %v9653, %v10147
  %v10149 = vsel %vm8313, %v10148, %v10144
  %v10150 = vlaneseq
  %v10151 = vshrl.u32 %v10150, 7
  %v10152 = vsub.s32 %v8315, %v10151
  %v10153 = vrot.slane %v9656, %v10152
  %v10154 = vsel %vm8320, %v10153, %v10149
  %v10155 = vlaneseq
  %v10156 = vshrl.u32 %v10155, 7
  %v10157 = vsub.s32 %v8322, %v10156
  %v10158 = vrot.slane %v9659, %v10157
  %v10159 = vsel %vm8327, %v10158, %v10154
  %v10160 = vlaneseq
  %v10161 = vshrl.u32 %v10160, 7
  %v10162 = vsub.s32 %v8329, %v10161
  %v10163 = vrot.slane %v9662, %v10162
  %v10164 = vsel %vm8334, %v10163, %v10159
  %v10165 = vlaneseq
  %v10166 = vshrl.u32 %v10165, 7
  %v10167 = vsub.s32 %v8336, %v10166
  %v10168 = vrot.slane %v9665, %v10167
  %v10169 = vsel %vm8341, %v10168, %v10164
  %v10170 = vlaneseq
  %v10171 = vshrl.u32 %v10170, 7
  %v10172 = vsub.s32 %v8343, %v10171
  %v10173 = vrot.slane %v9668, %v10172
  %v10174 = vsel %vm8348, %v10173, %v10169
  %v10175 = vlaneseq
  %v10176 = vshrl.u32 %v10175, 7
  %v10177 = vsub.s32 %v8350, %v10176
  %v10178 = vrot.slane %v9671, %v10177
  %v10179 = vsel %vm8355, %v10178, %v10174
  %v10180 = vlaneseq
  %v10181 = vshrl.u32 %v10180, 7
  %v10182 = vsub.s32 %v8247, %v10181
  %v10183 = vrot.slane %v9674, %v10182
  %v10184 = vlaneseq
  %v10185 = vshrl.u32 %v10184, 7
  %v10186 = vsub.s32 %v8252, %v10185
  %v10187 = vrot.slane %v9677, %v10186
  %v10188 = vsel %vm8257, %v10187, %v10183
  %v10189 = vlaneseq
  %v10190 = vshrl.u32 %v10189, 7
  %v10191 = vsub.s32 %v8259, %v10190
  %v10192 = vrot.slane %v9680, %v10191
  %v10193 = vsel %vm8264, %v10192, %v10188
  %v10194 = vlaneseq
  %v10195 = vshrl.u32 %v10194, 7
  %v10196 = vsub.s32 %v8266, %v10195
  %v10197 = vrot.slane %v9683, %v10196
  %v10198 = vsel %vm8271, %v10197, %v10193
  %v10199 = vlaneseq
  %v10200 = vshrl.u32 %v10199, 7
  %v10201 = vsub.s32 %v8273, %v10200
  %v10202 = vrot.slane %v9686, %v10201
  %v10203 = vsel %vm8278, %v10202, %v10198
  %v10204 = vlaneseq
  %v10205 = vshrl.u32 %v10204, 7
  %v10206 = vsub.s32 %v8280, %v10205
  %v10207 = vrot.slane %v9689, %v10206
  %v10208 = vsel %vm8285, %v10207, %v10203
  %v10209 = vlaneseq
  %v10210 = vshrl.u32 %v10209, 7
  %v10211 = vsub.s32 %v8287, %v10210
  %v10212 = vrot.slane %v9692, %v10211
  %v10213 = vsel %vm8292, %v10212, %v10208
  %v10214 = vlaneseq
  %v10215 = vshrl.u32 %v10214, 7
  %v10216 = vsub.s32 %v8294, %v10215
  %v10217 = vrot.slane %v9695, %v10216
  %v10218 = vsel %vm8299, %v10217, %v10213
  %v10219 = vlaneseq
  %v10220 = vshrl.u32 %v10219, 7
  %v10221 = vsub.s32 %v8301, %v10220
  %v10222 = vrot.slane %v9698, %v10221
  %v10223 = vsel %vm8306, %v10222, %v10218
  %v10224 = vlaneseq
  %v10225 = vshrl.u32 %v10224, 7
  %v10226 = vsub.s32 %v8308, %v10225
  %v10227 = vrot.slane %v9701, %v10226
  %v10228 = vsel %vm8313, %v10227, %v10223
  %v10229 = vlaneseq
  %v10230 = vshrl.u32 %v10229, 7
  %v10231 = vsub.s32 %v8315, %v10230
  %v10232 = vrot.slane %v9704, %v10231
  %v10233 = vsel %vm8320, %v10232, %v10228
  %v10234 = vlaneseq
  %v10235 = vshrl.u32 %v10234, 7
  %v10236 = vsub.s32 %v8322, %v10235
  %v10237 = vrot.slane %v9707, %v10236
  %v10238 = vsel %vm8327, %v10237, %v10233
  %v10239 = vlaneseq
  %v10240 = vshrl.u32 %v10239, 7
  %v10241 = vsub.s32 %v8329, %v10240
  %v10242 = vrot.slane %v9710, %v10241
  %v10243 = vsel %vm8334, %v10242, %v10238
  %v10244 = vlaneseq
  %v10245 = vshrl.u32 %v10244, 7
  %v10246 = vsub.s32 %v8336, %v10245
  %v10247 = vrot.slane %v9713, %v10246
  %v10248 = vsel %vm8341, %v10247, %v10243
  %v10249 = vlaneseq
  %v10250 = vshrl.u32 %v10249, 7
  %v10251 = vsub.s32 %v8343, %v10250
  %v10252 = vrot.slane %v9716, %v10251
  %v10253 = vsel %vm8348, %v10252, %v10248
  %v10254 = vlaneseq
  %v10255 = vshrl.u32 %v10254, 7
  %v10256 = vsub.s32 %v8350, %v10255
  %v10257 = vrot.slane %v9719, %v10256
  %v10258 = vsel %vm8355, %v10257, %v10253
  %v10259 = vlaneseq
  %v10260 = vshrl.u32 %v10259, 7
  %v10261 = vsub.s32 %v8247, %v10260
  %v10262 = vrot.slane %v9722, %v10261
  %v10263 = vlaneseq
  %v10264 = vshrl.u32 %v10263, 7
  %v10265 = vsub.s32 %v8252, %v10264
  %v10266 = vrot.slane %v9725, %v10265
  %v10267 = vsel %vm8257, %v10266, %v10262
  %v10268 = vlaneseq
  %v10269 = vshrl.u32 %v10268, 7
  %v10270 = vsub.s32 %v8259, %v10269
  %v10271 = vrot.slane %v9728, %v10270
  %v10272 = vsel %vm8264, %v10271, %v10267
  %v10273 = vlaneseq
  %v10274 = vshrl.u32 %v10273, 7
  %v10275 = vsub.s32 %v8266, %v10274
  %v10276 = vrot.slane %v9731, %v10275
  %v10277 = vsel %vm8271, %v10276, %v10272
  %v10278 = vlaneseq
  %v10279 = vshrl.u32 %v10278, 7
  %v10280 = vsub.s32 %v8273, %v10279
  %v10281 = vrot.slane %v9734, %v10280
  %v10282 = vsel %vm8278, %v10281, %v10277
  %v10283 = vlaneseq
  %v10284 = vshrl.u32 %v10283, 7
  %v10285 = vsub.s32 %v8280, %v10284
  %v10286 = vrot.slane %v9737, %v10285
  %v10287 = vsel %vm8285, %v10286, %v10282
  %v10288 = vlaneseq
  %v10289 = vshrl.u32 %v10288, 7
  %v10290 = vsub.s32 %v8287, %v10289
  %v10291 = vrot.slane %v9740, %v10290
  %v10292 = vsel %vm8292, %v10291, %v10287
  %v10293 = vlaneseq
  %v10294 = vshrl.u32 %v10293, 7
  %v10295 = vsub.s32 %v8294, %v10294
  %v10296 = vrot.slane %v9743, %v10295
  %v10297 = vsel %vm8299, %v10296, %v10292
  %v10298 = vlaneseq
  %v10299 = vshrl.u32 %v10298, 7
  %v10300 = vsub.s32 %v8301, %v10299
  %v10301 = vrot.slane %v9746, %v10300
  %v10302 = vsel %vm8306, %v10301, %v10297
  %v10303 = vlaneseq
  %v10304 = vshrl.u32 %v10303, 7
  %v10305 = vsub.s32 %v8308, %v10304
  %v10306 = vrot.slane %v9749, %v10305
  %v10307 = vsel %vm8313, %v10306, %v10302
  %v10308 = vlaneseq
  %v10309 = vshrl.u32 %v10308, 7
  %v10310 = vsub.s32 %v8315, %v10309
  %v10311 = vrot.slane %v9752, %v10310
  %v10312 = vsel %vm8320, %v10311, %v10307
  %v10313 = vlaneseq
  %v10314 = vshrl.u32 %v10313, 7
  %v10315 = vsub.s32 %v8322, %v10314
  %v10316 = vrot.slane %v9755, %v10315
  %v10317 = vsel %vm8327, %v10316, %v10312
  %v10318 = vlaneseq
  %v10319 = vshrl.u32 %v10318, 7
  %v10320 = vsub.s32 %v8329, %v10319
  %v10321 = vrot.slane %v9758, %v10320
  %v10322 = vsel %vm8334, %v10321, %v10317
  %v10323 = vlaneseq
  %v10324 = vshrl.u32 %v10323, 7
  %v10325 = vsub.s32 %v8336, %v10324
  %v10326 = vrot.slane %v9761, %v10325
  %v10327 = vsel %vm8341, %v10326, %v10322
  %v10328 = vlaneseq
  %v10329 = vshrl.u32 %v10328, 7
  %v10330 = vsub.s32 %v8343, %v10329
  %v10331 = vrot.slane %v9764, %v10330
  %v10332 = vsel %vm8348, %v10331, %v10327
  %v10333 = vlaneseq
  %v10334 = vshrl.u32 %v10333, 7
  %v10335 = vsub.s32 %v8350, %v10334
  %v10336 = vrot.slane %v9767, %v10335
  %v10337 = vsel %vm8355, %v10336, %v10332
  %v10338 = vlaneseq
  %v10339 = vshrl.u32 %v10338, 7
  %v10340 = vsub.s32 %v8247, %v10339
  %v10341 = vrot.slane %v9770, %v10340
  %v10342 = vlaneseq
  %v10343 = vshrl.u32 %v10342, 7
  %v10344 = vsub.s32 %v8252, %v10343
  %v10345 = vrot.slane %v9773, %v10344
  %v10346 = vsel %vm8257, %v10345, %v10341
  %v10347 = vlaneseq
  %v10348 = vshrl.u32 %v10347, 7
  %v10349 = vsub.s32 %v8259, %v10348
  %v10350 = vrot.slane %v9776, %v10349
  %v10351 = vsel %vm8264, %v10350, %v10346
  %v10352 = vlaneseq
  %v10353 = vshrl.u32 %v10352, 7
  %v10354 = vsub.s32 %v8266, %v10353
  %v10355 = vrot.slane %v9779, %v10354
  %v10356 = vsel %vm8271, %v10355, %v10351
  %v10357 = vlaneseq
  %v10358 = vshrl.u32 %v10357, 7
  %v10359 = vsub.s32 %v8273, %v10358
  %v10360 = vrot.slane %v9782, %v10359
  %v10361 = vsel %vm8278, %v10360, %v10356
  %v10362 = vlaneseq
  %v10363 = vshrl.u32 %v10362, 7
  %v10364 = vsub.s32 %v8280, %v10363
  %v10365 = vrot.slane %v9785, %v10364
  %v10366 = vsel %vm8285, %v10365, %v10361
  %v10367 = vlaneseq
  %v10368 = vshrl.u32 %v10367, 7
  %v10369 = vsub.s32 %v8287, %v10368
  %v10370 = vrot.slane %v9788, %v10369
  %v10371 = vsel %vm8292, %v10370, %v10366
  %v10372 = vlaneseq
  %v10373 = vshrl.u32 %v10372, 7
  %v10374 = vsub.s32 %v8294, %v10373
  %v10375 = vrot.slane %v9791, %v10374
  %v10376 = vsel %vm8299, %v10375, %v10371
  %v10377 = vlaneseq
  %v10378 = vshrl.u32 %v10377, 7
  %v10379 = vsub.s32 %v8301, %v10378
  %v10380 = vrot.slane %v9794, %v10379
  %v10381 = vsel %vm8306, %v10380, %v10376
  %v10382 = vlaneseq
  %v10383 = vshrl.u32 %v10382, 7
  %v10384 = vsub.s32 %v8308, %v10383
  %v10385 = vrot.slane %v9797, %v10384
  %v10386 = vsel %vm8313, %v10385, %v10381
  %v10387 = vlaneseq
  %v10388 = vshrl.u32 %v10387, 7
  %v10389 = vsub.s32 %v8315, %v10388
  %v10390 = vrot.slane %v9800, %v10389
  %v10391 = vsel %vm8320, %v10390, %v10386
  %v10392 = vlaneseq
  %v10393 = vshrl.u32 %v10392, 7
  %v10394 = vsub.s32 %v8322, %v10393
  %v10395 = vrot.slane %v9803, %v10394
  %v10396 = vsel %vm8327, %v10395, %v10391
  %v10397 = vlaneseq
  %v10398 = vshrl.u32 %v10397, 7
  %v10399 = vsub.s32 %v8329, %v10398
  %v10400 = vrot.slane %v9806, %v10399
  %v10401 = vsel %vm8334, %v10400, %v10396
  %v10402 = vlaneseq
  %v10403 = vshrl.u32 %v10402, 7
  %v10404 = vsub.s32 %v8336, %v10403
  %v10405 = vrot.slane %v9809, %v10404
  %v10406 = vsel %vm8341, %v10405, %v10401
  %v10407 = vlaneseq
  %v10408 = vshrl.u32 %v10407, 7
  %v10409 = vsub.s32 %v8343, %v10408
  %v10410 = vrot.slane %v9812, %v10409
  %v10411 = vsel %vm8348, %v10410, %v10406
  %v10412 = vlaneseq
  %v10413 = vshrl.u32 %v10412, 7
  %v10414 = vsub.s32 %v8350, %v10413
  %v10415 = vrot.slane %v9815, %v10414
  %v10416 = vsel %vm8355, %v10415, %v10411
  %v10417 = vlaneseq
  %v10418 = vshrl.u32 %v10417, 7
  %v10419 = vsub.s32 %v8247, %v10418
  %v10420 = vrot.slane %v9818, %v10419
  %v10421 = vlaneseq
  %v10422 = vshrl.u32 %v10421, 7
  %v10423 = vsub.s32 %v8252, %v10422
  %v10424 = vrot.slane %v9821, %v10423
  %v10425 = vsel %vm8257, %v10424, %v10420
  %v10426 = vlaneseq
  %v10427 = vshrl.u32 %v10426, 7
  %v10428 = vsub.s32 %v8259, %v10427
  %v10429 = vrot.slane %v9824, %v10428
  %v10430 = vsel %vm8264, %v10429, %v10425
  %v10431 = vlaneseq
  %v10432 = vshrl.u32 %v10431, 7
  %v10433 = vsub.s32 %v8266, %v10432
  %v10434 = vrot.slane %v9827, %v10433
  %v10435 = vsel %vm8271, %v10434, %v10430
  %v10436 = vlaneseq
  %v10437 = vshrl.u32 %v10436, 7
  %v10438 = vsub.s32 %v8273, %v10437
  %v10439 = vrot.slane %v9830, %v10438
  %v10440 = vsel %vm8278, %v10439, %v10435
  %v10441 = vlaneseq
  %v10442 = vshrl.u32 %v10441, 7
  %v10443 = vsub.s32 %v8280, %v10442
  %v10444 = vrot.slane %v9833, %v10443
  %v10445 = vsel %vm8285, %v10444, %v10440
  %v10446 = vlaneseq
  %v10447 = vshrl.u32 %v10446, 7
  %v10448 = vsub.s32 %v8287, %v10447
  %v10449 = vrot.slane %v9836, %v10448
  %v10450 = vsel %vm8292, %v10449, %v10445
  %v10451 = vlaneseq
  %v10452 = vshrl.u32 %v10451, 7
  %v10453 = vsub.s32 %v8294, %v10452
  %v10454 = vrot.slane %v9839, %v10453
  %v10455 = vsel %vm8299, %v10454, %v10450
  %v10456 = vlaneseq
  %v10457 = vshrl.u32 %v10456, 7
  %v10458 = vsub.s32 %v8301, %v10457
  %v10459 = vrot.slane %v9842, %v10458
  %v10460 = vsel %vm8306, %v10459, %v10455
  %v10461 = vlaneseq
  %v10462 = vshrl.u32 %v10461, 7
  %v10463 = vsub.s32 %v8308, %v10462
  %v10464 = vrot.slane %v9845, %v10463
  %v10465 = vsel %vm8313, %v10464, %v10460
  %v10466 = vlaneseq
  %v10467 = vshrl.u32 %v10466, 7
  %v10468 = vsub.s32 %v8315, %v10467
  %v10469 = vrot.slane %v9848, %v10468
  %v10470 = vsel %vm8320, %v10469, %v10465
  %v10471 = vlaneseq
  %v10472 = vshrl.u32 %v10471, 7
  %v10473 = vsub.s32 %v8322, %v10472
  %v10474 = vrot.slane %v9851, %v10473
  %v10475 = vsel %vm8327, %v10474, %v10470
  %v10476 = vlaneseq
  %v10477 = vshrl.u32 %v10476, 7
  %v10478 = vsub.s32 %v8329, %v10477
  %v10479 = vrot.slane %v9854, %v10478
  %v10480 = vsel %vm8334, %v10479, %v10475
  %v10481 = vlaneseq
  %v10482 = vshrl.u32 %v10481, 7
  %v10483 = vsub.s32 %v8336, %v10482
  %v10484 = vrot.slane %v9857, %v10483
  %v10485 = vsel %vm8341, %v10484, %v10480
  %v10486 = vlaneseq
  %v10487 = vshrl.u32 %v10486, 7
  %v10488 = vsub.s32 %v8343, %v10487
  %v10489 = vrot.slane %v9860, %v10488
  %v10490 = vsel %vm8348, %v10489, %v10485
  %v10491 = vlaneseq
  %v10492 = vshrl.u32 %v10491, 7
  %v10493 = vsub.s32 %v8350, %v10492
  %v10494 = vrot.slane %v9863, %v10493
  %v10495 = vsel %vm8355, %v10494, %v10490
  %v10496 = vsel %vm8910, %v10021, %v9942
  %v10497 = vsel %vm8912, %v10100, %v10496
  %v10498 = vsel %vm8914, %v10179, %v10497
  %v10499 = vsel %vm8916, %v10258, %v10498
  %v10500 = vsel %vm8918, %v10337, %v10499
  %v10501 = vsel %vm8920, %v10416, %v10500
  %v10502 = vsel %vm8922, %v10495, %v10501
  %10504 = vadd.xlane.f32.xlu0 %v10502
  %v10505 = vpop.xlane.xlu0 %10504
  %v10507 = vlaneseq
  %v10508 = vshrl.u32 %v10507, 7
  %v10509 = vsub.s32 0, %v10508
  %v10510 = vrot.slane %v10505, %v10509
  %v10511 = vlaneseq
  %v10512 = vshrl.u32 %v10511, 7
  %v10513 = vsub.s32 1, %v10512
  %v10514 = vrot.slane %v10505, %v10513
  %v10515 = vlaneseq
  %v10516 = vshrl.u32 %v10515, 7
  %v10517 = vsub.s32 2, %v10516
  %v10518 = vrot.slane %v10505, %v10517
  %v10519 = vlaneseq
  %v10520 = vshrl.u32 %v10519, 7
  %v10521 = vsub.s32 3, %v10520
  %v10522 = vrot.slane %v10505, %v10521
  %v10523 = vlaneseq
  %v10524 = vshrl.u32 %v10523, 7
  %v10525 = vsub.s32 4, %v10524
  %v10526 = vrot.slane %v10505, %v10525
  %v10527 = vlaneseq
  %v10528 = vshrl.u32 %v10527, 7
  %v10529 = vsub.s32 5, %v10528
  %v10530 = vrot.slane %v10505, %v10529
  %v10531 = vlaneseq
  %v10532 = vshrl.u32 %v10531, 7
  %v10533 = vsub.s32 6, %v10532
  %v10534 = vrot.slane %v10505, %v10533
  %v10535 = vlaneseq
  %v10536 = vshrl.u32 %v10535, 7
  %v10537 = vsub.s32 7, %v10536
  %v10538 = vrot.slane %v10505, %v10537
  %v10547 = vrcp.pop %v10510
  %v10548 = vmul.f32 %v9097, %v10547
  %v10549 = vmul.f32 %v9099, %v10547
  %v10550 = vmul.f32 %v9101, %v10547
  %v10551 = vmul.f32 %v9103, %v10547
  %v10552 = vmul.f32 %v9105, %v10547
  %v10553 = vmul.f32 %v9107, %v10547
  %v10554 = vmul.f32 %v9109, %v10547
  %v10555 = vmul.f32 %v9111, %v10547
  %v10556 = vmul.f32 %v9113, %v10547
  %v10557 = vmul.f32 %v9115, %v10547
  %v10558 = vmul.f32 %v9117, %v10547
  %v10559 = vmul.f32 %v9119, %v10547
  %v10560 = vmul.f32 %v9121, %v10547
  %v10561 = vmul.f32 %v9123, %v10547
  %v10562 = vmul.f32 %v9125, %v10547
  %v10563 = vmul.f32 %v9127, %v10547
  %v10564 = vrcp.pop %v10514
  %v10565 = vmul.f32 %v9129, %v10564
  %v10566 = vmul.f32 %v9131, %v10564
  %v10567 = vmul.f32 %v9133, %v10564
  %v10568 = vmul.f32 %v9135, %v10564
  %v10569 = vmul.f32 %v9137, %v10564
  %v10570 = vmul.f32 %v9139, %v10564
  %v10571 = vmul.f32 %v9141, %v10564
  %v10572 = vmul.f32 %v9143, %v10564
  %v10573 = vmul.f32 %v9145, %v10564
  %v10574 = vmul.f32 %v9147, %v10564
  %v10575 = vmul.f32 %v9149, %v10564
  %v10576 = vmul.f32 %v9151, %v10564
  %v10577 = vmul.f32 %v9153, %v10564
  %v10578 = vmul.f32 %v9155, %v10564
  %v10579 = vmul.f32 %v9157, %v10564
  %v10580 = vmul.f32 %v9159, %v10564
  %v10581 = vrcp.pop %v10518
  %v10582 = vmul.f32 %v9161, %v10581
  %v10583 = vmul.f32 %v9163, %v10581
  %v10584 = vmul.f32 %v9165, %v10581
  %v10585 = vmul.f32 %v9167, %v10581
  %v10586 = vmul.f32 %v9169, %v10581
  %v10587 = vmul.f32 %v9171, %v10581
  %v10588 = vmul.f32 %v9173, %v10581
  %v10589 = vmul.f32 %v9175, %v10581
  %v10590 = vmul.f32 %v9177, %v10581
  %v10591 = vmul.f32 %v9179, %v10581
  %v10592 = vmul.f32 %v9181, %v10581
  %v10593 = vmul.f32 %v9183, %v10581
  %v10594 = vmul.f32 %v9185, %v10581
  %v10595 = vmul.f32 %v9187, %v10581
  %v10596 = vmul.f32 %v9189, %v10581
  %v10597 = vmul.f32 %v9191, %v10581
  %v10598 = vrcp.pop %v10522
  %v10599 = vmul.f32 %v9193, %v10598
  %v10600 = vmul.f32 %v9195, %v10598
  %v10601 = vmul.f32 %v9197, %v10598
  %v10602 = vmul.f32 %v9199, %v10598
  %v10603 = vmul.f32 %v9201, %v10598
  %v10604 = vmul.f32 %v9203, %v10598
  %v10605 = vmul.f32 %v9205, %v10598
  %v10606 = vmul.f32 %v9207, %v10598
  %v10607 = vmul.f32 %v9209, %v10598
  %v10608 = vmul.f32 %v9211, %v10598
  %v10609 = vmul.f32 %v9213, %v10598
  %v10610 = vmul.f32 %v9215, %v10598
  %v10611 = vmul.f32 %v9217, %v10598
  %v10612 = vmul.f32 %v9219, %v10598
  %v10613 = vmul.f32 %v9221, %v10598
  %v10614 = vmul.f32 %v9223, %v10598
  %v10615 = vrcp.pop %v10526
  %v10616 = vmul.f32 %v9225, %v10615
  %v10617 = vmul.f32 %v9227, %v10615
  %v10618 = vmul.f32 %v9229, %v10615
  %v10619 = vmul.f32 %v9231, %v10615
  %v10620 = vmul.f32 %v9233, %v10615
  %v10621 = vmul.f32 %v9235, %v10615
  %v10622 = vmul.f32 %v9237, %v10615
  %v10623 = vmul.f32 %v9239, %v10615
  %v10624 = vmul.f32 %v9241, %v10615
  %v10625 = vmul.f32 %v9243, %v10615
  %v10626 = vmul.f32 %v9245, %v10615
  %v10627 = vmul.f32 %v9247, %v10615
  %v10628 = vmul.f32 %v9249, %v10615
  %v10629 = vmul.f32 %v9251, %v10615
  %v10630 = vmul.f32 %v9253, %v10615
  %v10631 = vmul.f32 %v9255, %v10615
  %v10632 = vrcp.pop %v10530
  %v10633 = vmul.f32 %v9257, %v10632
  %v10634 = vmul.f32 %v9259, %v10632
  %v10635 = vmul.f32 %v9261, %v10632
  %v10636 = vmul.f32 %v9263, %v10632
  %v10637 = vmul.f32 %v9265, %v10632
  %v10638 = vmul.f32 %v9267, %v10632
  %v10639 = vmul.f32 %v9269, %v10632
  %v10640 = vmul.f32 %v9271, %v10632
  %v10641 = vmul.f32 %v9273, %v10632
  %v10642 = vmul.f32 %v9275, %v10632
  %v10643 = vmul.f32 %v9277, %v10632
  %v10644 = vmul.f32 %v9279, %v10632
  %v10645 = vmul.f32 %v9281, %v10632
  %v10646 = vmul.f32 %v9283, %v10632
  %v10647 = vmul.f32 %v9285, %v10632
  %v10648 = vmul.f32 %v9287, %v10632
  %v10649 = vrcp.pop %v10534
  %v10650 = vmul.f32 %v9289, %v10649
  %v10651 = vmul.f32 %v9291, %v10649
  %v10652 = vmul.f32 %v9293, %v10649
  %v10653 = vmul.f32 %v9295, %v10649
  %v10654 = vmul.f32 %v9297, %v10649
  %v10655 = vmul.f32 %v9299, %v10649
  %v10656 = vmul.f32 %v9301, %v10649
  %v10657 = vmul.f32 %v9303, %v10649
  %v10658 = vmul.f32 %v9305, %v10649
  %v10659 = vmul.f32 %v9307, %v10649
  %v10660 = vmul.f32 %v9309, %v10649
  %v10661 = vmul.f32 %v9311, %v10649
  %v10662 = vmul.f32 %v9313, %v10649
  %v10663 = vmul.f32 %v9315, %v10649
  %v10664 = vmul.f32 %v9317, %v10649
  %v10665 = vmul.f32 %v9319, %v10649
  %v10666 = vrcp.pop %v10538
  %v10667 = vmul.f32 %v9321, %v10666
  %v10668 = vmul.f32 %v9323, %v10666
  %v10669 = vmul.f32 %v9325, %v10666
  %v10670 = vmul.f32 %v9327, %v10666
  %v10671 = vmul.f32 %v9329, %v10666
  %v10672 = vmul.f32 %v9331, %v10666
  %v10673 = vmul.f32 %v9333, %v10666
  %v10674 = vmul.f32 %v9335, %v10666
  %v10675 = vmul.f32 %v9337, %v10666
  %v10676 = vmul.f32 %v9339, %v10666
  %v10677 = vmul.f32 %v9341, %v10666
  %v10678 = vmul.f32 %v9343, %v10666
  %v10679 = vmul.f32 %v9345, %v10666
  %v10680 = vmul.f32 %v9347, %v10666
  %v10681 = vmul.f32 %v9349, %v10666
  %v10682 = vmul.f32 %v9351, %v10666
  %10684 = vset.pattern.permute.xlu0 0
  %10685 = vperm.xlu0 %10684, %v10548
  %v10686 = vpop.permute.xlu0 %10685
  %10689 = vset.pattern.permute.xlu0 0
  %10690 = vperm.xlu0 %10689, %v10549
  %v10691 = vpop.permute.xlu0 %10690
  %10694 = vset.pattern.permute.xlu0 0
  %10695 = vperm.xlu0 %10694, %v10550
  %v10696 = vpop.permute.xlu0 %10695
  %10699 = vset.pattern.permute.xlu0 0
  %10700 = vperm.xlu0 %10699, %v10551
  %v10701 = vpop.permute.xlu0 %10700
  %10704 = vset.pattern.permute.xlu0 0
  %10705 = vperm.xlu0 %10704, %v10552
  %v10706 = vpop.permute.xlu0 %10705
  %10709 = vset.pattern.permute.xlu0 0
  %10710 = vperm.xlu0 %10709, %v10553
  %v10711 = vpop.permute.xlu0 %10710
  %10714 = vset.pattern.permute.xlu0 0
  %10715 = vperm.xlu0 %10714, %v10554
  %v10716 = vpop.permute.xlu0 %10715
  %10719 = vset.pattern.permute.xlu0 0
  %10720 = vperm.xlu0 %10719, %v10555
  %v10721 = vpop.permute.xlu0 %10720
  %10724 = vset.pattern.permute.xlu0 0
  %10725 = vperm.xlu0 %10724, %v10556
  %v10726 = vpop.permute.xlu0 %10725
  %10729 = vset.pattern.permute.xlu0 0
  %10730 = vperm.xlu0 %10729, %v10557
  %v10731 = vpop.permute.xlu0 %10730
  %10734 = vset.pattern.permute.xlu0 0
  %10735 = vperm.xlu0 %10734, %v10558
  %v10736 = vpop.permute.xlu0 %10735
  %10739 = vset.pattern.permute.xlu0 0
  %10740 = vperm.xlu0 %10739, %v10559
  %v10741 = vpop.permute.xlu0 %10740
  %10744 = vset.pattern.permute.xlu0 0
  %10745 = vperm.xlu0 %10744, %v10560
  %v10746 = vpop.permute.xlu0 %10745
  %10749 = vset.pattern.permute.xlu0 0
  %10750 = vperm.xlu0 %10749, %v10561
  %v10751 = vpop.permute.xlu0 %10750
  %10754 = vset.pattern.permute.xlu0 0
  %10755 = vperm.xlu0 %10754, %v10562
  %v10756 = vpop.permute.xlu0 %10755
  %10759 = vset.pattern.permute.xlu0 0
  %10760 = vperm.xlu0 %10759, %v10563
  %v10761 = vpop.permute.xlu0 %10760
  %10764 = vset.pattern.permute.xlu0 0
  %10765 = vperm.xlu0 %10764, %v10565
  %v10766 = vpop.permute.xlu0 %10765
  %10769 = vset.pattern.permute.xlu0 0
  %10770 = vperm.xlu0 %10769, %v10566
  %v10771 = vpop.permute.xlu0 %10770
  %10774 = vset.pattern.permute.xlu0 0
  %10775 = vperm.xlu0 %10774, %v10567
  %v10776 = vpop.permute.xlu0 %10775
  %10779 = vset.pattern.permute.xlu0 0
  %10780 = vperm.xlu0 %10779, %v10568
  %v10781 = vpop.permute.xlu0 %10780
  %10784 = vset.pattern.permute.xlu0 0
  %10785 = vperm.xlu0 %10784, %v10569
  %v10786 = vpop.permute.xlu0 %10785
  %10789 = vset.pattern.permute.xlu0 0
  %10790 = vperm.xlu0 %10789, %v10570
  %v10791 = vpop.permute.xlu0 %10790
  %10794 = vset.pattern.permute.xlu0 0
  %10795 = vperm.xlu0 %10794, %v10571
  %v10796 = vpop.permute.xlu0 %10795
  %10799 = vset.pattern.permute.xlu0 0
  %10800 = vperm.xlu0 %10799, %v10572
  %v10801 = vpop.permute.xlu0 %10800
  %10804 = vset.pattern.permute.xlu0 0
  %10805 = vperm.xlu0 %10804, %v10573
  %v10806 = vpop.permute.xlu0 %10805
  %10809 = vset.pattern.permute.xlu0 0
  %10810 = vperm.xlu0 %10809, %v10574
  %v10811 = vpop.permute.xlu0 %10810
  %10814 = vset.pattern.permute.xlu0 0
  %10815 = vperm.xlu0 %10814, %v10575
  %v10816 = vpop.permute.xlu0 %10815
  %10819 = vset.pattern.permute.xlu0 0
  %10820 = vperm.xlu0 %10819, %v10576
  %v10821 = vpop.permute.xlu0 %10820
  %10824 = vset.pattern.permute.xlu0 0
  %10825 = vperm.xlu0 %10824, %v10577
  %v10826 = vpop.permute.xlu0 %10825
  %10829 = vset.pattern.permute.xlu0 0
  %10830 = vperm.xlu0 %10829, %v10578
  %v10831 = vpop.permute.xlu0 %10830
  %10834 = vset.pattern.permute.xlu0 0
  %10835 = vperm.xlu0 %10834, %v10579
  %v10836 = vpop.permute.xlu0 %10835
  %10839 = vset.pattern.permute.xlu0 0
  %10840 = vperm.xlu0 %10839, %v10580
  %v10841 = vpop.permute.xlu0 %10840
  %10844 = vset.pattern.permute.xlu0 0
  %10845 = vperm.xlu0 %10844, %v10582
  %v10846 = vpop.permute.xlu0 %10845
  %10849 = vset.pattern.permute.xlu0 0
  %10850 = vperm.xlu0 %10849, %v10583
  %v10851 = vpop.permute.xlu0 %10850
  %10854 = vset.pattern.permute.xlu0 0
  %10855 = vperm.xlu0 %10854, %v10584
  %v10856 = vpop.permute.xlu0 %10855
  %10859 = vset.pattern.permute.xlu0 0
  %10860 = vperm.xlu0 %10859, %v10585
  %v10861 = vpop.permute.xlu0 %10860
  %10864 = vset.pattern.permute.xlu0 0
  %10865 = vperm.xlu0 %10864, %v10586
  %v10866 = vpop.permute.xlu0 %10865
  %10869 = vset.pattern.permute.xlu0 0
  %10870 = vperm.xlu0 %10869, %v10587
  %v10871 = vpop.permute.xlu0 %10870
  %10874 = vset.pattern.permute.xlu0 0
  %10875 = vperm.xlu0 %10874, %v10588
  %v10876 = vpop.permute.xlu0 %10875
  %10879 = vset.pattern.permute.xlu0 0
  %10880 = vperm.xlu0 %10879, %v10589
  %v10881 = vpop.permute.xlu0 %10880
  %10884 = vset.pattern.permute.xlu0 0
  %10885 = vperm.xlu0 %10884, %v10590
  %v10886 = vpop.permute.xlu0 %10885
  %10889 = vset.pattern.permute.xlu0 0
  %10890 = vperm.xlu0 %10889, %v10591
  %v10891 = vpop.permute.xlu0 %10890
  %10894 = vset.pattern.permute.xlu0 0
  %10895 = vperm.xlu0 %10894, %v10592
  %v10896 = vpop.permute.xlu0 %10895
  %10899 = vset.pattern.permute.xlu0 0
  %10900 = vperm.xlu0 %10899, %v10593
  %v10901 = vpop.permute.xlu0 %10900
  %10904 = vset.pattern.permute.xlu0 0
  %10905 = vperm.xlu0 %10904, %v10594
  %v10906 = vpop.permute.xlu0 %10905
  %10909 = vset.pattern.permute.xlu0 0
  %10910 = vperm.xlu0 %10909, %v10595
  %v10911 = vpop.permute.xlu0 %10910
  %10914 = vset.pattern.permute.xlu0 0
  %10915 = vperm.xlu0 %10914, %v10596
  %v10916 = vpop.permute.xlu0 %10915
  %10919 = vset.pattern.permute.xlu0 0
  %10920 = vperm.xlu0 %10919, %v10597
  %v10921 = vpop.permute.xlu0 %10920
  %10924 = vset.pattern.permute.xlu0 0
  %10925 = vperm.xlu0 %10924, %v10599
  %v10926 = vpop.permute.xlu0 %10925
  %10929 = vset.pattern.permute.xlu0 0
  %10930 = vperm.xlu0 %10929, %v10600
  %v10931 = vpop.permute.xlu0 %10930
  %10934 = vset.pattern.permute.xlu0 0
  %10935 = vperm.xlu0 %10934, %v10601
  %v10936 = vpop.permute.xlu0 %10935
  %10939 = vset.pattern.permute.xlu0 0
  %10940 = vperm.xlu0 %10939, %v10602
  %v10941 = vpop.permute.xlu0 %10940
  %10944 = vset.pattern.permute.xlu0 0
  %10945 = vperm.xlu0 %10944, %v10603
  %v10946 = vpop.permute.xlu0 %10945
  %10949 = vset.pattern.permute.xlu0 0
  %10950 = vperm.xlu0 %10949, %v10604
  %v10951 = vpop.permute.xlu0 %10950
  %10954 = vset.pattern.permute.xlu0 0
  %10955 = vperm.xlu0 %10954, %v10605
  %v10956 = vpop.permute.xlu0 %10955
  %10959 = vset.pattern.permute.xlu0 0
  %10960 = vperm.xlu0 %10959, %v10606
  %v10961 = vpop.permute.xlu0 %10960
  %10964 = vset.pattern.permute.xlu0 0
  %10965 = vperm.xlu0 %10964, %v10607
  %v10966 = vpop.permute.xlu0 %10965
  %10969 = vset.pattern.permute.xlu0 0
  %10970 = vperm.xlu0 %10969, %v10608
  %v10971 = vpop.permute.xlu0 %10970
  %10974 = vset.pattern.permute.xlu0 0
  %10975 = vperm.xlu0 %10974, %v10609
  %v10976 = vpop.permute.xlu0 %10975
  %10979 = vset.pattern.permute.xlu0 0
  %10980 = vperm.xlu0 %10979, %v10610
  %v10981 = vpop.permute.xlu0 %10980
  %10984 = vset.pattern.permute.xlu0 0
  %10985 = vperm.xlu0 %10984, %v10611
  %v10986 = vpop.permute.xlu0 %10985
  %10989 = vset.pattern.permute.xlu0 0
  %10990 = vperm.xlu0 %10989, %v10612
  %v10991 = vpop.permute.xlu0 %10990
  %10994 = vset.pattern.permute.xlu0 0
  %10995 = vperm.xlu0 %10994, %v10613
  %v10996 = vpop.permute.xlu0 %10995
  %10999 = vset.pattern.permute.xlu0 0
  %11000 = vperm.xlu0 %10999, %v10614
  %v11001 = vpop.permute.xlu0 %11000
  %11004 = vset.pattern.permute.xlu0 0
  %11005 = vperm.xlu0 %11004, %v10616
  %v11006 = vpop.permute.xlu0 %11005
  %11009 = vset.pattern.permute.xlu0 0
  %11010 = vperm.xlu0 %11009, %v10617
  %v11011 = vpop.permute.xlu0 %11010
  %11014 = vset.pattern.permute.xlu0 0
  %11015 = vperm.xlu0 %11014, %v10618
  %v11016 = vpop.permute.xlu0 %11015
  %11019 = vset.pattern.permute.xlu0 0
  %11020 = vperm.xlu0 %11019, %v10619
  %v11021 = vpop.permute.xlu0 %11020
  %11024 = vset.pattern.permute.xlu0 0
  %11025 = vperm.xlu0 %11024, %v10620
  %v11026 = vpop.permute.xlu0 %11025
  %11029 = vset.pattern.permute.xlu0 0
  %11030 = vperm.xlu0 %11029, %v10621
  %v11031 = vpop.permute.xlu0 %11030
  %11034 = vset.pattern.permute.xlu0 0
  %11035 = vperm.xlu0 %11034, %v10622
  %v11036 = vpop.permute.xlu0 %11035
  %11039 = vset.pattern.permute.xlu0 0
  %11040 = vperm.xlu0 %11039, %v10623
  %v11041 = vpop.permute.xlu0 %11040
  %11044 = vset.pattern.permute.xlu0 0
  %11045 = vperm.xlu0 %11044, %v10624
  %v11046 = vpop.permute.xlu0 %11045
  %11049 = vset.pattern.permute.xlu0 0
  %11050 = vperm.xlu0 %11049, %v10625
  %v11051 = vpop.permute.xlu0 %11050
  %11054 = vset.pattern.permute.xlu0 0
  %11055 = vperm.xlu0 %11054, %v10626
  %v11056 = vpop.permute.xlu0 %11055
  %11059 = vset.pattern.permute.xlu0 0
  %11060 = vperm.xlu0 %11059, %v10627
  %v11061 = vpop.permute.xlu0 %11060
  %11064 = vset.pattern.permute.xlu0 0
  %11065 = vperm.xlu0 %11064, %v10628
  %v11066 = vpop.permute.xlu0 %11065
  %11069 = vset.pattern.permute.xlu0 0
  %11070 = vperm.xlu0 %11069, %v10629
  %v11071 = vpop.permute.xlu0 %11070
  %11074 = vset.pattern.permute.xlu0 0
  %11075 = vperm.xlu0 %11074, %v10630
  %v11076 = vpop.permute.xlu0 %11075
  %11079 = vset.pattern.permute.xlu0 0
  %11080 = vperm.xlu0 %11079, %v10631
  %v11081 = vpop.permute.xlu0 %11080
  %11084 = vset.pattern.permute.xlu0 0
  %11085 = vperm.xlu0 %11084, %v10633
  %v11086 = vpop.permute.xlu0 %11085
  %11089 = vset.pattern.permute.xlu0 0
  %11090 = vperm.xlu0 %11089, %v10634
  %v11091 = vpop.permute.xlu0 %11090
  %11094 = vset.pattern.permute.xlu0 0
  %11095 = vperm.xlu0 %11094, %v10635
  %v11096 = vpop.permute.xlu0 %11095
  %11099 = vset.pattern.permute.xlu0 0
  %11100 = vperm.xlu0 %11099, %v10636
  %v11101 = vpop.permute.xlu0 %11100
  %11104 = vset.pattern.permute.xlu0 0
  %11105 = vperm.xlu0 %11104, %v10637
  %v11106 = vpop.permute.xlu0 %11105
  %11109 = vset.pattern.permute.xlu0 0
  %11110 = vperm.xlu0 %11109, %v10638
  %v11111 = vpop.permute.xlu0 %11110
  %11114 = vset.pattern.permute.xlu0 0
  %11115 = vperm.xlu0 %11114, %v10639
  %v11116 = vpop.permute.xlu0 %11115
  %11119 = vset.pattern.permute.xlu0 0
  %11120 = vperm.xlu0 %11119, %v10640
  %v11121 = vpop.permute.xlu0 %11120
  %11124 = vset.pattern.permute.xlu0 0
  %11125 = vperm.xlu0 %11124, %v10641
  %v11126 = vpop.permute.xlu0 %11125
  %11129 = vset.pattern.permute.xlu0 0
  %11130 = vperm.xlu0 %11129, %v10642
  %v11131 = vpop.permute.xlu0 %11130
  %11134 = vset.pattern.permute.xlu0 0
  %11135 = vperm.xlu0 %11134, %v10643
  %v11136 = vpop.permute.xlu0 %11135
  %11139 = vset.pattern.permute.xlu0 0
  %11140 = vperm.xlu0 %11139, %v10644
  %v11141 = vpop.permute.xlu0 %11140
  %11144 = vset.pattern.permute.xlu0 0
  %11145 = vperm.xlu0 %11144, %v10645
  %v11146 = vpop.permute.xlu0 %11145
  %11149 = vset.pattern.permute.xlu0 0
  %11150 = vperm.xlu0 %11149, %v10646
  %v11151 = vpop.permute.xlu0 %11150
  %11154 = vset.pattern.permute.xlu0 0
  %11155 = vperm.xlu0 %11154, %v10647
  %v11156 = vpop.permute.xlu0 %11155
  %11159 = vset.pattern.permute.xlu0 0
  %11160 = vperm.xlu0 %11159, %v10648
  %v11161 = vpop.permute.xlu0 %11160
  %11164 = vset.pattern.permute.xlu0 0
  %11165 = vperm.xlu0 %11164, %v10650
  %v11166 = vpop.permute.xlu0 %11165
  %11169 = vset.pattern.permute.xlu0 0
  %11170 = vperm.xlu0 %11169, %v10651
  %v11171 = vpop.permute.xlu0 %11170
  %11174 = vset.pattern.permute.xlu0 0
  %11175 = vperm.xlu0 %11174, %v10652
  %v11176 = vpop.permute.xlu0 %11175
  %11179 = vset.pattern.permute.xlu0 0
  %11180 = vperm.xlu0 %11179, %v10653
  %v11181 = vpop.permute.xlu0 %11180
  %11184 = vset.pattern.permute.xlu0 0
  %11185 = vperm.xlu0 %11184, %v10654
  %v11186 = vpop.permute.xlu0 %11185
  %11189 = vset.pattern.permute.xlu0 0
  %11190 = vperm.xlu0 %11189, %v10655
  %v11191 = vpop.permute.xlu0 %11190
  %11194 = vset.pattern.permute.xlu0 0
  %11195 = vperm.xlu0 %11194, %v10656
  %v11196 = vpop.permute.xlu0 %11195
  %11199 = vset.pattern.permute.xlu0 0
  %11200 = vperm.xlu0 %11199, %v10657
  %v11201 = vpop.permute.xlu0 %11200
  %11204 = vset.pattern.permute.xlu0 0
  %11205 = vperm.xlu0 %11204, %v10658
  %v11206 = vpop.permute.xlu0 %11205
  %11209 = vset.pattern.permute.xlu0 0
  %11210 = vperm.xlu0 %11209, %v10659
  %v11211 = vpop.permute.xlu0 %11210
  %11214 = vset.pattern.permute.xlu0 0
  %11215 = vperm.xlu0 %11214, %v10660
  %v11216 = vpop.permute.xlu0 %11215
  %11219 = vset.pattern.permute.xlu0 0
  %11220 = vperm.xlu0 %11219, %v10661
  %v11221 = vpop.permute.xlu0 %11220
  %11224 = vset.pattern.permute.xlu0 0
  %11225 = vperm.xlu0 %11224, %v10662
  %v11226 = vpop.permute.xlu0 %11225
  %11229 = vset.pattern.permute.xlu0 0
  %11230 = vperm.xlu0 %11229, %v10663
  %v11231 = vpop.permute.xlu0 %11230
  %11234 = vset.pattern.permute.xlu0 0
  %11235 = vperm.xlu0 %11234, %v10664
  %v11236 = vpop.permute.xlu0 %11235
  %11239 = vset.pattern.permute.xlu0 0
  %11240 = vperm.xlu0 %11239, %v10665
  %v11241 = vpop.permute.xlu0 %11240
  %11244 = vset.pattern.permute.xlu0 0
  %11245 = vperm.xlu0 %11244, %v10667
  %v11246 = vpop.permute.xlu0 %11245
  %11249 = vset.pattern.permute.xlu0 0
  %11250 = vperm.xlu0 %11249, %v10668
  %v11251 = vpop.permute.xlu0 %11250
  %11254 = vset.pattern.permute.xlu0 0
  %11255 = vperm.xlu0 %11254, %v10669
  %v11256 = vpop.permute.xlu0 %11255
  %11259 = vset.pattern.permute.xlu0 0
  %11260 = vperm.xlu0 %11259, %v10670
  %v11261 = vpop.permute.xlu0 %11260
  %11264 = vset.pattern.permute.xlu0 0
  %11265 = vperm.xlu0 %11264, %v10671
  %v11266 = vpop.permute.xlu0 %11265
  %11269 = vset.pattern.permute.xlu0 0
  %11270 = vperm.xlu0 %11269, %v10672
  %v11271 = vpop.permute.xlu0 %11270
  %11274 = vset.pattern.permute.xlu0 0
  %11275 = vperm.xlu0 %11274, %v10673
  %v11276 = vpop.permute.xlu0 %11275
  %11279 = vset.pattern.permute.xlu0 0
  %11280 = vperm.xlu0 %11279, %v10674
  %v11281 = vpop.permute.xlu0 %11280
  %11284 = vset.pattern.permute.xlu0 0
  %11285 = vperm.xlu0 %11284, %v10675
  %v11286 = vpop.permute.xlu0 %11285
  %11289 = vset.pattern.permute.xlu0 0
  %11290 = vperm.xlu0 %11289, %v10676
  %v11291 = vpop.permute.xlu0 %11290
  %11294 = vset.pattern.permute.xlu0 0
  %11295 = vperm.xlu0 %11294, %v10677
  %v11296 = vpop.permute.xlu0 %11295
  %11299 = vset.pattern.permute.xlu0 0
  %11300 = vperm.xlu0 %11299, %v10678
  %v11301 = vpop.permute.xlu0 %11300
  %11304 = vset.pattern.permute.xlu0 0
  %11305 = vperm.xlu0 %11304, %v10679
  %v11306 = vpop.permute.xlu0 %11305
  %11309 = vset.pattern.permute.xlu0 0
  %11310 = vperm.xlu0 %11309, %v10680
  %v11311 = vpop.permute.xlu0 %11310
  %11314 = vset.pattern.permute.xlu0 0
  %11315 = vperm.xlu0 %11314, %v10681
  %v11316 = vpop.permute.xlu0 %11315
  %11319 = vset.pattern.permute.xlu0 0
  %11320 = vperm.xlu0 %11319, %v10682
  %v11321 = vpop.permute.xlu0 %11320
  %v11323 = vmul.f32 %v10686, %v6338
  %v11324 = vmul.f32 %v10691, %v6339
  %v11325 = vmul.f32 %v10696, %v6340
  %v11326 = vmul.f32 %v10701, %v6341
  %v11327 = vmul.f32 %v10706, %v6342
  %v11328 = vmul.f32 %v10711, %v6343
  %v11329 = vmul.f32 %v10716, %v6344
  %v11330 = vmul.f32 %v10721, %v6345
  %v11331 = vmul.f32 %v10726, %v6346
  %v11332 = vmul.f32 %v10731, %v6347
  %v11333 = vmul.f32 %v10736, %v6348
  %v11334 = vmul.f32 %v10741, %v6349
  %v11335 = vmul.f32 %v10746, %v6350
  %v11336 = vmul.f32 %v10751, %v6351
  %v11337 = vmul.f32 %v10756, %v6352
  %v11338 = vmul.f32 %v10761, %v6353
  %v11339 = vmul.f32 %v10766, %v6354
  %v11340 = vmul.f32 %v10771, %v6355
  %v11341 = vmul.f32 %v10776, %v6356
  %v11342 = vmul.f32 %v10781, %v6357
  %v11343 = vmul.f32 %v10786, %v6358
  %v11344 = vmul.f32 %v10791, %v6359
  %v11345 = vmul.f32 %v10796, %v6360
  %v11346 = vmul.f32 %v10801, %v6361
  %v11347 = vmul.f32 %v10806, %v6362
  %v11348 = vmul.f32 %v10811, %v6363
  %v11349 = vmul.f32 %v10816, %v6364
  %v11350 = vmul.f32 %v10821, %v6365
  %v11351 = vmul.f32 %v10826, %v6366
  %v11352 = vmul.f32 %v10831, %v6367
  %v11353 = vmul.f32 %v10836, %v6368
  %v11354 = vmul.f32 %v10841, %v6369
  %v11355 = vmul.f32 %v10846, %v6370
  %v11356 = vmul.f32 %v10851, %v6371
  %v11357 = vmul.f32 %v10856, %v6372
  %v11358 = vmul.f32 %v10861, %v6373
  %v11359 = vmul.f32 %v10866, %v6374
  %v11360 = vmul.f32 %v10871, %v6375
  %v11361 = vmul.f32 %v10876, %v6376
  %v11362 = vmul.f32 %v10881, %v6377
  %v11363 = vmul.f32 %v10886, %v6378
  %v11364 = vmul.f32 %v10891, %v6379
  %v11365 = vmul.f32 %v10896, %v6380
  %v11366 = vmul.f32 %v10901, %v6381
  %v11367 = vmul.f32 %v10906, %v6382
  %v11368 = vmul.f32 %v10911, %v6383
  %v11369 = vmul.f32 %v10916, %v6384
  %v11370 = vmul.f32 %v10921, %v6385
  %v11371 = vmul.f32 %v10926, %v6386
  %v11372 = vmul.f32 %v10931, %v6387
  %v11373 = vmul.f32 %v10936, %v6388
  %v11374 = vmul.f32 %v10941, %v6389
  %v11375 = vmul.f32 %v10946, %v6390
  %v11376 = vmul.f32 %v10951, %v6391
  %v11377 = vmul.f32 %v10956, %v6392
  %v11378 = vmul.f32 %v10961, %v6393
  %v11379 = vmul.f32 %v10966, %v6394
  %v11380 = vmul.f32 %v10971, %v6395
  %v11381 = vmul.f32 %v10976, %v6396
  %v11382 = vmul.f32 %v10981, %v6397
  %v11383 = vmul.f32 %v10986, %v6398
  %v11384 = vmul.f32 %v10991, %v6399
  %v11385 = vmul.f32 %v10996, %v6400
  %v11386 = vmul.f32 %v11001, %v6401
  %v11387 = vmul.f32 %v11006, %v6402
  %v11388 = vmul.f32 %v11011, %v6403
  %v11389 = vmul.f32 %v11016, %v6404
  %v11390 = vmul.f32 %v11021, %v6405
  %v11391 = vmul.f32 %v11026, %v6406
  %v11392 = vmul.f32 %v11031, %v6407
  %v11393 = vmul.f32 %v11036, %v6408
  %v11394 = vmul.f32 %v11041, %v6409
  %v11395 = vmul.f32 %v11046, %v6410
  %v11396 = vmul.f32 %v11051, %v6411
  %v11397 = vmul.f32 %v11056, %v6412
  %v11398 = vmul.f32 %v11061, %v6413
  %v11399 = vmul.f32 %v11066, %v6414
  %v11400 = vmul.f32 %v11071, %v6415
  %v11401 = vmul.f32 %v11076, %v6416
  %v11402 = vmul.f32 %v11081, %v6417
  %v11403 = vmul.f32 %v11086, %v6418
  %v11404 = vmul.f32 %v11091, %v6419
  %v11405 = vmul.f32 %v11096, %v6420
  %v11406 = vmul.f32 %v11101, %v6421
  %v11407 = vmul.f32 %v11106, %v6422
  %v11408 = vmul.f32 %v11111, %v6423
  %v11409 = vmul.f32 %v11116, %v6424
  %v11410 = vmul.f32 %v11121, %v6425
  %v11411 = vmul.f32 %v11126, %v6426
  %v11412 = vmul.f32 %v11131, %v6427
  %v11413 = vmul.f32 %v11136, %v6428
  %v11414 = vmul.f32 %v11141, %v6429
  %v11415 = vmul.f32 %v11146, %v6430
  %v11416 = vmul.f32 %v11151, %v6431
  %v11417 = vmul.f32 %v11156, %v6432
  %v11418 = vmul.f32 %v11161, %v6433
  %v11419 = vmul.f32 %v11166, %v6434
  %v11420 = vmul.f32 %v11171, %v6435
  %v11421 = vmul.f32 %v11176, %v6436
  %v11422 = vmul.f32 %v11181, %v6437
  %v11423 = vmul.f32 %v11186, %v6438
  %v11424 = vmul.f32 %v11191, %v6439
  %v11425 = vmul.f32 %v11196, %v6440
  %v11426 = vmul.f32 %v11201, %v6441
  %v11427 = vmul.f32 %v11206, %v6442
  %v11428 = vmul.f32 %v11211, %v6443
  %v11429 = vmul.f32 %v11216, %v6444
  %v11430 = vmul.f32 %v11221, %v6445
  %v11431 = vmul.f32 %v11226, %v6446
  %v11432 = vmul.f32 %v11231, %v6447
  %v11433 = vmul.f32 %v11236, %v6448
  %v11434 = vmul.f32 %v11241, %v6449
  %v11435 = vmul.f32 %v11246, %v6450
  %v11436 = vmul.f32 %v11251, %v6451
  %v11437 = vmul.f32 %v11256, %v6452
  %v11438 = vmul.f32 %v11261, %v6453
  %v11439 = vmul.f32 %v11266, %v6454
  %v11440 = vmul.f32 %v11271, %v6455
  %v11441 = vmul.f32 %v11276, %v6456
  %v11442 = vmul.f32 %v11281, %v6457
  %v11443 = vmul.f32 %v11286, %v6458
  %v11444 = vmul.f32 %v11291, %v6459
  %v11445 = vmul.f32 %v11296, %v6460
  %v11446 = vmul.f32 %v11301, %v6461
  %v11447 = vmul.f32 %v11306, %v6462
  %v11448 = vmul.f32 %v11311, %v6463
  %v11449 = vmul.f32 %v11316, %v6464
  %v11450 = vmul.f32 %v11321, %v6465
  %v11451 = vadd.f32 %v11323, %v11324
  %v11452 = vadd.f32 %v11451, %v11325
  %v11453 = vadd.f32 %v11452, %v11326
  %v11454 = vadd.f32 %v11453, %v11327
  %v11455 = vadd.f32 %v11454, %v11328
  %v11456 = vadd.f32 %v11455, %v11329
  %v11457 = vadd.f32 %v11456, %v11330
  %v11458 = vadd.f32 %v11457, %v11331
  %v11459 = vadd.f32 %v11458, %v11332
  %v11460 = vadd.f32 %v11459, %v11333
  %v11461 = vadd.f32 %v11460, %v11334
  %v11462 = vadd.f32 %v11461, %v11335
  %v11463 = vadd.f32 %v11462, %v11336
  %v11464 = vadd.f32 %v11463, %v11337
  %v11465 = vadd.f32 %v11464, %v11338
  %v11466 = vrot.slane %v11465, 4
  %v11467 = vadd.f32 %v11465, %v11466
  %v11468 = vrot.slane %v11467, 2
  %v11469 = vadd.f32 %v11467, %v11468
  %v11470 = vrot.slane %v11469, 1
  %v11471 = vadd.f32 %v11469, %v11470
  %v11472 = vadd.f32 %v11339, %v11340
  %v11473 = vadd.f32 %v11472, %v11341
  %v11474 = vadd.f32 %v11473, %v11342
  %v11475 = vadd.f32 %v11474, %v11343
  %v11476 = vadd.f32 %v11475, %v11344
  %v11477 = vadd.f32 %v11476, %v11345
  %v11478 = vadd.f32 %v11477, %v11346
  %v11479 = vadd.f32 %v11478, %v11347
  %v11480 = vadd.f32 %v11479, %v11348
  %v11481 = vadd.f32 %v11480, %v11349
  %v11482 = vadd.f32 %v11481, %v11350
  %v11483 = vadd.f32 %v11482, %v11351
  %v11484 = vadd.f32 %v11483, %v11352
  %v11485 = vadd.f32 %v11484, %v11353
  %v11486 = vadd.f32 %v11485, %v11354
  %v11487 = vrot.slane %v11486, 4
  %v11488 = vadd.f32 %v11486, %v11487
  %v11489 = vrot.slane %v11488, 2
  %v11490 = vadd.f32 %v11488, %v11489
  %v11491 = vrot.slane %v11490, 1
  %v11492 = vadd.f32 %v11490, %v11491
  %v11493 = vadd.f32 %v11355, %v11356
  %v11494 = vadd.f32 %v11493, %v11357
  %v11495 = vadd.f32 %v11494, %v11358
  %v11496 = vadd.f32 %v11495, %v11359
  %v11497 = vadd.f32 %v11496, %v11360
  %v11498 = vadd.f32 %v11497, %v11361
  %v11499 = vadd.f32 %v11498, %v11362
  %v11500 = vadd.f32 %v11499, %v11363
  %v11501 = vadd.f32 %v11500, %v11364
  %v11502 = vadd.f32 %v11501, %v11365
  %v11503 = vadd.f32 %v11502, %v11366
  %v11504 = vadd.f32 %v11503, %v11367
  %v11505 = vadd.f32 %v11504, %v11368
  %v11506 = vadd.f32 %v11505, %v11369
  %v11507 = vadd.f32 %v11506, %v11370
  %v11508 = vrot.slane %v11507, 4
  %v11509 = vadd.f32 %v11507, %v11508
  %v11510 = vrot.slane %v11509, 2
  %v11511 = vadd.f32 %v11509, %v11510
  %v11512 = vrot.slane %v11511, 1
  %v11513 = vadd.f32 %v11511, %v11512
  %v11514 = vadd.f32 %v11371, %v11372
  %v11515 = vadd.f32 %v11514, %v11373
  %v11516 = vadd.f32 %v11515, %v11374
  %v11517 = vadd.f32 %v11516, %v11375
  %v11518 = vadd.f32 %v11517, %v11376
  %v11519 = vadd.f32 %v11518, %v11377
  %v11520 = vadd.f32 %v11519, %v11378
  %v11521 = vadd.f32 %v11520, %v11379
  %v11522 = vadd.f32 %v11521, %v11380
  %v11523 = vadd.f32 %v11522, %v11381
  %v11524 = vadd.f32 %v11523, %v11382
  %v11525 = vadd.f32 %v11524, %v11383
  %v11526 = vadd.f32 %v11525, %v11384
  %v11527 = vadd.f32 %v11526, %v11385
  %v11528 = vadd.f32 %v11527, %v11386
  %v11529 = vrot.slane %v11528, 4
  %v11530 = vadd.f32 %v11528, %v11529
  %v11531 = vrot.slane %v11530, 2
  %v11532 = vadd.f32 %v11530, %v11531
  %v11533 = vrot.slane %v11532, 1
  %v11534 = vadd.f32 %v11532, %v11533
  %v11535 = vadd.f32 %v11387, %v11388
  %v11536 = vadd.f32 %v11535, %v11389
  %v11537 = vadd.f32 %v11536, %v11390
  %v11538 = vadd.f32 %v11537, %v11391
  %v11539 = vadd.f32 %v11538, %v11392
  %v11540 = vadd.f32 %v11539, %v11393
  %v11541 = vadd.f32 %v11540, %v11394
  %v11542 = vadd.f32 %v11541, %v11395
  %v11543 = vadd.f32 %v11542, %v11396
  %v11544 = vadd.f32 %v11543, %v11397
  %v11545 = vadd.f32 %v11544, %v11398
  %v11546 = vadd.f32 %v11545, %v11399
  %v11547 = vadd.f32 %v11546, %v11400
  %v11548 = vadd.f32 %v11547, %v11401
  %v11549 = vadd.f32 %v11548, %v11402
  %v11550 = vrot.slane %v11549, 4
  %v11551 = vadd.f32 %v11549, %v11550
  %v11552 = vrot.slane %v11551, 2
  %v11553 = vadd.f32 %v11551, %v11552
  %v11554 = vrot.slane %v11553, 1
  %v11555 = vadd.f32 %v11553, %v11554
  %v11556 = vadd.f32 %v11403, %v11404
  %v11557 = vadd.f32 %v11556, %v11405
  %v11558 = vadd.f32 %v11557, %v11406
  %v11559 = vadd.f32 %v11558, %v11407
  %v11560 = vadd.f32 %v11559, %v11408
  %v11561 = vadd.f32 %v11560, %v11409
  %v11562 = vadd.f32 %v11561, %v11410
  %v11563 = vadd.f32 %v11562, %v11411
  %v11564 = vadd.f32 %v11563, %v11412
  %v11565 = vadd.f32 %v11564, %v11413
  %v11566 = vadd.f32 %v11565, %v11414
  %v11567 = vadd.f32 %v11566, %v11415
  %v11568 = vadd.f32 %v11567, %v11416
  %v11569 = vadd.f32 %v11568, %v11417
  %v11570 = vadd.f32 %v11569, %v11418
  %v11571 = vrot.slane %v11570, 4
  %v11572 = vadd.f32 %v11570, %v11571
  %v11573 = vrot.slane %v11572, 2
  %v11574 = vadd.f32 %v11572, %v11573
  %v11575 = vrot.slane %v11574, 1
  %v11576 = vadd.f32 %v11574, %v11575
  %v11577 = vadd.f32 %v11419, %v11420
  %v11578 = vadd.f32 %v11577, %v11421
  %v11579 = vadd.f32 %v11578, %v11422
  %v11580 = vadd.f32 %v11579, %v11423
  %v11581 = vadd.f32 %v11580, %v11424
  %v11582 = vadd.f32 %v11581, %v11425
  %v11583 = vadd.f32 %v11582, %v11426
  %v11584 = vadd.f32 %v11583, %v11427
  %v11585 = vadd.f32 %v11584, %v11428
  %v11586 = vadd.f32 %v11585, %v11429
  %v11587 = vadd.f32 %v11586, %v11430
  %v11588 = vadd.f32 %v11587, %v11431
  %v11589 = vadd.f32 %v11588, %v11432
  %v11590 = vadd.f32 %v11589, %v11433
  %v11591 = vadd.f32 %v11590, %v11434
  %v11592 = vrot.slane %v11591, 4
  %v11593 = vadd.f32 %v11591, %v11592
  %v11594 = vrot.slane %v11593, 2
  %v11595 = vadd.f32 %v11593, %v11594
  %v11596 = vrot.slane %v11595, 1
  %v11597 = vadd.f32 %v11595, %v11596
  %v11598 = vadd.f32 %v11435, %v11436
  %v11599 = vadd.f32 %v11598, %v11437
  %v11600 = vadd.f32 %v11599, %v11438
  %v11601 = vadd.f32 %v11600, %v11439
  %v11602 = vadd.f32 %v11601, %v11440
  %v11603 = vadd.f32 %v11602, %v11441
  %v11604 = vadd.f32 %v11603, %v11442
  %v11605 = vadd.f32 %v11604, %v11443
  %v11606 = vadd.f32 %v11605, %v11444
  %v11607 = vadd.f32 %v11606, %v11445
  %v11608 = vadd.f32 %v11607, %v11446
  %v11609 = vadd.f32 %v11608, %v11447
  %v11610 = vadd.f32 %v11609, %v11448
  %v11611 = vadd.f32 %v11610, %v11449
  %v11612 = vadd.f32 %v11611, %v11450
  %v11613 = vrot.slane %v11612, 4
  %v11614 = vadd.f32 %v11612, %v11613
  %v11615 = vrot.slane %v11614, 2
  %v11616 = vadd.f32 %v11614, %v11615
  %v11617 = vrot.slane %v11616, 1
  %v11618 = vadd.f32 %v11616, %v11617
  %v11627 = vsel %vm8910, %v11492, %v11471
  %v11628 = vsel %vm8912, %v11513, %v11627
  %v11629 = vsel %vm8914, %v11534, %v11628
  %v11630 = vsel %vm8916, %v11555, %v11629
  %v11631 = vsel %vm8918, %v11576, %v11630
  %v11632 = vsel %vm8920, %v11597, %v11631
  %v11633 = vsel %vm8922, %v11618, %v11632
  %11635 = vst [vmem:[%s13] sm:$0xff] %v11633
  // Predicated region
  $region50: #{luong_decoder_forward.2} parent=0 // pred_check
    _
  $region51: #{luong_decoder_forward.2} parent=0 // pred_check_branch
    %11637 = sbr.rel (0) target = $region53
  $region52: #{luong_decoder_forward.2} parent=0 // pred_region
    _
  $region53: #{luong_decoder_forward.2} parent=0 // pred_fallthru
    _
  // Predicated region
  $region54: #{luong_decoder_forward.2} parent=0 // pred_check
    _
  $region55: #{luong_decoder_forward.2} parent=0 // pred_check_branch
    %11639 = sbr.rel (0) target = $region57
  $region56: #{luong_decoder_forward.2} parent=0 // pred_region
    _
  $region57: #{luong_decoder_forward.2} parent=0 // pred_fallthru
    _
  // Predicated region
  $region58: #{luong_decoder_forward.2} parent=0 // pred_check
    _
  $region59: #{luong_decoder_forward.2} parent=0 // pred_check_branch
    %11641 = sbr.rel (0) target = $region61
  $region60: #{luong_decoder_forward.2} parent=0 // pred_region
    _
  $region61: #{luong_decoder_forward.2} parent=0 // pred_fallthru
    _
  // Predicated region
  $region62: #{luong_decoder_forward.2} parent=0 // pred_check
    _
  $region63: #{luong_decoder_forward.2} parent=0 // pred_check_branch
    %11643 = sbr.rel (0) target = $region65
  $region64: #{luong_decoder_forward.2} parent=0 // pred_region
    _
  $region65: #{luong_decoder_forward.2} parent=0 // pred_fallthru
    _

</llo_original>
